<compile_context>
chip_gen: v7x
topology: tpu7x:2x2x1
jax: 0.10.0
libtpu: 0.0.40
codegen_flags: <defaults>
</compile_context>

<pallas_src>
import functools
import math

import jax
import jax.numpy as jnp
from jax.experimental import pallas as pl
from jax.experimental.pallas import tpu as pltpu


_VMEM_LIMIT = 48 * 1024 * 1024   # explicit scoped-VMEM budget (fits v5e..v7x)


# ---------------------------------------------------------------------------
# Helpers
# ---------------------------------------------------------------------------

def _pick_tile(total, desired, quantum):
    """Largest tile t <= desired such that total % t == 0 and t % quantum == 0.

    Falls back to the full dimension (always legal for Pallas block shapes)."""
    if total <= desired:
        return total
    t = (desired // quantum) * quantum
    while t >= quantum:
        if total % t == 0:
            return t
        t -= quantum
    return total


def _use_bf16_exp():
    """bf16 exp in attention on v6e/v7x (2x EUP throughput); f32 on v5."""
    try:
        kind = jax.devices()[0].device_kind.lower()
    except Exception:
        return True
    return "v5" not in kind


# ---------------------------------------------------------------------------
# Tiled GEMM with fused epilogues (bias / tanh-GELU / gated residual).
# Weights may be stacked as (2, K, N) for the two streams; the stream is then
# selected per row-block inside the index_map (stream 0 = image, 1 = context).
# ---------------------------------------------------------------------------

def _linear_kernel(x_ref, w_ref, b_ref, *rest, activation, fused_residual):
    if fused_residual:
        res_ref, gate_ref, o_ref, acc_ref = rest
    else:
        o_ref, acc_ref = rest

    k = pl.program_id(2)

    @pl.when(k == 0)
    def _():
        acc_ref[...] = jnp.zeros_like(acc_ref)

    acc_ref[...] += jnp.dot(x_ref[...], w_ref[...],
                            preferred_element_type=jnp.float32)

    @pl.when(k == pl.num_programs(2) - 1)
    def _():
        out = acc_ref[...] + b_ref[...].astype(jnp.float32)
        if activation == "gelu_tanh":
            c = math.sqrt(2.0 / math.pi)
            out = 0.5 * out * (1.0 + jnp.tanh(c * (out + 0.044715 * out * out * out)))
        if fused_residual:
            out = res_ref[...].astype(jnp.float32) + gate_ref[...].astype(jnp.float32) * out
        o_ref[...] = out.astype(o_ref.dtype)


def linear(x, w, b, *, activation=None, residual=None, gate=None,
           stream_boundary=None, out_dtype=jnp.bfloat16,
           tm=1024, tn=512, tk=512):
    """out = act(x @ w + b); optionally out = residual + gate * out (fused).

    If w.ndim == 3 (shape (2, K, N)) the weight/bias/gate of stream 0 is used
    for rows [0, stream_boundary) and stream 1 for the rest."""
    M, K = x.shape
    stacked = (w.ndim == 3)
    N = w.shape[-1]
    if stacked:
        assert stream_boundary is not None and 0 < stream_boundary < M
        tm = _pick_tile(math.gcd(stream_boundary, M - stream_boundary), tm, 8)
    else:
        tm = _pick_tile(M, tm, 8)
    tn = _pick_tile(N, tn, 128)
    tk = _pick_tile(K, tk, 128)
    grid = (M // tm, N // tn, K // tk)
    nb_img = (stream_boundary // tm) if stacked else 0

    def stream(i):
        return jnp.where(i < nb_img, 0, 1)

    in_specs = [pl.BlockSpec((tm, tk), lambda i, j, k: (i, k))]
    inputs = [x]
    if stacked:
        in_specs += [pl.BlockSpec((None, tk, tn), lambda i, j, k: (stream(i), k, j)),
                     pl.BlockSpec((None, 1, tn), lambda i, j, k: (stream(i), 0, j))]
        inputs += [w, b.reshape(2, 1, N)]
    else:
        in_specs += [pl.BlockSpec((tk, tn), lambda i, j, k: (k, j)),
                     pl.BlockSpec((1, tn), lambda i, j, k: (0, j))]
        inputs += [w, b.reshape(1, N)]

    fused_residual = residual is not None
    if fused_residual:
        in_specs.append(pl.BlockSpec((tm, tn), lambda i, j, k: (i, j)))
        inputs.append(residual)
        if stacked:
            in_specs.append(pl.BlockSpec((None, 1, tn), lambda i, j, k: (stream(i), 0, j)))
            inputs.append(gate.reshape(2, 1, N))
        else:
            in_specs.append(pl.BlockSpec((1, tn), lambda i, j, k: (0, j)))
            inputs.append(gate.reshape(1, N))

    return pl.pallas_call(
        functools.partial(_linear_kernel, activation=activation,
                          fused_residual=fused_residual),
        grid=grid,
        in_specs=in_specs,
        out_specs=pl.BlockSpec((tm, tn), lambda i, j, k: (i, j)),
        out_shape=jax.ShapeDtypeStruct((M, N), out_dtype),
        scratch_shapes=[pltpu.VMEM((tm, tn), jnp.float32)],
        compiler_params=pltpu.CompilerParams(
            dimension_semantics=("parallel", "parallel", "arbitrary"),
            vmem_limit_bytes=_VMEM_LIMIT),
    )(*inputs)


# ---------------------------------------------------------------------------
# LayerNorm (no affine) fused with AdaLN modulation, joint over both streams
# (per-stream scale/shift selected by row-block index).
# ---------------------------------------------------------------------------

def _ln_modulate_kernel(x_ref, scale_ref, shift_ref, o_ref, *, eps):
    x = x_ref[...].astype(jnp.float32)
    mean = jnp.mean(x, axis=-1, keepdims=True)
    xc = x - mean
    var = jnp.mean(xc * xc, axis=-1, keepdims=True)
    xn = xc * jax.lax.rsqrt(var + eps)
    o_ref[...] = (xn * scale_ref[...].astype(jnp.float32)
                  + shift_ref[...].astype(jnp.float32)).astype(o_ref.dtype)


def ln_modulate(x, scale, shift, *, stream_boundary, eps=1e-6, tm=256):
    T, D = x.shape
    tm = _pick_tile(math.gcd(stream_boundary, T - stream_boundary), tm, 8)
    nb_img = stream_boundary // tm

    def stream(i):
        return jnp.where(i < nb_img, 0, 1)

    return pl.pallas_call(
        functools.partial(_ln_modulate_kernel, eps=eps),
        grid=(T // tm,),
        in_specs=[pl.BlockSpec((tm, D), lambda i: (i, 0)),
                  pl.BlockSpec((None, 1, D), lambda i: (stream(i), 0, 0)),
                  pl.BlockSpec((None, 1, D), lambda i: (stream(i), 0, 0))],
        out_specs=pl.BlockSpec((tm, D), lambda i: (i, 0)),
        out_shape=jax.ShapeDtypeStruct((T, D), jnp.bfloat16),
        compiler_params=pltpu.CompilerParams(
            dimension_semantics=("parallel",), vmem_limit_bytes=_VMEM_LIMIT),
    )(x, scale.reshape(2, 1, D), shift.reshape(2, 1, D))


# ---------------------------------------------------------------------------
# Per-head RMSNorm + Flux RoPE for q AND k of both streams in one call.
# Grid (T/tm, H), h innermost: the (tm, Dh) rotary planes (with RMSNorm weight
# and q attention scale already folded in) are fetched once per row tile and
# reused across heads.  q/k are read directly from the (T, 3*dim) qkv buffer.
# ---------------------------------------------------------------------------

def _qk_norm_rope_kernel(q_ref, k_ref, faq_ref, fbq_ref, fak_ref, fbk_ref,
                         qo_ref, ko_ref, *, eps):
    lane = jax.lax.broadcasted_iota(jnp.int32, q_ref.shape, 1)
    is_even = (lane % 2) == 0

    def norm_rope(x_ref, fa_ref, fb_ref, o_ref):
        x = x_ref[...].astype(jnp.float32)                      # (tm, Dh)
        ms = jnp.mean(x * x, axis=-1, keepdims=True)            # 128-lane reduce
        xn = x * jax.lax.rsqrt(ms + eps)
        # RoPE on interleaved (even, odd) lane pairs:
        #   out[2i]   = f00*w[2i]  *xn[2i] + f01*w[2i+1]*xn[2i+1]
        #   out[2i+1] = f10*w[2i]  *xn[2i] + f11*w[2i+1]*xn[2i+1]
        # fa/fb already carry the weight (and attention scale for q).
        d = xn.shape[-1]
        nxt = pltpu.roll(xn, d - 1, 1)                          # [i] = xn[i+1]
        prv = pltpu.roll(xn, 1, 1)                              # [i] = xn[i-1]
        partner = jnp.where(is_even, nxt, prv)
        o_ref[...] = (fa_ref[...].astype(jnp.float32) * xn +
                      fb_ref[...].astype(jnp.float32) * partner).astype(o_ref.dtype)

    norm_rope(q_ref, faq_ref, fbq_ref, qo_ref)
    norm_rope(k_ref, fak_ref, fbk_ref, ko_ref)


def qk_norm_rope(qkv, fa_q, fb_q, fa_k, fb_k, *, num_heads, head_dim,
                 eps=1e-6, tm=256):
    T = qkv.shape[0]
    dim = num_heads * head_dim
    tm = _pick_tile(T, tm, 8)
    plane_spec = pl.BlockSpec((tm, head_dim), lambda i, h: (i, 0))
    out_spec = pl.BlockSpec((tm, head_dim), lambda i, h: (i, h))
    return pl.pallas_call(
        functools.partial(_qk_norm_rope_kernel, eps=eps),
        grid=(T // tm, num_heads),
        in_specs=[pl.BlockSpec((tm, head_dim), lambda i, h: (i, h)),              # q
                  pl.BlockSpec((tm, head_dim), lambda i, h: (i, num_heads + h)),  # k
                  plane_spec, plane_spec, plane_spec, plane_spec],
        out_specs=(out_spec, out_spec),
        out_shape=(jax.ShapeDtypeStruct((T, dim), jnp.bfloat16),
                   jax.ShapeDtypeStruct((T, dim), jnp.bfloat16)),
        compiler_params=pltpu.CompilerParams(
            dimension_semantics=("parallel", "arbitrary"),
            vmem_limit_bytes=_VMEM_LIMIT),
    )(qkv, qkv, fa_q, fb_q, fa_k, fb_k)


# ---------------------------------------------------------------------------
# Flash attention (online softmax).  q is pre-scaled (scale folded into the
# rotary planes); v is read directly from the (T, 3*dim) qkv buffer.
# ---------------------------------------------------------------------------

def _flash_attention_kernel(q_ref, k_ref, v_ref, o_ref, m_sc, l_sc, acc_sc, *,
                            exp_bf16):
    kv = pl.program_id(2)

    @pl.when(kv == 0)
    def _():
        m_sc[...] = jnp.full_like(m_sc, -1e30)
        l_sc[...] = jnp.zeros_like(l_sc)
        acc_sc[...] = jnp.zeros_like(acc_sc)

    s = jax.lax.dot_general(q_ref[...], k_ref[...], (((1,), (1,)), ((), ())),
                            preferred_element_type=jnp.float32)
    m_prev = m_sc[...]
    m_new = jnp.maximum(m_prev, jnp.max(s, axis=-1, keepdims=True))
    alpha = jnp.exp(m_prev - m_new)
    x = s - m_new
    if exp_bf16:
        p = jnp.exp(x.astype(jnp.bfloat16))
        p_sum = jnp.sum(p.astype(jnp.float32), axis=-1, keepdims=True)
        pv = jnp.dot(p, v_ref[...], preferred_element_type=jnp.float32)
    else:
        p = jnp.exp(x)
        p_sum = jnp.sum(p, axis=-1, keepdims=True)
        pv = jnp.dot(p.astype(v_ref.dtype), v_ref[...],
                     preferred_element_type=jnp.float32)
    l_sc[...] = alpha * l_sc[...] + p_sum
    acc_sc[...] = alpha * acc_sc[...] + pv
    m_sc[...] = m_new

    @pl.when(kv == pl.num_programs(2) - 1)
    def _():
        o_ref[...] = (acc_sc[...] *
                      pl.reciprocal(l_sc[...], approx=True)).astype(o_ref.dtype)


def attention(q, k, qkv, *, num_heads, dim_head, v_col_offset, tq=512, tkv=1024):
    T, D = q.shape
    tq = _pick_tile(T, tq, 8)
    tkv = _pick_tile(T, tkv, 8)
    grid = (num_heads, T // tq, T // tkv)
    return pl.pallas_call(
        functools.partial(_flash_attention_kernel, exp_bf16=_use_bf16_exp()),
        grid=grid,
        in_specs=[pl.BlockSpec((tq, dim_head), lambda h, i, j: (i, h)),
                  pl.BlockSpec((tkv, dim_head), lambda h, i, j: (j, h)),
                  pl.BlockSpec((tkv, dim_head), lambda h, i, j: (j, v_col_offset + h))],
        out_specs=pl.BlockSpec((tq, dim_head), lambda h, i, j: (i, h)),
        out_shape=jax.ShapeDtypeStruct((T, D), jnp.bfloat16),
        scratch_shapes=[pltpu.VMEM((tq, 1), jnp.float32),
                        pltpu.VMEM((tq, 1), jnp.float32),
                        pltpu.VMEM((tq, dim_head), jnp.float32)],
        compiler_params=pltpu.CompilerParams(
            dimension_semantics=("parallel", "parallel", "arbitrary"),
            vmem_limit_bytes=_VMEM_LIMIT),
    )(q, k, qkv)


# ---------------------------------------------------------------------------
# Parameters (deterministic, synthetic; full-precision stand-ins for W4A4/AWQ).
# Per-stream weights are pre-stacked as (2, K, N): stream 0 = image, 1 = context.
# ---------------------------------------------------------------------------

def init_params(key, dim, dim_head):
    keys = jax.random.split(key, 10)

    def lin(k, fan_in, fan_out):
        kw, kb = jax.random.split(k)
        w = (jax.random.normal(kw, (fan_in, fan_out), jnp.float32)
             / math.sqrt(fan_in)).astype(jnp.bfloat16)
        b = (jax.random.normal(kb, (fan_out,), jnp.float32) * 0.01).astype(jnp.bfloat16)
        return w, b

    def lin2(k_img, k_ctx, fan_in, fan_out):
        w0, b0 = lin(k_img, fan_in, fan_out)
        w1, b1 = lin(k_ctx, fan_in, fan_out)
        return jnp.stack([w0, w1]), jnp.stack([b0, b1])

    p = {}
    p['adaln_w'], p['adaln_b'] = lin(keys[0], dim, 6 * dim)
    p['adaln_ctx_w'], p['adaln_ctx_b'] = lin(keys[1], dim, 6 * dim)
    p['qkv_w'], p['qkv_b'] = lin2(keys[2], keys[3], dim, 3 * dim)
    p['out_w'], p['out_b'] = lin2(keys[4], keys[5], dim, dim)
    p['fc1_w'], p['fc1_b'] = lin2(keys[6], keys[7], dim, 4 * dim)
    p['fc2_w'], p['fc2_b'] = lin2(keys[8], keys[9], 4 * dim, dim)
    p['norm_q_w'] = jnp.ones((dim_head,), jnp.float32)
    p['norm_k_w'] = jnp.ones((dim_head,), jnp.float32)
    p['norm_added_q_w'] = jnp.ones((dim_head,), jnp.float32)
    p['norm_added_k_w'] = jnp.ones((dim_head,), jnp.float32)
    return p


# ---------------------------------------------------------------------------
# Forward pass (glue around the Pallas kernels)
# ---------------------------------------------------------------------------

def joint_transformer_block(params, hidden_states, encoder_hidden_states, temb,
                            image_rotary_emb, *, num_heads, dim_head):
    B, T_img, dim = hidden_states.shape
    T_txt = encoder_hidden_states.shape[1]
    T_total = T_img + T_txt
    assert B == 1, "reference modulation broadcasting requires batch == 1"
    assert T_img % 8 == 0 and T_txt % 8 == 0
    assert image_rotary_emb.ndim == 6
    assert image_rotary_emb.shape[0] == 1 and image_rotary_emb.shape[1] == 1
    assert image_rotary_emb.shape[2] == B * T_total

    H, Dh = num_heads, dim_head
    f32, bf16 = jnp.float32, jnp.bfloat16

    # joint residual buffer, ordered [image tokens ; context tokens]
    # (matches the reference's `concat` attention buffer ordering).
    x = jnp.concatenate([hidden_states[0].astype(bf16),
                         encoder_hidden_states[0].astype(bf16)], axis=0)

    temb_f = temb.astype(f32).reshape(1, dim)
    silu_temb = (temb_f * jax.nn.sigmoid(temb_f)).astype(bf16)

    # AdaLN-Zero: matches nunchaku's `emb.reshape((1,-1,6)).unbind(2)` layout.
    def adaln(w, b):
        emb = linear(silu_temb, w, b, out_dtype=f32)     # (1, 6*dim)
        emb = emb.reshape(dim, 6)
        return [emb[:, i].reshape(1, dim) for i in range(6)]

    (shift_msa, scale_msa, gate_msa,
     shift_mlp, scale_mlp, gate_mlp) = adaln(params['adaln_w'], params['adaln_b'])
    (c_shift_msa, c_scale_msa, c_gate_msa,
     c_shift_mlp, c_scale_mlp, c_gate_mlp) = adaln(params['adaln_ctx_w'],
                                                   params['adaln_ctx_b'])

    def stack2(a, b_):   # (2, dim), row 0 = image stream, row 1 = context stream
        return jnp.concatenate([a, b_], axis=0)

    scale_msa_s, shift_msa_s, gate_msa_s = (stack2(scale_msa, c_scale_msa),
                                            stack2(shift_msa, c_shift_msa),
                                            stack2(gate_msa, c_gate_msa))
    scale_mlp_s, shift_mlp_s, gate_mlp_s = (stack2(scale_mlp, c_scale_mlp),
                                            stack2(shift_mlp, c_shift_mlp),
                                            stack2(gate_mlp, c_gate_mlp))

    # ----- attention branch ------------------------------------------------
    norm_x = ln_modulate(x, scale_msa_s, shift_msa_s, stream_boundary=T_img)
    qkv = linear(norm_x, params['qkv_w'], params['qkv_b'],
                 stream_boundary=T_img)                 # (T_total, 3*dim) bf16

    # rotary matrices: reference order is [txt ; img]; joint buffer is [img ; txt]
    rot = image_rotary_emb.reshape(T_total, Dh // 2, 2, 2).astype(f32)
    rot_txt, rot_img = rot[:T_txt], rot[T_txt:]

    def planes(r):       # (T, Dh/2, 2, 2) -> "self" (fa) and "partner" (fb) coeffs
        Ts = r.shape[0]
        fa = jnp.stack([r[:, :, 0, 0], r[:, :, 1, 1]], -1).reshape(Ts, Dh)
        fb = jnp.stack([r[:, :, 0, 1], r[:, :, 1, 0]], -1).reshape(Ts, Dh)
        return fa, fb

    fa_img, fb_img = planes(rot_img)
    fa_txt, fb_txt = planes(rot_txt)

    def swap_pairs(w):   # (Dh,) even/odd pair swap (for the partner coefficient)
        return w.reshape(Dh // 2, 2)[:, ::-1].reshape(Dh)

    attn_scale = 1.0 / math.sqrt(Dh)
    wq = params['norm_q_w'].astype(f32)
    wk = params['norm_k_w'].astype(f32)
    wqa = params['norm_added_q_w'].astype(f32)
    wka = params['norm_added_k_w'].astype(f32)

    # fold RMSNorm weights (+ attention scale for q) into the bf16 rotary planes
    fa_q = jnp.concatenate([fa_img * (wq * attn_scale),
                            fa_txt * (wqa * attn_scale)], 0).astype(bf16)
    fb_q = jnp.concatenate([fb_img * (swap_pairs(wq) * attn_scale),
                            fb_txt * (swap_pairs(wqa) * attn_scale)], 0).astype(bf16)
    fa_k = jnp.concatenate([fa_img * wk, fa_txt * wka], 0).astype(bf16)
    fb_k = jnp.concatenate([fb_img * swap_pairs(wk),
                            fb_txt * swap_pairs(wka)], 0).astype(bf16)

    q_rope, k_rope = qk_norm_rope(qkv, fa_q, fb_q, fa_k, fb_k,
                                  num_heads=H, head_dim=Dh)

    attn = attention(q_rope, k_rope, qkv, num_heads=H, dim_head=Dh,
                     v_col_offset=2 * H)                # (T_total, dim) bf16

    # output projection with fused gate*out + residual epilogue
    x = linear(attn, params['out_w'], params['out_b'],
               residual=x, gate=gate_msa_s, stream_boundary=T_img)

    # ----- MLP branch (tanh-GELU fused into fc1, gated residual into fc2) ---
    norm_x2 = ln_modulate(x, scale_mlp_s, shift_mlp_s, stream_boundary=T_img)
    ff = linear(norm_x2, params['fc1_w'], params['fc1_b'],
                activation="gelu_tanh", stream_boundary=T_img)
    x = linear(ff, params['fc2_w'], params['fc2_b'],
               residual=x, gate=gate_mlp_s, stream_boundary=T_img)

    # reference block runs in bf16 (no fp16 clipping path)
    hidden_out = x[:T_img]
    encoder_out = x[T_img:]
    return encoder_out[None], hidden_out[None]


# ---------------------------------------------------------------------------
# Demo
# ---------------------------------------------------------------------------

if __name__ == "__main__":
    # small but lane-aligned shapes (head_dim = 128 as in Flux)
    dim = 256
    num_heads = 2
    dim_head = dim // num_heads       # 128
    B, T_img, T_txt = 1, 8, 8

    key = jax.random.PRNGKey(0)
    k1, k2, k3, k4 = jax.random.split(key, 4)
    params = init_params(k1, dim, dim_head)

    hidden_states = jax.random.normal(k2, (B, T_img, dim), jnp.float32).astype(jnp.bfloat16)
    encoder_hidden_states = jax.random.normal(k3, (B, T_txt, dim), jnp.float32).astype(jnp.bfloat16)
    temb = jax.random.normal(k4, (B, dim), jnp.float32).astype(jnp.bfloat16)

    # Flux-style rotary matrices [[cos, -sin], [sin, cos]] per (token, freq)
    pos = jnp.arange(B * (T_txt + T_img), dtype=jnp.float32)[:, None]
    freqs = jnp.exp(-jnp.arange(dim_head // 2, dtype=jnp.float32) / (dim_head // 2))[None, :]
    ang = pos * freqs
    cos, sin = jnp.cos(ang), jnp.sin(ang)
    rot = jnp.stack([jnp.stack([cos, -sin], -1), jnp.stack([sin, cos], -1)], -2)
    image_rotary_emb = rot.reshape(1, 1, B * (T_txt + T_img), dim_head // 2, 2, 2)

    fwd = jax.jit(functools.partial(joint_transformer_block,
                                    num_heads=num_heads, dim_head=dim_head))
    enc_out, hid_out = fwd(params, hidden_states, encoder_hidden_states, temb,
                           image_rotary_emb)
    jax.block_until_ready((enc_out, hid_out))

    assert enc_out.shape == (B, T_txt, dim) and enc_out.dtype == jnp.bfloat16
    assert hid_out.shape == (B, T_img, dim) and hid_out.dtype == jnp.bfloat16
    assert bool(jnp.all(jnp.isfinite(enc_out.astype(jnp.float32))))
    assert bool(jnp.all(jnp.isfinite(hid_out.astype(jnp.float32))))
    print("KERNEL_OK")
</pallas_src>

<mosaic_0001>
module attributes {stable_mosaic.version = 11 : i64} {
  func.func @_linear_kernel(%arg0: i32, %arg1: i32, %arg2: i32, %arg3: memref<1x256xbf16, #tpu.memory_space<vmem>>, %arg4: memref<256x512xbf16, #tpu.memory_space<vmem>>, %arg5: memref<1x512xbf16, #tpu.memory_space<vmem>>, %arg6: memref<1x512xf32, #tpu.memory_space<vmem>>, %arg7: memref<1x512xf32, #tpu.memory_space<vmem>>) attributes {dimension_semantics = [#tpu.dimension_semantics<parallel>, #tpu.dimension_semantics<parallel>, #tpu.dimension_semantics<arbitrary>], iteration_bounds = array<i64: 1, 3, 1>, scalar_prefetch = 0 : i64, scratch_operands = 1 : i64, tpu.core_type = #tpu.core_type<tc>, window_params = [{transform_indices = @transform_0, window_bounds = array<i64: 1, 256>}, {transform_indices = @transform_1, window_bounds = array<i64: 256, 512>}, {transform_indices = @transform_2, window_bounds = array<i64: 1, 512>}, {transform_indices = @transform_3, window_bounds = array<i64: 1, 512>}]} {
    %c0_i32 = arith.constant 0 : i32
    %0 = arith.cmpi eq, %arg2, %c0_i32 : i32
    %1 = arith.extui %0 : i1 to i32
    %c0_i32_0 = arith.constant 0 : i32
    %2 = arith.cmpi ne, %1, %c0_i32_0 : i32
    scf.if %2 {
      %cst_10 = arith.constant 0.000000e+00 : f32
      %12 = vector.broadcast %cst_10 : f32 to vector<1x512xf32>
      %c0_11 = arith.constant 0 : index
      %c0_12 = arith.constant 0 : index
      %13 = vector.load %arg7[%c0_11, %c0_12] : memref<1x512xf32, #tpu.memory_space<vmem>>, vector<1x512xf32>
      tpu.vector_store %arg7[%c0_11, %c0_12], %12 {strides = array<i32>} : memref<1x512xf32, #tpu.memory_space<vmem>>, vector<1x512xf32>,
    } else {
    }
    %c0 = arith.constant 0 : index
    %c0_1 = arith.constant 0 : index
    %3 = vector.load %arg7[%c0, %c0_1] : memref<1x512xf32, #tpu.memory_space<vmem>>, vector<1x512xf32>
    %c0_2 = arith.constant 0 : index
    %c0_3 = arith.constant 0 : index
    %4 = vector.load %arg3[%c0_2, %c0_3] : memref<1x256xbf16, #tpu.memory_space<vmem>>, vector<1x256xbf16>
    %c0_4 = arith.constant 0 : index
    %c0_5 = arith.constant 0 : index
    %5 = vector.load %arg4[%c0_4, %c0_5] : memref<256x512xbf16, #tpu.memory_space<vmem>>, vector<256x512xbf16>
    %cst = arith.constant dense<0.000000e+00> : vector<1x512xf32>
    %6 = tpu.matmul %4, %5, %cst {dimension_numbers = #tpu.dot_dimension_numbers<[1], [0], [0], [1], [0, 0, 1, 1], [], []>} : vector<1x256xbf16>, vector<256x512xbf16>, vector<1x512xf32> -> vector<1x512xf32>
    %7 = arith.addf %3, %6 : vector<1x512xf32>
    %c0_6 = arith.constant 0 : index
    %c0_7 = arith.constant 0 : index
    %8 = vector.load %arg7[%c0_6, %c0_7] : memref<1x512xf32, #tpu.memory_space<vmem>>, vector<1x512xf32>
    tpu.vector_store %arg7[%c0_6, %c0_7], %7 {strides = array<i32>} : memref<1x512xf32, #tpu.memory_space<vmem>>, vector<1x512xf32>,
    %c0_i32_8 = arith.constant 0 : i32
    %9 = arith.cmpi eq, %arg2, %c0_i32_8 : i32
    %10 = arith.extui %9 : i1 to i32
    %c0_i32_9 = arith.constant 0 : i32
    %11 = arith.cmpi ne, %10, %c0_i32_9 : i32
    scf.if %11 {
      %c0_10 = arith.constant 0 : index
      %c0_11 = arith.constant 0 : index
      %12 = vector.load %arg7[%c0_10, %c0_11] : memref<1x512xf32, #tpu.memory_space<vmem>>, vector<1x512xf32>
      %c0_12 = arith.constant 0 : index
      %c0_13 = arith.constant 0 : index
      %13 = vector.load %arg5[%c0_12, %c0_13] : memref<1x512xbf16, #tpu.memory_space<vmem>>, vector<1x512xbf16>
      %14 = arith.extf %13 : vector<1x512xbf16> to vector<1x512xf32>
      %15 = arith.addf %12, %14 : vector<1x512xf32>
      %c0_14 = arith.constant 0 : index
      %c0_15 = arith.constant 0 : index
      %16 = vector.load %arg6[%c0_14, %c0_15] : memref<1x512xf32, #tpu.memory_space<vmem>>, vector<1x512xf32>
      tpu.vector_store %arg6[%c0_14, %c0_15], %15 {strides = array<i32>} : memref<1x512xf32, #tpu.memory_space<vmem>>, vector<1x512xf32>,
    } else {
    }
    return
  }
  func.func @transform_0(%arg0: i32, %arg1: i32, %arg2: i32) -> (i32, i32) {
    %c0_i32 = arith.constant 0 : i32
    return %arg0, %arg2 : i32, i32
  }
  func.func @transform_1(%arg0: i32, %arg1: i32, %arg2: i32) -> (i32, i32) {
    %c0_i32 = arith.constant 0 : i32
    return %arg2, %arg1 : i32, i32
  }
  func.func @transform_2(%arg0: i32, %arg1: i32, %arg2: i32) -> (i32, i32) {
    %c0_i32 = arith.constant 0 : i32
    %c0_i32_0 = arith.constant 0 : i32
    return %c0_i32, %arg1 : i32, i32
  }
  func.func @transform_3(%arg0: i32, %arg1: i32, %arg2: i32) -> (i32, i32) {
    %c0_i32 = arith.constant 0 : i32
    return %arg0, %arg1 : i32, i32
  }
}

module attributes {stable_mosaic.version = 11 : i64} {
  func.func @_linear_kernel(%arg0: i32, %arg1: i32, %arg2: i32, %arg3: memref<1x256xbf16, #tpu.memory_space<vmem>>, %arg4: memref<256x512xbf16, #tpu.memory_space<vmem>>, %arg5: memref<1x512xbf16, #tpu.memory_space<vmem>>, %arg6: memref<1x512xf32, #tpu.memory_space<vmem>>, %arg7: memref<1x512xf32, #tpu.memory_space<vmem>>) attributes {dimension_semantics = [#tpu.dimension_semantics<parallel>, #tpu.dimension_semantics<parallel>, #tpu.dimension_semantics<arbitrary>], iteration_bounds = array<i64: 1, 3, 1>, scalar_prefetch = 0 : i64, scratch_operands = 1 : i64, tpu.core_type = #tpu.core_type<tc>, window_params = [{transform_indices = @transform_0, window_bounds = array<i64: 1, 256>}, {transform_indices = @transform_1, window_bounds = array<i64: 256, 512>}, {transform_indices = @transform_2, window_bounds = array<i64: 1, 512>}, {transform_indices = @transform_3, window_bounds = array<i64: 1, 512>}]} {
    %c0_i32 = arith.constant 0 : i32
    %0 = arith.cmpi eq, %arg2, %c0_i32 : i32
    %1 = arith.extui %0 : i1 to i32
    %c0_i32_0 = arith.constant 0 : i32
    %2 = arith.cmpi ne, %1, %c0_i32_0 : i32
    scf.if %2 {
      %cst_10 = arith.constant 0.000000e+00 : f32
      %12 = vector.broadcast %cst_10 : f32 to vector<1x512xf32>
      %c0_11 = arith.constant 0 : index
      %c0_12 = arith.constant 0 : index
      %13 = vector.load %arg7[%c0_11, %c0_12] : memref<1x512xf32, #tpu.memory_space<vmem>>, vector<1x512xf32>
      tpu.vector_store %arg7[%c0_11, %c0_12], %12 {strides = array<i32>} : memref<1x512xf32, #tpu.memory_space<vmem>>, vector<1x512xf32>,
    } else {
    }
    %c0 = arith.constant 0 : index
    %c0_1 = arith.constant 0 : index
    %3 = vector.load %arg7[%c0, %c0_1] : memref<1x512xf32, #tpu.memory_space<vmem>>, vector<1x512xf32>
    %c0_2 = arith.constant 0 : index
    %c0_3 = arith.constant 0 : index
    %4 = vector.load %arg3[%c0_2, %c0_3] : memref<1x256xbf16, #tpu.memory_space<vmem>>, vector<1x256xbf16>
    %c0_4 = arith.constant 0 : index
    %c0_5 = arith.constant 0 : index
    %5 = vector.load %arg4[%c0_4, %c0_5] : memref<256x512xbf16, #tpu.memory_space<vmem>>, vector<256x512xbf16>
    %cst = arith.constant dense<0.000000e+00> : vector<1x512xf32>
    %6 = tpu.matmul %4, %5, %cst {dimension_numbers = #tpu.dot_dimension_numbers<[1], [0], [0], [1], [0, 0, 1, 1], [], []>} : vector<1x256xbf16>, vector<256x512xbf16>, vector<1x512xf32> -> vector<1x512xf32>
    %7 = arith.addf %3, %6 : vector<1x512xf32>
    %c0_6 = arith.constant 0 : index
    %c0_7 = arith.constant 0 : index
    %8 = vector.load %arg7[%c0_6, %c0_7] : memref<1x512xf32, #tpu.memory_space<vmem>>, vector<1x512xf32>
    tpu.vector_store %arg7[%c0_6, %c0_7], %7 {strides = array<i32>} : memref<1x512xf32, #tpu.memory_space<vmem>>, vector<1x512xf32>,
    %c0_i32_8 = arith.constant 0 : i32
    %9 = arith.cmpi eq, %arg2, %c0_i32_8 : i32
    %10 = arith.extui %9 : i1 to i32
    %c0_i32_9 = arith.constant 0 : i32
    %11 = arith.cmpi ne, %10, %c0_i32_9 : i32
    scf.if %11 {
      %c0_10 = arith.constant 0 : index
      %c0_11 = arith.constant 0 : index
      %12 = vector.load %arg7[%c0_10, %c0_11] : memref<1x512xf32, #tpu.memory_space<vmem>>, vector<1x512xf32>
      %c0_12 = arith.constant 0 : index
      %c0_13 = arith.constant 0 : index
      %13 = vector.load %arg5[%c0_12, %c0_13] : memref<1x512xbf16, #tpu.memory_space<vmem>>, vector<1x512xbf16>
      %14 = arith.extf %13 : vector<1x512xbf16> to vector<1x512xf32>
      %15 = arith.addf %12, %14 : vector<1x512xf32>
      %c0_14 = arith.constant 0 : index
      %c0_15 = arith.constant 0 : index
      %16 = vector.load %arg6[%c0_14, %c0_15] : memref<1x512xf32, #tpu.memory_space<vmem>>, vector<1x512xf32>
      tpu.vector_store %arg6[%c0_14, %c0_15], %15 {strides = array<i32>} : memref<1x512xf32, #tpu.memory_space<vmem>>, vector<1x512xf32>,
    } else {
    }
    return
  }
  func.func @transform_0(%arg0: i32, %arg1: i32, %arg2: i32) -> (i32, i32) {
    %c0_i32 = arith.constant 0 : i32
    return %arg0, %arg2 : i32, i32
  }
  func.func @transform_1(%arg0: i32, %arg1: i32, %arg2: i32) -> (i32, i32) {
    %c0_i32 = arith.constant 0 : i32
    return %arg2, %arg1 : i32, i32
  }
  func.func @transform_2(%arg0: i32, %arg1: i32, %arg2: i32) -> (i32, i32) {
    %c0_i32 = arith.constant 0 : i32
    %c0_i32_0 = arith.constant 0 : i32
    return %c0_i32, %arg1 : i32, i32
  }
  func.func @transform_3(%arg0: i32, %arg1: i32, %arg2: i32) -> (i32, i32) {
    %c0_i32 = arith.constant 0 : i32
    return %arg0, %arg1 : i32, i32
  }
}

module attributes {stable_mosaic.version = 11 : i64} {
  func.func @_ln_modulate_kernel(%arg0: i32, %arg1: memref<8x256xbf16, #tpu.memory_space<vmem>>, %arg2: memref<1x1x256xf32, #tpu.memory_space<vmem>>, %arg3: memref<1x1x256xf32, #tpu.memory_space<vmem>>, %arg4: memref<8x256xbf16, #tpu.memory_space<vmem>>) attributes {dimension_semantics = [#tpu.dimension_semantics<parallel>], iteration_bounds = array<i64: 2>, scalar_prefetch = 0 : i64, scratch_operands = 0 : i64, tpu.core_type = #tpu.core_type<tc>, window_params = [{transform_indices = @transform_0, window_bounds = array<i64: 8, 256>}, {transform_indices = @transform_1, window_bounds = array<i64: 1, 1, 256>}, {transform_indices = @transform_2, window_bounds = array<i64: 1, 1, 256>}, {transform_indices = @transform_3, window_bounds = array<i64: 8, 256>}]} {
    %c0 = arith.constant 0 : index
    %c0_0 = arith.constant 0 : index
    %0 = vector.load %arg1[%c0, %c0_0] : memref<8x256xbf16, #tpu.memory_space<vmem>>, vector<8x256xbf16>
    %1 = arith.extf %0 : vector<8x256xbf16> to vector<8x256xf32>
    %cst = arith.constant dense<0.000000e+00> : vector<8xf32>
    %2 = vector.multi_reduction <add>, %1, %cst [1] : vector<8x256xf32> to vector<8xf32>
    %3 = vector.shape_cast %2 : vector<8xf32> to vector<8x1xf32>
    %cst_1 = arith.constant 2.560000e+02 : f32
    %4 = vector.broadcast %cst_1 : f32 to vector<8x1xf32>
    %5 = arith.divf %3, %4 : vector<8x1xf32>
    %6 = vector.broadcast %5 : vector<8x1xf32> to vector<8x256xf32>
    %7 = arith.subf %1, %6 : vector<8x256xf32>
    %8 = arith.mulf %7, %7 : vector<8x256xf32>
    %cst_2 = arith.constant dense<0.000000e+00> : vector<8xf32>
    %9 = vector.multi_reduction <add>, %8, %cst_2 [1] : vector<8x256xf32> to vector<8xf32>
    %10 = vector.shape_cast %9 : vector<8xf32> to vector<8x1xf32>
    %cst_3 = arith.constant 2.560000e+02 : f32
    %11 = vector.broadcast %cst_3 : f32 to vector<8x1xf32>
    %12 = arith.divf %10, %11 : vector<8x1xf32>
    %cst_4 = arith.constant 9.99999997E-7 : f32
    %13 = vector.broadcast %cst_4 : f32 to vector<8x1xf32>
    %14 = arith.addf %12, %13 : vector<8x1xf32>
    %15 = math.rsqrt %14 : vector<8x1xf32>
    %16 = vector.broadcast %15 : vector<8x1xf32> to vector<8x256xf32>
    %17 = arith.mulf %7, %16 : vector<8x256xf32>
    %c0_5 = arith.constant 0 : index
    %c0_6 = arith.constant 0 : index
    %c0_7 = arith.constant 0 : index
    %18 = vector.load %arg2[%c0_5, %c0_6, %c0_7] : memref<1x1x256xf32, #tpu.memory_space<vmem>>, vector<1x1x256xf32>
    %19 = vector.shape_cast %18 : vector<1x1x256xf32> to vector<1x256xf32>
    %20 = vector.broadcast %19 : vector<1x256xf32> to vector<8x256xf32>
    %21 = arith.mulf %17, %20 : vector<8x256xf32>
    %c0_8 = arith.constant 0 : index
    %c0_9 = arith.constant 0 : index
    %c0_10 = arith.constant 0 : index
    %22 = vector.load %arg3[%c0_8, %c0_9, %c0_10] : memref<1x1x256xf32, #tpu.memory_space<vmem>>, vector<1x1x256xf32>
    %23 = vector.shape_cast %22 : vector<1x1x256xf32> to vector<1x256xf32>
    %24 = vector.broadcast %23 : vector<1x256xf32> to vector<8x256xf32>
    %25 = arith.addf %21, %24 : vector<8x256xf32>
    %26 = arith.truncf %25 : vector<8x256xf32> to vector<8x256xbf16>
    %c0_11 = arith.constant 0 : index
    %c0_12 = arith.constant 0 : index
    %27 = vector.load %arg4[%c0_11, %c0_12] : memref<8x256xbf16, #tpu.memory_space<vmem>>, vector<8x256xbf16>
    tpu.vector_store %arg4[%c0_11, %c0_12], %26 {strides = array<i32>} : memref<8x256xbf16, #tpu.memory_space<vmem>>, vector<8x256xbf16>,
    return
  }
  func.func @transform_0(%arg0: i32) -> (i32, i32) {
    %c0_i32 = arith.constant 0 : i32
    %c0_i32_0 = arith.constant 0 : i32
    return %arg0, %c0_i32 : i32, i32
  }
  func.func @transform_1(%arg0: i32) -> (i32, i32, i32) {
    %c1_i32 = arith.constant 1 : i32
    %0 = arith.cmpi slt, %arg0, %c1_i32 : i32
    %c0_i32 = arith.constant 0 : i32
    %c1_i32_0 = arith.constant 1 : i32
    %1 = arith.select %0, %c0_i32, %c1_i32_0 : i32
    %c0_i32_1 = arith.constant 0 : i32
    %c0_i32_2 = arith.constant 0 : i32
    %c0_i32_3 = arith.constant 0 : i32
    return %1, %c0_i32_1, %c0_i32_2 : i32, i32, i32
  }
  func.func @transform_2(%arg0: i32) -> (i32, i32, i32) {
    %c1_i32 = arith.constant 1 : i32
    %0 = arith.cmpi slt, %arg0, %c1_i32 : i32
    %c0_i32 = arith.constant 0 : i32
    %c1_i32_0 = arith.constant 1 : i32
    %1 = arith.select %0, %c0_i32, %c1_i32_0 : i32
    %c0_i32_1 = arith.constant 0 : i32
    %c0_i32_2 = arith.constant 0 : i32
    %c0_i32_3 = arith.constant 0 : i32
    return %1, %c0_i32_1, %c0_i32_2 : i32, i32, i32
  }
  func.func @transform_3(%arg0: i32) -> (i32, i32) {
    %c0_i32 = arith.constant 0 : i32
    %c0_i32_0 = arith.constant 0 : i32
    return %arg0, %c0_i32 : i32, i32
  }
}

module attributes {stable_mosaic.version = 11 : i64} {
  func.func @_linear_kernel(%arg0: i32, %arg1: i32, %arg2: i32, %arg3: memref<8x256xbf16, #tpu.memory_space<vmem>>, %arg4: memref<1x256x384xbf16, #tpu.memory_space<vmem>>, %arg5: memref<1x1x384xbf16, #tpu.memory_space<vmem>>, %arg6: memref<8x384xbf16, #tpu.memory_space<vmem>>, %arg7: memref<8x384xf32, #tpu.memory_space<vmem>>) attributes {dimension_semantics = [#tpu.dimension_semantics<parallel>, #tpu.dimension_semantics<parallel>, #tpu.dimension_semantics<arbitrary>], iteration_bounds = array<i64: 2, 2, 1>, scalar_prefetch = 0 : i64, scratch_operands = 1 : i64, tpu.core_type = #tpu.core_type<tc>, window_params = [{transform_indices = @transform_0, window_bounds = array<i64: 8, 256>}, {transform_indices = @transform_1, window_bounds = array<i64: 1, 256, 384>}, {transform_indices = @transform_2, window_bounds = array<i64: 1, 1, 384>}, {transform_indices = @transform_3, window_bounds = array<i64: 8, 384>}]} {
    %c0_i32 = arith.constant 0 : i32
    %0 = arith.cmpi eq, %arg2, %c0_i32 : i32
    %1 = arith.extui %0 : i1 to i32
    %c0_i32_0 = arith.constant 0 : i32
    %2 = arith.cmpi ne, %1, %c0_i32_0 : i32
    scf.if %2 {
      %cst_11 = arith.constant 0.000000e+00 : f32
      %13 = vector.broadcast %cst_11 : f32 to vector<8x384xf32>
      %c0_12 = arith.constant 0 : index
      %c0_13 = arith.constant 0 : index
      %14 = vector.load %arg7[%c0_12, %c0_13] : memref<8x384xf32, #tpu.memory_space<vmem>>, vector<8x384xf32>
      tpu.vector_store %arg7[%c0_12, %c0_13], %13 {strides = array<i32>} : memref<8x384xf32, #tpu.memory_space<vmem>>, vector<8x384xf32>,
    } else {
    }
    %c0 = arith.constant 0 : index
    %c0_1 = arith.constant 0 : index
    %3 = vector.load %arg7[%c0, %c0_1] : memref<8x384xf32, #tpu.memory_space<vmem>>, vector<8x384xf32>
    %c0_2 = arith.constant 0 : index
    %c0_3 = arith.constant 0 : index
    %4 = vector.load %arg3[%c0_2, %c0_3] : memref<8x256xbf16, #tpu.memory_space<vmem>>, vector<8x256xbf16>
    %c0_4 = arith.constant 0 : index
    %c0_5 = arith.constant 0 : index
    %c0_6 = arith.constant 0 : index
    %5 = vector.load %arg4[%c0_4, %c0_5, %c0_6] : memref<1x256x384xbf16, #tpu.memory_space<vmem>>, vector<1x256x384xbf16>
    %6 = vector.shape_cast %5 : vector<1x256x384xbf16> to vector<256x384xbf16>
    %cst = arith.constant dense<0.000000e+00> : vector<8x384xf32>
    %7 = tpu.matmul %4, %6, %cst {dimension_numbers = #tpu.dot_dimension_numbers<[1], [0], [0], [1], [0, 0, 1, 1], [], []>} : vector<8x256xbf16>, vector<256x384xbf16>, vector<8x384xf32> -> vector<8x384xf32>
    %8 = arith.addf %3, %7 : vector<8x384xf32>
    %c0_7 = arith.constant 0 : index
    %c0_8 = arith.constant 0 : index
    %9 = vector.load %arg7[%c0_7, %c0_8] : memref<8x384xf32, #tpu.memory_space<vmem>>, vector<8x384xf32>
    tpu.vector_store %arg7[%c0_7, %c0_8], %8 {strides = array<i32>} : memref<8x384xf32, #tpu.memory_space<vmem>>, vector<8x384xf32>,
    %c0_i32_9 = arith.constant 0 : i32
    %10 = arith.cmpi eq, %arg2, %c0_i32_9 : i32
    %11 = arith.extui %10 : i1 to i32
    %c0_i32_10 = arith.constant 0 : i32
    %12 = arith.cmpi ne, %11, %c0_i32_10 : i32
    scf.if %12 {
      %c0_11 = arith.constant 0 : index
      %c0_12 = arith.constant 0 : index
      %13 = vector.load %arg7[%c0_11, %c0_12] : memref<8x384xf32, #tpu.memory_space<vmem>>, vector<8x384xf32>
      %c0_13 = arith.constant 0 : index
      %c0_14 = arith.constant 0 : index
      %c0_15 = arith.constant 0 : index
      %14 = vector.load %arg5[%c0_13, %c0_14, %c0_15] : memref<1x1x384xbf16, #tpu.memory_space<vmem>>, vector<1x1x384xbf16>
      %15 = vector.shape_cast %14 : vector<1x1x384xbf16> to vector<1x384xbf16>
      %16 = arith.extf %15 : vector<1x384xbf16> to vector<1x384xf32>
      %17 = vector.broadcast %16 : vector<1x384xf32> to vector<8x384xf32>
      %18 = arith.addf %13, %17 : vector<8x384xf32>
      %19 = arith.truncf %18 : vector<8x384xf32> to vector<8x384xbf16>
      %c0_16 = arith.constant 0 : index
      %c0_17 = arith.constant 0 : index
      %20 = vector.load %arg6[%c0_16, %c0_17] : memref<8x384xbf16, #tpu.memory_space<vmem>>, vector<8x384xbf16>
      tpu.vector_store %arg6[%c0_16, %c0_17], %19 {strides = array<i32>} : memref<8x384xbf16, #tpu.memory_space<vmem>>, vector<8x384xbf16>,
    } else {
    }
    return
  }
  func.func @transform_0(%arg0: i32, %arg1: i32, %arg2: i32) -> (i32, i32) {
    %c0_i32 = arith.constant 0 : i32
    return %arg0, %arg2 : i32, i32
  }
  func.func @transform_1(%arg0: i32, %arg1: i32, %arg2: i32) -> (i32, i32, i32) {
    %c1_i32 = arith.constant 1 : i32
    %0 = arith.cmpi slt, %arg0, %c1_i32 : i32
    %c0_i32 = arith.constant 0 : i32
    %c1_i32_0 = arith.constant 1 : i32
    %1 = arith.select %0, %c0_i32, %c1_i32_0 : i32
    %c0_i32_1 = arith.constant 0 : i32
    return %1, %arg2, %arg1 : i32, i32, i32
  }
  func.func @transform_2(%arg0: i32, %arg1: i32, %arg2: i32) -> (i32, i32, i32) {
    %c1_i32 = arith.constant 1 : i32
    %0 = arith.cmpi slt, %arg0, %c1_i32 : i32
    %c0_i32 = arith.constant 0 : i32
    %c1_i32_0 = arith.constant 1 : i32
    %1 = arith.select %0, %c0_i32, %c1_i32_0 : i32
    %c0_i32_1 = arith.constant 0 : i32
    %c0_i32_2 = arith.constant 0 : i32
    return %1, %c0_i32_1, %arg1 : i32, i32, i32
  }
  func.func @transform_3(%arg0: i32, %arg1: i32, %arg2: i32) -> (i32, i32) {
    %c0_i32 = arith.constant 0 : i32
    return %arg0, %arg1 : i32, i32
  }
}

module attributes {stable_mosaic.version = 11 : i64} {
  func.func @_qk_norm_rope_kernel(%arg0: i32, %arg1: i32, %arg2: memref<16x128xbf16, #tpu.memory_space<vmem>>, %arg3: memref<16x128xbf16, #tpu.memory_space<vmem>>, %arg4: memref<16x128xbf16, #tpu.memory_space<vmem>>, %arg5: memref<16x128xbf16, #tpu.memory_space<vmem>>, %arg6: memref<16x128xbf16, #tpu.memory_space<vmem>>, %arg7: memref<16x128xbf16, #tpu.memory_space<vmem>>, %arg8: memref<16x128xbf16, #tpu.memory_space<vmem>>, %arg9: memref<16x128xbf16, #tpu.memory_space<vmem>>) attributes {dimension_semantics = [#tpu.dimension_semantics<parallel>, #tpu.dimension_semantics<arbitrary>], iteration_bounds = array<i64: 1, 2>, scalar_prefetch = 0 : i64, scratch_operands = 0 : i64, tpu.core_type = #tpu.core_type<tc>, window_params = [{transform_indices = @transform_0, window_bounds = array<i64: 16, 128>}, {transform_indices = @transform_1, window_bounds = array<i64: 16, 128>}, {transform_indices = @transform_2, window_bounds = array<i64: 16, 128>}, {transform_indices = @transform_3, window_bounds = array<i64: 16, 128>}, {transform_indices = @transform_4, window_bounds = array<i64: 16, 128>}, {transform_indices = @transform_5, window_bounds = array<i64: 16, 128>}, {transform_indices = @transform_6, window_bounds = array<i64: 16, 128>}, {transform_indices = @transform_7, window_bounds = array<i64: 16, 128>}]} {
    %0 = tpu.iota {dimensions = array<i32: 1>} : vector<16x128xi32>
    %c2_i32 = arith.constant 2 : i32
    %c0_i32 = arith.constant 0 : i32
    %1 = arith.cmpi eq, %c2_i32, %c0_i32 : i32
    %c1_i32 = arith.constant 1 : i32
    %2 = arith.select %1, %c1_i32, %c2_i32 : i32
    %3 = vector.broadcast %2 : i32 to vector<16x128xi32>
    %4 = arith.remsi %0, %3 : vector<16x128xi32>
    %c0_i32_0 = arith.constant 0 : i32
    %5 = vector.broadcast %c0_i32_0 : i32 to vector<16x128xi32>
    %6 = arith.cmpi ne, %4, %5 : vector<16x128xi32>
    %c0_i32_1 = arith.constant 0 : i32
    %7 = vector.broadcast %c0_i32_1 : i32 to vector<16x128xi32>
    %8 = arith.cmpi slt, %4, %7 : vector<16x128xi32>
    %c0_i32_2 = arith.constant 0 : i32
    %9 = arith.cmpi slt, %2, %c0_i32_2 : i32
    %10 = vector.broadcast %9 : i1 to vector<16x128xi1>
    %11 = vector.broadcast %10 : vector<16x128xi1> to vector<16x128xi1>
    %12 = arith.xori %8, %11 : vector<16x128xi1>
    %13 = arith.andi %12, %6 : vector<16x128xi1>
    %14 = vector.broadcast %2 : i32 to vector<16x128xi32>
    %15 = arith.addi %4, %14 : vector<16x128xi32>
    %16 = arith.select %13, %15, %4 : vector<16x128xi1>, vector<16x128xi32>
    %c0_i32_3 = arith.constant 0 : i32
    %17 = vector.broadcast %c0_i32_3 : i32 to vector<16x128xi32>
    %18 = arith.cmpi eq, %16, %17 : vector<16x128xi32>
    %c0 = arith.constant 0 : index
    %c0_4 = arith.constant 0 : index
    %19 = vector.load %arg2[%c0, %c0_4] : memref<16x128xbf16, #tpu.memory_space<vmem>>, vector<16x128xbf16>
    %20 = arith.extf %19 : vector<16x128xbf16> to vector<16x128xf32>
    %21 = arith.mulf %20, %20 : vector<16x128xf32>
    %cst = arith.constant dense<0.000000e+00> : vector<16xf32>
    %22 = vector.multi_reduction <add>, %21, %cst [1] : vector<16x128xf32> to vector<16xf32>
    %23 = vector.shape_cast %22 : vector<16xf32> to vector<16x1xf32>
    %cst_5 = arith.constant 1.280000e+02 : f32
    %24 = vector.broadcast %cst_5 : f32 to vector<16x1xf32>
    %25 = arith.divf %23, %24 : vector<16x1xf32>
    %cst_6 = arith.constant 9.99999997E-7 : f32
    %26 = vector.broadcast %cst_6 : f32 to vector<16x1xf32>
    %27 = arith.addf %25, %26 : vector<16x1xf32>
    %28 = math.rsqrt %27 : vector<16x1xf32>
    %29 = vector.broadcast %28 : vector<16x1xf32> to vector<16x128xf32>
    %30 = arith.mulf %20, %29 : vector<16x128xf32>
    %c127_i32 = arith.constant 127 : i32
    %31 = tpu.dynamic_rotate %30 by %c127_i32 dim 1 : vector<16x128xf32>, i32 -> vector<16x128xf32>
    %c1_i32_7 = arith.constant 1 : i32
    %32 = tpu.dynamic_rotate %30 by %c1_i32_7 dim 1 : vector<16x128xf32>, i32 -> vector<16x128xf32>
    %33 = arith.select %18, %31, %32 : vector<16x128xi1>, vector<16x128xf32>
    %c0_8 = arith.constant 0 : index
    %c0_9 = arith.constant 0 : index
    %34 = vector.load %arg4[%c0_8, %c0_9] : memref<16x128xbf16, #tpu.memory_space<vmem>>, vector<16x128xbf16>
    %35 = arith.extf %34 : vector<16x128xbf16> to vector<16x128xf32>
    %36 = arith.mulf %35, %30 : vector<16x128xf32>
    %c0_10 = arith.constant 0 : index
    %c0_11 = arith.constant 0 : index
    %37 = vector.load %arg5[%c0_10, %c0_11] : memref<16x128xbf16, #tpu.memory_space<vmem>>, vector<16x128xbf16>
    %38 = arith.extf %37 : vector<16x128xbf16> to vector<16x128xf32>
    %39 = arith.mulf %38, %33 : vector<16x128xf32>
    %40 = arith.addf %36, %39 : vector<16x128xf32>
    %41 = arith.truncf %40 : vector<16x128xf32> to vector<16x128xbf16>
    %c0_12 = arith.constant 0 : index
    %c0_13 = arith.constant 0 : index
    %42 = vector.load %arg8[%c0_12, %c0_13] : memref<16x128xbf16, #tpu.memory_space<vmem>>, vector<16x128xbf16>
    tpu.vector_store %arg8[%c0_12, %c0_13], %41 {strides = array<i32>} : memref<16x128xbf16, #tpu.memory_space<vmem>>, vector<16x128xbf16>,
    %c0_14 = arith.constant 0 : index
    %c0_15 = arith.constant 0 : index
    %43 = vector.load %arg3[%c0_14, %c0_15] : memref<16x128xbf16, #tpu.memory_space<vmem>>, vector<16x128xbf16>
    %44 = arith.extf %43 : vector<16x128xbf16> to vector<16x128xf32>
    %45 = arith.mulf %44, %44 : vector<16x128xf32>
    %cst_16 = arith.constant dense<0.000000e+00> : vector<16xf32>
    %46 = vector.multi_reduction <add>, %45, %cst_16 [1] : vector<16x128xf32> to vector<16xf32>
    %47 = vector.shape_cast %46 : vector<16xf32> to vector<16x1xf32>
    %cst_17 = arith.constant 1.280000e+02 : f32
    %48 = vector.broadcast %cst_17 : f32 to vector<16x1xf32>
    %49 = arith.divf %47, %48 : vector<16x1xf32>
    %cst_18 = arith.constant 9.99999997E-7 : f32
    %50 = vector.broadcast %cst_18 : f32 to vector<16x1xf32>
    %51 = arith.addf %49, %50 : vector<16x1xf32>
    %52 = math.rsqrt %51 : vector<16x1xf32>
    %53 = vector.broadcast %52 : vector<16x1xf32> to vector<16x128xf32>
    %54 = arith.mulf %44, %53 : vector<16x128xf32>
    %c127_i32_19 = arith.constant 127 : i32
    %55 = tpu.dynamic_rotate %54 by %c127_i32_19 dim 1 : vector<16x128xf32>, i32 -> vector<16x128xf32>
    %c1_i32_20 = arith.constant 1 : i32
    %56 = tpu.dynamic_rotate %54 by %c1_i32_20 dim 1 : vector<16x128xf32>, i32 -> vector<16x128xf32>
    %57 = arith.select %18, %55, %56 : vector<16x128xi1>, vector<16x128xf32>
    %c0_21 = arith.constant 0 : index
    %c0_22 = arith.constant 0 : index
    %58 = vector.load %arg6[%c0_21, %c0_22] : memref<16x128xbf16, #tpu.memory_space<vmem>>, vector<16x128xbf16>
    %59 = arith.extf %58 : vector<16x128xbf16> to vector<16x128xf32>
    %60 = arith.mulf %59, %54 : vector<16x128xf32>
    %c0_23 = arith.constant 0 : index
    %c0_24 = arith.constant 0 : index
    %61 = vector.load %arg7[%c0_23, %c0_24] : memref<16x128xbf16, #tpu.memory_space<vmem>>, vector<16x128xbf16>
    %62 = arith.extf %61 : vector<16x128xbf16> to vector<16x128xf32>
    %63 = arith.mulf %62, %57 : vector<16x128xf32>
    %64 = arith.addf %60, %63 : vector<16x128xf32>
    %65 = arith.truncf %64 : vector<16x128xf32> to vector<16x128xbf16>
    %c0_25 = arith.constant 0 : index
    %c0_26 = arith.constant 0 : index
    %66 = vector.load %arg9[%c0_25, %c0_26] : memref<16x128xbf16, #tpu.memory_space<vmem>>, vector<16x128xbf16>
    tpu.vector_store %arg9[%c0_25, %c0_26], %65 {strides = array<i32>} : memref<16x128xbf16, #tpu.memory_space<vmem>>, vector<16x128xbf16>,
    return
  }
  func.func @transform_0(%arg0: i32, %arg1: i32) -> (i32, i32) {
    %c0_i32 = arith.constant 0 : i32
    return %arg0, %arg1 : i32, i32
  }
  func.func @transform_1(%arg0: i32, %arg1: i32) -> (i32, i32) {
    %c2_i32 = arith.constant 2 : i32
    %0 = arith.addi %c2_i32, %arg1 : i32
    %c0_i32 = arith.constant 0 : i32
    return %arg0, %0 : i32, i32
  }
  func.func @transform_2(%arg0: i32, %arg1: i32) -> (i32, i32) {
    %c0_i32 = arith.constant 0 : i32
    %c0_i32_0 = arith.constant 0 : i32
    return %arg0, %c0_i32 : i32, i32
  }
  func.func @transform_3(%arg0: i32, %arg1: i32) -> (i32, i32) {
    %c0_i32 = arith.constant 0 : i32
    %c0_i32_0 = arith.constant 0 : i32
    return %arg0, %c0_i32 : i32, i32
  }
  func.func @transform_4(%arg0: i32, %arg1: i32) -> (i32, i32) {
    %c0_i32 = arith.constant 0 : i32
    %c0_i32_0 = arith.constant 0 : i32
    return %arg0, %c0_i32 : i32, i32
  }
  func.func @transform_5(%arg0: i32, %arg1: i32) -> (i32, i32) {
    %c0_i32 = arith.constant 0 : i32
    %c0_i32_0 = arith.constant 0 : i32
    return %arg0, %c0_i32 : i32, i32
  }
  func.func @transform_6(%arg0: i32, %arg1: i32) -> (i32, i32) {
    %c0_i32 = arith.constant 0 : i32
    return %arg0, %arg1 : i32, i32
  }
  func.func @transform_7(%arg0: i32, %arg1: i32) -> (i32, i32) {
    %c0_i32 = arith.constant 0 : i32
    return %arg0, %arg1 : i32, i32
  }
}

module attributes {stable_mosaic.version = 11 : i64} {
  func.func @_flash_attention_kernel(%arg0: i32, %arg1: i32, %arg2: i32, %arg3: memref<16x128xbf16, #tpu.memory_space<vmem>>, %arg4: memref<16x128xbf16, #tpu.memory_space<vmem>>, %arg5: memref<16x128xbf16, #tpu.memory_space<vmem>>, %arg6: memref<16x128xbf16, #tpu.memory_space<vmem>>, %arg7: memref<16x1xf32, #tpu.memory_space<vmem>>, %arg8: memref<16x1xf32, #tpu.memory_space<vmem>>, %arg9: memref<16x128xf32, #tpu.memory_space<vmem>>) attributes {dimension_semantics = [#tpu.dimension_semantics<parallel>, #tpu.dimension_semantics<parallel>, #tpu.dimension_semantics<arbitrary>], iteration_bounds = array<i64: 2, 1, 1>, scalar_prefetch = 0 : i64, scratch_operands = 3 : i64, tpu.core_type = #tpu.core_type<tc>, window_params = [{transform_indices = @transform_0, window_bounds = array<i64: 16, 128>}, {transform_indices = @transform_1, window_bounds = array<i64: 16, 128>}, {transform_indices = @transform_2, window_bounds = array<i64: 16, 128>}, {transform_indices = @transform_3, window_bounds = array<i64: 16, 128>}]} {
    %c0_i32 = arith.constant 0 : i32
    %0 = arith.cmpi eq, %arg2, %c0_i32 : i32
    %1 = arith.extui %0 : i1 to i32
    %c0_i32_0 = arith.constant 0 : i32
    %2 = arith.cmpi ne, %1, %c0_i32_0 : i32
    scf.if %2 {
      %cst_23 = arith.constant -1.000000e+30 : f32
      %34 = vector.broadcast %cst_23 : f32 to vector<16x1xf32>
      %c0_24 = arith.constant 0 : index
      %c0_25 = arith.constant 0 : index
      %35 = vector.load %arg7[%c0_24, %c0_25] : memref<16x1xf32, #tpu.memory_space<vmem>>, vector<16x1xf32>
      tpu.vector_store %arg7[%c0_24, %c0_25], %34 {strides = array<i32>} : memref<16x1xf32, #tpu.memory_space<vmem>>, vector<16x1xf32>,
      %cst_26 = arith.constant 0.000000e+00 : f32
      %36 = vector.broadcast %cst_26 : f32 to vector<16x1xf32>
      %c0_27 = arith.constant 0 : index
      %c0_28 = arith.constant 0 : index
      %37 = vector.load %arg8[%c0_27, %c0_28] : memref<16x1xf32, #tpu.memory_space<vmem>>, vector<16x1xf32>
      tpu.vector_store %arg8[%c0_27, %c0_28], %36 {strides = array<i32>} : memref<16x1xf32, #tpu.memory_space<vmem>>, vector<16x1xf32>,
      %cst_29 = arith.constant 0.000000e+00 : f32
      %38 = vector.broadcast %cst_29 : f32 to vector<16x128xf32>
      %c0_30 = arith.constant 0 : index
      %c0_31 = arith.constant 0 : index
      %39 = vector.load %arg9[%c0_30, %c0_31] : memref<16x128xf32, #tpu.memory_space<vmem>>, vector<16x128xf32>
      tpu.vector_store %arg9[%c0_30, %c0_31], %38 {strides = array<i32>} : memref<16x128xf32, #tpu.memory_space<vmem>>, vector<16x128xf32>,
    } else {
    }
    %c0 = arith.constant 0 : index
    %c0_1 = arith.constant 0 : index
    %3 = vector.load %arg3[%c0, %c0_1] : memref<16x128xbf16, #tpu.memory_space<vmem>>, vector<16x128xbf16>
    %c0_2 = arith.constant 0 : index
    %c0_3 = arith.constant 0 : index
    %4 = vector.load %arg4[%c0_2, %c0_3] : memref<16x128xbf16, #tpu.memory_space<vmem>>, vector<16x128xbf16>
    %cst = arith.constant dense<0.000000e+00> : vector<16x16xf32>
    %5 = tpu.matmul %3, %4, %cst {dimension_numbers = #tpu.dot_dimension_numbers<[1], [1], [0], [0], [0, 0, 1, 0], [], []>} : vector<16x128xbf16>, vector<16x128xbf16>, vector<16x16xf32> -> vector<16x16xf32>
    %c0_4 = arith.constant 0 : index
    %c0_5 = arith.constant 0 : index
    %6 = vector.load %arg7[%c0_4, %c0_5] : memref<16x1xf32, #tpu.memory_space<vmem>>, vector<16x1xf32>
    %cst_6 = arith.constant dense<0xFF800000> : vector<16xf32>
    %7 = vector.multi_reduction <maximumf>, %5, %cst_6 [1] : vector<16x16xf32> to vector<16xf32>
    %8 = vector.shape_cast %7 : vector<16xf32> to vector<16x1xf32>
    %9 = arith.maximumf %6, %8 : vector<16x1xf32>
    %10 = arith.subf %6, %9 : vector<16x1xf32>
    %11 = math.exp %10 : vector<16x1xf32>
    %12 = vector.broadcast %9 : vector<16x1xf32> to vector<16x16xf32>
    %13 = arith.subf %5, %12 : vector<16x16xf32>
    %14 = arith.truncf %13 : vector<16x16xf32> to vector<16x16xbf16>
    %15 = math.exp %14 : vector<16x16xbf16>
    %16 = arith.extf %15 : vector<16x16xbf16> to vector<16x16xf32>
    %cst_7 = arith.constant dense<0.000000e+00> : vector<16xf32>
    %17 = vector.multi_reduction <add>, %16, %cst_7 [1] : vector<16x16xf32> to vector<16xf32>
    %18 = vector.shape_cast %17 : vector<16xf32> to vector<16x1xf32>
    %c0_8 = arith.constant 0 : index
    %c0_9 = arith.constant 0 : index
    %19 = vector.load %arg5[%c0_8, %c0_9] : memref<16x128xbf16, #tpu.memory_space<vmem>>, vector<16x128xbf16>
    %cst_10 = arith.constant dense<0.000000e+00> : vector<16x128xf32>
    %20 = tpu.matmul %15, %19, %cst_10 {dimension_numbers = #tpu.dot_dimension_numbers<[1], [0], [0], [1], [0, 0, 1, 1], [], []>} : vector<16x16xbf16>, vector<16x128xbf16>, vector<16x128xf32> -> vector<16x128xf32>
    %c0_11 = arith.constant 0 : index
    %c0_12 = arith.constant 0 : index
    %21 = vector.load %arg8[%c0_11, %c0_12] : memref<16x1xf32, #tpu.memory_space<vmem>>, vector<16x1xf32>
    %22 = arith.mulf %11, %21 : vector<16x1xf32>
    %23 = arith.addf %22, %18 : vector<16x1xf32>
    %c0_13 = arith.constant 0 : index
    %c0_14 = arith.constant 0 : index
    %24 = vector.load %arg8[%c0_13, %c0_14] : memref<16x1xf32, #tpu.memory_space<vmem>>, vector<16x1xf32>
    tpu.vector_store %arg8[%c0_13, %c0_14], %23 {strides = array<i32>} : memref<16x1xf32, #tpu.memory_space<vmem>>, vector<16x1xf32>,
    %c0_15 = arith.constant 0 : index
    %c0_16 = arith.constant 0 : index
    %25 = vector.load %arg9[%c0_15, %c0_16] : memref<16x128xf32, #tpu.memory_space<vmem>>, vector<16x128xf32>
    %26 = vector.broadcast %11 : vector<16x1xf32> to vector<16x128xf32>
    %27 = arith.mulf %26, %25 : vector<16x128xf32>
    %28 = arith.addf %27, %20 : vector<16x128xf32>
    %c0_17 = arith.constant 0 : index
    %c0_18 = arith.constant 0 : index
    %29 = vector.load %arg9[%c0_17, %c0_18] : memref<16x128xf32, #tpu.memory_space<vmem>>, vector<16x128xf32>
    tpu.vector_store %arg9[%c0_17, %c0_18], %28 {strides = array<i32>} : memref<16x128xf32, #tpu.memory_space<vmem>>, vector<16x128xf32>,
    %c0_19 = arith.constant 0 : index
    %c0_20 = arith.constant 0 : index
    %30 = vector.load %arg7[%c0_19, %c0_20] : memref<16x1xf32, #tpu.memory_space<vmem>>, vector<16x1xf32>
    tpu.vector_store %arg7[%c0_19, %c0_20], %9 {strides = array<i32>} : memref<16x1xf32, #tpu.memory_space<vmem>>, vector<16x1xf32>,
    %c0_i32_21 = arith.constant 0 : i32
    %31 = arith.cmpi eq, %arg2, %c0_i32_21 : i32
    %32 = arith.extui %31 : i1 to i32
    %c0_i32_22 = arith.constant 0 : i32
    %33 = arith.cmpi ne, %32, %c0_i32_22 : i32
    scf.if %33 {
      %c0_23 = arith.constant 0 : index
      %c0_24 = arith.constant 0 : index
      %34 = vector.load %arg9[%c0_23, %c0_24] : memref<16x128xf32, #tpu.memory_space<vmem>>, vector<16x128xf32>
      %c0_25 = arith.constant 0 : index
      %c0_26 = arith.constant 0 : index
      %35 = vector.load %arg8[%c0_25, %c0_26] : memref<16x1xf32, #tpu.memory_space<vmem>>, vector<16x1xf32>
      %36 = tpu.reciprocal %35 {approx = true} : vector<16x1xf32> -> vector<16x1xf32>
      %37 = vector.broadcast %36 : vector<16x1xf32> to vector<16x128xf32>
      %38 = arith.mulf %34, %37 : vector<16x128xf32>
      %39 = arith.truncf %38 : vector<16x128xf32> to vector<16x128xbf16>
      %c0_27 = arith.constant 0 : index
      %c0_28 = arith.constant 0 : index
      %40 = vector.load %arg6[%c0_27, %c0_28] : memref<16x128xbf16, #tpu.memory_space<vmem>>, vector<16x128xbf16>
      tpu.vector_store %arg6[%c0_27, %c0_28], %39 {strides = array<i32>} : memref<16x128xbf16, #tpu.memory_space<vmem>>, vector<16x128xbf16>,
    } else {
    }
    return
  }
  func.func @transform_0(%arg0: i32, %arg1: i32, %arg2: i32) -> (i32, i32) {
    %c0_i32 = arith.constant 0 : i32
    return %arg1, %arg0 : i32, i32
  }
  func.func @transform_1(%arg0: i32, %arg1: i32, %arg2: i32) -> (i32, i32) {
    %c0_i32 = arith.constant 0 : i32
    return %arg2, %arg0 : i32, i32
  }
  func.func @transform_2(%arg0: i32, %arg1: i32, %arg2: i32) -> (i32, i32) {
    %c4_i32 = arith.constant 4 : i32
    %0 = arith.addi %c4_i32, %arg0 : i32
    %c0_i32 = arith.constant 0 : i32
    return %arg2, %0 : i32, i32
  }
  func.func @transform_3(%arg0: i32, %arg1: i32, %arg2: i32) -> (i32, i32) {
    %c0_i32 = arith.constant 0 : i32
    return %arg1, %arg0 : i32, i32
  }
}

module attributes {stable_mosaic.version = 11 : i64} {
  func.func @_linear_kernel(%arg0: i32, %arg1: i32, %arg2: i32, %arg3: memref<8x256xbf16, #tpu.memory_space<vmem>>, %arg4: memref<1x256x256xbf16, #tpu.memory_space<vmem>>, %arg5: memref<1x1x256xbf16, #tpu.memory_space<vmem>>, %arg6: memref<8x256xbf16, #tpu.memory_space<vmem>>, %arg7: memref<1x1x256xf32, #tpu.memory_space<vmem>>, %arg8: memref<8x256xbf16, #tpu.memory_space<vmem>>, %arg9: memref<8x256xf32, #tpu.memory_space<vmem>>) attributes {dimension_semantics = [#tpu.dimension_semantics<parallel>, #tpu.dimension_semantics<parallel>, #tpu.dimension_semantics<arbitrary>], iteration_bounds = array<i64: 2, 1, 1>, scalar_prefetch = 0 : i64, scratch_operands = 1 : i64, tpu.core_type = #tpu.core_type<tc>, window_params = [{transform_indices = @transform_0, window_bounds = array<i64: 8, 256>}, {transform_indices = @transform_1, window_bounds = array<i64: 1, 256, 256>}, {transform_indices = @transform_2, window_bounds = array<i64: 1, 1, 256>}, {transform_indices = @transform_3, window_bounds = array<i64: 8, 256>}, {transform_indices = @transform_4, window_bounds = array<i64: 1, 1, 256>}, {transform_indices = @transform_5, window_bounds = array<i64: 8, 256>}]} {
    %c0_i32 = arith.constant 0 : i32
    %0 = arith.cmpi eq, %arg2, %c0_i32 : i32
    %1 = arith.extui %0 : i1 to i32
    %c0_i32_0 = arith.constant 0 : i32
    %2 = arith.cmpi ne, %1, %c0_i32_0 : i32
    scf.if %2 {
      %cst_11 = arith.constant 0.000000e+00 : f32
      %13 = vector.broadcast %cst_11 : f32 to vector<8x256xf32>
      %c0_12 = arith.constant 0 : index
      %c0_13 = arith.constant 0 : index
      %14 = vector.load %arg9[%c0_12, %c0_13] : memref<8x256xf32, #tpu.memory_space<vmem>>, vector<8x256xf32>
      tpu.vector_store %arg9[%c0_12, %c0_13], %13 {strides = array<i32>} : memref<8x256xf32, #tpu.memory_space<vmem>>, vector<8x256xf32>,
    } else {
    }
    %c0 = arith.constant 0 : index
    %c0_1 = arith.constant 0 : index
    %3 = vector.load %arg9[%c0, %c0_1] : memref<8x256xf32, #tpu.memory_space<vmem>>, vector<8x256xf32>
    %c0_2 = arith.constant 0 : index
    %c0_3 = arith.constant 0 : index
    %4 = vector.load %arg3[%c0_2, %c0_3] : memref<8x256xbf16, #tpu.memory_space<vmem>>, vector<8x256xbf16>
    %c0_4 = arith.constant 0 : index
    %c0_5 = arith.constant 0 : index
    %c0_6 = arith.constant 0 : index
    %5 = vector.load %arg4[%c0_4, %c0_5, %c0_6] : memref<1x256x256xbf16, #tpu.memory_space<vmem>>, vector<1x256x256xbf16>
    %6 = vector.shape_cast %5 : vector<1x256x256xbf16> to vector<256x256xbf16>
    %cst = arith.constant dense<0.000000e+00> : vector<8x256xf32>
    %7 = tpu.matmul %4, %6, %cst {dimension_numbers = #tpu.dot_dimension_numbers<[1], [0], [0], [1], [0, 0, 1, 1], [], []>} : vector<8x256xbf16>, vector<256x256xbf16>, vector<8x256xf32> -> vector<8x256xf32>
    %8 = arith.addf %3, %7 : vector<8x256xf32>
    %c0_7 = arith.constant 0 : index
    %c0_8 = arith.constant 0 : index
    %9 = vector.load %arg9[%c0_7, %c0_8] : memref<8x256xf32, #tpu.memory_space<vmem>>, vector<8x256xf32>
    tpu.vector_store %arg9[%c0_7, %c0_8], %8 {strides = array<i32>} : memref<8x256xf32, #tpu.memory_space<vmem>>, vector<8x256xf32>,
    %c0_i32_9 = arith.constant 0 : i32
    %10 = arith.cmpi eq, %arg2, %c0_i32_9 : i32
    %11 = arith.extui %10 : i1 to i32
    %c0_i32_10 = arith.constant 0 : i32
    %12 = arith.cmpi ne, %11, %c0_i32_10 : i32
    scf.if %12 {
      %c0_11 = arith.constant 0 : index
      %c0_12 = arith.constant 0 : index
      %13 = vector.load %arg9[%c0_11, %c0_12] : memref<8x256xf32, #tpu.memory_space<vmem>>, vector<8x256xf32>
      %c0_13 = arith.constant 0 : index
      %c0_14 = arith.constant 0 : index
      %c0_15 = arith.constant 0 : index
      %14 = vector.load %arg5[%c0_13, %c0_14, %c0_15] : memref<1x1x256xbf16, #tpu.memory_space<vmem>>, vector<1x1x256xbf16>
      %15 = vector.shape_cast %14 : vector<1x1x256xbf16> to vector<1x256xbf16>
      %16 = arith.extf %15 : vector<1x256xbf16> to vector<1x256xf32>
      %17 = vector.broadcast %16 : vector<1x256xf32> to vector<8x256xf32>
      %18 = arith.addf %13, %17 : vector<8x256xf32>
      %c0_16 = arith.constant 0 : index
      %c0_17 = arith.constant 0 : index
      %19 = vector.load %arg6[%c0_16, %c0_17] : memref<8x256xbf16, #tpu.memory_space<vmem>>, vector<8x256xbf16>
      %20 = arith.extf %19 : vector<8x256xbf16> to vector<8x256xf32>
      %c0_18 = arith.constant 0 : index
      %c0_19 = arith.constant 0 : index
      %c0_20 = arith.constant 0 : index
      %21 = vector.load %arg7[%c0_18, %c0_19, %c0_20] : memref<1x1x256xf32, #tpu.memory_space<vmem>>, vector<1x1x256xf32>
      %22 = vector.shape_cast %21 : vector<1x1x256xf32> to vector<1x256xf32>
      %23 = vector.broadcast %22 : vector<1x256xf32> to vector<8x256xf32>
      %24 = arith.mulf %23, %18 : vector<8x256xf32>
      %25 = arith.addf %20, %24 : vector<8x256xf32>
      %26 = arith.truncf %25 : vector<8x256xf32> to vector<8x256xbf16>
      %c0_21 = arith.constant 0 : index
      %c0_22 = arith.constant 0 : index
      %27 = vector.load %arg8[%c0_21, %c0_22] : memref<8x256xbf16, #tpu.memory_space<vmem>>, vector<8x256xbf16>
      tpu.vector_store %arg8[%c0_21, %c0_22], %26 {strides = array<i32>} : memref<8x256xbf16, #tpu.memory_space<vmem>>, vector<8x256xbf16>,
    } else {
    }
    return
  }
  func.func @transform_0(%arg0: i32, %arg1: i32, %arg2: i32) -> (i32, i32) {
    %c0_i32 = arith.constant 0 : i32
    return %arg0, %arg2 : i32, i32
  }
  func.func @transform_1(%arg0: i32, %arg1: i32, %arg2: i32) -> (i32, i32, i32) {
    %c1_i32 = arith.constant 1 : i32
    %0 = arith.cmpi slt, %arg0, %c1_i32 : i32
    %c0_i32 = arith.constant 0 : i32
    %c1_i32_0 = arith.constant 1 : i32
    %1 = arith.select %0, %c0_i32, %c1_i32_0 : i32
    %c0_i32_1 = arith.constant 0 : i32
    return %1, %arg2, %arg1 : i32, i32, i32
  }
  func.func @transform_2(%arg0: i32, %arg1: i32, %arg2: i32) -> (i32, i32, i32) {
    %c1_i32 = arith.constant 1 : i32
    %0 = arith.cmpi slt, %arg0, %c1_i32 : i32
    %c0_i32 = arith.constant 0 : i32
    %c1_i32_0 = arith.constant 1 : i32
    %1 = arith.select %0, %c0_i32, %c1_i32_0 : i32
    %c0_i32_1 = arith.constant 0 : i32
    %c0_i32_2 = arith.constant 0 : i32
    return %1, %c0_i32_1, %arg1 : i32, i32, i32
  }
  func.func @transform_3(%arg0: i32, %arg1: i32, %arg2: i32) -> (i32, i32) {
    %c0_i32 = arith.constant 0 : i32
    return %arg0, %arg1 : i32, i32
  }
  func.func @transform_4(%arg0: i32, %arg1: i32, %arg2: i32) -> (i32, i32, i32) {
    %c1_i32 = arith.constant 1 : i32
    %0 = arith.cmpi slt, %arg0, %c1_i32 : i32
    %c0_i32 = arith.constant 0 : i32
    %c1_i32_0 = arith.constant 1 : i32
    %1 = arith.select %0, %c0_i32, %c1_i32_0 : i32
    %c0_i32_1 = arith.constant 0 : i32
    %c0_i32_2 = arith.constant 0 : i32
    return %1, %c0_i32_1, %arg1 : i32, i32, i32
  }
  func.func @transform_5(%arg0: i32, %arg1: i32, %arg2: i32) -> (i32, i32) {
    %c0_i32 = arith.constant 0 : i32
    return %arg0, %arg1 : i32, i32
  }
}

module attributes {stable_mosaic.version = 11 : i64} {
  func.func @_linear_kernel(%arg0: i32, %arg1: i32, %arg2: i32, %arg3: memref<8x256xbf16, #tpu.memory_space<vmem>>, %arg4: memref<1x256x512xbf16, #tpu.memory_space<vmem>>, %arg5: memref<1x1x512xbf16, #tpu.memory_space<vmem>>, %arg6: memref<8x512xbf16, #tpu.memory_space<vmem>>, %arg7: memref<8x512xf32, #tpu.memory_space<vmem>>) attributes {dimension_semantics = [#tpu.dimension_semantics<parallel>, #tpu.dimension_semantics<parallel>, #tpu.dimension_semantics<arbitrary>], iteration_bounds = array<i64: 2, 2, 1>, scalar_prefetch = 0 : i64, scratch_operands = 1 : i64, tpu.core_type = #tpu.core_type<tc>, window_params = [{transform_indices = @transform_0, window_bounds = array<i64: 8, 256>}, {transform_indices = @transform_1, window_bounds = array<i64: 1, 256, 512>}, {transform_indices = @transform_2, window_bounds = array<i64: 1, 1, 512>}, {transform_indices = @transform_3, window_bounds = array<i64: 8, 512>}]} {
    %c0_i32 = arith.constant 0 : i32
    %0 = arith.cmpi eq, %arg2, %c0_i32 : i32
    %1 = arith.extui %0 : i1 to i32
    %c0_i32_0 = arith.constant 0 : i32
    %2 = arith.cmpi ne, %1, %c0_i32_0 : i32
    scf.if %2 {
      %cst_11 = arith.constant 0.000000e+00 : f32
      %13 = vector.broadcast %cst_11 : f32 to vector<8x512xf32>
      %c0_12 = arith.constant 0 : index
      %c0_13 = arith.constant 0 : index
      %14 = vector.load %arg7[%c0_12, %c0_13] : memref<8x512xf32, #tpu.memory_space<vmem>>, vector<8x512xf32>
      tpu.vector_store %arg7[%c0_12, %c0_13], %13 {strides = array<i32>} : memref<8x512xf32, #tpu.memory_space<vmem>>, vector<8x512xf32>,
    } else {
    }
    %c0 = arith.constant 0 : index
    %c0_1 = arith.constant 0 : index
    %3 = vector.load %arg7[%c0, %c0_1] : memref<8x512xf32, #tpu.memory_space<vmem>>, vector<8x512xf32>
    %c0_2 = arith.constant 0 : index
    %c0_3 = arith.constant 0 : index
    %4 = vector.load %arg3[%c0_2, %c0_3] : memref<8x256xbf16, #tpu.memory_space<vmem>>, vector<8x256xbf16>
    %c0_4 = arith.constant 0 : index
    %c0_5 = arith.constant 0 : index
    %c0_6 = arith.constant 0 : index
    %5 = vector.load %arg4[%c0_4, %c0_5, %c0_6] : memref<1x256x512xbf16, #tpu.memory_space<vmem>>, vector<1x256x512xbf16>
    %6 = vector.shape_cast %5 : vector<1x256x512xbf16> to vector<256x512xbf16>
    %cst = arith.constant dense<0.000000e+00> : vector<8x512xf32>
    %7 = tpu.matmul %4, %6, %cst {dimension_numbers = #tpu.dot_dimension_numbers<[1], [0], [0], [1], [0, 0, 1, 1], [], []>} : vector<8x256xbf16>, vector<256x512xbf16>, vector<8x512xf32> -> vector<8x512xf32>
    %8 = arith.addf %3, %7 : vector<8x512xf32>
    %c0_7 = arith.constant 0 : index
    %c0_8 = arith.constant 0 : index
    %9 = vector.load %arg7[%c0_7, %c0_8] : memref<8x512xf32, #tpu.memory_space<vmem>>, vector<8x512xf32>
    tpu.vector_store %arg7[%c0_7, %c0_8], %8 {strides = array<i32>} : memref<8x512xf32, #tpu.memory_space<vmem>>, vector<8x512xf32>,
    %c0_i32_9 = arith.constant 0 : i32
    %10 = arith.cmpi eq, %arg2, %c0_i32_9 : i32
    %11 = arith.extui %10 : i1 to i32
    %c0_i32_10 = arith.constant 0 : i32
    %12 = arith.cmpi ne, %11, %c0_i32_10 : i32
    scf.if %12 {
      %c0_11 = arith.constant 0 : index
      %c0_12 = arith.constant 0 : index
      %13 = vector.load %arg7[%c0_11, %c0_12] : memref<8x512xf32, #tpu.memory_space<vmem>>, vector<8x512xf32>
      %c0_13 = arith.constant 0 : index
      %c0_14 = arith.constant 0 : index
      %c0_15 = arith.constant 0 : index
      %14 = vector.load %arg5[%c0_13, %c0_14, %c0_15] : memref<1x1x512xbf16, #tpu.memory_space<vmem>>, vector<1x1x512xbf16>
      %15 = vector.shape_cast %14 : vector<1x1x512xbf16> to vector<1x512xbf16>
      %16 = arith.extf %15 : vector<1x512xbf16> to vector<1x512xf32>
      %17 = vector.broadcast %16 : vector<1x512xf32> to vector<8x512xf32>
      %18 = arith.addf %13, %17 : vector<8x512xf32>
      %cst_16 = arith.constant 5.000000e-01 : f32
      %19 = vector.broadcast %cst_16 : f32 to vector<8x512xf32>
      %20 = arith.mulf %19, %18 : vector<8x512xf32>
      %cst_17 = arith.constant 4.471500e-02 : f32
      %21 = vector.broadcast %cst_17 : f32 to vector<8x512xf32>
      %22 = arith.mulf %21, %18 : vector<8x512xf32>
      %23 = arith.mulf %22, %18 : vector<8x512xf32>
      %24 = arith.mulf %23, %18 : vector<8x512xf32>
      %25 = arith.addf %18, %24 : vector<8x512xf32>
      %cst_18 = arith.constant 0.797884583 : f32
      %26 = vector.broadcast %cst_18 : f32 to vector<8x512xf32>
      %27 = arith.mulf %26, %25 : vector<8x512xf32>
      %28 = math.tanh %27 : vector<8x512xf32>
      %cst_19 = arith.constant 1.000000e+00 : f32
      %29 = vector.broadcast %cst_19 : f32 to vector<8x512xf32>
      %30 = arith.addf %29, %28 : vector<8x512xf32>
      %31 = arith.mulf %20, %30 : vector<8x512xf32>
      %32 = arith.truncf %31 : vector<8x512xf32> to vector<8x512xbf16>
      %c0_20 = arith.constant 0 : index
      %c0_21 = arith.constant 0 : index
      %33 = vector.load %arg6[%c0_20, %c0_21] : memref<8x512xbf16, #tpu.memory_space<vmem>>, vector<8x512xbf16>
      tpu.vector_store %arg6[%c0_20, %c0_21], %32 {strides = array<i32>} : memref<8x512xbf16, #tpu.memory_space<vmem>>, vector<8x512xbf16>,
    } else {
    }
    return
  }
  func.func @transform_0(%arg0: i32, %arg1: i32, %arg2: i32) -> (i32, i32) {
    %c0_i32 = arith.constant 0 : i32
    return %arg0, %arg2 : i32, i32
  }
  func.func @transform_1(%arg0: i32, %arg1: i32, %arg2: i32) -> (i32, i32, i32) {
    %c1_i32 = arith.constant 1 : i32
    %0 = arith.cmpi slt, %arg0, %c1_i32 : i32
    %c0_i32 = arith.constant 0 : i32
    %c1_i32_0 = arith.constant 1 : i32
    %1 = arith.select %0, %c0_i32, %c1_i32_0 : i32
    %c0_i32_1 = arith.constant 0 : i32
    return %1, %arg2, %arg1 : i32, i32, i32
  }
  func.func @transform_2(%arg0: i32, %arg1: i32, %arg2: i32) -> (i32, i32, i32) {
    %c1_i32 = arith.constant 1 : i32
    %0 = arith.cmpi slt, %arg0, %c1_i32 : i32
    %c0_i32 = arith.constant 0 : i32
    %c1_i32_0 = arith.constant 1 : i32
    %1 = arith.select %0, %c0_i32, %c1_i32_0 : i32
    %c0_i32_1 = arith.constant 0 : i32
    %c0_i32_2 = arith.constant 0 : i32
    return %1, %c0_i32_1, %arg1 : i32, i32, i32
  }
  func.func @transform_3(%arg0: i32, %arg1: i32, %arg2: i32) -> (i32, i32) {
    %c0_i32 = arith.constant 0 : i32
    return %arg0, %arg1 : i32, i32
  }
}

module attributes {stable_mosaic.version = 11 : i64} {
  func.func @_linear_kernel(%arg0: i32, %arg1: i32, %arg2: i32, %arg3: memref<8x512xbf16, #tpu.memory_space<vmem>>, %arg4: memref<1x512x256xbf16, #tpu.memory_space<vmem>>, %arg5: memref<1x1x256xbf16, #tpu.memory_space<vmem>>, %arg6: memref<8x256xbf16, #tpu.memory_space<vmem>>, %arg7: memref<1x1x256xf32, #tpu.memory_space<vmem>>, %arg8: memref<8x256xbf16, #tpu.memory_space<vmem>>, %arg9: memref<8x256xf32, #tpu.memory_space<vmem>>) attributes {dimension_semantics = [#tpu.dimension_semantics<parallel>, #tpu.dimension_semantics<parallel>, #tpu.dimension_semantics<arbitrary>], iteration_bounds = array<i64: 2, 1, 2>, scalar_prefetch = 0 : i64, scratch_operands = 1 : i64, tpu.core_type = #tpu.core_type<tc>, window_params = [{transform_indices = @transform_0, window_bounds = array<i64: 8, 512>}, {transform_indices = @transform_1, window_bounds = array<i64: 1, 512, 256>}, {transform_indices = @transform_2, window_bounds = array<i64: 1, 1, 256>}, {transform_indices = @transform_3, window_bounds = array<i64: 8, 256>}, {transform_indices = @transform_4, window_bounds = array<i64: 1, 1, 256>}, {transform_indices = @transform_5, window_bounds = array<i64: 8, 256>}]} {
    %c0_i32 = arith.constant 0 : i32
    %0 = arith.cmpi eq, %arg2, %c0_i32 : i32
    %1 = arith.extui %0 : i1 to i32
    %c0_i32_0 = arith.constant 0 : i32
    %2 = arith.cmpi ne, %1, %c0_i32_0 : i32
    scf.if %2 {
      %cst_10 = arith.constant 0.000000e+00 : f32
      %13 = vector.broadcast %cst_10 : f32 to vector<8x256xf32>
      %c0_11 = arith.constant 0 : index
      %c0_12 = arith.constant 0 : index
      %14 = vector.load %arg9[%c0_11, %c0_12] : memref<8x256xf32, #tpu.memory_space<vmem>>, vector<8x256xf32>
      tpu.vector_store %arg9[%c0_11, %c0_12], %13 {strides = array<i32>} : memref<8x256xf32, #tpu.memory_space<vmem>>, vector<8x256xf32>,
    } else {
    }
    %c0 = arith.constant 0 : index
    %c0_1 = arith.constant 0 : index
    %3 = vector.load %arg9[%c0, %c0_1] : memref<8x256xf32, #tpu.memory_space<vmem>>, vector<8x256xf32>
    %c0_2 = arith.constant 0 : index
    %c0_3 = arith.constant 0 : index
    %4 = vector.load %arg3[%c0_2, %c0_3] : memref<8x512xbf16, #tpu.memory_space<vmem>>, vector<8x512xbf16>
    %c0_4 = arith.constant 0 : index
    %c0_5 = arith.constant 0 : index
    %c0_6 = arith.constant 0 : index
    %5 = vector.load %arg4[%c0_4, %c0_5, %c0_6] : memref<1x512x256xbf16, #tpu.memory_space<vmem>>, vector<1x512x256xbf16>
    %6 = vector.shape_cast %5 : vector<1x512x256xbf16> to vector<512x256xbf16>
    %cst = arith.constant dense<0.000000e+00> : vector<8x256xf32>
    %7 = tpu.matmul %4, %6, %cst {dimension_numbers = #tpu.dot_dimension_numbers<[1], [0], [0], [1], [0, 0, 1, 1], [], []>} : vector<8x512xbf16>, vector<512x256xbf16>, vector<8x256xf32> -> vector<8x256xf32>
    %8 = arith.addf %3, %7 : vector<8x256xf32>
    %c0_7 = arith.constant 0 : index
    %c0_8 = arith.constant 0 : index
    %9 = vector.load %arg9[%c0_7, %c0_8] : memref<8x256xf32, #tpu.memory_space<vmem>>, vector<8x256xf32>
    tpu.vector_store %arg9[%c0_7, %c0_8], %8 {strides = array<i32>} : memref<8x256xf32, #tpu.memory_space<vmem>>, vector<8x256xf32>,
    %c1_i32 = arith.constant 1 : i32
    %10 = arith.cmpi eq, %arg2, %c1_i32 : i32
    %11 = arith.extui %10 : i1 to i32
    %c0_i32_9 = arith.constant 0 : i32
    %12 = arith.cmpi ne, %11, %c0_i32_9 : i32
    scf.if %12 {
      %c0_10 = arith.constant 0 : index
      %c0_11 = arith.constant 0 : index
      %13 = vector.load %arg9[%c0_10, %c0_11] : memref<8x256xf32, #tpu.memory_space<vmem>>, vector<8x256xf32>
      %c0_12 = arith.constant 0 : index
      %c0_13 = arith.constant 0 : index
      %c0_14 = arith.constant 0 : index
      %14 = vector.load %arg5[%c0_12, %c0_13, %c0_14] : memref<1x1x256xbf16, #tpu.memory_space<vmem>>, vector<1x1x256xbf16>
      %15 = vector.shape_cast %14 : vector<1x1x256xbf16> to vector<1x256xbf16>
      %16 = arith.extf %15 : vector<1x256xbf16> to vector<1x256xf32>
      %17 = vector.broadcast %16 : vector<1x256xf32> to vector<8x256xf32>
      %18 = arith.addf %13, %17 : vector<8x256xf32>
      %c0_15 = arith.constant 0 : index
      %c0_16 = arith.constant 0 : index
      %19 = vector.load %arg6[%c0_15, %c0_16] : memref<8x256xbf16, #tpu.memory_space<vmem>>, vector<8x256xbf16>
      %20 = arith.extf %19 : vector<8x256xbf16> to vector<8x256xf32>
      %c0_17 = arith.constant 0 : index
      %c0_18 = arith.constant 0 : index
      %c0_19 = arith.constant 0 : index
      %21 = vector.load %arg7[%c0_17, %c0_18, %c0_19] : memref<1x1x256xf32, #tpu.memory_space<vmem>>, vector<1x1x256xf32>
      %22 = vector.shape_cast %21 : vector<1x1x256xf32> to vector<1x256xf32>
      %23 = vector.broadcast %22 : vector<1x256xf32> to vector<8x256xf32>
      %24 = arith.mulf %23, %18 : vector<8x256xf32>
      %25 = arith.addf %20, %24 : vector<8x256xf32>
      %26 = arith.truncf %25 : vector<8x256xf32> to vector<8x256xbf16>
      %c0_20 = arith.constant 0 : index
      %c0_21 = arith.constant 0 : index
      %27 = vector.load %arg8[%c0_20, %c0_21] : memref<8x256xbf16, #tpu.memory_space<vmem>>, vector<8x256xbf16>
      tpu.vector_store %arg8[%c0_20, %c0_21], %26 {strides = array<i32>} : memref<8x256xbf16, #tpu.memory_space<vmem>>, vector<8x256xbf16>,
    } else {
    }
    return
  }
  func.func @transform_0(%arg0: i32, %arg1: i32, %arg2: i32) -> (i32, i32) {
    %c0_i32 = arith.constant 0 : i32
    return %arg0, %arg2 : i32, i32
  }
  func.func @transform_1(%arg0: i32, %arg1: i32, %arg2: i32) -> (i32, i32, i32) {
    %c1_i32 = arith.constant 1 : i32
    %0 = arith.cmpi slt, %arg0, %c1_i32 : i32
    %c0_i32 = arith.constant 0 : i32
    %c1_i32_0 = arith.constant 1 : i32
    %1 = arith.select %0, %c0_i32, %c1_i32_0 : i32
    %c0_i32_1 = arith.constant 0 : i32
    return %1, %arg2, %arg1 : i32, i32, i32
  }
  func.func @transform_2(%arg0: i32, %arg1: i32, %arg2: i32) -> (i32, i32, i32) {
    %c1_i32 = arith.constant 1 : i32
    %0 = arith.cmpi slt, %arg0, %c1_i32 : i32
    %c0_i32 = arith.constant 0 : i32
    %c1_i32_0 = arith.constant 1 : i32
    %1 = arith.select %0, %c0_i32, %c1_i32_0 : i32
    %c0_i32_1 = arith.constant 0 : i32
    %c0_i32_2 = arith.constant 0 : i32
    return %1, %c0_i32_1, %arg1 : i32, i32, i32
  }
  func.func @transform_3(%arg0: i32, %arg1: i32, %arg2: i32) -> (i32, i32) {
    %c0_i32 = arith.constant 0 : i32
    return %arg0, %arg1 : i32, i32
  }
  func.func @transform_4(%arg0: i32, %arg1: i32, %arg2: i32) -> (i32, i32, i32) {
    %c1_i32 = arith.constant 1 : i32
    %0 = arith.cmpi slt, %arg0, %c1_i32 : i32
    %c0_i32 = arith.constant 0 : i32
    %c1_i32_0 = arith.constant 1 : i32
    %1 = arith.select %0, %c0_i32, %c1_i32_0 : i32
    %c0_i32_1 = arith.constant 0 : i32
    %c0_i32_2 = arith.constant 0 : i32
    return %1, %c0_i32_1, %arg1 : i32, i32, i32
  }
  func.func @transform_5(%arg0: i32, %arg1: i32, %arg2: i32) -> (i32, i32) {
    %c0_i32 = arith.constant 0 : i32
    return %arg0, %arg1 : i32, i32
  }
}

</mosaic_0001>

<llo_original>
// kernel: joint_transformer_block.10
$region0: #{joint_transformer_block.10}
  #allocation0 [shape = 'u32[]', space=smem, size = 0x4, offset = 0x4, fixed_abs, tag = 'smem constant byte address 0x4 - core index']
  #allocation1 [shape = 'u32[144,128]{1,0:T(1,128)}', space=vmem, size = 0x12000, scoped, tag = 'internal scratch']
  #allocation2 [shape = 'f32[1,512]{1,0:T(1,128)}', space=vmem, size = 0x800, scoped, tag = 'scratch operand']
  %s0 = inlined_call_operand.vmem [shape: bf16[1,256], index: 0, kind: input, shape index: {}]
  %s1 = inlined_call_operand.vmem [shape: bf16[256,1536], index: 1, kind: input, shape index: {}]
  %s2 = inlined_call_operand.vmem [shape: bf16[1,1536], index: 2, kind: input, shape index: {}]
  %s3 = inlined_call_operand.vmem [shape: f32[1,1536], index: 3, kind: output, shape index: {}]
  %s4 = sld [smem:[#allocation0]]
  $region76: #{joint_transformer_block.10} parent=0
    _
  %s6 = ssub.s32 1, %s4
  %s7 = scalar_select 0, %s6, %s4
  $region1: #{joint_transformer_block.10} parent=0
    #allocation3 [shape = 'u8[524288]{0}', space=vmem, size = 0x80000, scoped, tag = 'input window, operand 1']
    loop: start=0, step=1, limit=5
    $region2: #{joint_transformer_block.10} parent=1 // loop_pre_header
      _
    $region3: #{joint_transformer_block.10} parent=1 // loop_header
      %s9 = sphi 0, %s13
      %p10 = scmp.ge.s32.totalorder %s9, 5
      %s16 = sphi 0, %s35
      %s17 = sphi 0, %s31
      %s18 = sphi 0, %s27
      %s19 = sphi 0, %s16
      %s20 = sphi 0, %s17
      %s21 = sphi 0, %s18
      %s22 = sphi 0, %s19
      %s23 = sphi 0, %s20
      %s24 = sphi 0, %s21
      %s40 = sphi 0, %s42
      %s43 = sphi 0, %s40
      %s44 = sphi 0, %s43
      %s60 = sphi 0, %s44
      %s68 = sphi 0, %s70
      %s71 = sphi 0, %s68
      %s72 = sphi 0, %s71
      %s88 = sphi 0, %s72
      %s94 = sphi 0, %s96
      %s97 = sphi 0, %s94
      %s98 = sphi 0, %s97
      %s114 = sphi 0, %s98
      %s122 = sphi 0, %s124
      %s125 = sphi 0, %s122
      %s126 = sphi 0, %s125
      %s142 = sphi 0, %s126
    $region4: #{joint_transformer_block.10} parent=1 // loop_header_branch
      %12 = sbr.rel (%p10) target = $region8
    $region5: #{joint_transformer_block.10} parent=1 // loop_body
      %s14 = ssub.s32 %s9, 1
      %s15 = ssub.s32 %s9, 2
      %s25 = sadd.s32 1, %s18
      %p26 = scmp.ge.s32.totalorder %s25, 1
      %s27 = scalar_select %p26, 0, %s25
      %s28 = sadd.s32 1, %s17
      %s29 = scalar_select %p26, %s28, %s17
      %p30 = scmp.ge.s32.totalorder %s29, 3
      %s31 = scalar_select %p30, 0, %s29
      %s32 = sadd.s32 1, %s16
      %s33 = scalar_select %p30, %s32, %s16
      %p34 = scmp.ge.s32.totalorder %s33, 1
      %s35 = scalar_select %p34, 0, %s33
      %s36 = ssub.s32 %s16, %s35
      %s37 = ssub.s32 %s18, %s27
      %s38 = sor.u32 %s36, %s37
      %p39 = scmp.eq.s32.totalorder %s38, 0
      %s41 = sadd.s32 %s40, 1
      %s42 = scalar_select %p39, %s40, %s41
      %p45 = pneg %p39
      %p46 = scmp.eq.s32.totalorder %s9, 2
      %p47 = por %p45, %p46
      %p48 = scmp.ne.s32.totalorder %s40, %s43
      %p49 = scmp.eq.s32.totalorder %s9, 0
      %p50 = por %p48, %p49
      %p51 = scmp.ne.s32.totalorder %s40, %s43
      %p52 = scmp.eq.s32.totalorder %s14, 2
      %p53 = por %p51, %p52
      %p54 = scmp.ne.s32.totalorder %s43, %s44
      %p55 = scmp.eq.s32.totalorder %s14, 0
      %p56 = por %p54, %p55
      %p57 = scmp.ne.s32.totalorder %s43, %s44
      %p58 = scmp.eq.s32.totalorder %s15, 2
      %p59 = por %p57, %p58
      %p61 = scmp.ne.s32.totalorder %s44, %s60
      %p62 = scmp.eq.s32.totalorder %s15, 0
      %p63 = por %p61, %p62
      %s64 = ssub.s32 %s18, %s27
      %s65 = ssub.s32 %s17, %s31
      %s66 = sor.u32 %s64, %s65
      %p67 = scmp.eq.s32.totalorder %s66, 0
      %s69 = sadd.s32 %s68, 1
      %s70 = scalar_select %p67, %s68, %s69
      %p73 = pneg %p67
      %p74 = scmp.eq.s32.totalorder %s9, 2
      %p75 = por %p73, %p74
      %p76 = scmp.ne.s32.totalorder %s68, %s71
      %p77 = scmp.eq.s32.totalorder %s9, 0
      %p78 = por %p76, %p77
      %p79 = scmp.ne.s32.totalorder %s68, %s71
      %p80 = scmp.eq.s32.totalorder %s14, 2
      %p81 = por %p79, %p80
      %p82 = scmp.ne.s32.totalorder %s71, %s72
      %p83 = scmp.eq.s32.totalorder %s14, 0
      %p84 = por %p82, %p83
      %p85 = scmp.ne.s32.totalorder %s71, %s72
      %p86 = scmp.eq.s32.totalorder %s15, 2
      %p87 = por %p85, %p86
      %p89 = scmp.ne.s32.totalorder %s72, %s88
      %p90 = scmp.eq.s32.totalorder %s15, 0
      %p91 = por %p89, %p90
      %s92 = ssub.s32 %s17, %s31
      %p93 = scmp.eq.s32.totalorder %s92, 0
      %s95 = sadd.s32 %s94, 1
      %s96 = scalar_select %p93, %s94, %s95
      %p99 = pneg %p93
      %p100 = scmp.eq.s32.totalorder %s9, 2
      %p101 = por %p99, %p100
      %p102 = scmp.ne.s32.totalorder %s94, %s97
      %p103 = scmp.eq.s32.totalorder %s9, 0
      %p104 = por %p102, %p103
      %p105 = scmp.ne.s32.totalorder %s94, %s97
      %p106 = scmp.eq.s32.totalorder %s14, 2
      %p107 = por %p105, %p106
      %p108 = scmp.ne.s32.totalorder %s97, %s98
      %p109 = scmp.eq.s32.totalorder %s14, 0
      %p110 = por %p108, %p109
      %p111 = scmp.ne.s32.totalorder %s97, %s98
      %p112 = scmp.eq.s32.totalorder %s15, 2
      %p113 = por %p111, %p112
      %p115 = scmp.ne.s32.totalorder %s98, %s114
      %p116 = scmp.eq.s32.totalorder %s15, 0
      %p117 = por %p115, %p116
      %s118 = ssub.s32 %s16, %s35
      %s119 = ssub.s32 %s17, %s31
      %s120 = sor.u32 %s118, %s119
      %p121 = scmp.eq.s32.totalorder %s120, 0
      %s123 = sadd.s32 %s122, 1
      %s124 = scalar_select %p121, %s122, %s123
      %p127 = pneg %p121
      %p128 = scmp.eq.s32.totalorder %s9, 2
      %p129 = por %p127, %p128
      %p130 = scmp.ne.s32.totalorder %s122, %s125
      %p131 = scmp.eq.s32.totalorder %s9, 0
      %p132 = por %p130, %p131
      %p133 = scmp.ne.s32.totalorder %s122, %s125
      %p134 = scmp.eq.s32.totalorder %s14, 2
      %p135 = por %p133, %p134
      %p136 = scmp.ne.s32.totalorder %s125, %s126
      %p137 = scmp.eq.s32.totalorder %s14, 0
      %p138 = por %p136, %p137
      %p139 = scmp.ne.s32.totalorder %s125, %s126
      %p140 = scmp.eq.s32.totalorder %s15, 2
      %p141 = por %p139, %p140
      %p143 = scmp.ne.s32.totalorder %s126, %s142
      %p144 = scmp.eq.s32.totalorder %s15, 0
      %p145 = por %p143, %p144
      %p146 = scmp.le.s32.totalorder 1, %s9
      %p147 = scmp.lt.s32.totalorder %s9, 4
      %p148 = pnand %p146, %p147
      %p149 = pneg %p148
      // Predicated region
      $region9: #{joint_transformer_block.10} parent=5 // pred_check
        _
      $region10: #{joint_transformer_block.10} parent=5 // pred_check_branch
        %151 = sbr.rel (%p148) target = $region12
      $region11: #{joint_transformer_block.10} parent=5 // pred_region
        %s152 = ssub.s32 %s9, 1
        // Predicated region
        $region13: #{joint_transformer_block.10} parent=11 // pred_check
          %p153 = pneg %p56
        $region14: #{joint_transformer_block.10} parent=11 // pred_check_branch
          %155 = sbr.rel (%p153) target = $region16
        $region15: #{joint_transformer_block.10} parent=11 // pred_region
          %s156 = smul.u32 2, %s21
          %p157 = scmp.lt.s32.totalorder %s19, 0
          %s158 = scalar_select %p157, %s19, 0
          %p159 = scmp.lt.s32.totalorder %s156, 1
          %s160 = scalar_select %p159, %s156, 1
          %s161 = smul.addr %s158, 2
          %s162 = sadd.s32 %s160, %s161
          %s163 = scalar_lea.vmem %s0, %s162
          %s164 = smul.u32 2, %s21
        $region16: #{joint_transformer_block.10} parent=11 // pred_fallthru
          _
      $region12: #{joint_transformer_block.10} parent=5 // pred_fallthru
        _
      %p165 = scmp.lt.s32.totalorder %s9, 3
      // Predicated region
      $region17: #{joint_transformer_block.10} parent=5 // pred_check
        %p166 = pneg %p165
      $region18: #{joint_transformer_block.10} parent=5 // pred_check_branch
        %168 = sbr.rel (%p166) target = $region20
      $region19: #{joint_transformer_block.10} parent=5 // pred_region
        // Predicated region
        $region21: #{joint_transformer_block.10} parent=19 // pred_check
          %p169 = pneg %p78
        $region22: #{joint_transformer_block.10} parent=19 // pred_check_branch
          %171 = sbr.rel (%p169) target = $region24
        $region23: #{joint_transformer_block.10} parent=19 // pred_region
          %s172 = sand.u32 %s68, 1
          %s173 = sand.u32 %s68, 1
          %s174 = smul.addr %s173, 512
          %s175 = scalar_lea.vmem [#allocation3], %s174
          %s176 = smul.u32 32, %s18
          %s177 = smul.u32 4, %s17
          %s178 = smul.addr %s176, 12
          %s179 = sadd.s32 %s177, %s178
          %s180 = smul.addr %s179, 4
          %s181 = scalar_lea.vmem %s1, %s180
          // Predicated region
          $region25: #{joint_transformer_block.10} parent=23 // pred_check
            _
          $region26: #{joint_transformer_block.10} parent=23 // pred_check_branch
            %183 = sbr.rel (0) target = $region28
          $region27: #{joint_transformer_block.10} parent=23 // pred_region
            // Predicated region
            $region29: #{joint_transformer_block.10} parent=27 // pred_check
              _
            $region30: #{joint_transformer_block.10} parent=27 // pred_check_branch
              %185 = sbr.rel (0) target = $region32
            $region31: #{joint_transformer_block.10} parent=27 // pred_region
              loop: start=0, step=1, limit=1
              $region33: #{joint_transformer_block.10} parent=31 // loop_pre_header
                _
              $region34: #{joint_transformer_block.10} parent=31 // loop_header
                %s187 = sphi 0, %s191
                %p188 = scmp.ge.s32.totalorder %s187, 1
                %s192 = sphi %s181, %s181
                %s193 = sphi %s175, %s175
              $region35: #{joint_transformer_block.10} parent=31 // loop_header_branch
                %190 = sbr.rel (%p188) target = $region39
              $region36: #{joint_transformer_block.10} parent=31 // loop_body
                %v194 = vld [vmem:[%s192] sm:$0xff]
                %195 = vst [vmem:[%s193] sm:$0xff] %v194
                %v196 = vld [vmem:[%s192 + $0x8] sm:$0xff]
                %197 = vst [vmem:[%s193 + $0x8] sm:$0xff] %v196
                %v198 = vld [vmem:[%s192 + $0x30] sm:$0xff]
                %199 = vst [vmem:[%s193 + $0x10] sm:$0xff] %v198
                %v200 = vld [vmem:[%s192 + $0x38] sm:$0xff]
                %201 = vst [vmem:[%s193 + $0x18] sm:$0xff] %v200
                %v202 = vld [vmem:[%s192 + $0x60] sm:$0xff]
                %203 = vst [vmem:[%s193 + $0x20] sm:$0xff] %v202
                %v204 = vld [vmem:[%s192 + $0x68] sm:$0xff]
                %205 = vst [vmem:[%s193 + $0x28] sm:$0xff] %v204
                %v206 = vld [vmem:[%s192 + $0x90] sm:$0xff]
                %207 = vst [vmem:[%s193 + $0x30] sm:$0xff] %v206
                %v208 = vld [vmem:[%s192 + $0x98] sm:$0xff]
                %209 = vst [vmem:[%s193 + $0x38] sm:$0xff] %v208
                %v210 = vld [vmem:[%s192 + $0xc0] sm:$0xff]
                %211 = vst [vmem:[%s193 + $0x40] sm:$0xff] %v210
                %v212 = vld [vmem:[%s192 + $0xc8] sm:$0xff]
                %213 = vst [vmem:[%s193 + $0x48] sm:$0xff] %v212
                %v214 = vld [vmem:[%s192 + $0xf0] sm:$0xff]
                %215 = vst [vmem:[%s193 + $0x50] sm:$0xff] %v214
                %v216 = vld [vmem:[%s192 + $0xf8] sm:$0xff]
                %217 = vst [vmem:[%s193 + $0x58] sm:$0xff] %v216
                %v218 = vld [vmem:[%s192 + $0x120] sm:$0xff]
                %219 = vst [vmem:[%s193 + $0x60] sm:$0xff] %v218
                %v220 = vld [vmem:[%s192 + $0x128] sm:$0xff]
                %221 = vst [vmem:[%s193 + $0x68] sm:$0xff] %v220
                %v222 = vld [vmem:[%s192 + $0x150] sm:$0xff]
                %223 = vst [vmem:[%s193 + $0x70] sm:$0xff] %v222
                %v224 = vld [vmem:[%s192 + $0x158] sm:$0xff]
                %225 = vst [vmem:[%s193 + $0x78] sm:$0xff] %v224
                %v226 = vld [vmem:[%s192 + $0x180] sm:$0xff]
                %227 = vst [vmem:[%s193 + $0x80] sm:$0xff] %v226
                %v228 = vld [vmem:[%s192 + $0x188] sm:$0xff]
                %229 = vst [vmem:[%s193 + $0x88] sm:$0xff] %v228
                %v230 = vld [vmem:[%s192 + $0x1b0] sm:$0xff]
                %231 = vst [vmem:[%s193 + $0x90] sm:$0xff] %v230
                %v232 = vld [vmem:[%s192 + $0x1b8] sm:$0xff]
                %233 = vst [vmem:[%s193 + $0x98] sm:$0xff] %v232
                %v234 = vld [vmem:[%s192 + $0x1e0] sm:$0xff]
                %235 = vst [vmem:[%s193 + $0xa0] sm:$0xff] %v234
                %v236 = vld [vmem:[%s192 + $0x1e8] sm:$0xff]
                %237 = vst [vmem:[%s193 + $0xa8] sm:$0xff] %v236
                %v238 = vld [vmem:[%s192 + $0x210] sm:$0xff]
                %239 = vst [vmem:[%s193 + $0xb0] sm:$0xff] %v238
                %v240 = vld [vmem:[%s192 + $0x218] sm:$0xff]
                %241 = vst [vmem:[%s193 + $0xb8] sm:$0xff] %v240
                %v242 = vld [vmem:[%s192 + $0x240] sm:$0xff]
                %243 = vst [vmem:[%s193 + $0xc0] sm:$0xff] %v242
                %v244 = vld [vmem:[%s192 + $0x248] sm:$0xff]
                %245 = vst [vmem:[%s193 + $0xc8] sm:$0xff] %v244
                %v246 = vld [vmem:[%s192 + $0x270] sm:$0xff]
                %247 = vst [vmem:[%s193 + $0xd0] sm:$0xff] %v246
                %v248 = vld [vmem:[%s192 + $0x278] sm:$0xff]
                %249 = vst [vmem:[%s193 + $0xd8] sm:$0xff] %v248
                %v250 = vld [vmem:[%s192 + $0x2a0] sm:$0xff]
                %251 = vst [vmem:[%s193 + $0xe0] sm:$0xff] %v250
                %v252 = vld [vmem:[%s192 + $0x2a8] sm:$0xff]
                %253 = vst [vmem:[%s193 + $0xe8] sm:$0xff] %v252
                %v254 = vld [vmem:[%s192 + $0x2d0] sm:$0xff]
                %255 = vst [vmem:[%s193 + $0xf0] sm:$0xff] %v254
                %v256 = vld [vmem:[%s192 + $0x2d8] sm:$0xff]
                %257 = vst [vmem:[%s193 + $0xf8] sm:$0xff] %v256
                %v258 = vld [vmem:[%s192 + $0x300] sm:$0xff]
                %259 = vst [vmem:[%s193 + $0x100] sm:$0xff] %v258
                %v260 = vld [vmem:[%s192 + $0x308] sm:$0xff]
                %261 = vst [vmem:[%s193 + $0x108] sm:$0xff] %v260
                %v262 = vld [vmem:[%s192 + $0x330] sm:$0xff]
                %263 = vst [vmem:[%s193 + $0x110] sm:$0xff] %v262
                %v264 = vld [vmem:[%s192 + $0x338] sm:$0xff]
                %265 = vst [vmem:[%s193 + $0x118] sm:$0xff] %v264
                %v266 = vld [vmem:[%s192 + $0x360] sm:$0xff]
                %267 = vst [vmem:[%s193 + $0x120] sm:$0xff] %v266
                %v268 = vld [vmem:[%s192 + $0x368] sm:$0xff]
                %269 = vst [vmem:[%s193 + $0x128] sm:$0xff] %v268
                %v270 = vld [vmem:[%s192 + $0x390] sm:$0xff]
                %271 = vst [vmem:[%s193 + $0x130] sm:$0xff] %v270
                %v272 = vld [vmem:[%s192 + $0x398] sm:$0xff]
                %273 = vst [vmem:[%s193 + $0x138] sm:$0xff] %v272
                %v274 = vld [vmem:[%s192 + $0x3c0] sm:$0xff]
                %275 = vst [vmem:[%s193 + $0x140] sm:$0xff] %v274
                %v276 = vld [vmem:[%s192 + $0x3c8] sm:$0xff]
                %277 = vst [vmem:[%s193 + $0x148] sm:$0xff] %v276
                %v278 = vld [vmem:[%s192 + $0x3f0] sm:$0xff]
                %279 = vst [vmem:[%s193 + $0x150] sm:$0xff] %v278
                %v280 = vld [vmem:[%s192 + $0x3f8] sm:$0xff]
                %281 = vst [vmem:[%s193 + $0x158] sm:$0xff] %v280
                %v282 = vld [vmem:[%s192 + $0x420] sm:$0xff]
                %283 = vst [vmem:[%s193 + $0x160] sm:$0xff] %v282
                %v284 = vld [vmem:[%s192 + $0x428] sm:$0xff]
                %285 = vst [vmem:[%s193 + $0x168] sm:$0xff] %v284
                %v286 = vld [vmem:[%s192 + $0x450] sm:$0xff]
                %287 = vst [vmem:[%s193 + $0x170] sm:$0xff] %v286
                %v288 = vld [vmem:[%s192 + $0x458] sm:$0xff]
                %289 = vst [vmem:[%s193 + $0x178] sm:$0xff] %v288
                %v290 = vld [vmem:[%s192 + $0x480] sm:$0xff]
                %291 = vst [vmem:[%s193 + $0x180] sm:$0xff] %v290
                %v292 = vld [vmem:[%s192 + $0x488] sm:$0xff]
                %293 = vst [vmem:[%s193 + $0x188] sm:$0xff] %v292
                %v294 = vld [vmem:[%s192 + $0x4b0] sm:$0xff]
                %295 = vst [vmem:[%s193 + $0x190] sm:$0xff] %v294
                %v296 = vld [vmem:[%s192 + $0x4b8] sm:$0xff]
                %297 = vst [vmem:[%s193 + $0x198] sm:$0xff] %v296
                %v298 = vld [vmem:[%s192 + $0x4e0] sm:$0xff]
                %299 = vst [vmem:[%s193 + $0x1a0] sm:$0xff] %v298
                %v300 = vld [vmem:[%s192 + $0x4e8] sm:$0xff]
                %301 = vst [vmem:[%s193 + $0x1a8] sm:$0xff] %v300
                %v302 = vld [vmem:[%s192 + $0x510] sm:$0xff]
                %303 = vst [vmem:[%s193 + $0x1b0] sm:$0xff] %v302
                %v304 = vld [vmem:[%s192 + $0x518] sm:$0xff]
                %305 = vst [vmem:[%s193 + $0x1b8] sm:$0xff] %v304
                %v306 = vld [vmem:[%s192 + $0x540] sm:$0xff]
                %307 = vst [vmem:[%s193 + $0x1c0] sm:$0xff] %v306
                %v308 = vld [vmem:[%s192 + $0x548] sm:$0xff]
                %309 = vst [vmem:[%s193 + $0x1c8] sm:$0xff] %v308
                %v310 = vld [vmem:[%s192 + $0x570] sm:$0xff]
                %311 = vst [vmem:[%s193 + $0x1d0] sm:$0xff] %v310
                %v312 = vld [vmem:[%s192 + $0x578] sm:$0xff]
                %313 = vst [vmem:[%s193 + $0x1d8] sm:$0xff] %v312
                %v314 = vld [vmem:[%s192 + $0x5a0] sm:$0xff]
                %315 = vst [vmem:[%s193 + $0x1e0] sm:$0xff] %v314
                %v316 = vld [vmem:[%s192 + $0x5a8] sm:$0xff]
                %317 = vst [vmem:[%s193 + $0x1e8] sm:$0xff] %v316
                %v318 = vld [vmem:[%s192 + $0x5d0] sm:$0xff]
                %319 = vst [vmem:[%s193 + $0x1f0] sm:$0xff] %v318
                %v320 = vld [vmem:[%s192 + $0x5d8] sm:$0xff]
                %321 = vst [vmem:[%s193 + $0x1f8] sm:$0xff] %v320
              $region37: #{joint_transformer_block.10} parent=31 // loop_footer
                %s191 = sadd.s32 1, %s187
              $region38: #{joint_transformer_block.10} parent=31 // loop_footer_branch
                %186 = sbr.rel target = $region34
              $region39: #{joint_transformer_block.10} parent=31 // loop_exit
                _
            $region32: #{joint_transformer_block.10} parent=27 // pred_fallthru
              _
            // Predicated region
            $region40: #{joint_transformer_block.10} parent=27 // pred_check
              _
            $region41: #{joint_transformer_block.10} parent=27 // pred_check_branch
              %323 = sbr.rel target = $region43
            $region42: #{joint_transformer_block.10} parent=27 // pred_region
              _
            $region43: #{joint_transformer_block.10} parent=27 // pred_fallthru
              _
          $region28: #{joint_transformer_block.10} parent=23 // pred_fallthru
            _
          %324 = vnop
        $region24: #{joint_transformer_block.10} parent=19 // pred_fallthru
          _
        // Predicated region
        $region44: #{joint_transformer_block.10} parent=19 // pred_check
          %p325 = pneg %p104
        $region45: #{joint_transformer_block.10} parent=19 // pred_check_branch
          %327 = sbr.rel (%p325) target = $region47
        $region46: #{joint_transformer_block.10} parent=19 // pred_region
          %s328 = smul.u32 4, %s17
          %p329 = scmp.lt.s32.totalorder %s328, 11
          %s330 = scalar_select %p329, %s328, 11
          %s331 = scalar_lea.vmem %s2, %s330
          %s332 = smul.u32 4, %s17
        $region47: #{joint_transformer_block.10} parent=19 // pred_fallthru
          _
      $region20: #{joint_transformer_block.10} parent=5 // pred_fallthru
        _
      %p333 = scmp.le.s32.totalorder 1, %s9
      %p334 = scmp.lt.s32.totalorder %s9, 4
      %p335 = pnand %p333, %p334
      %p336 = pneg %p335
      // Predicated region
      $region48: #{joint_transformer_block.10} parent=5 // pred_check
        _
      $region49: #{joint_transformer_block.10} parent=5 // pred_check_branch
        %338 = sbr.rel (%p335) target = $region51
      $region50: #{joint_transformer_block.10} parent=5 // pred_region
        %s339 = ssub.s32 %s9, 1
        %s340 = sand.u32 %s71, 1
        %s341 = sand.u32 %s71, 1
        %s342 = smul.addr %s341, 512
        %s343 = scalar_lea.vmem [#allocation3], %s342
        // Predicated region
        $region52: #{joint_transformer_block.10} parent=50 // pred_check
          %p344 = pneg %p84
        $region53: #{joint_transformer_block.10} parent=50 // pred_check_branch
          %346 = sbr.rel (%p344) target = $region55
        $region54: #{joint_transformer_block.10} parent=50 // pred_region
          _
        $region55: #{joint_transformer_block.10} parent=50 // pred_fallthru
          _
        %s347 = smul.u32 2, %s21
        %p348 = scmp.lt.s32.totalorder %s19, 0
        %s349 = scalar_select %p348, %s19, 0
        %p350 = scmp.lt.s32.totalorder %s347, 1
        %s351 = scalar_select %p350, %s347, 1
        %s352 = smul.addr %s349, 2
        %s353 = sadd.s32 %s351, %s352
        %s354 = scalar_lea.vmem %s0, %s353
        %p355 = pneg %p56
        %p356 = pneg %p53
        %s357 = sand.u32 %s71, 1
        %s358 = sand.u32 %s71, 1
        %s359 = smul.addr %s358, 512
        %s360 = scalar_lea.vmem [#allocation3], %s359
        %p361 = pneg %p84
        %p362 = pneg %p81
        %s363 = smul.u32 4, %s20
        %p364 = scmp.lt.s32.totalorder %s363, 11
        %s365 = scalar_select %p364, %s363, 11
        %s366 = scalar_lea.vmem %s2, %s365
        %p367 = pneg %p110
        %p368 = pneg %p107
        %p369 = pneg %p138
        %p370 = pneg %p135
        %s371 = smul.u32 4, %s20
        %p372 = scmp.lt.s32.totalorder %s19, 0
        %s373 = scalar_select %p372, %s19, 0
        %p374 = scmp.lt.s32.totalorder %s371, 11
        %s375 = scalar_select %p374, %s371, 11
        %s376 = smul.addr %s373, 12
        %s377 = sadd.s32 %s375, %s376
        %s378 = scalar_lea.vmem %s3, %s377
        %s379 = smul.u32 2, %s21
        %p380 = scmp.lt.s32.totalorder %s19, 0
        %s381 = scalar_select %p380, %s19, 0
        %p382 = scmp.lt.s32.totalorder %s379, 1
        %s383 = scalar_select %p382, %s379, 1
        %s384 = smul.addr %s381, 2
        %s385 = sadd.s32 %s383, %s384
        %s386 = scalar_lea.vmem %s0, %s385
        %s387 = smul.u32 2, %s21
        %s388 = smul.u32 32, %s21
        %s389 = smul.u32 4, %s20
        %s390 = smul.u32 4, %s20
        %p391 = scmp.lt.s32.totalorder %s390, 11
        %s392 = scalar_select %p391, %s390, 11
        %s393 = scalar_lea.vmem %s2, %s392
        %s394 = smul.u32 4, %s20
        %s395 = smul.u32 4, %s20
        %p396 = scmp.lt.s32.totalorder %s19, 0
        %s397 = scalar_select %p396, %s19, 0
        %p398 = scmp.lt.s32.totalorder %s395, 11
        %s399 = scalar_select %p398, %s395, 11
        %s400 = smul.addr %s397, 12
        %s401 = sadd.s32 %s399, %s400
        %s402 = scalar_lea.vmem %s3, %s401
        %s403 = smul.u32 4, %s20
        %p404 = scmp.eq.s32.totalorder %s21, 0
        // Predicated region
        $region56: #{joint_transformer_block.10} parent=50 // pred_check
          %p405 = pneg %p404
        $region57: #{joint_transformer_block.10} parent=50 // pred_check_branch
          %407 = sbr.rel (%p405) target = $region59
        $region58: #{joint_transformer_block.10} parent=50 // pred_region
          %v408 = vlaneseq
          %vm409 = vcmp.ge.s32.totalorder %v408, 0
          %vm410 = vcmp.lt.s32.totalorder %v408, 512
          %vm411 = vmand %vm409, %vm410
          %412 = vst.msk [vmem:[#allocation2] sm:$0xf] %vm411, 0.0
        $region59: #{joint_transformer_block.10} parent=50 // pred_fallthru
          _
        %v413 = vld [vmem:[#allocation2] sm:$0xf]
        %v414 = vld [vmem:[%s386] sm:$0x3]
        %v415 = vld [vmem:[%s343] sm:$0xff]
        %v416 = vld [vmem:[%s343 + $0x8] sm:$0xff]
        %v417 = vld [vmem:[%s343 + $0x10] sm:$0xff]
        %v418 = vld [vmem:[%s343 + $0x18] sm:$0xff]
        %v419 = vld [vmem:[%s343 + $0x20] sm:$0xff]
        %v420 = vld [vmem:[%s343 + $0x28] sm:$0xff]
        %v421 = vld [vmem:[%s343 + $0x30] sm:$0xff]
        %v422 = vld [vmem:[%s343 + $0x38] sm:$0xff]
        %v423 = vld [vmem:[%s343 + $0x40] sm:$0xff]
        %v424 = vld [vmem:[%s343 + $0x48] sm:$0xff]
        %v425 = vld [vmem:[%s343 + $0x50] sm:$0xff]
        %v426 = vld [vmem:[%s343 + $0x58] sm:$0xff]
        %v427 = vld [vmem:[%s343 + $0x60] sm:$0xff]
        %v428 = vld [vmem:[%s343 + $0x68] sm:$0xff]
        %v429 = vld [vmem:[%s343 + $0x70] sm:$0xff]
        %v430 = vld [vmem:[%s343 + $0x78] sm:$0xff]
        %v431 = vld [vmem:[%s343 + $0x80] sm:$0xff]
        %v432 = vld [vmem:[%s343 + $0x88] sm:$0xff]
        %v433 = vld [vmem:[%s343 + $0x90] sm:$0xff]
        %v434 = vld [vmem:[%s343 + $0x98] sm:$0xff]
        %v435 = vld [vmem:[%s343 + $0xa0] sm:$0xff]
        %v436 = vld [vmem:[%s343 + $0xa8] sm:$0xff]
        %v437 = vld [vmem:[%s343 + $0xb0] sm:$0xff]
        %v438 = vld [vmem:[%s343 + $0xb8] sm:$0xff]
        %v439 = vld [vmem:[%s343 + $0xc0] sm:$0xff]
        %v440 = vld [vmem:[%s343 + $0xc8] sm:$0xff]
        %v441 = vld [vmem:[%s343 + $0xd0] sm:$0xff]
        %v442 = vld [vmem:[%s343 + $0xd8] sm:$0xff]
        %v443 = vld [vmem:[%s343 + $0xe0] sm:$0xff]
        %v444 = vld [vmem:[%s343 + $0xe8] sm:$0xff]
        %v445 = vld [vmem:[%s343 + $0xf0] sm:$0xff]
        %v446 = vld [vmem:[%s343 + $0xf8] sm:$0xff]
        %v447 = vld [vmem:[%s343 + $0x100] sm:$0xff]
        %v448 = vld [vmem:[%s343 + $0x108] sm:$0xff]
        %v449 = vld [vmem:[%s343 + $0x110] sm:$0xff]
        %v450 = vld [vmem:[%s343 + $0x118] sm:$0xff]
        %v451 = vld [vmem:[%s343 + $0x120] sm:$0xff]
        %v452 = vld [vmem:[%s343 + $0x128] sm:$0xff]
        %v453 = vld [vmem:[%s343 + $0x130] sm:$0xff]
        %v454 = vld [vmem:[%s343 + $0x138] sm:$0xff]
        %v455 = vld [vmem:[%s343 + $0x140] sm:$0xff]
        %v456 = vld [vmem:[%s343 + $0x148] sm:$0xff]
        %v457 = vld [vmem:[%s343 + $0x150] sm:$0xff]
        %v458 = vld [vmem:[%s343 + $0x158] sm:$0xff]
        %v459 = vld [vmem:[%s343 + $0x160] sm:$0xff]
        %v460 = vld [vmem:[%s343 + $0x168] sm:$0xff]
        %v461 = vld [vmem:[%s343 + $0x170] sm:$0xff]
        %v462 = vld [vmem:[%s343 + $0x178] sm:$0xff]
        %v463 = vld [vmem:[%s343 + $0x180] sm:$0xff]
        %v464 = vld [vmem:[%s343 + $0x188] sm:$0xff]
        %v465 = vld [vmem:[%s343 + $0x190] sm:$0xff]
        %v466 = vld [vmem:[%s343 + $0x198] sm:$0xff]
        %v467 = vld [vmem:[%s343 + $0x1a0] sm:$0xff]
        %v468 = vld [vmem:[%s343 + $0x1a8] sm:$0xff]
        %v469 = vld [vmem:[%s343 + $0x1b0] sm:$0xff]
        %v470 = vld [vmem:[%s343 + $0x1b8] sm:$0xff]
        %v471 = vld [vmem:[%s343 + $0x1c0] sm:$0xff]
        %v472 = vld [vmem:[%s343 + $0x1c8] sm:$0xff]
        %v473 = vld [vmem:[%s343 + $0x1d0] sm:$0xff]
        %v474 = vld [vmem:[%s343 + $0x1d8] sm:$0xff]
        %v475 = vld [vmem:[%s343 + $0x1e0] sm:$0xff]
        %v476 = vld [vmem:[%s343 + $0x1e8] sm:$0xff]
        %v477 = vld [vmem:[%s343 + $0x1f0] sm:$0xff]
        %v478 = vld [vmem:[%s343 + $0x1f8] sm:$0xff]
        %v481 = vunpack.c.l.s4 1966171168
        %v482 = vunpack.c.0.s8 %v481
        %v483 = vlaneseq
        %v484 = vshrl.u32 %v483, 7
        %v485 = vsub.s32 %v482, %v484
        %v486 = vrot.slane %v414, %v485
        %v487 = vcombine.high %v486, %v486
        %v489 = vunpack.c.l.s4 1966171168
        %v490 = vunpack.c.0.s8 %v489
        %v491 = vlaneseq
        %v492 = vshrl.u32 %v491, 7
        %v493 = vsub.s32 %v490, %v492
        %v494 = vrot.slane %v486, %v493
        %v496 = vunpack.c.l.s4 1966171168
        %v497 = vunpack.c.0.s8 %v496
        %v498 = vlaneseq
        %v499 = vshrl.u32 %v498, 7
        %v500 = vsub.s32 %v497, %v499
        %v501 = vrot.slane %v487, %v500
        %v568 = vunpack.c.l.b16 %v415
        %v569 = vunpack.c.h.b16 %v415
        %v570 = vunpack.c.l.b16 %v416
        %v571 = vunpack.c.h.b16 %v416
        %v572 = vunpack.c.l.b16 %v417
        %v573 = vunpack.c.h.b16 %v417
        %v574 = vunpack.c.l.b16 %v418
        %v575 = vunpack.c.h.b16 %v418
        %v576 = vunpack.c.l.b16 %v419
        %v577 = vunpack.c.h.b16 %v419
        %v578 = vunpack.c.l.b16 %v420
        %v579 = vunpack.c.h.b16 %v420
        %v580 = vunpack.c.l.b16 %v421
        %v581 = vunpack.c.h.b16 %v421
        %v582 = vunpack.c.l.b16 %v422
        %v583 = vunpack.c.h.b16 %v422
        %v584 = vunpack.c.l.b16 %v423
        %v585 = vunpack.c.h.b16 %v423
        %v586 = vunpack.c.l.b16 %v424
        %v587 = vunpack.c.h.b16 %v424
        %v588 = vunpack.c.l.b16 %v425
        %v589 = vunpack.c.h.b16 %v425
        %v590 = vunpack.c.l.b16 %v426
        %v591 = vunpack.c.h.b16 %v426
        %v592 = vunpack.c.l.b16 %v427
        %v593 = vunpack.c.h.b16 %v427
        %v594 = vunpack.c.l.b16 %v428
        %v595 = vunpack.c.h.b16 %v428
        %v596 = vunpack.c.l.b16 %v429
        %v597 = vunpack.c.h.b16 %v429
        %v598 = vunpack.c.l.b16 %v430
        %v599 = vunpack.c.h.b16 %v430
        %v600 = vunpack.c.l.b16 %v431
        %v601 = vunpack.c.h.b16 %v431
        %v602 = vunpack.c.l.b16 %v432
        %v603 = vunpack.c.h.b16 %v432
        %v604 = vunpack.c.l.b16 %v433
        %v605 = vunpack.c.h.b16 %v433
        %v606 = vunpack.c.l.b16 %v434
        %v607 = vunpack.c.h.b16 %v434
        %v608 = vunpack.c.l.b16 %v435
        %v609 = vunpack.c.h.b16 %v435
        %v610 = vunpack.c.l.b16 %v436
        %v611 = vunpack.c.h.b16 %v436
        %v612 = vunpack.c.l.b16 %v437
        %v613 = vunpack.c.h.b16 %v437
        %v614 = vunpack.c.l.b16 %v438
        %v615 = vunpack.c.h.b16 %v438
        %v616 = vunpack.c.l.b16 %v439
        %v617 = vunpack.c.h.b16 %v439
        %v618 = vunpack.c.l.b16 %v440
        %v619 = vunpack.c.h.b16 %v440
        %v620 = vunpack.c.l.b16 %v441
        %v621 = vunpack.c.h.b16 %v441
        %v622 = vunpack.c.l.b16 %v442
        %v623 = vunpack.c.h.b16 %v442
        %v624 = vunpack.c.l.b16 %v443
        %v625 = vunpack.c.h.b16 %v443
        %v626 = vunpack.c.l.b16 %v444
        %v627 = vunpack.c.h.b16 %v444
        %v628 = vunpack.c.l.b16 %v445
        %v629 = vunpack.c.h.b16 %v445
        %v630 = vunpack.c.l.b16 %v446
        %v631 = vunpack.c.h.b16 %v446
        %v632 = vunpack.c.l.b16 %v447
        %v633 = vunpack.c.h.b16 %v447
        %v634 = vunpack.c.l.b16 %v448
        %v635 = vunpack.c.h.b16 %v448
        %v636 = vunpack.c.l.b16 %v449
        %v637 = vunpack.c.h.b16 %v449
        %v638 = vunpack.c.l.b16 %v450
        %v639 = vunpack.c.h.b16 %v450
        %v640 = vunpack.c.l.b16 %v451
        %v641 = vunpack.c.h.b16 %v451
        %v642 = vunpack.c.l.b16 %v452
        %v643 = vunpack.c.h.b16 %v452
        %v644 = vunpack.c.l.b16 %v453
        %v645 = vunpack.c.h.b16 %v453
        %v646 = vunpack.c.l.b16 %v454
        %v647 = vunpack.c.h.b16 %v454
        %v648 = vunpack.c.l.b16 %v455
        %v649 = vunpack.c.h.b16 %v455
        %v650 = vunpack.c.l.b16 %v456
        %v651 = vunpack.c.h.b16 %v456
        %v652 = vunpack.c.l.b16 %v457
        %v653 = vunpack.c.h.b16 %v457
        %v654 = vunpack.c.l.b16 %v458
        %v655 = vunpack.c.h.b16 %v458
        %v656 = vunpack.c.l.b16 %v459
        %v657 = vunpack.c.h.b16 %v459
        %v658 = vunpack.c.l.b16 %v460
        %v659 = vunpack.c.h.b16 %v460
        %v660 = vunpack.c.l.b16 %v461
        %v661 = vunpack.c.h.b16 %v461
        %v662 = vunpack.c.l.b16 %v462
        %v663 = vunpack.c.h.b16 %v462
        %v664 = vunpack.c.l.b16 %v463
        %v665 = vunpack.c.h.b16 %v463
        %v666 = vunpack.c.l.b16 %v464
        %v667 = vunpack.c.h.b16 %v464
        %v668 = vunpack.c.l.b16 %v465
        %v669 = vunpack.c.h.b16 %v465
        %v670 = vunpack.c.l.b16 %v466
        %v671 = vunpack.c.h.b16 %v466
        %v672 = vunpack.c.l.b16 %v467
        %v673 = vunpack.c.h.b16 %v467
        %v674 = vunpack.c.l.b16 %v468
        %v675 = vunpack.c.h.b16 %v468
        %v676 = vunpack.c.l.b16 %v469
        %v677 = vunpack.c.h.b16 %v469
        %v678 = vunpack.c.l.b16 %v470
        %v679 = vunpack.c.h.b16 %v470
        %v680 = vunpack.c.l.b16 %v471
        %v681 = vunpack.c.h.b16 %v471
        %v682 = vunpack.c.l.b16 %v472
        %v683 = vunpack.c.h.b16 %v472
        %v684 = vunpack.c.l.b16 %v473
        %v685 = vunpack.c.h.b16 %v473
        %v686 = vunpack.c.l.b16 %v474
        %v687 = vunpack.c.h.b16 %v474
        %v688 = vunpack.c.l.b16 %v475
        %v689 = vunpack.c.h.b16 %v475
        %v690 = vunpack.c.l.b16 %v476
        %v691 = vunpack.c.h.b16 %v476
        %v692 = vunpack.c.l.b16 %v477
        %v693 = vunpack.c.h.b16 %v477
        %v694 = vunpack.c.l.b16 %v478
        %v695 = vunpack.c.h.b16 %v478
        %v696 = vpack.c.b16 %v572, %v568
        %v697 = vpack.c.b16 %v573, %v569
        %v698 = vpack.c.b16 %v574, %v570
        %v699 = vpack.c.b16 %v575, %v571
        %v700 = vpack.c.b16 %v580, %v576
        %v701 = vpack.c.b16 %v581, %v577
        %v702 = vpack.c.b16 %v582, %v578
        %v703 = vpack.c.b16 %v583, %v579
        %v704 = vpack.c.b16 %v588, %v584
        %v705 = vpack.c.b16 %v589, %v585
        %v706 = vpack.c.b16 %v590, %v586
        %v707 = vpack.c.b16 %v591, %v587
        %v708 = vpack.c.b16 %v596, %v592
        %v709 = vpack.c.b16 %v597, %v593
        %v710 = vpack.c.b16 %v598, %v594
        %v711 = vpack.c.b16 %v599, %v595
        %v712 = vpack.c.b16 %v604, %v600
        %v713 = vpack.c.b16 %v605, %v601
        %v714 = vpack.c.b16 %v606, %v602
        %v715 = vpack.c.b16 %v607, %v603
        %v716 = vpack.c.b16 %v612, %v608
        %v717 = vpack.c.b16 %v613, %v609
        %v718 = vpack.c.b16 %v614, %v610
        %v719 = vpack.c.b16 %v615, %v611
        %v720 = vpack.c.b16 %v620, %v616
        %v721 = vpack.c.b16 %v621, %v617
        %v722 = vpack.c.b16 %v622, %v618
        %v723 = vpack.c.b16 %v623, %v619
        %v724 = vpack.c.b16 %v628, %v624
        %v725 = vpack.c.b16 %v629, %v625
        %v726 = vpack.c.b16 %v630, %v626
        %v727 = vpack.c.b16 %v631, %v627
        %v728 = vpack.c.b16 %v636, %v632
        %v729 = vpack.c.b16 %v637, %v633
        %v730 = vpack.c.b16 %v638, %v634
        %v731 = vpack.c.b16 %v639, %v635
        %v732 = vpack.c.b16 %v644, %v640
        %v733 = vpack.c.b16 %v645, %v641
        %v734 = vpack.c.b16 %v646, %v642
        %v735 = vpack.c.b16 %v647, %v643
        %v736 = vpack.c.b16 %v652, %v648
        %v737 = vpack.c.b16 %v653, %v649
        %v738 = vpack.c.b16 %v654, %v650
        %v739 = vpack.c.b16 %v655, %v651
        %v740 = vpack.c.b16 %v660, %v656
        %v741 = vpack.c.b16 %v661, %v657
        %v742 = vpack.c.b16 %v662, %v658
        %v743 = vpack.c.b16 %v663, %v659
        %v744 = vpack.c.b16 %v668, %v664
        %v745 = vpack.c.b16 %v669, %v665
        %v746 = vpack.c.b16 %v670, %v666
        %v747 = vpack.c.b16 %v671, %v667
        %v748 = vpack.c.b16 %v676, %v672
        %v749 = vpack.c.b16 %v677, %v673
        %v750 = vpack.c.b16 %v678, %v674
        %v751 = vpack.c.b16 %v679, %v675
        %v752 = vpack.c.b16 %v684, %v680
        %v753 = vpack.c.b16 %v685, %v681
        %v754 = vpack.c.b16 %v686, %v682
        %v755 = vpack.c.b16 %v687, %v683
        %v756 = vpack.c.b16 %v692, %v688
        %v757 = vpack.c.b16 %v693, %v689
        %v758 = vpack.c.b16 %v694, %v690
        %v759 = vpack.c.b16 %v695, %v691
        %824 = vmatprep.subr.bf16.mxu0 %v697
        %825 = vmatpush1.bf16.msra.mxu0 %v696
        %826 = vmatprep.subr.bf16.mxu0 %v701
        %827 = vmatpush1.bf16.msra.mxu0 %v700
        %828 = vmatprep.subr.bf16.mxu0 %v705
        %829 = vmatpush1.bf16.msra.mxu0 %v704
        %830 = vmatprep.subr.bf16.mxu0 %v709
        %831 = vmatpush1.bf16.msra.mxu0 %v708
        %832 = vmatprep.subr.bf16.mxu0 %v713
        %833 = vmatpush1.bf16.msra.mxu0 %v712
        %834 = vmatprep.subr.bf16.mxu0 %v717
        %835 = vmatpush1.bf16.msra.mxu0 %v716
        %836 = vmatprep.subr.bf16.mxu0 %v721
        %837 = vmatpush1.bf16.msra.mxu0 %v720
        %838 = vmatprep.subr.bf16.mxu0 %v725
        %839 = vmatpush1.bf16.msra.mxu0 %v724
        %840 = vmatprep.subr.bf16.mxu0 %v729
        %841 = vmatpush1.bf16.msra.mxu0 %v728
        %842 = vmatprep.subr.bf16.mxu0 %v733
        %843 = vmatpush1.bf16.msra.mxu0 %v732
        %844 = vmatprep.subr.bf16.mxu0 %v737
        %845 = vmatpush1.bf16.msra.mxu0 %v736
        %846 = vmatprep.subr.bf16.mxu0 %v741
        %847 = vmatpush1.bf16.msra.mxu0 %v740
        %848 = vmatprep.subr.bf16.mxu0 %v745
        %849 = vmatpush1.bf16.msra.mxu0 %v744
        %850 = vmatprep.subr.bf16.mxu0 %v749
        %851 = vmatpush1.bf16.msra.mxu0 %v748
        %852 = vmatprep.subr.bf16.mxu0 %v753
        %853 = vmatpush1.bf16.msra.mxu0 %v752
        %854 = vmatprep.subr.bf16.mxu0 %v757
        %855 = vmatpush1.bf16.msra.mxu0 %v756
        %856 = vmatprep.mubr.bf16.mxu0 %v501
        %857 = vmatmul.mubr.bf16.gmra.mrb[0].mxu0 %v494
        %v858 = vpop.f32.mrb[0].mxu0
        %v859 = vadd.f32 0.0, %v858
        %v860 = vpop.f32.mrb[0].mxu0
        %v861 = vadd.f32 0.0, %v860
        %v862 = vpop.f32.mrb[0].mxu0
        %v863 = vpop.f32.mrb[0].mxu0
        %864 = vdwg.mxu0
        %865 = vmatprep.subr.bf16.mxu0 %v699
        %866 = vmatpush1.bf16.msra.mxu0 %v698
        %867 = vmatprep.subr.bf16.mxu0 %v703
        %868 = vmatpush1.bf16.msra.mxu0 %v702
        %869 = vmatprep.subr.bf16.mxu0 %v707
        %870 = vmatpush1.bf16.msra.mxu0 %v706
        %871 = vmatprep.subr.bf16.mxu0 %v711
        %872 = vmatpush1.bf16.msra.mxu0 %v710
        %873 = vmatprep.subr.bf16.mxu0 %v715
        %874 = vmatpush1.bf16.msra.mxu0 %v714
        %875 = vmatprep.subr.bf16.mxu0 %v719
        %876 = vmatpush1.bf16.msra.mxu0 %v718
        %877 = vmatprep.subr.bf16.mxu0 %v723
        %878 = vmatpush1.bf16.msra.mxu0 %v722
        %879 = vmatprep.subr.bf16.mxu0 %v727
        %880 = vmatpush1.bf16.msra.mxu0 %v726
        %881 = vmatprep.subr.bf16.mxu0 %v731
        %882 = vmatpush1.bf16.msra.mxu0 %v730
        %883 = vmatprep.subr.bf16.mxu0 %v735
        %884 = vmatpush1.bf16.msra.mxu0 %v734
        %885 = vmatprep.subr.bf16.mxu0 %v739
        %886 = vmatpush1.bf16.msra.mxu0 %v738
        %887 = vmatprep.subr.bf16.mxu0 %v743
        %888 = vmatpush1.bf16.msra.mxu0 %v742
        %889 = vmatprep.subr.bf16.mxu0 %v747
        %890 = vmatpush1.bf16.msra.mxu0 %v746
        %891 = vmatprep.subr.bf16.mxu0 %v751
        %892 = vmatpush1.bf16.msra.mxu0 %v750
        %893 = vmatprep.subr.bf16.mxu0 %v755
        %894 = vmatpush1.bf16.msra.mxu0 %v754
        %895 = vmatprep.subr.bf16.mxu0 %v759
        %896 = vmatpush1.bf16.msra.mxu0 %v758
        %897 = vmatprep.mubr.bf16.mxu0 %v501
        %898 = vmatmul.mubr.bf16.gmra.mrb[0].mxu0 %v494
        %v899 = vpop.f32.mrb[0].mxu0
        %v900 = vadd.f32 0.0, %v899
        %v901 = vpop.f32.mrb[0].mxu0
        %v902 = vadd.f32 0.0, %v901
        %v903 = vpop.f32.mrb[0].mxu0
        %v904 = vpop.f32.mrb[0].mxu0
        %905 = vdwg.mxu0
        %v910 = vcombine.low %v859, %v861
        %v911 = vcombine.low %v900, %v902
        %v913 = vunpack.c.l.s4 1966171168
        %v914 = vunpack.c.0.s8 %v913
        %v915 = vlaneseq
        %v916 = vshrl.u32 %v915, 7
        %v917 = vsub.s32 %v914, %v916
        %v918 = vrot.slane %v910, %v917
        %v920 = vunpack.c.l.s4 1966171168
        %v921 = vunpack.c.0.s8 %v920
        %v922 = vlaneseq
        %v923 = vshrl.u32 %v922, 7
        %v924 = vsub.s32 %v921, %v923
        %v925 = vrot.slane %v911, %v924
        %v926 = vcombine.low %v918, %v925
        %v928 = vunpack.c.l.s4 1966171168
        %v929 = vunpack.c.0.s8 %v928
        %v930 = vlaneseq
        %v931 = vshrl.u32 %v930, 7
        %v932 = vsub.s32 %v929, %v931
        %v933 = vrot.slane %v926, %v932
        %v935 = vadd.f32 %v413, %v933
        %v936 = vlaneseq
        %vm937 = vcmp.ge.s32.totalorder %v936, 0
        %vm938 = vcmp.lt.s32.totalorder %v936, 512
        %vm939 = vmand %vm937, %vm938
        %940 = vst.msk [vmem:[#allocation2] sm:$0xf] %vm939, %v935
        // Predicated region
        $region60: #{joint_transformer_block.10} parent=50 // pred_check
          %p941 = pneg %p404
        $region61: #{joint_transformer_block.10} parent=50 // pred_check_branch
          %943 = sbr.rel (%p941) target = $region63
        $region62: #{joint_transformer_block.10} parent=50 // pred_region
          %v944 = vld [vmem:[#allocation2] sm:$0xf]
          %v945 = vld [vmem:[%s393] sm:$0xf]
          %v946 = vunpack.c.l.bf16 %v945
          %v949 = vunpack.c.l.s4 1966171168
          %v950 = vunpack.c.0.s8 %v949
          %v951 = vlaneseq
          %v952 = vshrl.u32 %v951, 7
          %v953 = vsub.s32 %v950, %v952
          %v954 = vrot.slane %v946, %v953
          %v956 = vadd.f32 %v944, %v954
          %957 = vst.msk [vmem:[%s402] sm:$0xf] %vm939, %v956
        $region63: #{joint_transformer_block.10} parent=50 // pred_fallthru
          _
        %s958 = smul.u32 4, %s20
        %p959 = scmp.lt.s32.totalorder %s19, 0
        %s960 = scalar_select %p959, %s19, 0
        %p961 = scmp.lt.s32.totalorder %s958, 11
        %s962 = scalar_select %p961, %s958, 11
        %s963 = smul.addr %s960, 12
        %s964 = sadd.s32 %s962, %s963
        %s965 = scalar_lea.vmem %s3, %s964
        // Predicated region
        $region64: #{joint_transformer_block.10} parent=50 // pred_check
          %p966 = pneg %p135
        $region65: #{joint_transformer_block.10} parent=50 // pred_check_branch
          %968 = sbr.rel (%p966) target = $region67
        $region66: #{joint_transformer_block.10} parent=50 // pred_region
          %s969 = smul.u32 4, %s20
        $region67: #{joint_transformer_block.10} parent=50 // pred_fallthru
          _
      $region51: #{joint_transformer_block.10} parent=5 // pred_fallthru
        _
      %p970 = scmp.le.s32.totalorder 2, %s9
      // Predicated region
      $region68: #{joint_transformer_block.10} parent=5 // pred_check
        %p971 = pneg %p970
      $region69: #{joint_transformer_block.10} parent=5 // pred_check_branch
        %973 = sbr.rel (%p971) target = $region71
      $region70: #{joint_transformer_block.10} parent=5 // pred_region
        %s974 = ssub.s32 %s9, 2
        // Predicated region
        $region72: #{joint_transformer_block.10} parent=70 // pred_check
          %p975 = pneg %p141
        $region73: #{joint_transformer_block.10} parent=70 // pred_check_branch
          %977 = sbr.rel (%p975) target = $region75
        $region74: #{joint_transformer_block.10} parent=70 // pred_region
          %s978 = smul.u32 4, %s23
          %p979 = scmp.lt.s32.totalorder %s22, 0
          %s980 = scalar_select %p979, %s22, 0
          %p981 = scmp.lt.s32.totalorder %s978, 11
          %s982 = scalar_select %p981, %s978, 11
          %s983 = smul.addr %s980, 12
          %s984 = sadd.s32 %s982, %s983
          %s985 = scalar_lea.vmem %s3, %s984
        $region75: #{joint_transformer_block.10} parent=70 // pred_fallthru
          _
      $region71: #{joint_transformer_block.10} parent=5 // pred_fallthru
        _
    $region6: #{joint_transformer_block.10} parent=1 // loop_footer
      %s13 = sadd.s32 1, %s9
    $region7: #{joint_transformer_block.10} parent=1 // loop_footer_branch
      %8 = sbr.rel target = $region3
    $region8: #{joint_transformer_block.10} parent=1 // loop_exit
      _

// kernel: joint_transformer_block.11
$region0: #{joint_transformer_block.11}
  #allocation0 [shape = 'u32[]', space=smem, size = 0x4, offset = 0x4, fixed_abs, tag = 'smem constant byte address 0x4 - core index']
  #allocation1 [shape = 'u32[144,128]{1,0:T(1,128)}', space=vmem, size = 0x12000, scoped, tag = 'internal scratch']
  #allocation2 [shape = 'f32[1,512]{1,0:T(1,128)}', space=vmem, size = 0x800, scoped, tag = 'scratch operand']
  %s0 = inlined_call_operand.vmem [shape: bf16[1,256], index: 0, kind: input, shape index: {}]
  %s1 = inlined_call_operand.hbm [shape: bf16[256,1536], index: 1, kind: input, shape index: {}]
  %s2 = inlined_call_operand.vmem [shape: bf16[1,1536], index: 2, kind: input, shape index: {}]
  %s3 = inlined_call_operand.vmem [shape: f32[1,1536], index: 3, kind: output, shape index: {}]
  %s4 = sld [smem:[#allocation0]]
  $region57: #{joint_transformer_block.11} parent=0
    _
  %s6 = ssub.s32 1, %s4
  %s7 = scalar_select 0, %s6, %s4
  $region1: #{joint_transformer_block.11} parent=0
    #allocation3 [shape = 'u8[524288]{0}', space=vmem, size = 0x80000, scoped, tag = 'input window, operand 1']
    #allocation4 [shape = 's32[2]{0}', space=sflag, size = 0x8, scoped, tag = 'scoped memory for joint_transformer_block.11']
    %8 = vsyncpa [#allocation4], 0
    %s9 = scalar_lea.sflag [#allocation4], 1
    %10 = vsyncpa %s9, 0
    loop: start=0, step=1, limit=5
    $region2: #{joint_transformer_block.11} parent=1 // loop_pre_header
      _
    $region3: #{joint_transformer_block.11} parent=1 // loop_header
      %s12 = sphi 0, %s16
      %p13 = scmp.ge.s32.totalorder %s12, 5
      %s19 = sphi 0, %s38
      %s20 = sphi 0, %s34
      %s21 = sphi 0, %s30
      %s22 = sphi 0, %s19
      %s23 = sphi 0, %s20
      %s24 = sphi 0, %s21
      %s25 = sphi 0, %s22
      %s26 = sphi 0, %s23
      %s27 = sphi 0, %s24
      %s43 = sphi 0, %s45
      %s46 = sphi 0, %s43
      %s47 = sphi 0, %s46
      %s63 = sphi 0, %s47
      %s71 = sphi 0, %s73
      %s74 = sphi 0, %s71
      %s75 = sphi 0, %s74
      %s91 = sphi 0, %s75
      %s97 = sphi 0, %s99
      %s100 = sphi 0, %s97
      %s101 = sphi 0, %s100
      %s117 = sphi 0, %s101
      %s125 = sphi 0, %s127
      %s128 = sphi 0, %s125
      %s129 = sphi 0, %s128
      %s145 = sphi 0, %s129
    $region4: #{joint_transformer_block.11} parent=1 // loop_header_branch
      %15 = sbr.rel (%p13) target = $region8
    $region5: #{joint_transformer_block.11} parent=1 // loop_body
      %s17 = ssub.s32 %s12, 1
      %s18 = ssub.s32 %s12, 2
      %s28 = sadd.s32 1, %s21
      %p29 = scmp.ge.s32.totalorder %s28, 1
      %s30 = scalar_select %p29, 0, %s28
      %s31 = sadd.s32 1, %s20
      %s32 = scalar_select %p29, %s31, %s20
      %p33 = scmp.ge.s32.totalorder %s32, 3
      %s34 = scalar_select %p33, 0, %s32
      %s35 = sadd.s32 1, %s19
      %s36 = scalar_select %p33, %s35, %s19
      %p37 = scmp.ge.s32.totalorder %s36, 1
      %s38 = scalar_select %p37, 0, %s36
      %s39 = ssub.s32 %s19, %s38
      %s40 = ssub.s32 %s21, %s30
      %s41 = sor.u32 %s39, %s40
      %p42 = scmp.eq.s32.totalorder %s41, 0
      %s44 = sadd.s32 %s43, 1
      %s45 = scalar_select %p42, %s43, %s44
      %p48 = pneg %p42
      %p49 = scmp.eq.s32.totalorder %s12, 2
      %p50 = por %p48, %p49
      %p51 = scmp.ne.s32.totalorder %s43, %s46
      %p52 = scmp.eq.s32.totalorder %s12, 0
      %p53 = por %p51, %p52
      %p54 = scmp.ne.s32.totalorder %s43, %s46
      %p55 = scmp.eq.s32.totalorder %s17, 2
      %p56 = por %p54, %p55
      %p57 = scmp.ne.s32.totalorder %s46, %s47
      %p58 = scmp.eq.s32.totalorder %s17, 0
      %p59 = por %p57, %p58
      %p60 = scmp.ne.s32.totalorder %s46, %s47
      %p61 = scmp.eq.s32.totalorder %s18, 2
      %p62 = por %p60, %p61
      %p64 = scmp.ne.s32.totalorder %s47, %s63
      %p65 = scmp.eq.s32.totalorder %s18, 0
      %p66 = por %p64, %p65
      %s67 = ssub.s32 %s21, %s30
      %s68 = ssub.s32 %s20, %s34
      %s69 = sor.u32 %s67, %s68
      %p70 = scmp.eq.s32.totalorder %s69, 0
      %s72 = sadd.s32 %s71, 1
      %s73 = scalar_select %p70, %s71, %s72
      %p76 = pneg %p70
      %p77 = scmp.eq.s32.totalorder %s12, 2
      %p78 = por %p76, %p77
      %p79 = scmp.ne.s32.totalorder %s71, %s74
      %p80 = scmp.eq.s32.totalorder %s12, 0
      %p81 = por %p79, %p80
      %p82 = scmp.ne.s32.totalorder %s71, %s74
      %p83 = scmp.eq.s32.totalorder %s17, 2
      %p84 = por %p82, %p83
      %p85 = scmp.ne.s32.totalorder %s74, %s75
      %p86 = scmp.eq.s32.totalorder %s17, 0
      %p87 = por %p85, %p86
      %p88 = scmp.ne.s32.totalorder %s74, %s75
      %p89 = scmp.eq.s32.totalorder %s18, 2
      %p90 = por %p88, %p89
      %p92 = scmp.ne.s32.totalorder %s75, %s91
      %p93 = scmp.eq.s32.totalorder %s18, 0
      %p94 = por %p92, %p93
      %s95 = ssub.s32 %s20, %s34
      %p96 = scmp.eq.s32.totalorder %s95, 0
      %s98 = sadd.s32 %s97, 1
      %s99 = scalar_select %p96, %s97, %s98
      %p102 = pneg %p96
      %p103 = scmp.eq.s32.totalorder %s12, 2
      %p104 = por %p102, %p103
      %p105 = scmp.ne.s32.totalorder %s97, %s100
      %p106 = scmp.eq.s32.totalorder %s12, 0
      %p107 = por %p105, %p106
      %p108 = scmp.ne.s32.totalorder %s97, %s100
      %p109 = scmp.eq.s32.totalorder %s17, 2
      %p110 = por %p108, %p109
      %p111 = scmp.ne.s32.totalorder %s100, %s101
      %p112 = scmp.eq.s32.totalorder %s17, 0
      %p113 = por %p111, %p112
      %p114 = scmp.ne.s32.totalorder %s100, %s101
      %p115 = scmp.eq.s32.totalorder %s18, 2
      %p116 = por %p114, %p115
      %p118 = scmp.ne.s32.totalorder %s101, %s117
      %p119 = scmp.eq.s32.totalorder %s18, 0
      %p120 = por %p118, %p119
      %s121 = ssub.s32 %s19, %s38
      %s122 = ssub.s32 %s20, %s34
      %s123 = sor.u32 %s121, %s122
      %p124 = scmp.eq.s32.totalorder %s123, 0
      %s126 = sadd.s32 %s125, 1
      %s127 = scalar_select %p124, %s125, %s126
      %p130 = pneg %p124
      %p131 = scmp.eq.s32.totalorder %s12, 2
      %p132 = por %p130, %p131
      %p133 = scmp.ne.s32.totalorder %s125, %s128
      %p134 = scmp.eq.s32.totalorder %s12, 0
      %p135 = por %p133, %p134
      %p136 = scmp.ne.s32.totalorder %s125, %s128
      %p137 = scmp.eq.s32.totalorder %s17, 2
      %p138 = por %p136, %p137
      %p139 = scmp.ne.s32.totalorder %s128, %s129
      %p140 = scmp.eq.s32.totalorder %s17, 0
      %p141 = por %p139, %p140
      %p142 = scmp.ne.s32.totalorder %s128, %s129
      %p143 = scmp.eq.s32.totalorder %s18, 2
      %p144 = por %p142, %p143
      %p146 = scmp.ne.s32.totalorder %s129, %s145
      %p147 = scmp.eq.s32.totalorder %s18, 0
      %p148 = por %p146, %p147
      %p149 = scmp.le.s32.totalorder 1, %s12
      %p150 = scmp.lt.s32.totalorder %s12, 4
      %p151 = pnand %p149, %p150
      %p152 = pneg %p151
      // Predicated region
      $region9: #{joint_transformer_block.11} parent=5 // pred_check
        _
      $region10: #{joint_transformer_block.11} parent=5 // pred_check_branch
        %154 = sbr.rel (%p151) target = $region12
      $region11: #{joint_transformer_block.11} parent=5 // pred_region
        %s155 = ssub.s32 %s12, 1
        // Predicated region
        $region13: #{joint_transformer_block.11} parent=11 // pred_check
          %p156 = pneg %p59
        $region14: #{joint_transformer_block.11} parent=11 // pred_check_branch
          %158 = sbr.rel (%p156) target = $region16
        $region15: #{joint_transformer_block.11} parent=11 // pred_region
          %s159 = smul.u32 2, %s24
          %p160 = scmp.lt.s32.totalorder %s22, 0
          %s161 = scalar_select %p160, %s22, 0
          %p162 = scmp.lt.s32.totalorder %s159, 1
          %s163 = scalar_select %p162, %s159, 1
          %s164 = smul.addr %s161, 2
          %s165 = sadd.s32 %s163, %s164
          %s166 = scalar_lea.vmem %s0, %s165
          %s167 = smul.u32 2, %s24
        $region16: #{joint_transformer_block.11} parent=11 // pred_fallthru
          _
      $region12: #{joint_transformer_block.11} parent=5 // pred_fallthru
        _
      %p168 = scmp.lt.s32.totalorder %s12, 3
      // Predicated region
      $region17: #{joint_transformer_block.11} parent=5 // pred_check
        %p169 = pneg %p168
      $region18: #{joint_transformer_block.11} parent=5 // pred_check_branch
        %171 = sbr.rel (%p169) target = $region20
      $region19: #{joint_transformer_block.11} parent=5 // pred_region
        // Predicated region
        $region21: #{joint_transformer_block.11} parent=19 // pred_check
          %p172 = pneg %p81
        $region22: #{joint_transformer_block.11} parent=19 // pred_check_branch
          %174 = sbr.rel (%p172) target = $region24
        $region23: #{joint_transformer_block.11} parent=19 // pred_region
          %s175 = sand.u32 %s71, 1
          %s176 = scalar_lea.sflag [#allocation4], %s175
          %s177 = sand.u32 %s71, 1
          %s178 = smul.addr %s177, 512
          %s179 = scalar_lea.vmem [#allocation3], %s178
          %s180 = smul.u32 32, %s21
          %s181 = smul.u32 4, %s20
          %s183 = ssub.s32 8192, 8192
          %184 = vsyncadd %s176, %s183
          %s185 = smul.addr %s180, 12
          %s186 = sadd.s32 %s181, %s185
          %s187 = smul.addr %s186, 64
          %s188 = scalar_lea.hbm %s1, %s187
          %s189 = sshll.u32 %s179, 4
          %s190 = int_to_ptr.vmem [resolvable:$true] %s189
          %195 = dma.hbm_to_vmem [thread:$0]  %s188, 8192, %s190, %s176, 768, 256, 16
        $region24: #{joint_transformer_block.11} parent=19 // pred_fallthru
          _
        // Predicated region
        $region25: #{joint_transformer_block.11} parent=19 // pred_check
          %p196 = pneg %p107
        $region26: #{joint_transformer_block.11} parent=19 // pred_check_branch
          %198 = sbr.rel (%p196) target = $region28
        $region27: #{joint_transformer_block.11} parent=19 // pred_region
          %s199 = smul.u32 4, %s20
          %p200 = scmp.lt.s32.totalorder %s199, 11
          %s201 = scalar_select %p200, %s199, 11
          %s202 = scalar_lea.vmem %s2, %s201
          %s203 = smul.u32 4, %s20
        $region28: #{joint_transformer_block.11} parent=19 // pred_fallthru
          _
      $region20: #{joint_transformer_block.11} parent=5 // pred_fallthru
        _
      %p204 = scmp.le.s32.totalorder 1, %s12
      %p205 = scmp.lt.s32.totalorder %s12, 4
      %p206 = pnand %p204, %p205
      %p207 = pneg %p206
      // Predicated region
      $region29: #{joint_transformer_block.11} parent=5 // pred_check
        _
      $region30: #{joint_transformer_block.11} parent=5 // pred_check_branch
        %209 = sbr.rel (%p206) target = $region32
      $region31: #{joint_transformer_block.11} parent=5 // pred_region
        %s210 = ssub.s32 %s12, 1
        %s211 = sand.u32 %s74, 1
        %s212 = scalar_lea.sflag [#allocation4], %s211
        %s213 = sand.u32 %s74, 1
        %s214 = smul.addr %s213, 512
        %s215 = scalar_lea.vmem [#allocation3], %s214
        // Predicated region
        $region33: #{joint_transformer_block.11} parent=31 // pred_check
          %p216 = pneg %p87
        $region34: #{joint_transformer_block.11} parent=31 // pred_check_branch
          %218 = sbr.rel (%p216) target = $region36
        $region35: #{joint_transformer_block.11} parent=31 // pred_region
          %219 = dma.done %s212, 8192
        $region36: #{joint_transformer_block.11} parent=31 // pred_fallthru
          _
        %s220 = smul.u32 2, %s24
        %p221 = scmp.lt.s32.totalorder %s22, 0
        %s222 = scalar_select %p221, %s22, 0
        %p223 = scmp.lt.s32.totalorder %s220, 1
        %s224 = scalar_select %p223, %s220, 1
        %s225 = smul.addr %s222, 2
        %s226 = sadd.s32 %s224, %s225
        %s227 = scalar_lea.vmem %s0, %s226
        %p228 = pneg %p59
        %p229 = pneg %p56
        %s230 = sand.u32 %s74, 1
        %s231 = scalar_lea.sflag [#allocation4], %s230
        %s232 = sand.u32 %s74, 1
        %s233 = smul.addr %s232, 512
        %s234 = scalar_lea.vmem [#allocation3], %s233
        %p235 = pneg %p87
        %p236 = pneg %p84
        %s237 = smul.u32 4, %s23
        %p238 = scmp.lt.s32.totalorder %s237, 11
        %s239 = scalar_select %p238, %s237, 11
        %s240 = scalar_lea.vmem %s2, %s239
        %p241 = pneg %p113
        %p242 = pneg %p110
        %p243 = pneg %p141
        %p244 = pneg %p138
        %s245 = smul.u32 4, %s23
        %p246 = scmp.lt.s32.totalorder %s22, 0
        %s247 = scalar_select %p246, %s22, 0
        %p248 = scmp.lt.s32.totalorder %s245, 11
        %s249 = scalar_select %p248, %s245, 11
        %s250 = smul.addr %s247, 12
        %s251 = sadd.s32 %s249, %s250
        %s252 = scalar_lea.vmem %s3, %s251
        %s253 = smul.u32 2, %s24
        %p254 = scmp.lt.s32.totalorder %s22, 0
        %s255 = scalar_select %p254, %s22, 0
        %p256 = scmp.lt.s32.totalorder %s253, 1
        %s257 = scalar_select %p256, %s253, 1
        %s258 = smul.addr %s255, 2
        %s259 = sadd.s32 %s257, %s258
        %s260 = scalar_lea.vmem %s0, %s259
        %s261 = smul.u32 2, %s24
        %s262 = smul.u32 32, %s24
        %s263 = smul.u32 4, %s23
        %s264 = smul.u32 4, %s23
        %p265 = scmp.lt.s32.totalorder %s264, 11
        %s266 = scalar_select %p265, %s264, 11
        %s267 = scalar_lea.vmem %s2, %s266
        %s268 = smul.u32 4, %s23
        %s269 = smul.u32 4, %s23
        %p270 = scmp.lt.s32.totalorder %s22, 0
        %s271 = scalar_select %p270, %s22, 0
        %p272 = scmp.lt.s32.totalorder %s269, 11
        %s273 = scalar_select %p272, %s269, 11
        %s274 = smul.addr %s271, 12
        %s275 = sadd.s32 %s273, %s274
        %s276 = scalar_lea.vmem %s3, %s275
        %s277 = smul.u32 4, %s23
        %p278 = scmp.eq.s32.totalorder %s24, 0
        // Predicated region
        $region37: #{joint_transformer_block.11} parent=31 // pred_check
          %p279 = pneg %p278
        $region38: #{joint_transformer_block.11} parent=31 // pred_check_branch
          %281 = sbr.rel (%p279) target = $region40
        $region39: #{joint_transformer_block.11} parent=31 // pred_region
          %v282 = vlaneseq
          %vm283 = vcmp.ge.s32.totalorder %v282, 0
          %vm284 = vcmp.lt.s32.totalorder %v282, 512
          %vm285 = vmand %vm283, %vm284
          %286 = vst.msk [vmem:[#allocation2] sm:$0xf] %vm285, 0.0
        $region40: #{joint_transformer_block.11} parent=31 // pred_fallthru
          _
        %v287 = vld [vmem:[#allocation2] sm:$0xf]
        %v288 = vld [vmem:[%s260] sm:$0x3]
        %v289 = vld [vmem:[%s215] sm:$0xff]
        %v290 = vld [vmem:[%s215 + $0x8] sm:$0xff]
        %v291 = vld [vmem:[%s215 + $0x10] sm:$0xff]
        %v292 = vld [vmem:[%s215 + $0x18] sm:$0xff]
        %v293 = vld [vmem:[%s215 + $0x20] sm:$0xff]
        %v294 = vld [vmem:[%s215 + $0x28] sm:$0xff]
        %v295 = vld [vmem:[%s215 + $0x30] sm:$0xff]
        %v296 = vld [vmem:[%s215 + $0x38] sm:$0xff]
        %v297 = vld [vmem:[%s215 + $0x40] sm:$0xff]
        %v298 = vld [vmem:[%s215 + $0x48] sm:$0xff]
        %v299 = vld [vmem:[%s215 + $0x50] sm:$0xff]
        %v300 = vld [vmem:[%s215 + $0x58] sm:$0xff]
        %v301 = vld [vmem:[%s215 + $0x60] sm:$0xff]
        %v302 = vld [vmem:[%s215 + $0x68] sm:$0xff]
        %v303 = vld [vmem:[%s215 + $0x70] sm:$0xff]
        %v304 = vld [vmem:[%s215 + $0x78] sm:$0xff]
        %v305 = vld [vmem:[%s215 + $0x80] sm:$0xff]
        %v306 = vld [vmem:[%s215 + $0x88] sm:$0xff]
        %v307 = vld [vmem:[%s215 + $0x90] sm:$0xff]
        %v308 = vld [vmem:[%s215 + $0x98] sm:$0xff]
        %v309 = vld [vmem:[%s215 + $0xa0] sm:$0xff]
        %v310 = vld [vmem:[%s215 + $0xa8] sm:$0xff]
        %v311 = vld [vmem:[%s215 + $0xb0] sm:$0xff]
        %v312 = vld [vmem:[%s215 + $0xb8] sm:$0xff]
        %v313 = vld [vmem:[%s215 + $0xc0] sm:$0xff]
        %v314 = vld [vmem:[%s215 + $0xc8] sm:$0xff]
        %v315 = vld [vmem:[%s215 + $0xd0] sm:$0xff]
        %v316 = vld [vmem:[%s215 + $0xd8] sm:$0xff]
        %v317 = vld [vmem:[%s215 + $0xe0] sm:$0xff]
        %v318 = vld [vmem:[%s215 + $0xe8] sm:$0xff]
        %v319 = vld [vmem:[%s215 + $0xf0] sm:$0xff]
        %v320 = vld [vmem:[%s215 + $0xf8] sm:$0xff]
        %v321 = vld [vmem:[%s215 + $0x100] sm:$0xff]
        %v322 = vld [vmem:[%s215 + $0x108] sm:$0xff]
        %v323 = vld [vmem:[%s215 + $0x110] sm:$0xff]
        %v324 = vld [vmem:[%s215 + $0x118] sm:$0xff]
        %v325 = vld [vmem:[%s215 + $0x120] sm:$0xff]
        %v326 = vld [vmem:[%s215 + $0x128] sm:$0xff]
        %v327 = vld [vmem:[%s215 + $0x130] sm:$0xff]
        %v328 = vld [vmem:[%s215 + $0x138] sm:$0xff]
        %v329 = vld [vmem:[%s215 + $0x140] sm:$0xff]
        %v330 = vld [vmem:[%s215 + $0x148] sm:$0xff]
        %v331 = vld [vmem:[%s215 + $0x150] sm:$0xff]
        %v332 = vld [vmem:[%s215 + $0x158] sm:$0xff]
        %v333 = vld [vmem:[%s215 + $0x160] sm:$0xff]
        %v334 = vld [vmem:[%s215 + $0x168] sm:$0xff]
        %v335 = vld [vmem:[%s215 + $0x170] sm:$0xff]
        %v336 = vld [vmem:[%s215 + $0x178] sm:$0xff]
        %v337 = vld [vmem:[%s215 + $0x180] sm:$0xff]
        %v338 = vld [vmem:[%s215 + $0x188] sm:$0xff]
        %v339 = vld [vmem:[%s215 + $0x190] sm:$0xff]
        %v340 = vld [vmem:[%s215 + $0x198] sm:$0xff]
        %v341 = vld [vmem:[%s215 + $0x1a0] sm:$0xff]
        %v342 = vld [vmem:[%s215 + $0x1a8] sm:$0xff]
        %v343 = vld [vmem:[%s215 + $0x1b0] sm:$0xff]
        %v344 = vld [vmem:[%s215 + $0x1b8] sm:$0xff]
        %v345 = vld [vmem:[%s215 + $0x1c0] sm:$0xff]
        %v346 = vld [vmem:[%s215 + $0x1c8] sm:$0xff]
        %v347 = vld [vmem:[%s215 + $0x1d0] sm:$0xff]
        %v348 = vld [vmem:[%s215 + $0x1d8] sm:$0xff]
        %v349 = vld [vmem:[%s215 + $0x1e0] sm:$0xff]
        %v350 = vld [vmem:[%s215 + $0x1e8] sm:$0xff]
        %v351 = vld [vmem:[%s215 + $0x1f0] sm:$0xff]
        %v352 = vld [vmem:[%s215 + $0x1f8] sm:$0xff]
        %v355 = vunpack.c.l.s4 1966171168
        %v356 = vunpack.c.0.s8 %v355
        %v357 = vlaneseq
        %v358 = vshrl.u32 %v357, 7
        %v359 = vsub.s32 %v356, %v358
        %v360 = vrot.slane %v288, %v359
        %v361 = vcombine.high %v360, %v360
        %v363 = vunpack.c.l.s4 1966171168
        %v364 = vunpack.c.0.s8 %v363
        %v365 = vlaneseq
        %v366 = vshrl.u32 %v365, 7
        %v367 = vsub.s32 %v364, %v366
        %v368 = vrot.slane %v360, %v367
        %v370 = vunpack.c.l.s4 1966171168
        %v371 = vunpack.c.0.s8 %v370
        %v372 = vlaneseq
        %v373 = vshrl.u32 %v372, 7
        %v374 = vsub.s32 %v371, %v373
        %v375 = vrot.slane %v361, %v374
        %v442 = vunpack.c.l.b16 %v289
        %v443 = vunpack.c.h.b16 %v289
        %v444 = vunpack.c.l.b16 %v290
        %v445 = vunpack.c.h.b16 %v290
        %v446 = vunpack.c.l.b16 %v291
        %v447 = vunpack.c.h.b16 %v291
        %v448 = vunpack.c.l.b16 %v292
        %v449 = vunpack.c.h.b16 %v292
        %v450 = vunpack.c.l.b16 %v293
        %v451 = vunpack.c.h.b16 %v293
        %v452 = vunpack.c.l.b16 %v294
        %v453 = vunpack.c.h.b16 %v294
        %v454 = vunpack.c.l.b16 %v295
        %v455 = vunpack.c.h.b16 %v295
        %v456 = vunpack.c.l.b16 %v296
        %v457 = vunpack.c.h.b16 %v296
        %v458 = vunpack.c.l.b16 %v297
        %v459 = vunpack.c.h.b16 %v297
        %v460 = vunpack.c.l.b16 %v298
        %v461 = vunpack.c.h.b16 %v298
        %v462 = vunpack.c.l.b16 %v299
        %v463 = vunpack.c.h.b16 %v299
        %v464 = vunpack.c.l.b16 %v300
        %v465 = vunpack.c.h.b16 %v300
        %v466 = vunpack.c.l.b16 %v301
        %v467 = vunpack.c.h.b16 %v301
        %v468 = vunpack.c.l.b16 %v302
        %v469 = vunpack.c.h.b16 %v302
        %v470 = vunpack.c.l.b16 %v303
        %v471 = vunpack.c.h.b16 %v303
        %v472 = vunpack.c.l.b16 %v304
        %v473 = vunpack.c.h.b16 %v304
        %v474 = vunpack.c.l.b16 %v305
        %v475 = vunpack.c.h.b16 %v305
        %v476 = vunpack.c.l.b16 %v306
        %v477 = vunpack.c.h.b16 %v306
        %v478 = vunpack.c.l.b16 %v307
        %v479 = vunpack.c.h.b16 %v307
        %v480 = vunpack.c.l.b16 %v308
        %v481 = vunpack.c.h.b16 %v308
        %v482 = vunpack.c.l.b16 %v309
        %v483 = vunpack.c.h.b16 %v309
        %v484 = vunpack.c.l.b16 %v310
        %v485 = vunpack.c.h.b16 %v310
        %v486 = vunpack.c.l.b16 %v311
        %v487 = vunpack.c.h.b16 %v311
        %v488 = vunpack.c.l.b16 %v312
        %v489 = vunpack.c.h.b16 %v312
        %v490 = vunpack.c.l.b16 %v313
        %v491 = vunpack.c.h.b16 %v313
        %v492 = vunpack.c.l.b16 %v314
        %v493 = vunpack.c.h.b16 %v314
        %v494 = vunpack.c.l.b16 %v315
        %v495 = vunpack.c.h.b16 %v315
        %v496 = vunpack.c.l.b16 %v316
        %v497 = vunpack.c.h.b16 %v316
        %v498 = vunpack.c.l.b16 %v317
        %v499 = vunpack.c.h.b16 %v317
        %v500 = vunpack.c.l.b16 %v318
        %v501 = vunpack.c.h.b16 %v318
        %v502 = vunpack.c.l.b16 %v319
        %v503 = vunpack.c.h.b16 %v319
        %v504 = vunpack.c.l.b16 %v320
        %v505 = vunpack.c.h.b16 %v320
        %v506 = vunpack.c.l.b16 %v321
        %v507 = vunpack.c.h.b16 %v321
        %v508 = vunpack.c.l.b16 %v322
        %v509 = vunpack.c.h.b16 %v322
        %v510 = vunpack.c.l.b16 %v323
        %v511 = vunpack.c.h.b16 %v323
        %v512 = vunpack.c.l.b16 %v324
        %v513 = vunpack.c.h.b16 %v324
        %v514 = vunpack.c.l.b16 %v325
        %v515 = vunpack.c.h.b16 %v325
        %v516 = vunpack.c.l.b16 %v326
        %v517 = vunpack.c.h.b16 %v326
        %v518 = vunpack.c.l.b16 %v327
        %v519 = vunpack.c.h.b16 %v327
        %v520 = vunpack.c.l.b16 %v328
        %v521 = vunpack.c.h.b16 %v328
        %v522 = vunpack.c.l.b16 %v329
        %v523 = vunpack.c.h.b16 %v329
        %v524 = vunpack.c.l.b16 %v330
        %v525 = vunpack.c.h.b16 %v330
        %v526 = vunpack.c.l.b16 %v331
        %v527 = vunpack.c.h.b16 %v331
        %v528 = vunpack.c.l.b16 %v332
        %v529 = vunpack.c.h.b16 %v332
        %v530 = vunpack.c.l.b16 %v333
        %v531 = vunpack.c.h.b16 %v333
        %v532 = vunpack.c.l.b16 %v334
        %v533 = vunpack.c.h.b16 %v334
        %v534 = vunpack.c.l.b16 %v335
        %v535 = vunpack.c.h.b16 %v335
        %v536 = vunpack.c.l.b16 %v336
        %v537 = vunpack.c.h.b16 %v336
        %v538 = vunpack.c.l.b16 %v337
        %v539 = vunpack.c.h.b16 %v337
        %v540 = vunpack.c.l.b16 %v338
        %v541 = vunpack.c.h.b16 %v338
        %v542 = vunpack.c.l.b16 %v339
        %v543 = vunpack.c.h.b16 %v339
        %v544 = vunpack.c.l.b16 %v340
        %v545 = vunpack.c.h.b16 %v340
        %v546 = vunpack.c.l.b16 %v341
        %v547 = vunpack.c.h.b16 %v341
        %v548 = vunpack.c.l.b16 %v342
        %v549 = vunpack.c.h.b16 %v342
        %v550 = vunpack.c.l.b16 %v343
        %v551 = vunpack.c.h.b16 %v343
        %v552 = vunpack.c.l.b16 %v344
        %v553 = vunpack.c.h.b16 %v344
        %v554 = vunpack.c.l.b16 %v345
        %v555 = vunpack.c.h.b16 %v345
        %v556 = vunpack.c.l.b16 %v346
        %v557 = vunpack.c.h.b16 %v346
        %v558 = vunpack.c.l.b16 %v347
        %v559 = vunpack.c.h.b16 %v347
        %v560 = vunpack.c.l.b16 %v348
        %v561 = vunpack.c.h.b16 %v348
        %v562 = vunpack.c.l.b16 %v349
        %v563 = vunpack.c.h.b16 %v349
        %v564 = vunpack.c.l.b16 %v350
        %v565 = vunpack.c.h.b16 %v350
        %v566 = vunpack.c.l.b16 %v351
        %v567 = vunpack.c.h.b16 %v351
        %v568 = vunpack.c.l.b16 %v352
        %v569 = vunpack.c.h.b16 %v352
        %v570 = vpack.c.b16 %v446, %v442
        %v571 = vpack.c.b16 %v447, %v443
        %v572 = vpack.c.b16 %v448, %v444
        %v573 = vpack.c.b16 %v449, %v445
        %v574 = vpack.c.b16 %v454, %v450
        %v575 = vpack.c.b16 %v455, %v451
        %v576 = vpack.c.b16 %v456, %v452
        %v577 = vpack.c.b16 %v457, %v453
        %v578 = vpack.c.b16 %v462, %v458
        %v579 = vpack.c.b16 %v463, %v459
        %v580 = vpack.c.b16 %v464, %v460
        %v581 = vpack.c.b16 %v465, %v461
        %v582 = vpack.c.b16 %v470, %v466
        %v583 = vpack.c.b16 %v471, %v467
        %v584 = vpack.c.b16 %v472, %v468
        %v585 = vpack.c.b16 %v473, %v469
        %v586 = vpack.c.b16 %v478, %v474
        %v587 = vpack.c.b16 %v479, %v475
        %v588 = vpack.c.b16 %v480, %v476
        %v589 = vpack.c.b16 %v481, %v477
        %v590 = vpack.c.b16 %v486, %v482
        %v591 = vpack.c.b16 %v487, %v483
        %v592 = vpack.c.b16 %v488, %v484
        %v593 = vpack.c.b16 %v489, %v485
        %v594 = vpack.c.b16 %v494, %v490
        %v595 = vpack.c.b16 %v495, %v491
        %v596 = vpack.c.b16 %v496, %v492
        %v597 = vpack.c.b16 %v497, %v493
        %v598 = vpack.c.b16 %v502, %v498
        %v599 = vpack.c.b16 %v503, %v499
        %v600 = vpack.c.b16 %v504, %v500
        %v601 = vpack.c.b16 %v505, %v501
        %v602 = vpack.c.b16 %v510, %v506
        %v603 = vpack.c.b16 %v511, %v507
        %v604 = vpack.c.b16 %v512, %v508
        %v605 = vpack.c.b16 %v513, %v509
        %v606 = vpack.c.b16 %v518, %v514
        %v607 = vpack.c.b16 %v519, %v515
        %v608 = vpack.c.b16 %v520, %v516
        %v609 = vpack.c.b16 %v521, %v517
        %v610 = vpack.c.b16 %v526, %v522
        %v611 = vpack.c.b16 %v527, %v523
        %v612 = vpack.c.b16 %v528, %v524
        %v613 = vpack.c.b16 %v529, %v525
        %v614 = vpack.c.b16 %v534, %v530
        %v615 = vpack.c.b16 %v535, %v531
        %v616 = vpack.c.b16 %v536, %v532
        %v617 = vpack.c.b16 %v537, %v533
        %v618 = vpack.c.b16 %v542, %v538
        %v619 = vpack.c.b16 %v543, %v539
        %v620 = vpack.c.b16 %v544, %v540
        %v621 = vpack.c.b16 %v545, %v541
        %v622 = vpack.c.b16 %v550, %v546
        %v623 = vpack.c.b16 %v551, %v547
        %v624 = vpack.c.b16 %v552, %v548
        %v625 = vpack.c.b16 %v553, %v549
        %v626 = vpack.c.b16 %v558, %v554
        %v627 = vpack.c.b16 %v559, %v555
        %v628 = vpack.c.b16 %v560, %v556
        %v629 = vpack.c.b16 %v561, %v557
        %v630 = vpack.c.b16 %v566, %v562
        %v631 = vpack.c.b16 %v567, %v563
        %v632 = vpack.c.b16 %v568, %v564
        %v633 = vpack.c.b16 %v569, %v565
        %698 = vmatprep.subr.bf16.mxu0 %v571
        %699 = vmatpush1.bf16.msra.mxu0 %v570
        %700 = vmatprep.subr.bf16.mxu0 %v575
        %701 = vmatpush1.bf16.msra.mxu0 %v574
        %702 = vmatprep.subr.bf16.mxu0 %v579
        %703 = vmatpush1.bf16.msra.mxu0 %v578
        %704 = vmatprep.subr.bf16.mxu0 %v583
        %705 = vmatpush1.bf16.msra.mxu0 %v582
        %706 = vmatprep.subr.bf16.mxu0 %v587
        %707 = vmatpush1.bf16.msra.mxu0 %v586
        %708 = vmatprep.subr.bf16.mxu0 %v591
        %709 = vmatpush1.bf16.msra.mxu0 %v590
        %710 = vmatprep.subr.bf16.mxu0 %v595
        %711 = vmatpush1.bf16.msra.mxu0 %v594
        %712 = vmatprep.subr.bf16.mxu0 %v599
        %713 = vmatpush1.bf16.msra.mxu0 %v598
        %714 = vmatprep.subr.bf16.mxu0 %v603
        %715 = vmatpush1.bf16.msra.mxu0 %v602
        %716 = vmatprep.subr.bf16.mxu0 %v607
        %717 = vmatpush1.bf16.msra.mxu0 %v606
        %718 = vmatprep.subr.bf16.mxu0 %v611
        %719 = vmatpush1.bf16.msra.mxu0 %v610
        %720 = vmatprep.subr.bf16.mxu0 %v615
        %721 = vmatpush1.bf16.msra.mxu0 %v614
        %722 = vmatprep.subr.bf16.mxu0 %v619
        %723 = vmatpush1.bf16.msra.mxu0 %v618
        %724 = vmatprep.subr.bf16.mxu0 %v623
        %725 = vmatpush1.bf16.msra.mxu0 %v622
        %726 = vmatprep.subr.bf16.mxu0 %v627
        %727 = vmatpush1.bf16.msra.mxu0 %v626
        %728 = vmatprep.subr.bf16.mxu0 %v631
        %729 = vmatpush1.bf16.msra.mxu0 %v630
        %730 = vmatprep.mubr.bf16.mxu0 %v375
        %731 = vmatmul.mubr.bf16.gmra.mrb[0].mxu0 %v368
        %v732 = vpop.f32.mrb[0].mxu0
        %v733 = vadd.f32 0.0, %v732
        %v734 = vpop.f32.mrb[0].mxu0
        %v735 = vadd.f32 0.0, %v734
        %v736 = vpop.f32.mrb[0].mxu0
        %v737 = vpop.f32.mrb[0].mxu0
        %738 = vdwg.mxu0
        %739 = vmatprep.subr.bf16.mxu0 %v573
        %740 = vmatpush1.bf16.msra.mxu0 %v572
        %741 = vmatprep.subr.bf16.mxu0 %v577
        %742 = vmatpush1.bf16.msra.mxu0 %v576
        %743 = vmatprep.subr.bf16.mxu0 %v581
        %744 = vmatpush1.bf16.msra.mxu0 %v580
        %745 = vmatprep.subr.bf16.mxu0 %v585
        %746 = vmatpush1.bf16.msra.mxu0 %v584
        %747 = vmatprep.subr.bf16.mxu0 %v589
        %748 = vmatpush1.bf16.msra.mxu0 %v588
        %749 = vmatprep.subr.bf16.mxu0 %v593
        %750 = vmatpush1.bf16.msra.mxu0 %v592
        %751 = vmatprep.subr.bf16.mxu0 %v597
        %752 = vmatpush1.bf16.msra.mxu0 %v596
        %753 = vmatprep.subr.bf16.mxu0 %v601
        %754 = vmatpush1.bf16.msra.mxu0 %v600
        %755 = vmatprep.subr.bf16.mxu0 %v605
        %756 = vmatpush1.bf16.msra.mxu0 %v604
        %757 = vmatprep.subr.bf16.mxu0 %v609
        %758 = vmatpush1.bf16.msra.mxu0 %v608
        %759 = vmatprep.subr.bf16.mxu0 %v613
        %760 = vmatpush1.bf16.msra.mxu0 %v612
        %761 = vmatprep.subr.bf16.mxu0 %v617
        %762 = vmatpush1.bf16.msra.mxu0 %v616
        %763 = vmatprep.subr.bf16.mxu0 %v621
        %764 = vmatpush1.bf16.msra.mxu0 %v620
        %765 = vmatprep.subr.bf16.mxu0 %v625
        %766 = vmatpush1.bf16.msra.mxu0 %v624
        %767 = vmatprep.subr.bf16.mxu0 %v629
        %768 = vmatpush1.bf16.msra.mxu0 %v628
        %769 = vmatprep.subr.bf16.mxu0 %v633
        %770 = vmatpush1.bf16.msra.mxu0 %v632
        %771 = vmatprep.mubr.bf16.mxu0 %v375
        %772 = vmatmul.mubr.bf16.gmra.mrb[0].mxu0 %v368
        %v773 = vpop.f32.mrb[0].mxu0
        %v774 = vadd.f32 0.0, %v773
        %v775 = vpop.f32.mrb[0].mxu0
        %v776 = vadd.f32 0.0, %v775
        %v777 = vpop.f32.mrb[0].mxu0
        %v778 = vpop.f32.mrb[0].mxu0
        %779 = vdwg.mxu0
        %v784 = vcombine.low %v733, %v735
        %v785 = vcombine.low %v774, %v776
        %v787 = vunpack.c.l.s4 1966171168
        %v788 = vunpack.c.0.s8 %v787
        %v789 = vlaneseq
        %v790 = vshrl.u32 %v789, 7
        %v791 = vsub.s32 %v788, %v790
        %v792 = vrot.slane %v784, %v791
        %v794 = vunpack.c.l.s4 1966171168
        %v795 = vunpack.c.0.s8 %v794
        %v796 = vlaneseq
        %v797 = vshrl.u32 %v796, 7
        %v798 = vsub.s32 %v795, %v797
        %v799 = vrot.slane %v785, %v798
        %v800 = vcombine.low %v792, %v799
        %v802 = vunpack.c.l.s4 1966171168
        %v803 = vunpack.c.0.s8 %v802
        %v804 = vlaneseq
        %v805 = vshrl.u32 %v804, 7
        %v806 = vsub.s32 %v803, %v805
        %v807 = vrot.slane %v800, %v806
        %v809 = vadd.f32 %v287, %v807
        %v810 = vlaneseq
        %vm811 = vcmp.ge.s32.totalorder %v810, 0
        %vm812 = vcmp.lt.s32.totalorder %v810, 512
        %vm813 = vmand %vm811, %vm812
        %814 = vst.msk [vmem:[#allocation2] sm:$0xf] %vm813, %v809
        // Predicated region
        $region41: #{joint_transformer_block.11} parent=31 // pred_check
          %p815 = pneg %p278
        $region42: #{joint_transformer_block.11} parent=31 // pred_check_branch
          %817 = sbr.rel (%p815) target = $region44
        $region43: #{joint_transformer_block.11} parent=31 // pred_region
          %v818 = vld [vmem:[#allocation2] sm:$0xf]
          %v819 = vld [vmem:[%s267] sm:$0xf]
          %v820 = vunpack.c.l.bf16 %v819
          %v823 = vunpack.c.l.s4 1966171168
          %v824 = vunpack.c.0.s8 %v823
          %v825 = vlaneseq
          %v826 = vshrl.u32 %v825, 7
          %v827 = vsub.s32 %v824, %v826
          %v828 = vrot.slane %v820, %v827
          %v830 = vadd.f32 %v818, %v828
          %831 = vst.msk [vmem:[%s276] sm:$0xf] %vm813, %v830
        $region44: #{joint_transformer_block.11} parent=31 // pred_fallthru
          _
        %s832 = smul.u32 4, %s23
        %p833 = scmp.lt.s32.totalorder %s22, 0
        %s834 = scalar_select %p833, %s22, 0
        %p835 = scmp.lt.s32.totalorder %s832, 11
        %s836 = scalar_select %p835, %s832, 11
        %s837 = smul.addr %s834, 12
        %s838 = sadd.s32 %s836, %s837
        %s839 = scalar_lea.vmem %s3, %s838
        // Predicated region
        $region45: #{joint_transformer_block.11} parent=31 // pred_check
          %p840 = pneg %p138
        $region46: #{joint_transformer_block.11} parent=31 // pred_check_branch
          %842 = sbr.rel (%p840) target = $region48
        $region47: #{joint_transformer_block.11} parent=31 // pred_region
          %s843 = smul.u32 4, %s23
        $region48: #{joint_transformer_block.11} parent=31 // pred_fallthru
          _
      $region32: #{joint_transformer_block.11} parent=5 // pred_fallthru
        _
      %p844 = scmp.le.s32.totalorder 2, %s12
      // Predicated region
      $region49: #{joint_transformer_block.11} parent=5 // pred_check
        %p845 = pneg %p844
      $region50: #{joint_transformer_block.11} parent=5 // pred_check_branch
        %847 = sbr.rel (%p845) target = $region52
      $region51: #{joint_transformer_block.11} parent=5 // pred_region
        %s848 = ssub.s32 %s12, 2
        // Predicated region
        $region53: #{joint_transformer_block.11} parent=51 // pred_check
          %p849 = pneg %p144
        $region54: #{joint_transformer_block.11} parent=51 // pred_check_branch
          %851 = sbr.rel (%p849) target = $region56
        $region55: #{joint_transformer_block.11} parent=51 // pred_region
          %s852 = smul.u32 4, %s26
          %p853 = scmp.lt.s32.totalorder %s25, 0
          %s854 = scalar_select %p853, %s25, 0
          %p855 = scmp.lt.s32.totalorder %s852, 11
          %s856 = scalar_select %p855, %s852, 11
          %s857 = smul.addr %s854, 12
          %s858 = sadd.s32 %s856, %s857
          %s859 = scalar_lea.vmem %s3, %s858
        $region56: #{joint_transformer_block.11} parent=51 // pred_fallthru
          _
      $region52: #{joint_transformer_block.11} parent=5 // pred_fallthru
        _
    $region6: #{joint_transformer_block.11} parent=1 // loop_footer
      %s16 = sadd.s32 1, %s12
    $region7: #{joint_transformer_block.11} parent=1 // loop_footer_branch
      %11 = sbr.rel target = $region3
    $region8: #{joint_transformer_block.11} parent=1 // loop_exit
      _
    %860 = vsyncpa [#allocation4], 1
    %s861 = scalar_lea.sflag [#allocation4], 1
    %862 = vsyncpa %s861, 1

// kernel: joint_transformer_block.12
$region0: #{joint_transformer_block.12}
  #allocation0 [shape = 'u32[]', space=smem, size = 0x4, offset = 0x4, fixed_abs, tag = 'smem constant byte address 0x4 - core index']
  #allocation1 [shape = 'u32[144,128]{1,0:T(1,128)}', space=vmem, size = 0x12000, scoped, tag = 'internal scratch']
  %s0 = inlined_call_operand.vmem [shape: bf16[16,256], index: 0, kind: input, shape index: {}]
  %s1 = inlined_call_operand.vmem [shape: f32[2,1,256], index: 1, kind: input, shape index: {}]
  %s2 = inlined_call_operand.vmem [shape: f32[2,1,256], index: 2, kind: input, shape index: {}]
  %s3 = inlined_call_operand.vmem [shape: bf16[16,256], index: 3, kind: output, shape index: {}]
  %s4 = sld [smem:[#allocation0]]
  $region45: #{joint_transformer_block.12} parent=0
    _
  %s6 = ssub.s32 1, %s4
  %s7 = scalar_select 0, %s6, %s4
  loop: start=0, step=1, limit=4
  $region2: #{joint_transformer_block.12} parent=0 // loop_pre_header
    _
  $region3: #{joint_transformer_block.12} parent=0 // loop_header
    %s9 = sphi 0, %s13
    %p10 = scmp.ge.s32.totalorder %s9, 4
    %s19 = sphi 0, %s21
    %s22 = sphi 0, %s19
    %s23 = sphi 0, %s22
    %s39 = sphi 0, %s23
    %s49 = sphi 0, %s51
    %s52 = sphi 0, %s49
    %s53 = sphi 0, %s52
    %s69 = sphi 0, %s53
    %s79 = sphi 0, %s81
    %s82 = sphi 0, %s79
    %s83 = sphi 0, %s82
    %s99 = sphi 0, %s83
    %s105 = sphi 0, %s107
    %s108 = sphi 0, %s105
    %s109 = sphi 0, %s108
    %s125 = sphi 0, %s109
  $region4: #{joint_transformer_block.12} parent=0 // loop_header_branch
    %12 = sbr.rel (%p10) target = $region8
  $region5: #{joint_transformer_block.12} parent=0 // loop_body
    %s14 = ssub.s32 %s9, 1
    %s15 = ssub.s32 %s9, 2
    %s16 = sadd.s32 %s9, 1
    %s17 = ssub.s32 %s9, %s16
    %p18 = scmp.eq.s32.totalorder %s17, 0
    %s20 = sadd.s32 %s19, 1
    %s21 = scalar_select %p18, %s19, %s20
    %p24 = pneg %p18
    %p25 = scmp.eq.s32.totalorder %s9, 1
    %p26 = por %p24, %p25
    %p27 = scmp.ne.s32.totalorder %s19, %s22
    %p28 = scmp.eq.s32.totalorder %s9, 0
    %p29 = por %p27, %p28
    %p30 = scmp.ne.s32.totalorder %s19, %s22
    %p31 = scmp.eq.s32.totalorder %s14, 1
    %p32 = por %p30, %p31
    %p33 = scmp.ne.s32.totalorder %s22, %s23
    %p34 = scmp.eq.s32.totalorder %s14, 0
    %p35 = por %p33, %p34
    %p36 = scmp.ne.s32.totalorder %s22, %s23
    %p37 = scmp.eq.s32.totalorder %s15, 1
    %p38 = por %p36, %p37
    %p40 = scmp.ne.s32.totalorder %s23, %s39
    %p41 = scmp.eq.s32.totalorder %s15, 0
    %p42 = por %p40, %p41
    %p43 = scmp.ge.s32.totalorder %s9, 1
    %s44 = scalar_select %p43, 1, 0
    %p45 = scmp.ge.s32.totalorder %s16, 1
    %s46 = scalar_select %p45, 1, 0
    %s47 = ssub.s32 %s44, %s46
    %p48 = scmp.eq.s32.totalorder %s47, 0
    %s50 = sadd.s32 %s49, 1
    %s51 = scalar_select %p48, %s49, %s50
    %p54 = pneg %p48
    %p55 = scmp.eq.s32.totalorder %s9, 1
    %p56 = por %p54, %p55
    %p57 = scmp.ne.s32.totalorder %s49, %s52
    %p58 = scmp.eq.s32.totalorder %s9, 0
    %p59 = por %p57, %p58
    %p60 = scmp.ne.s32.totalorder %s49, %s52
    %p61 = scmp.eq.s32.totalorder %s14, 1
    %p62 = por %p60, %p61
    %p63 = scmp.ne.s32.totalorder %s52, %s53
    %p64 = scmp.eq.s32.totalorder %s14, 0
    %p65 = por %p63, %p64
    %p66 = scmp.ne.s32.totalorder %s52, %s53
    %p67 = scmp.eq.s32.totalorder %s15, 1
    %p68 = por %p66, %p67
    %p70 = scmp.ne.s32.totalorder %s53, %s69
    %p71 = scmp.eq.s32.totalorder %s15, 0
    %p72 = por %p70, %p71
    %p73 = scmp.ge.s32.totalorder %s9, 1
    %s74 = scalar_select %p73, 1, 0
    %p75 = scmp.ge.s32.totalorder %s16, 1
    %s76 = scalar_select %p75, 1, 0
    %s77 = ssub.s32 %s74, %s76
    %p78 = scmp.eq.s32.totalorder %s77, 0
    %s80 = sadd.s32 %s79, 1
    %s81 = scalar_select %p78, %s79, %s80
    %p84 = pneg %p78
    %p85 = scmp.eq.s32.totalorder %s9, 1
    %p86 = por %p84, %p85
    %p87 = scmp.ne.s32.totalorder %s79, %s82
    %p88 = scmp.eq.s32.totalorder %s9, 0
    %p89 = por %p87, %p88
    %p90 = scmp.ne.s32.totalorder %s79, %s82
    %p91 = scmp.eq.s32.totalorder %s14, 1
    %p92 = por %p90, %p91
    %p93 = scmp.ne.s32.totalorder %s82, %s83
    %p94 = scmp.eq.s32.totalorder %s14, 0
    %p95 = por %p93, %p94
    %p96 = scmp.ne.s32.totalorder %s82, %s83
    %p97 = scmp.eq.s32.totalorder %s15, 1
    %p98 = por %p96, %p97
    %p100 = scmp.ne.s32.totalorder %s83, %s99
    %p101 = scmp.eq.s32.totalorder %s15, 0
    %p102 = por %p100, %p101
    %s103 = ssub.s32 %s9, %s16
    %p104 = scmp.eq.s32.totalorder %s103, 0
    %s106 = sadd.s32 %s105, 1
    %s107 = scalar_select %p104, %s105, %s106
    %p110 = pneg %p104
    %p111 = scmp.eq.s32.totalorder %s9, 1
    %p112 = por %p110, %p111
    %p113 = scmp.ne.s32.totalorder %s105, %s108
    %p114 = scmp.eq.s32.totalorder %s9, 0
    %p115 = por %p113, %p114
    %p116 = scmp.ne.s32.totalorder %s105, %s108
    %p117 = scmp.eq.s32.totalorder %s14, 1
    %p118 = por %p116, %p117
    %p119 = scmp.ne.s32.totalorder %s108, %s109
    %p120 = scmp.eq.s32.totalorder %s14, 0
    %p121 = por %p119, %p120
    %p122 = scmp.ne.s32.totalorder %s108, %s109
    %p123 = scmp.eq.s32.totalorder %s15, 1
    %p124 = por %p122, %p123
    %p126 = scmp.ne.s32.totalorder %s109, %s125
    %p127 = scmp.eq.s32.totalorder %s15, 0
    %p128 = por %p126, %p127
    %p129 = scmp.le.s32.totalorder 1, %s9
    %p130 = scmp.lt.s32.totalorder %s9, 3
    %p131 = pnand %p129, %p130
    %p132 = pneg %p131
    // Predicated region
    $region9: #{joint_transformer_block.12} parent=5 // pred_check
      _
    $region10: #{joint_transformer_block.12} parent=5 // pred_check_branch
      %134 = sbr.rel (%p131) target = $region12
    $region11: #{joint_transformer_block.12} parent=5 // pred_region
      %s135 = ssub.s32 %s9, 1
    $region12: #{joint_transformer_block.12} parent=5 // pred_fallthru
      _
    %p136 = scmp.lt.s32.totalorder %s9, 2
    // Predicated region
    $region13: #{joint_transformer_block.12} parent=5 // pred_check
      %p137 = pneg %p136
    $region14: #{joint_transformer_block.12} parent=5 // pred_check_branch
      %139 = sbr.rel (%p137) target = $region16
    $region15: #{joint_transformer_block.12} parent=5 // pred_region
      // Predicated region
      $region17: #{joint_transformer_block.12} parent=15 // pred_check
        %p140 = pneg %p29
      $region18: #{joint_transformer_block.12} parent=15 // pred_check_branch
        %142 = sbr.rel (%p140) target = $region20
      $region19: #{joint_transformer_block.12} parent=15 // pred_region
        %p143 = scmp.lt.s32.totalorder %s9, 1
        %s144 = scalar_select %p143, %s9, 1
        %s145 = smul.addr %s144, 2
        %s146 = smul.addr %s145, 4
        %s147 = scalar_lea.vmem %s0, %s146
      $region20: #{joint_transformer_block.12} parent=15 // pred_fallthru
        _
      // Predicated region
      $region21: #{joint_transformer_block.12} parent=15 // pred_check
        %p148 = pneg %p59
      $region22: #{joint_transformer_block.12} parent=15 // pred_check_branch
        %150 = sbr.rel (%p148) target = $region24
      $region23: #{joint_transformer_block.12} parent=15 // pred_region
        %p151 = scmp.ge.s32.totalorder %s9, 1
        %s152 = scalar_select %p151, 1, 0
        %p153 = scmp.lt.s32.totalorder %s152, 1
        %s154 = scalar_select %p153, %s152, 1
        %s155 = smul.addr %s154, 2
        %s156 = scalar_lea.vmem %s1, %s155
        %p157 = scmp.ge.s32.totalorder %s9, 1
        %s158 = scalar_select %p157, 1, 0
      $region24: #{joint_transformer_block.12} parent=15 // pred_fallthru
        _
      // Predicated region
      $region25: #{joint_transformer_block.12} parent=15 // pred_check
        %p159 = pneg %p89
      $region26: #{joint_transformer_block.12} parent=15 // pred_check_branch
        %161 = sbr.rel (%p159) target = $region28
      $region27: #{joint_transformer_block.12} parent=15 // pred_region
        %p162 = scmp.ge.s32.totalorder %s9, 1
        %s163 = scalar_select %p162, 1, 0
        %p164 = scmp.lt.s32.totalorder %s163, 1
        %s165 = scalar_select %p164, %s163, 1
        %s166 = smul.addr %s165, 2
        %s167 = scalar_lea.vmem %s2, %s166
        %p168 = scmp.ge.s32.totalorder %s9, 1
        %s169 = scalar_select %p168, 1, 0
      $region28: #{joint_transformer_block.12} parent=15 // pred_fallthru
        _
    $region16: #{joint_transformer_block.12} parent=5 // pred_fallthru
      _
    %p170 = scmp.le.s32.totalorder 1, %s9
    %p171 = scmp.lt.s32.totalorder %s9, 3
    %p172 = pnand %p170, %p171
    %p173 = pneg %p172
    // Predicated region
    $region29: #{joint_transformer_block.12} parent=5 // pred_check
      _
    $region30: #{joint_transformer_block.12} parent=5 // pred_check_branch
      %175 = sbr.rel (%p172) target = $region32
    $region31: #{joint_transformer_block.12} parent=5 // pred_region
      %s176 = ssub.s32 %s9, 1
      %p177 = scmp.lt.s32.totalorder %s14, 1
      %s178 = scalar_select %p177, %s14, 1
      %s179 = smul.addr %s178, 2
      %s180 = smul.addr %s179, 4
      %s181 = scalar_lea.vmem %s0, %s180
      %p182 = pneg %p35
      %p183 = pneg %p32
      %p184 = scmp.ge.s32.totalorder %s14, 1
      %s185 = scalar_select %p184, 1, 0
      %p186 = scmp.lt.s32.totalorder %s185, 1
      %s187 = scalar_select %p186, %s185, 1
      %s188 = smul.addr %s187, 2
      %s189 = scalar_lea.vmem %s1, %s188
      %p190 = pneg %p65
      %p191 = pneg %p62
      %p192 = scmp.ge.s32.totalorder %s14, 1
      %s193 = scalar_select %p192, 1, 0
      %p194 = scmp.lt.s32.totalorder %s193, 1
      %s195 = scalar_select %p194, %s193, 1
      %s196 = smul.addr %s195, 2
      %s197 = scalar_lea.vmem %s2, %s196
      %p198 = pneg %p95
      %p199 = pneg %p92
      %p200 = pneg %p121
      %p201 = pneg %p118
      %p202 = scmp.lt.s32.totalorder %s14, 1
      %s203 = scalar_select %p202, %s14, 1
      %s204 = smul.addr %s203, 2
      %s205 = smul.addr %s204, 4
      %s206 = scalar_lea.vmem %s3, %s205
      %p207 = scmp.lt.s32.totalorder %s14, 1
      %s208 = scalar_select %p207, %s14, 1
      %s209 = smul.addr %s208, 2
      %s210 = smul.addr %s209, 4
      %s211 = scalar_lea.vmem %s0, %s210
      %p212 = scmp.ge.s32.totalorder %s14, 1
      %s213 = scalar_select %p212, 1, 0
      %p214 = scmp.lt.s32.totalorder %s213, 1
      %s215 = scalar_select %p214, %s213, 1
      %s216 = smul.addr %s215, 2
      %s217 = scalar_lea.vmem %s1, %s216
      %p218 = scmp.ge.s32.totalorder %s14, 1
      %s219 = scalar_select %p218, 1, 0
      %p220 = scmp.ge.s32.totalorder %s14, 1
      %s221 = scalar_select %p220, 1, 0
      %p222 = scmp.lt.s32.totalorder %s221, 1
      %s223 = scalar_select %p222, %s221, 1
      %s224 = smul.addr %s223, 2
      %s225 = scalar_lea.vmem %s2, %s224
      %p226 = scmp.ge.s32.totalorder %s14, 1
      %s227 = scalar_select %p226, 1, 0
      %p228 = scmp.lt.s32.totalorder %s14, 1
      %s229 = scalar_select %p228, %s14, 1
      %s230 = smul.addr %s229, 2
      %s231 = smul.addr %s230, 4
      %s232 = scalar_lea.vmem %s3, %s231
      %v233 = vld [vmem:[%s211] sm:$0xff]
      %v234 = vunpack.c.l.bf16 %v233
      %v235 = vunpack.c.h.bf16 %v233
      %v236 = vadd.f32 %v234, %v235
      %237 = vadd.xlane.f32.xlu0 %v236
      %v238 = vpop.xlane.xlu0 %237
      %v239 = vrcp.pop 256.0
      %v240 = vmul.f32 %v238, %v239
      %v241 = vsub.f32 %v234, %v240
      %v242 = vsub.f32 %v235, %v240
      %v243 = vmul.f32 %v241, %v241
      %v244 = vmul.f32 %v242, %v242
      %v245 = vadd.f32 %v243, %v244
      %246 = vadd.xlane.f32.xlu0 %v245
      %v247 = vpop.xlane.xlu0 %246
      %v248 = vmul.f32 %v247, %v239
      %v249 = vadd.f32 %v248, 1e-06
      %v250 = vrsqrt.pop %v249
      %v251 = vmul.f32 %v241, %v250
      %v252 = vmul.f32 %v242, %v250
      %v253 = vld [vmem:[%s217] sm:$0x3]
      %v255 = vlaneseq
      %v256 = vshrl.u32 %v255, 7
      %v257 = vsub.s32 0, %v256
      %v258 = vrot.slane %v253, %v257
      %v259 = vlaneseq
      %v260 = vshrl.u32 %v259, 7
      %v261 = vsub.s32 1, %v260
      %v262 = vrot.slane %v253, %v261
      %v265 = vmul.f32 %v251, %v258
      %v266 = vmul.f32 %v252, %v262
      %v267 = vld [vmem:[%s225] sm:$0x3]
      %v269 = vlaneseq
      %v270 = vshrl.u32 %v269, 7
      %v271 = vsub.s32 0, %v270
      %v272 = vrot.slane %v267, %v271
      %v273 = vlaneseq
      %v274 = vshrl.u32 %v273, 7
      %v275 = vsub.s32 1, %v274
      %v276 = vrot.slane %v267, %v275
      %v279 = vadd.f32 %v265, %v272
      %v280 = vadd.f32 %v266, %v276
      %v281 = vpack.c.bf16 %v279, %v279
      %v282 = vpack.c.bf16 %v280, %v280
      %v285 = vunpack.c.l.b16 %v281
      %v286 = vunpack.c.l.b16 %v282
      %v287 = vpack.c.b16 %v286, %v285
      %289 = vst [vmem:[%s232] sm:$0xff] %v287
      %p290 = scmp.lt.s32.totalorder %s14, 1
      %s291 = scalar_select %p290, %s14, 1
      %s292 = smul.addr %s291, 2
      %s293 = smul.addr %s292, 4
      %s294 = scalar_lea.vmem %s3, %s293
      // Predicated region
      $region33: #{joint_transformer_block.12} parent=31 // pred_check
        %p295 = pneg %p118
      $region34: #{joint_transformer_block.12} parent=31 // pred_check_branch
        %297 = sbr.rel (%p295) target = $region36
      $region35: #{joint_transformer_block.12} parent=31 // pred_region
        _
      $region36: #{joint_transformer_block.12} parent=31 // pred_fallthru
        _
    $region32: #{joint_transformer_block.12} parent=5 // pred_fallthru
      _
    %p298 = scmp.le.s32.totalorder 2, %s9
    // Predicated region
    $region37: #{joint_transformer_block.12} parent=5 // pred_check
      %p299 = pneg %p298
    $region38: #{joint_transformer_block.12} parent=5 // pred_check_branch
      %301 = sbr.rel (%p299) target = $region40
    $region39: #{joint_transformer_block.12} parent=5 // pred_region
      %s302 = ssub.s32 %s9, 2
      // Predicated region
      $region41: #{joint_transformer_block.12} parent=39 // pred_check
        %p303 = pneg %p124
      $region42: #{joint_transformer_block.12} parent=39 // pred_check_branch
        %305 = sbr.rel (%p303) target = $region44
      $region43: #{joint_transformer_block.12} parent=39 // pred_region
        %p306 = scmp.lt.s32.totalorder %s15, 1
        %s307 = scalar_select %p306, %s15, 1
        %s308 = smul.addr %s307, 2
        %s309 = smul.addr %s308, 4
        %s310 = scalar_lea.vmem %s3, %s309
      $region44: #{joint_transformer_block.12} parent=39 // pred_fallthru
        _
    $region40: #{joint_transformer_block.12} parent=5 // pred_fallthru
      _
  $region6: #{joint_transformer_block.12} parent=0 // loop_footer
    %s13 = sadd.s32 1, %s9
  $region7: #{joint_transformer_block.12} parent=0 // loop_footer_branch
    %8 = sbr.rel target = $region3
  $region8: #{joint_transformer_block.12} parent=0 // loop_exit
    _

// kernel: mul.71
$region0: #{mul.71}
  %s0 = inlined_call_operand.vmem [shape: f32[64,2], index: 0, kind: input, shape index: {}]
  %s1 = inlined_call_operand.vmem [shape: f32[128], index: 1, kind: output, shape index: {}]
  $region1: #{mul.71} parent=0
    #allocation0 [shape = 'u8[4096]{0}', space=vmem, size = 0x1000, scoped, tag = 'scoped mem for output reshape']
    %v2 = vld [vmem:[%s0] sm:$0x1]
    %vm3 = vcmask 15360
    %4 = vst.msk [vmem:[#allocation0] sm:$0x1] %vm3, %v2
    %s5 = scalar_lea.vmem %s0, 63
    %v6 = vld [vmem:[%s5] sm:$0x1]
    %7 = vrot.lane.b32.xlu0 %v6, 126
    %v8 = vpop.permute.xlu0 %7
    %vm9 = vcmask 1048560
    %10 = vst.msk [vmem:[#allocation0] sm:$0x1] %vm9, %v8
    %s11 = scalar_lea.vmem %s0, 62
    %v12 = vld [vmem:[%s11] sm:$0x1]
    %13 = vrot.lane.b32.xlu0 %v12, 124
    %v14 = vpop.permute.xlu0 %13
    %vm15 = vcmask 1032160
    %16 = vst.msk [vmem:[#allocation0] sm:$0x1] %vm15, %v14
    %s17 = scalar_lea.vmem %s0, 61
    %v18 = vld [vmem:[%s17] sm:$0x1]
    %19 = vrot.lane.b32.xlu0 %v18, 122
    %v20 = vpop.permute.xlu0 %19
    %vm21 = vcmask 1015760
    %22 = vst.msk [vmem:[#allocation0] sm:$0x1] %vm21, %v20
    %s23 = scalar_lea.vmem %s0, 60
    %v24 = vld [vmem:[%s23] sm:$0x1]
    %25 = vrot.lane.b32.xlu0 %v24, 120
    %v26 = vpop.permute.xlu0 %25
    %vm27 = vcmask 999360
    %28 = vst.msk [vmem:[#allocation0] sm:$0x1] %vm27, %v26
    %s29 = scalar_lea.vmem %s0, 59
    %v30 = vld [vmem:[%s29] sm:$0x1]
    %31 = vrot.lane.b32.xlu0 %v30, 118
    %v32 = vpop.permute.xlu0 %31
    %vm33 = vcmask 982960
    %34 = vst.msk [vmem:[#allocation0] sm:$0x1] %vm33, %v32
    %s35 = scalar_lea.vmem %s0, 58
    %v36 = vld [vmem:[%s35] sm:$0x1]
    %37 = vrot.lane.b32.xlu0 %v36, 116
    %v38 = vpop.permute.xlu0 %37
    %vm39 = vcmask 966560
    %40 = vst.msk [vmem:[#allocation0] sm:$0x1] %vm39, %v38
    %s41 = scalar_lea.vmem %s0, 57
    %v42 = vld [vmem:[%s41] sm:$0x1]
    %43 = vrot.lane.b32.xlu0 %v42, 114
    %v44 = vpop.permute.xlu0 %43
    %vm45 = vcmask 950160
    %46 = vst.msk [vmem:[#allocation0] sm:$0x1] %vm45, %v44
    %s47 = scalar_lea.vmem %s0, 56
    %v48 = vld [vmem:[%s47] sm:$0x1]
    %49 = vrot.lane.b32.xlu0 %v48, 112
    %v50 = vpop.permute.xlu0 %49
    %vm51 = vcmask 933760
    %52 = vst.msk [vmem:[#allocation0] sm:$0x1] %vm51, %v50
    %s53 = scalar_lea.vmem %s0, 55
    %v54 = vld [vmem:[%s53] sm:$0x1]
    %55 = vrot.lane.b32.xlu0 %v54, 110
    %v56 = vpop.permute.xlu0 %55
    %vm57 = vcmask 917360
    %58 = vst.msk [vmem:[#allocation0] sm:$0x1] %vm57, %v56
    %s59 = scalar_lea.vmem %s0, 54
    %v60 = vld [vmem:[%s59] sm:$0x1]
    %61 = vrot.lane.b32.xlu0 %v60, 108
    %v62 = vpop.permute.xlu0 %61
    %vm63 = vcmask 900960
    %64 = vst.msk [vmem:[#allocation0] sm:$0x1] %vm63, %v62
    %s65 = scalar_lea.vmem %s0, 53
    %v66 = vld [vmem:[%s65] sm:$0x1]
    %67 = vrot.lane.b32.xlu0 %v66, 106
    %v68 = vpop.permute.xlu0 %67
    %vm69 = vcmask 884560
    %70 = vst.msk [vmem:[#allocation0] sm:$0x1] %vm69, %v68
    %s71 = scalar_lea.vmem %s0, 52
    %v72 = vld [vmem:[%s71] sm:$0x1]
    %73 = vrot.lane.b32.xlu0 %v72, 104
    %v74 = vpop.permute.xlu0 %73
    %vm75 = vcmask 868160
    %76 = vst.msk [vmem:[#allocation0] sm:$0x1] %vm75, %v74
    %s77 = scalar_lea.vmem %s0, 51
    %v78 = vld [vmem:[%s77] sm:$0x1]
    %79 = vrot.lane.b32.xlu0 %v78, 102
    %v80 = vpop.permute.xlu0 %79
    %vm81 = vcmask 851760
    %82 = vst.msk [vmem:[#allocation0] sm:$0x1] %vm81, %v80
    %s83 = scalar_lea.vmem %s0, 50
    %v84 = vld [vmem:[%s83] sm:$0x1]
    %85 = vrot.lane.b32.xlu0 %v84, 100
    %v86 = vpop.permute.xlu0 %85
    %vm87 = vcmask 835360
    %88 = vst.msk [vmem:[#allocation0] sm:$0x1] %vm87, %v86
    %s89 = scalar_lea.vmem %s0, 49
    %v90 = vld [vmem:[%s89] sm:$0x1]
    %91 = vrot.lane.b32.xlu0 %v90, 98
    %v92 = vpop.permute.xlu0 %91
    %vm93 = vcmask 818960
    %94 = vst.msk [vmem:[#allocation0] sm:$0x1] %vm93, %v92
    %s95 = scalar_lea.vmem %s0, 48
    %v96 = vld [vmem:[%s95] sm:$0x1]
    %97 = vrot.lane.b32.xlu0 %v96, 96
    %v98 = vpop.permute.xlu0 %97
    %vm99 = vcmask 802560
    %100 = vst.msk [vmem:[#allocation0] sm:$0x1] %vm99, %v98
    %s101 = scalar_lea.vmem %s0, 47
    %v102 = vld [vmem:[%s101] sm:$0x1]
    %103 = vrot.lane.b32.xlu0 %v102, 94
    %v104 = vpop.permute.xlu0 %103
    %vm105 = vcmask 786160
    %106 = vst.msk [vmem:[#allocation0] sm:$0x1] %vm105, %v104
    %s107 = scalar_lea.vmem %s0, 46
    %v108 = vld [vmem:[%s107] sm:$0x1]
    %109 = vrot.lane.b32.xlu0 %v108, 92
    %v110 = vpop.permute.xlu0 %109
    %vm111 = vcmask 769760
    %112 = vst.msk [vmem:[#allocation0] sm:$0x1] %vm111, %v110
    %s113 = scalar_lea.vmem %s0, 45
    %v114 = vld [vmem:[%s113] sm:$0x1]
    %115 = vrot.lane.b32.xlu0 %v114, 90
    %v116 = vpop.permute.xlu0 %115
    %vm117 = vcmask 753360
    %118 = vst.msk [vmem:[#allocation0] sm:$0x1] %vm117, %v116
    %s119 = scalar_lea.vmem %s0, 44
    %v120 = vld [vmem:[%s119] sm:$0x1]
    %121 = vrot.lane.b32.xlu0 %v120, 88
    %v122 = vpop.permute.xlu0 %121
    %vm123 = vcmask 736960
    %124 = vst.msk [vmem:[#allocation0] sm:$0x1] %vm123, %v122
    %s125 = scalar_lea.vmem %s0, 43
    %v126 = vld [vmem:[%s125] sm:$0x1]
    %127 = vrot.lane.b32.xlu0 %v126, 86
    %v128 = vpop.permute.xlu0 %127
    %vm129 = vcmask 720560
    %130 = vst.msk [vmem:[#allocation0] sm:$0x1] %vm129, %v128
    %s131 = scalar_lea.vmem %s0, 42
    %v132 = vld [vmem:[%s131] sm:$0x1]
    %133 = vrot.lane.b32.xlu0 %v132, 84
    %v134 = vpop.permute.xlu0 %133
    %vm135 = vcmask 704160
    %136 = vst.msk [vmem:[#allocation0] sm:$0x1] %vm135, %v134
    %s137 = scalar_lea.vmem %s0, 41
    %v138 = vld [vmem:[%s137] sm:$0x1]
    %139 = vrot.lane.b32.xlu0 %v138, 82
    %v140 = vpop.permute.xlu0 %139
    %vm141 = vcmask 687760
    %142 = vst.msk [vmem:[#allocation0] sm:$0x1] %vm141, %v140
    %s143 = scalar_lea.vmem %s0, 40
    %v144 = vld [vmem:[%s143] sm:$0x1]
    %145 = vrot.lane.b32.xlu0 %v144, 80
    %v146 = vpop.permute.xlu0 %145
    %vm147 = vcmask 671360
    %148 = vst.msk [vmem:[#allocation0] sm:$0x1] %vm147, %v146
    %s149 = scalar_lea.vmem %s0, 39
    %v150 = vld [vmem:[%s149] sm:$0x1]
    %151 = vrot.lane.b32.xlu0 %v150, 78
    %v152 = vpop.permute.xlu0 %151
    %vm153 = vcmask 654960
    %154 = vst.msk [vmem:[#allocation0] sm:$0x1] %vm153, %v152
    %s155 = scalar_lea.vmem %s0, 38
    %v156 = vld [vmem:[%s155] sm:$0x1]
    %157 = vrot.lane.b32.xlu0 %v156, 76
    %v158 = vpop.permute.xlu0 %157
    %vm159 = vcmask 638560
    %160 = vst.msk [vmem:[#allocation0] sm:$0x1] %vm159, %v158
    %s161 = scalar_lea.vmem %s0, 37
    %v162 = vld [vmem:[%s161] sm:$0x1]
    %163 = vrot.lane.b32.xlu0 %v162, 74
    %v164 = vpop.permute.xlu0 %163
    %vm165 = vcmask 622160
    %166 = vst.msk [vmem:[#allocation0] sm:$0x1] %vm165, %v164
    %s167 = scalar_lea.vmem %s0, 36
    %v168 = vld [vmem:[%s167] sm:$0x1]
    %169 = vrot.lane.b32.xlu0 %v168, 72
    %v170 = vpop.permute.xlu0 %169
    %vm171 = vcmask 605760
    %172 = vst.msk [vmem:[#allocation0] sm:$0x1] %vm171, %v170
    %s173 = scalar_lea.vmem %s0, 35
    %v174 = vld [vmem:[%s173] sm:$0x1]
    %175 = vrot.lane.b32.xlu0 %v174, 70
    %v176 = vpop.permute.xlu0 %175
    %vm177 = vcmask 589360
    %178 = vst.msk [vmem:[#allocation0] sm:$0x1] %vm177, %v176
    %s179 = scalar_lea.vmem %s0, 34
    %v180 = vld [vmem:[%s179] sm:$0x1]
    %181 = vrot.lane.b32.xlu0 %v180, 68
    %v182 = vpop.permute.xlu0 %181
    %vm183 = vcmask 572960
    %184 = vst.msk [vmem:[#allocation0] sm:$0x1] %vm183, %v182
    %s185 = scalar_lea.vmem %s0, 33
    %v186 = vld [vmem:[%s185] sm:$0x1]
    %187 = vrot.lane.b32.xlu0 %v186, 66
    %v188 = vpop.permute.xlu0 %187
    %vm189 = vcmask 556560
    %190 = vst.msk [vmem:[#allocation0] sm:$0x1] %vm189, %v188
    %s191 = scalar_lea.vmem %s0, 32
    %v192 = vld [vmem:[%s191] sm:$0x1]
    %193 = vrot.lane.b32.xlu0 %v192, 64
    %v194 = vpop.permute.xlu0 %193
    %vm195 = vcmask 540160
    %196 = vst.msk [vmem:[#allocation0] sm:$0x1] %vm195, %v194
    %s197 = scalar_lea.vmem %s0, 31
    %v198 = vld [vmem:[%s197] sm:$0x1]
    %199 = vrot.lane.b32.xlu0 %v198, 62
    %v200 = vpop.permute.xlu0 %199
    %vm201 = vcmask 523760
    %202 = vst.msk [vmem:[#allocation0] sm:$0x1] %vm201, %v200
    %s203 = scalar_lea.vmem %s0, 30
    %v204 = vld [vmem:[%s203] sm:$0x1]
    %205 = vrot.lane.b32.xlu0 %v204, 60
    %v206 = vpop.permute.xlu0 %205
    %vm207 = vcmask 507360
    %208 = vst.msk [vmem:[#allocation0] sm:$0x1] %vm207, %v206
    %s209 = scalar_lea.vmem %s0, 29
    %v210 = vld [vmem:[%s209] sm:$0x1]
    %211 = vrot.lane.b32.xlu0 %v210, 58
    %v212 = vpop.permute.xlu0 %211
    %vm213 = vcmask 490960
    %214 = vst.msk [vmem:[#allocation0] sm:$0x1] %vm213, %v212
    %s215 = scalar_lea.vmem %s0, 28
    %v216 = vld [vmem:[%s215] sm:$0x1]
    %217 = vrot.lane.b32.xlu0 %v216, 56
    %v218 = vpop.permute.xlu0 %217
    %vm219 = vcmask 474560
    %220 = vst.msk [vmem:[#allocation0] sm:$0x1] %vm219, %v218
    %s221 = scalar_lea.vmem %s0, 27
    %v222 = vld [vmem:[%s221] sm:$0x1]
    %223 = vrot.lane.b32.xlu0 %v222, 54
    %v224 = vpop.permute.xlu0 %223
    %vm225 = vcmask 458160
    %226 = vst.msk [vmem:[#allocation0] sm:$0x1] %vm225, %v224
    %s227 = scalar_lea.vmem %s0, 26
    %v228 = vld [vmem:[%s227] sm:$0x1]
    %229 = vrot.lane.b32.xlu0 %v228, 52
    %v230 = vpop.permute.xlu0 %229
    %vm231 = vcmask 441760
    %232 = vst.msk [vmem:[#allocation0] sm:$0x1] %vm231, %v230
    %s233 = scalar_lea.vmem %s0, 25
    %v234 = vld [vmem:[%s233] sm:$0x1]
    %235 = vrot.lane.b32.xlu0 %v234, 50
    %v236 = vpop.permute.xlu0 %235
    %vm237 = vcmask 425360
    %238 = vst.msk [vmem:[#allocation0] sm:$0x1] %vm237, %v236
    %s239 = scalar_lea.vmem %s0, 24
    %v240 = vld [vmem:[%s239] sm:$0x1]
    %241 = vrot.lane.b32.xlu0 %v240, 48
    %v242 = vpop.permute.xlu0 %241
    %vm243 = vcmask 408960
    %244 = vst.msk [vmem:[#allocation0] sm:$0x1] %vm243, %v242
    %s245 = scalar_lea.vmem %s0, 23
    %v246 = vld [vmem:[%s245] sm:$0x1]
    %247 = vrot.lane.b32.xlu0 %v246, 46
    %v248 = vpop.permute.xlu0 %247
    %vm249 = vcmask 392560
    %250 = vst.msk [vmem:[#allocation0] sm:$0x1] %vm249, %v248
    %s251 = scalar_lea.vmem %s0, 22
    %v252 = vld [vmem:[%s251] sm:$0x1]
    %253 = vrot.lane.b32.xlu0 %v252, 44
    %v254 = vpop.permute.xlu0 %253
    %vm255 = vcmask 376160
    %256 = vst.msk [vmem:[#allocation0] sm:$0x1] %vm255, %v254
    %s257 = scalar_lea.vmem %s0, 21
    %v258 = vld [vmem:[%s257] sm:$0x1]
    %259 = vrot.lane.b32.xlu0 %v258, 42
    %v260 = vpop.permute.xlu0 %259
    %vm261 = vcmask 359760
    %262 = vst.msk [vmem:[#allocation0] sm:$0x1] %vm261, %v260
    %s263 = scalar_lea.vmem %s0, 20
    %v264 = vld [vmem:[%s263] sm:$0x1]
    %265 = vrot.lane.b32.xlu0 %v264, 40
    %v266 = vpop.permute.xlu0 %265
    %vm267 = vcmask 343360
    %268 = vst.msk [vmem:[#allocation0] sm:$0x1] %vm267, %v266
    %s269 = scalar_lea.vmem %s0, 19
    %v270 = vld [vmem:[%s269] sm:$0x1]
    %271 = vrot.lane.b32.xlu0 %v270, 38
    %v272 = vpop.permute.xlu0 %271
    %vm273 = vcmask 326960
    %274 = vst.msk [vmem:[#allocation0] sm:$0x1] %vm273, %v272
    %s275 = scalar_lea.vmem %s0, 18
    %v276 = vld [vmem:[%s275] sm:$0x1]
    %277 = vrot.lane.b32.xlu0 %v276, 36
    %v278 = vpop.permute.xlu0 %277
    %vm279 = vcmask 310560
    %280 = vst.msk [vmem:[#allocation0] sm:$0x1] %vm279, %v278
    %s281 = scalar_lea.vmem %s0, 17
    %v282 = vld [vmem:[%s281] sm:$0x1]
    %283 = vrot.lane.b32.xlu0 %v282, 34
    %v284 = vpop.permute.xlu0 %283
    %vm285 = vcmask 294160
    %286 = vst.msk [vmem:[#allocation0] sm:$0x1] %vm285, %v284
    %s287 = scalar_lea.vmem %s0, 16
    %v288 = vld [vmem:[%s287] sm:$0x1]
    %289 = vrot.lane.b32.xlu0 %v288, 32
    %v290 = vpop.permute.xlu0 %289
    %vm291 = vcmask 277760
    %292 = vst.msk [vmem:[#allocation0] sm:$0x1] %vm291, %v290
    %s293 = scalar_lea.vmem %s0, 15
    %v294 = vld [vmem:[%s293] sm:$0x1]
    %295 = vrot.lane.b32.xlu0 %v294, 30
    %v296 = vpop.permute.xlu0 %295
    %vm297 = vcmask 261360
    %298 = vst.msk [vmem:[#allocation0] sm:$0x1] %vm297, %v296
    %s299 = scalar_lea.vmem %s0, 14
    %v300 = vld [vmem:[%s299] sm:$0x1]
    %301 = vrot.lane.b32.xlu0 %v300, 28
    %v302 = vpop.permute.xlu0 %301
    %vm303 = vcmask 244960
    %304 = vst.msk [vmem:[#allocation0] sm:$0x1] %vm303, %v302
    %s305 = scalar_lea.vmem %s0, 13
    %v306 = vld [vmem:[%s305] sm:$0x1]
    %307 = vrot.lane.b32.xlu0 %v306, 26
    %v308 = vpop.permute.xlu0 %307
    %vm309 = vcmask 228560
    %310 = vst.msk [vmem:[#allocation0] sm:$0x1] %vm309, %v308
    %s311 = scalar_lea.vmem %s0, 12
    %v312 = vld [vmem:[%s311] sm:$0x1]
    %313 = vrot.lane.b32.xlu0 %v312, 24
    %v314 = vpop.permute.xlu0 %313
    %vm315 = vcmask 212160
    %316 = vst.msk [vmem:[#allocation0] sm:$0x1] %vm315, %v314
    %s317 = scalar_lea.vmem %s0, 11
    %v318 = vld [vmem:[%s317] sm:$0x1]
    %319 = vrot.lane.b32.xlu0 %v318, 22
    %v320 = vpop.permute.xlu0 %319
    %vm321 = vcmask 195760
    %322 = vst.msk [vmem:[#allocation0] sm:$0x1] %vm321, %v320
    %s323 = scalar_lea.vmem %s0, 10
    %v324 = vld [vmem:[%s323] sm:$0x1]
    %325 = vrot.lane.b32.xlu0 %v324, 20
    %v326 = vpop.permute.xlu0 %325
    %vm327 = vcmask 179360
    %328 = vst.msk [vmem:[#allocation0] sm:$0x1] %vm327, %v326
    %s329 = scalar_lea.vmem %s0, 9
    %v330 = vld [vmem:[%s329] sm:$0x1]
    %331 = vrot.lane.b32.xlu0 %v330, 18
    %v332 = vpop.permute.xlu0 %331
    %vm333 = vcmask 162960
    %334 = vst.msk [vmem:[#allocation0] sm:$0x1] %vm333, %v332
    %s335 = scalar_lea.vmem %s0, 8
    %v336 = vld [vmem:[%s335] sm:$0x1]
    %337 = vrot.lane.b32.xlu0 %v336, 16
    %v338 = vpop.permute.xlu0 %337
    %vm339 = vcmask 146560
    %340 = vst.msk [vmem:[#allocation0] sm:$0x1] %vm339, %v338
    %s341 = scalar_lea.vmem %s0, 7
    %v342 = vld [vmem:[%s341] sm:$0x1]
    %343 = vrot.lane.b32.xlu0 %v342, 14
    %v344 = vpop.permute.xlu0 %343
    %vm345 = vcmask 130160
    %346 = vst.msk [vmem:[#allocation0] sm:$0x1] %vm345, %v344
    %s347 = scalar_lea.vmem %s0, 6
    %v348 = vld [vmem:[%s347] sm:$0x1]
    %349 = vrot.lane.b32.xlu0 %v348, 12
    %v350 = vpop.permute.xlu0 %349
    %vm351 = vcmask 113760
    %352 = vst.msk [vmem:[#allocation0] sm:$0x1] %vm351, %v350
    %s353 = scalar_lea.vmem %s0, 5
    %v354 = vld [vmem:[%s353] sm:$0x1]
    %355 = vrot.lane.b32.xlu0 %v354, 10
    %v356 = vpop.permute.xlu0 %355
    %vm357 = vcmask 97360
    %358 = vst.msk [vmem:[#allocation0] sm:$0x1] %vm357, %v356
    %s359 = scalar_lea.vmem %s0, 4
    %v360 = vld [vmem:[%s359] sm:$0x1]
    %361 = vrot.lane.b32.xlu0 %v360, 8
    %v362 = vpop.permute.xlu0 %361
    %vm363 = vcmask 80960
    %364 = vst.msk [vmem:[#allocation0] sm:$0x1] %vm363, %v362
    %s365 = scalar_lea.vmem %s0, 3
    %v366 = vld [vmem:[%s365] sm:$0x1]
    %367 = vrot.lane.b32.xlu0 %v366, 6
    %v368 = vpop.permute.xlu0 %367
    %vm369 = vcmask 64560
    %370 = vst.msk [vmem:[#allocation0] sm:$0x1] %vm369, %v368
    %s371 = scalar_lea.vmem %s0, 2
    %v372 = vld [vmem:[%s371] sm:$0x1]
    %373 = vrot.lane.b32.xlu0 %v372, 4
    %v374 = vpop.permute.xlu0 %373
    %vm375 = vcmask 48160
    %376 = vst.msk [vmem:[#allocation0] sm:$0x1] %vm375, %v374
    %s377 = scalar_lea.vmem %s0, 1
    %v378 = vld [vmem:[%s377] sm:$0x1]
    %379 = vrot.lane.b32.xlu0 %v378, 2
    %v380 = vpop.permute.xlu0 %379
    %vm381 = vcmask 31760
    %382 = vst.msk [vmem:[#allocation0] sm:$0x1] %vm381, %v380
    %s384 = sshllo.u32 0, 1
    %v386 = vld [vmem:[#allocation0] sm:%s384]
    %s387 = sshllo.u32 0, 1
    %388 = vst [vmem:[%s1] sm:%s387] %v386

// kernel: joint_transformer_block.13
$region0: #{joint_transformer_block.13}
  #allocation0 [shape = 'u32[]', space=smem, size = 0x4, offset = 0x4, fixed_abs, tag = 'smem constant byte address 0x4 - core index']
  #allocation1 [shape = 'u32[144,128]{1,0:T(1,128)}', space=vmem, size = 0x12000, scoped, tag = 'internal scratch']
  #allocation2 [shape = 'f32[8,384]{1,0:T(8,128)}', space=vmem, size = 0x3000, scoped, tag = 'scratch operand']
  %s0 = inlined_call_operand.vmem [shape: bf16[16,256], index: 0, kind: input, shape index: {}]
  %s1 = inlined_call_operand.vmem [shape: bf16[2,256,768], index: 1, kind: input, shape index: {}]
  %s2 = inlined_call_operand.vmem [shape: bf16[2,1,768], index: 2, kind: input, shape index: {}]
  %s3 = inlined_call_operand.vmem [shape: bf16[16,768], index: 3, kind: output, shape index: {}]
  %s4 = sld [smem:[#allocation0]]
  $region79: #{joint_transformer_block.13} parent=0
    _
  %s6 = ssub.s32 1, %s4
  %s7 = scalar_select 0, %s6, %s4
  $region1: #{joint_transformer_block.13} parent=0
    #allocation3 [shape = 'u8[393216]{0}', space=vmem, size = 0x60000, scoped, tag = 'input window, operand 1']
    loop: start=0, step=1, limit=6
    $region2: #{joint_transformer_block.13} parent=1 // loop_pre_header
      _
    $region3: #{joint_transformer_block.13} parent=1 // loop_header
      %s9 = sphi 0, %s13
      %p10 = scmp.ge.s32.totalorder %s9, 6
      %s16 = sphi 0, %s35
      %s17 = sphi 0, %s31
      %s18 = sphi 0, %s27
      %s19 = sphi 0, %s16
      %s20 = sphi 0, %s17
      %s21 = sphi 0, %s18
      %s22 = sphi 0, %s19
      %s23 = sphi 0, %s20
      %s24 = sphi 0, %s21
      %s40 = sphi 0, %s42
      %s43 = sphi 0, %s40
      %s44 = sphi 0, %s43
      %s60 = sphi 0, %s44
      %s74 = sphi 0, %s76
      %s77 = sphi 0, %s74
      %s78 = sphi 0, %s77
      %s94 = sphi 0, %s78
      %s106 = sphi 0, %s108
      %s109 = sphi 0, %s106
      %s110 = sphi 0, %s109
      %s126 = sphi 0, %s110
      %s134 = sphi 0, %s136
      %s137 = sphi 0, %s134
      %s138 = sphi 0, %s137
      %s154 = sphi 0, %s138
    $region4: #{joint_transformer_block.13} parent=1 // loop_header_branch
      %12 = sbr.rel (%p10) target = $region8
    $region5: #{joint_transformer_block.13} parent=1 // loop_body
      %s14 = ssub.s32 %s9, 1
      %s15 = ssub.s32 %s9, 2
      %s25 = sadd.s32 1, %s18
      %p26 = scmp.ge.s32.totalorder %s25, 1
      %s27 = scalar_select %p26, 0, %s25
      %s28 = sadd.s32 1, %s17
      %s29 = scalar_select %p26, %s28, %s17
      %p30 = scmp.ge.s32.totalorder %s29, 2
      %s31 = scalar_select %p30, 0, %s29
      %s32 = sadd.s32 1, %s16
      %s33 = scalar_select %p30, %s32, %s16
      %p34 = scmp.ge.s32.totalorder %s33, 2
      %s35 = scalar_select %p34, 0, %s33
      %s36 = ssub.s32 %s16, %s35
      %s37 = ssub.s32 %s18, %s27
      %s38 = sor.u32 %s36, %s37
      %p39 = scmp.eq.s32.totalorder %s38, 0
      %s41 = sadd.s32 %s40, 1
      %s42 = scalar_select %p39, %s40, %s41
      %p45 = pneg %p39
      %p46 = scmp.eq.s32.totalorder %s9, 3
      %p47 = por %p45, %p46
      %p48 = scmp.ne.s32.totalorder %s40, %s43
      %p49 = scmp.eq.s32.totalorder %s9, 0
      %p50 = por %p48, %p49
      %p51 = scmp.ne.s32.totalorder %s40, %s43
      %p52 = scmp.eq.s32.totalorder %s14, 3
      %p53 = por %p51, %p52
      %p54 = scmp.ne.s32.totalorder %s43, %s44
      %p55 = scmp.eq.s32.totalorder %s14, 0
      %p56 = por %p54, %p55
      %p57 = scmp.ne.s32.totalorder %s43, %s44
      %p58 = scmp.eq.s32.totalorder %s15, 3
      %p59 = por %p57, %p58
      %p61 = scmp.ne.s32.totalorder %s44, %s60
      %p62 = scmp.eq.s32.totalorder %s15, 0
      %p63 = por %p61, %p62
      %p64 = scmp.ge.s32.totalorder %s16, 1
      %s65 = scalar_select %p64, 1, 0
      %p66 = scmp.ge.s32.totalorder %s35, 1
      %s67 = scalar_select %p66, 1, 0
      %s68 = ssub.s32 %s65, %s67
      %s69 = ssub.s32 %s18, %s27
      %s70 = sor.u32 %s68, %s69
      %s71 = ssub.s32 %s17, %s31
      %s72 = sor.u32 %s70, %s71
      %p73 = scmp.eq.s32.totalorder %s72, 0
      %s75 = sadd.s32 %s74, 1
      %s76 = scalar_select %p73, %s74, %s75
      %p79 = pneg %p73
      %p80 = scmp.eq.s32.totalorder %s9, 3
      %p81 = por %p79, %p80
      %p82 = scmp.ne.s32.totalorder %s74, %s77
      %p83 = scmp.eq.s32.totalorder %s9, 0
      %p84 = por %p82, %p83
      %p85 = scmp.ne.s32.totalorder %s74, %s77
      %p86 = scmp.eq.s32.totalorder %s14, 3
      %p87 = por %p85, %p86
      %p88 = scmp.ne.s32.totalorder %s77, %s78
      %p89 = scmp.eq.s32.totalorder %s14, 0
      %p90 = por %p88, %p89
      %p91 = scmp.ne.s32.totalorder %s77, %s78
      %p92 = scmp.eq.s32.totalorder %s15, 3
      %p93 = por %p91, %p92
      %p95 = scmp.ne.s32.totalorder %s78, %s94
      %p96 = scmp.eq.s32.totalorder %s15, 0
      %p97 = por %p95, %p96
      %p98 = scmp.ge.s32.totalorder %s16, 1
      %s99 = scalar_select %p98, 1, 0
      %p100 = scmp.ge.s32.totalorder %s35, 1
      %s101 = scalar_select %p100, 1, 0
      %s102 = ssub.s32 %s99, %s101
      %s103 = ssub.s32 %s17, %s31
      %s104 = sor.u32 %s102, %s103
      %p105 = scmp.eq.s32.totalorder %s104, 0
      %s107 = sadd.s32 %s106, 1
      %s108 = scalar_select %p105, %s106, %s107
      %p111 = pneg %p105
      %p112 = scmp.eq.s32.totalorder %s9, 3
      %p113 = por %p111, %p112
      %p114 = scmp.ne.s32.totalorder %s106, %s109
      %p115 = scmp.eq.s32.totalorder %s9, 0
      %p116 = por %p114, %p115
      %p117 = scmp.ne.s32.totalorder %s106, %s109
      %p118 = scmp.eq.s32.totalorder %s14, 3
      %p119 = por %p117, %p118
      %p120 = scmp.ne.s32.totalorder %s109, %s110
      %p121 = scmp.eq.s32.totalorder %s14, 0
      %p122 = por %p120, %p121
      %p123 = scmp.ne.s32.totalorder %s109, %s110
      %p124 = scmp.eq.s32.totalorder %s15, 3
      %p125 = por %p123, %p124
      %p127 = scmp.ne.s32.totalorder %s110, %s126
      %p128 = scmp.eq.s32.totalorder %s15, 0
      %p129 = por %p127, %p128
      %s130 = ssub.s32 %s16, %s35
      %s131 = ssub.s32 %s17, %s31
      %s132 = sor.u32 %s130, %s131
      %p133 = scmp.eq.s32.totalorder %s132, 0
      %s135 = sadd.s32 %s134, 1
      %s136 = scalar_select %p133, %s134, %s135
      %p139 = pneg %p133
      %p140 = scmp.eq.s32.totalorder %s9, 3
      %p141 = por %p139, %p140
      %p142 = scmp.ne.s32.totalorder %s134, %s137
      %p143 = scmp.eq.s32.totalorder %s9, 0
      %p144 = por %p142, %p143
      %p145 = scmp.ne.s32.totalorder %s134, %s137
      %p146 = scmp.eq.s32.totalorder %s14, 3
      %p147 = por %p145, %p146
      %p148 = scmp.ne.s32.totalorder %s137, %s138
      %p149 = scmp.eq.s32.totalorder %s14, 0
      %p150 = por %p148, %p149
      %p151 = scmp.ne.s32.totalorder %s137, %s138
      %p152 = scmp.eq.s32.totalorder %s15, 3
      %p153 = por %p151, %p152
      %p155 = scmp.ne.s32.totalorder %s138, %s154
      %p156 = scmp.eq.s32.totalorder %s15, 0
      %p157 = por %p155, %p156
      %p158 = scmp.le.s32.totalorder 1, %s9
      %p159 = scmp.lt.s32.totalorder %s9, 5
      %p160 = pnand %p158, %p159
      %p161 = pneg %p160
      // Predicated region
      $region9: #{joint_transformer_block.13} parent=5 // pred_check
        _
      $region10: #{joint_transformer_block.13} parent=5 // pred_check_branch
        %163 = sbr.rel (%p160) target = $region12
      $region11: #{joint_transformer_block.13} parent=5 // pred_region
        %s164 = ssub.s32 %s9, 1
      $region12: #{joint_transformer_block.13} parent=5 // pred_fallthru
        _
      %p165 = scmp.lt.s32.totalorder %s9, 4
      // Predicated region
      $region13: #{joint_transformer_block.13} parent=5 // pred_check
        %p166 = pneg %p165
      $region14: #{joint_transformer_block.13} parent=5 // pred_check_branch
        %168 = sbr.rel (%p166) target = $region16
      $region15: #{joint_transformer_block.13} parent=5 // pred_region
        // Predicated region
        $region17: #{joint_transformer_block.13} parent=15 // pred_check
          %p169 = pneg %p50
        $region18: #{joint_transformer_block.13} parent=15 // pred_check_branch
          %171 = sbr.rel (%p169) target = $region20
        $region19: #{joint_transformer_block.13} parent=15 // pred_region
          %s172 = smul.u32 2, %s18
          %p173 = scmp.lt.s32.totalorder %s16, 1
          %s174 = scalar_select %p173, %s16, 1
          %p175 = scmp.lt.s32.totalorder %s172, 1
          %s176 = scalar_select %p175, %s172, 1
          %s177 = smul.addr %s174, 2
          %s178 = sadd.s32 %s176, %s177
          %s179 = smul.addr %s178, 4
          %s180 = scalar_lea.vmem %s0, %s179
          %s181 = smul.u32 2, %s18
        $region20: #{joint_transformer_block.13} parent=15 // pred_fallthru
          _
        // Predicated region
        $region21: #{joint_transformer_block.13} parent=15 // pred_check
          %p182 = pneg %p84
        $region22: #{joint_transformer_block.13} parent=15 // pred_check_branch
          %184 = sbr.rel (%p182) target = $region24
        $region23: #{joint_transformer_block.13} parent=15 // pred_region
          %s185 = sand.u32 %s74, 1
          %s186 = sand.u32 %s74, 1
          %s187 = smul.addr %s186, 384
          %s188 = scalar_lea.vmem [#allocation3], %s187
          %p189 = scmp.ge.s32.totalorder %s16, 1
          %s190 = scalar_select %p189, 1, 0
          %s191 = smul.u32 32, %s18
          %s192 = smul.u32 3, %s17
          %s193 = smul.addr %s191, 6
          %s194 = sadd.s32 %s192, %s193
          %s195 = smul.addr %s190, 192
          %s196 = sadd.s32 %s194, %s195
          %s197 = smul.addr %s196, 4
          %s198 = scalar_lea.vmem %s1, %s197
          // Predicated region
          $region25: #{joint_transformer_block.13} parent=23 // pred_check
            _
          $region26: #{joint_transformer_block.13} parent=23 // pred_check_branch
            %200 = sbr.rel (0) target = $region28
          $region27: #{joint_transformer_block.13} parent=23 // pred_region
            // Predicated region
            $region29: #{joint_transformer_block.13} parent=27 // pred_check
              _
            $region30: #{joint_transformer_block.13} parent=27 // pred_check_branch
              %202 = sbr.rel (0) target = $region32
            $region31: #{joint_transformer_block.13} parent=27 // pred_region
              %s203 = scalar_lea.vmem %s198, 8
              %s204 = scalar_lea.vmem %s188, 8 [#allocation3]
              loop: start=0, step=1, limit=1
              $region33: #{joint_transformer_block.13} parent=31 // loop_pre_header
                _
              $region34: #{joint_transformer_block.13} parent=31 // loop_header
                %s206 = sphi 0, %s210
                %p207 = scmp.ge.s32.totalorder %s206, 1
                %s211 = sphi %s198, %s198
                %s212 = sphi %s188, %s188
              $region35: #{joint_transformer_block.13} parent=31 // loop_header_branch
                %209 = sbr.rel (%p207) target = $region39
              $region36: #{joint_transformer_block.13} parent=31 // loop_body
                %v213 = vld [vmem:[%s211] sm:$0xff]
                %214 = vst [vmem:[%s212] sm:$0xff] %v213
                %v215 = vld [vmem:[%s211 + $0x18] sm:$0xff]
                %216 = vst [vmem:[%s212 + $0xc] sm:$0xff] %v215
                %v217 = vld [vmem:[%s211 + $0x30] sm:$0xff]
                %218 = vst [vmem:[%s212 + $0x18] sm:$0xff] %v217
                %v219 = vld [vmem:[%s211 + $0x48] sm:$0xff]
                %220 = vst [vmem:[%s212 + $0x24] sm:$0xff] %v219
                %v221 = vld [vmem:[%s211 + $0x60] sm:$0xff]
                %222 = vst [vmem:[%s212 + $0x30] sm:$0xff] %v221
                %v223 = vld [vmem:[%s211 + $0x78] sm:$0xff]
                %224 = vst [vmem:[%s212 + $0x3c] sm:$0xff] %v223
                %v225 = vld [vmem:[%s211 + $0x90] sm:$0xff]
                %226 = vst [vmem:[%s212 + $0x48] sm:$0xff] %v225
                %v227 = vld [vmem:[%s211 + $0xa8] sm:$0xff]
                %228 = vst [vmem:[%s212 + $0x54] sm:$0xff] %v227
                %v229 = vld [vmem:[%s211 + $0xc0] sm:$0xff]
                %230 = vst [vmem:[%s212 + $0x60] sm:$0xff] %v229
                %v231 = vld [vmem:[%s211 + $0xd8] sm:$0xff]
                %232 = vst [vmem:[%s212 + $0x6c] sm:$0xff] %v231
                %v233 = vld [vmem:[%s211 + $0xf0] sm:$0xff]
                %234 = vst [vmem:[%s212 + $0x78] sm:$0xff] %v233
                %v235 = vld [vmem:[%s211 + $0x108] sm:$0xff]
                %236 = vst [vmem:[%s212 + $0x84] sm:$0xff] %v235
                %v237 = vld [vmem:[%s211 + $0x120] sm:$0xff]
                %238 = vst [vmem:[%s212 + $0x90] sm:$0xff] %v237
                %v239 = vld [vmem:[%s211 + $0x138] sm:$0xff]
                %240 = vst [vmem:[%s212 + $0x9c] sm:$0xff] %v239
                %v241 = vld [vmem:[%s211 + $0x150] sm:$0xff]
                %242 = vst [vmem:[%s212 + $0xa8] sm:$0xff] %v241
                %v243 = vld [vmem:[%s211 + $0x168] sm:$0xff]
                %244 = vst [vmem:[%s212 + $0xb4] sm:$0xff] %v243
                %v245 = vld [vmem:[%s211 + $0x180] sm:$0xff]
                %246 = vst [vmem:[%s212 + $0xc0] sm:$0xff] %v245
                %v247 = vld [vmem:[%s211 + $0x198] sm:$0xff]
                %248 = vst [vmem:[%s212 + $0xcc] sm:$0xff] %v247
                %v249 = vld [vmem:[%s211 + $0x1b0] sm:$0xff]
                %250 = vst [vmem:[%s212 + $0xd8] sm:$0xff] %v249
                %v251 = vld [vmem:[%s211 + $0x1c8] sm:$0xff]
                %252 = vst [vmem:[%s212 + $0xe4] sm:$0xff] %v251
                %v253 = vld [vmem:[%s211 + $0x1e0] sm:$0xff]
                %254 = vst [vmem:[%s212 + $0xf0] sm:$0xff] %v253
                %v255 = vld [vmem:[%s211 + $0x1f8] sm:$0xff]
                %256 = vst [vmem:[%s212 + $0xfc] sm:$0xff] %v255
                %v257 = vld [vmem:[%s211 + $0x210] sm:$0xff]
                %258 = vst [vmem:[%s212 + $0x108] sm:$0xff] %v257
                %v259 = vld [vmem:[%s211 + $0x228] sm:$0xff]
                %260 = vst [vmem:[%s212 + $0x114] sm:$0xff] %v259
                %v261 = vld [vmem:[%s211 + $0x240] sm:$0xff]
                %262 = vst [vmem:[%s212 + $0x120] sm:$0xff] %v261
                %v263 = vld [vmem:[%s211 + $0x258] sm:$0xff]
                %264 = vst [vmem:[%s212 + $0x12c] sm:$0xff] %v263
                %v265 = vld [vmem:[%s211 + $0x270] sm:$0xff]
                %266 = vst [vmem:[%s212 + $0x138] sm:$0xff] %v265
                %v267 = vld [vmem:[%s211 + $0x288] sm:$0xff]
                %268 = vst [vmem:[%s212 + $0x144] sm:$0xff] %v267
                %v269 = vld [vmem:[%s211 + $0x2a0] sm:$0xff]
                %270 = vst [vmem:[%s212 + $0x150] sm:$0xff] %v269
                %v271 = vld [vmem:[%s211 + $0x2b8] sm:$0xff]
                %272 = vst [vmem:[%s212 + $0x15c] sm:$0xff] %v271
                %v273 = vld [vmem:[%s211 + $0x2d0] sm:$0xff]
                %274 = vst [vmem:[%s212 + $0x168] sm:$0xff] %v273
                %v275 = vld [vmem:[%s211 + $0x2e8] sm:$0xff]
                %276 = vst [vmem:[%s212 + $0x174] sm:$0xff] %v275
              $region37: #{joint_transformer_block.13} parent=31 // loop_footer
                %s210 = sadd.s32 1, %s206
              $region38: #{joint_transformer_block.13} parent=31 // loop_footer_branch
                %205 = sbr.rel target = $region34
              $region39: #{joint_transformer_block.13} parent=31 // loop_exit
                _
              loop: start=0, step=1, limit=1
              $region40: #{joint_transformer_block.13} parent=31 // loop_pre_header
                _
              $region41: #{joint_transformer_block.13} parent=31 // loop_header
                %s279 = sphi 0, %s283
                %p280 = scmp.ge.s32.totalorder %s279, 1
                %s284 = sphi %s203, %s203
                %s285 = sphi %s204, %s204
              $region42: #{joint_transformer_block.13} parent=31 // loop_header_branch
                %282 = sbr.rel (%p280) target = $region46
              $region43: #{joint_transformer_block.13} parent=31 // loop_body
                %v286 = vld [vmem:[%s284] sm:$0xf]
                %287 = vst [vmem:[%s285] sm:$0xf] %v286
                %v288 = vld [vmem:[%s284 + $0x18] sm:$0xf]
                %289 = vst [vmem:[%s285 + $0xc] sm:$0xf] %v288
                %v290 = vld [vmem:[%s284 + $0x30] sm:$0xf]
                %291 = vst [vmem:[%s285 + $0x18] sm:$0xf] %v290
                %v292 = vld [vmem:[%s284 + $0x48] sm:$0xf]
                %293 = vst [vmem:[%s285 + $0x24] sm:$0xf] %v292
                %v294 = vld [vmem:[%s284 + $0x60] sm:$0xf]
                %295 = vst [vmem:[%s285 + $0x30] sm:$0xf] %v294
                %v296 = vld [vmem:[%s284 + $0x78] sm:$0xf]
                %297 = vst [vmem:[%s285 + $0x3c] sm:$0xf] %v296
                %v298 = vld [vmem:[%s284 + $0x90] sm:$0xf]
                %299 = vst [vmem:[%s285 + $0x48] sm:$0xf] %v298
                %v300 = vld [vmem:[%s284 + $0xa8] sm:$0xf]
                %301 = vst [vmem:[%s285 + $0x54] sm:$0xf] %v300
                %v302 = vld [vmem:[%s284 + $0xc0] sm:$0xf]
                %303 = vst [vmem:[%s285 + $0x60] sm:$0xf] %v302
                %v304 = vld [vmem:[%s284 + $0xd8] sm:$0xf]
                %305 = vst [vmem:[%s285 + $0x6c] sm:$0xf] %v304
                %v306 = vld [vmem:[%s284 + $0xf0] sm:$0xf]
                %307 = vst [vmem:[%s285 + $0x78] sm:$0xf] %v306
                %v308 = vld [vmem:[%s284 + $0x108] sm:$0xf]
                %309 = vst [vmem:[%s285 + $0x84] sm:$0xf] %v308
                %v310 = vld [vmem:[%s284 + $0x120] sm:$0xf]
                %311 = vst [vmem:[%s285 + $0x90] sm:$0xf] %v310
                %v312 = vld [vmem:[%s284 + $0x138] sm:$0xf]
                %313 = vst [vmem:[%s285 + $0x9c] sm:$0xf] %v312
                %v314 = vld [vmem:[%s284 + $0x150] sm:$0xf]
                %315 = vst [vmem:[%s285 + $0xa8] sm:$0xf] %v314
                %v316 = vld [vmem:[%s284 + $0x168] sm:$0xf]
                %317 = vst [vmem:[%s285 + $0xb4] sm:$0xf] %v316
                %v318 = vld [vmem:[%s284 + $0x180] sm:$0xf]
                %319 = vst [vmem:[%s285 + $0xc0] sm:$0xf] %v318
                %v320 = vld [vmem:[%s284 + $0x198] sm:$0xf]
                %321 = vst [vmem:[%s285 + $0xcc] sm:$0xf] %v320
                %v322 = vld [vmem:[%s284 + $0x1b0] sm:$0xf]
                %323 = vst [vmem:[%s285 + $0xd8] sm:$0xf] %v322
                %v324 = vld [vmem:[%s284 + $0x1c8] sm:$0xf]
                %325 = vst [vmem:[%s285 + $0xe4] sm:$0xf] %v324
                %v326 = vld [vmem:[%s284 + $0x1e0] sm:$0xf]
                %327 = vst [vmem:[%s285 + $0xf0] sm:$0xf] %v326
                %v328 = vld [vmem:[%s284 + $0x1f8] sm:$0xf]
                %329 = vst [vmem:[%s285 + $0xfc] sm:$0xf] %v328
                %v330 = vld [vmem:[%s284 + $0x210] sm:$0xf]
                %331 = vst [vmem:[%s285 + $0x108] sm:$0xf] %v330
                %v332 = vld [vmem:[%s284 + $0x228] sm:$0xf]
                %333 = vst [vmem:[%s285 + $0x114] sm:$0xf] %v332
                %v334 = vld [vmem:[%s284 + $0x240] sm:$0xf]
                %335 = vst [vmem:[%s285 + $0x120] sm:$0xf] %v334
                %v336 = vld [vmem:[%s284 + $0x258] sm:$0xf]
                %337 = vst [vmem:[%s285 + $0x12c] sm:$0xf] %v336
                %v338 = vld [vmem:[%s284 + $0x270] sm:$0xf]
                %339 = vst [vmem:[%s285 + $0x138] sm:$0xf] %v338
                %v340 = vld [vmem:[%s284 + $0x288] sm:$0xf]
                %341 = vst [vmem:[%s285 + $0x144] sm:$0xf] %v340
                %v342 = vld [vmem:[%s284 + $0x2a0] sm:$0xf]
                %343 = vst [vmem:[%s285 + $0x150] sm:$0xf] %v342
                %v344 = vld [vmem:[%s284 + $0x2b8] sm:$0xf]
                %345 = vst [vmem:[%s285 + $0x15c] sm:$0xf] %v344
                %v346 = vld [vmem:[%s284 + $0x2d0] sm:$0xf]
                %347 = vst [vmem:[%s285 + $0x168] sm:$0xf] %v346
                %v348 = vld [vmem:[%s284 + $0x2e8] sm:$0xf]
                %349 = vst [vmem:[%s285 + $0x174] sm:$0xf] %v348
              $region44: #{joint_transformer_block.13} parent=31 // loop_footer
                %s283 = sadd.s32 1, %s279
              $region45: #{joint_transformer_block.13} parent=31 // loop_footer_branch
                %278 = sbr.rel target = $region41
              $region46: #{joint_transformer_block.13} parent=31 // loop_exit
                _
            $region32: #{joint_transformer_block.13} parent=27 // pred_fallthru
              _
          $region28: #{joint_transformer_block.13} parent=23 // pred_fallthru
            _
          %350 = vnop
        $region24: #{joint_transformer_block.13} parent=15 // pred_fallthru
          _
        // Predicated region
        $region47: #{joint_transformer_block.13} parent=15 // pred_check
          %p351 = pneg %p116
        $region48: #{joint_transformer_block.13} parent=15 // pred_check_branch
          %353 = sbr.rel (%p351) target = $region50
        $region49: #{joint_transformer_block.13} parent=15 // pred_region
          %p354 = scmp.ge.s32.totalorder %s16, 1
          %s355 = scalar_select %p354, 1, 0
          %s356 = smul.u32 3, %s17
          %p357 = scmp.lt.s32.totalorder %s355, 1
          %s358 = scalar_select %p357, %s355, 1
          %p359 = scmp.lt.s32.totalorder %s356, 5
          %s360 = scalar_select %p359, %s356, 5
          %s361 = smul.addr %s358, 6
          %s362 = sadd.s32 %s360, %s361
          %s363 = scalar_lea.vmem %s2, %s362
          %p364 = scmp.ge.s32.totalorder %s16, 1
          %s365 = scalar_select %p364, 1, 0
          %s366 = smul.u32 3, %s17
        $region50: #{joint_transformer_block.13} parent=15 // pred_fallthru
          _
      $region16: #{joint_transformer_block.13} parent=5 // pred_fallthru
        _
      %p367 = scmp.le.s32.totalorder 1, %s9
      %p368 = scmp.lt.s32.totalorder %s9, 5
      %p369 = pnand %p367, %p368
      %p370 = pneg %p369
      // Predicated region
      $region51: #{joint_transformer_block.13} parent=5 // pred_check
        _
      $region52: #{joint_transformer_block.13} parent=5 // pred_check_branch
        %372 = sbr.rel (%p369) target = $region54
      $region53: #{joint_transformer_block.13} parent=5 // pred_region
        %s373 = ssub.s32 %s9, 1
        %s374 = sand.u32 %s77, 1
        %s375 = sand.u32 %s77, 1
        %s376 = smul.addr %s375, 384
        %s377 = scalar_lea.vmem [#allocation3], %s376
        // Predicated region
        $region55: #{joint_transformer_block.13} parent=53 // pred_check
          %p378 = pneg %p90
        $region56: #{joint_transformer_block.13} parent=53 // pred_check_branch
          %380 = sbr.rel (%p378) target = $region58
        $region57: #{joint_transformer_block.13} parent=53 // pred_region
          _
        $region58: #{joint_transformer_block.13} parent=53 // pred_fallthru
          _
        %s381 = smul.u32 2, %s21
        %p382 = scmp.lt.s32.totalorder %s19, 1
        %s383 = scalar_select %p382, %s19, 1
        %p384 = scmp.lt.s32.totalorder %s381, 1
        %s385 = scalar_select %p384, %s381, 1
        %s386 = smul.addr %s383, 2
        %s387 = sadd.s32 %s385, %s386
        %s388 = smul.addr %s387, 4
        %s389 = scalar_lea.vmem %s0, %s388
        %p390 = pneg %p56
        %p391 = pneg %p53
        %s392 = sand.u32 %s77, 1
        %s393 = sand.u32 %s77, 1
        %s394 = smul.addr %s393, 384
        %s395 = scalar_lea.vmem [#allocation3], %s394
        %p396 = pneg %p90
        %p397 = pneg %p87
        %p398 = scmp.ge.s32.totalorder %s19, 1
        %s399 = scalar_select %p398, 1, 0
        %s400 = smul.u32 3, %s20
        %p401 = scmp.lt.s32.totalorder %s399, 1
        %s402 = scalar_select %p401, %s399, 1
        %p403 = scmp.lt.s32.totalorder %s400, 5
        %s404 = scalar_select %p403, %s400, 5
        %s405 = smul.addr %s402, 6
        %s406 = sadd.s32 %s404, %s405
        %s407 = scalar_lea.vmem %s2, %s406
        %p408 = pneg %p122
        %p409 = pneg %p119
        %p410 = pneg %p150
        %p411 = pneg %p147
        %s412 = smul.u32 3, %s20
        %p413 = scmp.lt.s32.totalorder %s19, 1
        %s414 = scalar_select %p413, %s19, 1
        %p415 = scmp.lt.s32.totalorder %s412, 5
        %s416 = scalar_select %p415, %s412, 5
        %s417 = smul.addr %s414, 6
        %s418 = sadd.s32 %s416, %s417
        %s419 = smul.addr %s418, 4
        %s420 = scalar_lea.vmem %s3, %s419
        %s421 = smul.u32 2, %s21
        %p422 = scmp.lt.s32.totalorder %s19, 1
        %s423 = scalar_select %p422, %s19, 1
        %p424 = scmp.lt.s32.totalorder %s421, 1
        %s425 = scalar_select %p424, %s421, 1
        %s426 = smul.addr %s423, 2
        %s427 = sadd.s32 %s425, %s426
        %s428 = smul.addr %s427, 4
        %s429 = scalar_lea.vmem %s0, %s428
        %s430 = smul.u32 2, %s21
        %p431 = scmp.ge.s32.totalorder %s19, 1
        %s432 = scalar_select %p431, 1, 0
        %s433 = smul.u32 32, %s21
        %s434 = smul.u32 3, %s20
        %p435 = scmp.ge.s32.totalorder %s19, 1
        %s436 = scalar_select %p435, 1, 0
        %s437 = smul.u32 3, %s20
        %p438 = scmp.lt.s32.totalorder %s436, 1
        %s439 = scalar_select %p438, %s436, 1
        %p440 = scmp.lt.s32.totalorder %s437, 5
        %s441 = scalar_select %p440, %s437, 5
        %s442 = smul.addr %s439, 6
        %s443 = sadd.s32 %s441, %s442
        %s444 = scalar_lea.vmem %s2, %s443
        %p445 = scmp.ge.s32.totalorder %s19, 1
        %s446 = scalar_select %p445, 1, 0
        %s447 = smul.u32 3, %s20
        %s448 = smul.u32 3, %s20
        %p449 = scmp.lt.s32.totalorder %s19, 1
        %s450 = scalar_select %p449, %s19, 1
        %p451 = scmp.lt.s32.totalorder %s448, 5
        %s452 = scalar_select %p451, %s448, 5
        %s453 = smul.addr %s450, 6
        %s454 = sadd.s32 %s452, %s453
        %s455 = smul.addr %s454, 4
        %s456 = scalar_lea.vmem %s3, %s455
        %s457 = smul.u32 3, %s20
        %p459 = scmp.eq.s32.totalorder %s21, 0
        // Predicated region
        $region59: #{joint_transformer_block.13} parent=53 // pred_check
          %p460 = pneg %p459
        $region60: #{joint_transformer_block.13} parent=53 // pred_check_branch
          %462 = sbr.rel (%p460) target = $region62
        $region61: #{joint_transformer_block.13} parent=53 // pred_region
          %463 = vst [vmem:[#allocation2] sm:$0xff] 0.0
          %464 = vst [vmem:[#allocation2 + $0x8] sm:$0xff] 0.0
          %465 = vst [vmem:[#allocation2 + $0x10] sm:$0xff] 0.0
        $region62: #{joint_transformer_block.13} parent=53 // pred_fallthru
          _
        %v466 = vld [vmem:[#allocation2] sm:$0xff]
        %v467 = vld [vmem:[#allocation2 + $0x8] sm:$0xff]
        %v468 = vld [vmem:[#allocation2 + $0x10] sm:$0xff]
        %v469 = vld [vmem:[%s429] sm:$0xff]
        %v470 = vld [vmem:[%s377] sm:$0xff]
        %v471 = vld [vmem:[%s377 + $0x8] sm:$0xf]
        %v472 = vld [vmem:[%s377 + $0xc] sm:$0xff]
        %v473 = vld [vmem:[%s377 + $0x14] sm:$0xf]
        %v474 = vld [vmem:[%s377 + $0x18] sm:$0xff]
        %v475 = vld [vmem:[%s377 + $0x20] sm:$0xf]
        %v476 = vld [vmem:[%s377 + $0x24] sm:$0xff]
        %v477 = vld [vmem:[%s377 + $0x2c] sm:$0xf]
        %v478 = vld [vmem:[%s377 + $0x30] sm:$0xff]
        %v479 = vld [vmem:[%s377 + $0x38] sm:$0xf]
        %v480 = vld [vmem:[%s377 + $0x3c] sm:$0xff]
        %v481 = vld [vmem:[%s377 + $0x44] sm:$0xf]
        %v482 = vld [vmem:[%s377 + $0x48] sm:$0xff]
        %v483 = vld [vmem:[%s377 + $0x50] sm:$0xf]
        %v484 = vld [vmem:[%s377 + $0x54] sm:$0xff]
        %v485 = vld [vmem:[%s377 + $0x5c] sm:$0xf]
        %v486 = vld [vmem:[%s377 + $0x60] sm:$0xff]
        %v487 = vld [vmem:[%s377 + $0x68] sm:$0xf]
        %v488 = vld [vmem:[%s377 + $0x6c] sm:$0xff]
        %v489 = vld [vmem:[%s377 + $0x74] sm:$0xf]
        %v490 = vld [vmem:[%s377 + $0x78] sm:$0xff]
        %v491 = vld [vmem:[%s377 + $0x80] sm:$0xf]
        %v492 = vld [vmem:[%s377 + $0x84] sm:$0xff]
        %v493 = vld [vmem:[%s377 + $0x8c] sm:$0xf]
        %v494 = vld [vmem:[%s377 + $0x90] sm:$0xff]
        %v495 = vld [vmem:[%s377 + $0x98] sm:$0xf]
        %v496 = vld [vmem:[%s377 + $0x9c] sm:$0xff]
        %v497 = vld [vmem:[%s377 + $0xa4] sm:$0xf]
        %v498 = vld [vmem:[%s377 + $0xa8] sm:$0xff]
        %v499 = vld [vmem:[%s377 + $0xb0] sm:$0xf]
        %v500 = vld [vmem:[%s377 + $0xb4] sm:$0xff]
        %v501 = vld [vmem:[%s377 + $0xbc] sm:$0xf]
        %v502 = vld [vmem:[%s377 + $0xc0] sm:$0xff]
        %v503 = vld [vmem:[%s377 + $0xc8] sm:$0xf]
        %v504 = vld [vmem:[%s377 + $0xcc] sm:$0xff]
        %v505 = vld [vmem:[%s377 + $0xd4] sm:$0xf]
        %v506 = vld [vmem:[%s377 + $0xd8] sm:$0xff]
        %v507 = vld [vmem:[%s377 + $0xe0] sm:$0xf]
        %v508 = vld [vmem:[%s377 + $0xe4] sm:$0xff]
        %v509 = vld [vmem:[%s377 + $0xec] sm:$0xf]
        %v510 = vld [vmem:[%s377 + $0xf0] sm:$0xff]
        %v511 = vld [vmem:[%s377 + $0xf8] sm:$0xf]
        %v512 = vld [vmem:[%s377 + $0xfc] sm:$0xff]
        %v513 = vld [vmem:[%s377 + $0x104] sm:$0xf]
        %v514 = vld [vmem:[%s377 + $0x108] sm:$0xff]
        %v515 = vld [vmem:[%s377 + $0x110] sm:$0xf]
        %v516 = vld [vmem:[%s377 + $0x114] sm:$0xff]
        %v517 = vld [vmem:[%s377 + $0x11c] sm:$0xf]
        %v518 = vld [vmem:[%s377 + $0x120] sm:$0xff]
        %v519 = vld [vmem:[%s377 + $0x128] sm:$0xf]
        %v520 = vld [vmem:[%s377 + $0x12c] sm:$0xff]
        %v521 = vld [vmem:[%s377 + $0x134] sm:$0xf]
        %v522 = vld [vmem:[%s377 + $0x138] sm:$0xff]
        %v523 = vld [vmem:[%s377 + $0x140] sm:$0xf]
        %v524 = vld [vmem:[%s377 + $0x144] sm:$0xff]
        %v525 = vld [vmem:[%s377 + $0x14c] sm:$0xf]
        %v526 = vld [vmem:[%s377 + $0x150] sm:$0xff]
        %v527 = vld [vmem:[%s377 + $0x158] sm:$0xf]
        %v528 = vld [vmem:[%s377 + $0x15c] sm:$0xff]
        %v529 = vld [vmem:[%s377 + $0x164] sm:$0xf]
        %v530 = vld [vmem:[%s377 + $0x168] sm:$0xff]
        %v531 = vld [vmem:[%s377 + $0x170] sm:$0xf]
        %v532 = vld [vmem:[%s377 + $0x174] sm:$0xff]
        %v533 = vld [vmem:[%s377 + $0x17c] sm:$0xf]
        %v535 = vunpack.c.l.b16 %v469
        %v536 = vunpack.c.h.b16 %v469
        %v537 = vpack.c.b16 %v535, %v535
        %v538 = vpack.c.b16 %v536, %v536
        %v605 = vunpack.c.l.b16 %v470
        %v606 = vunpack.c.h.b16 %v470
        %v607 = vunpack.c.l.b16 %v471
        %v608 = vunpack.c.l.b16 %v472
        %v609 = vunpack.c.h.b16 %v472
        %v610 = vunpack.c.l.b16 %v473
        %v611 = vunpack.c.l.b16 %v474
        %v612 = vunpack.c.h.b16 %v474
        %v613 = vunpack.c.l.b16 %v475
        %v614 = vunpack.c.l.b16 %v476
        %v615 = vunpack.c.h.b16 %v476
        %v616 = vunpack.c.l.b16 %v477
        %v617 = vunpack.c.l.b16 %v478
        %v618 = vunpack.c.h.b16 %v478
        %v619 = vunpack.c.l.b16 %v479
        %v620 = vunpack.c.l.b16 %v480
        %v621 = vunpack.c.h.b16 %v480
        %v622 = vunpack.c.l.b16 %v481
        %v623 = vunpack.c.l.b16 %v482
        %v624 = vunpack.c.h.b16 %v482
        %v625 = vunpack.c.l.b16 %v483
        %v626 = vunpack.c.l.b16 %v484
        %v627 = vunpack.c.h.b16 %v484
        %v628 = vunpack.c.l.b16 %v485
        %v629 = vunpack.c.l.b16 %v486
        %v630 = vunpack.c.h.b16 %v486
        %v631 = vunpack.c.l.b16 %v487
        %v632 = vunpack.c.l.b16 %v488
        %v633 = vunpack.c.h.b16 %v488
        %v634 = vunpack.c.l.b16 %v489
        %v635 = vunpack.c.l.b16 %v490
        %v636 = vunpack.c.h.b16 %v490
        %v637 = vunpack.c.l.b16 %v491
        %v638 = vunpack.c.l.b16 %v492
        %v639 = vunpack.c.h.b16 %v492
        %v640 = vunpack.c.l.b16 %v493
        %v641 = vunpack.c.l.b16 %v494
        %v642 = vunpack.c.h.b16 %v494
        %v643 = vunpack.c.l.b16 %v495
        %v644 = vunpack.c.l.b16 %v496
        %v645 = vunpack.c.h.b16 %v496
        %v646 = vunpack.c.l.b16 %v497
        %v647 = vunpack.c.l.b16 %v498
        %v648 = vunpack.c.h.b16 %v498
        %v649 = vunpack.c.l.b16 %v499
        %v650 = vunpack.c.l.b16 %v500
        %v651 = vunpack.c.h.b16 %v500
        %v652 = vunpack.c.l.b16 %v501
        %v653 = vunpack.c.l.b16 %v502
        %v654 = vunpack.c.h.b16 %v502
        %v655 = vunpack.c.l.b16 %v503
        %v656 = vunpack.c.l.b16 %v504
        %v657 = vunpack.c.h.b16 %v504
        %v658 = vunpack.c.l.b16 %v505
        %v659 = vunpack.c.l.b16 %v506
        %v660 = vunpack.c.h.b16 %v506
        %v661 = vunpack.c.l.b16 %v507
        %v662 = vunpack.c.l.b16 %v508
        %v663 = vunpack.c.h.b16 %v508
        %v664 = vunpack.c.l.b16 %v509
        %v665 = vunpack.c.l.b16 %v510
        %v666 = vunpack.c.h.b16 %v510
        %v667 = vunpack.c.l.b16 %v511
        %v668 = vunpack.c.l.b16 %v512
        %v669 = vunpack.c.h.b16 %v512
        %v670 = vunpack.c.l.b16 %v513
        %v671 = vunpack.c.l.b16 %v514
        %v672 = vunpack.c.h.b16 %v514
        %v673 = vunpack.c.l.b16 %v515
        %v674 = vunpack.c.l.b16 %v516
        %v675 = vunpack.c.h.b16 %v516
        %v676 = vunpack.c.l.b16 %v517
        %v677 = vunpack.c.l.b16 %v518
        %v678 = vunpack.c.h.b16 %v518
        %v679 = vunpack.c.l.b16 %v519
        %v680 = vunpack.c.l.b16 %v520
        %v681 = vunpack.c.h.b16 %v520
        %v682 = vunpack.c.l.b16 %v521
        %v683 = vunpack.c.l.b16 %v522
        %v684 = vunpack.c.h.b16 %v522
        %v685 = vunpack.c.l.b16 %v523
        %v686 = vunpack.c.l.b16 %v524
        %v687 = vunpack.c.h.b16 %v524
        %v688 = vunpack.c.l.b16 %v525
        %v689 = vunpack.c.l.b16 %v526
        %v690 = vunpack.c.h.b16 %v526
        %v691 = vunpack.c.l.b16 %v527
        %v692 = vunpack.c.l.b16 %v528
        %v693 = vunpack.c.h.b16 %v528
        %v694 = vunpack.c.l.b16 %v529
        %v695 = vunpack.c.l.b16 %v530
        %v696 = vunpack.c.h.b16 %v530
        %v697 = vunpack.c.l.b16 %v531
        %v698 = vunpack.c.l.b16 %v532
        %v699 = vunpack.c.h.b16 %v532
        %v700 = vunpack.c.l.b16 %v533
        %v701 = vpack.c.b16 %v608, %v605
        %v702 = vpack.c.b16 %v609, %v606
        %v703 = vpack.c.b16 %v610, %v607
        %v704 = vpack.c.b16 %v614, %v611
        %v705 = vpack.c.b16 %v615, %v612
        %v706 = vpack.c.b16 %v616, %v613
        %v707 = vpack.c.b16 %v620, %v617
        %v708 = vpack.c.b16 %v621, %v618
        %v709 = vpack.c.b16 %v622, %v619
        %v710 = vpack.c.b16 %v626, %v623
        %v711 = vpack.c.b16 %v627, %v624
        %v712 = vpack.c.b16 %v628, %v625
        %v713 = vpack.c.b16 %v632, %v629
        %v714 = vpack.c.b16 %v633, %v630
        %v715 = vpack.c.b16 %v634, %v631
        %v716 = vpack.c.b16 %v638, %v635
        %v717 = vpack.c.b16 %v639, %v636
        %v718 = vpack.c.b16 %v640, %v637
        %v719 = vpack.c.b16 %v644, %v641
        %v720 = vpack.c.b16 %v645, %v642
        %v721 = vpack.c.b16 %v646, %v643
        %v722 = vpack.c.b16 %v650, %v647
        %v723 = vpack.c.b16 %v651, %v648
        %v724 = vpack.c.b16 %v652, %v649
        %v725 = vpack.c.b16 %v656, %v653
        %v726 = vpack.c.b16 %v657, %v654
        %v727 = vpack.c.b16 %v658, %v655
        %v728 = vpack.c.b16 %v662, %v659
        %v729 = vpack.c.b16 %v663, %v660
        %v730 = vpack.c.b16 %v664, %v661
        %v731 = vpack.c.b16 %v668, %v665
        %v732 = vpack.c.b16 %v669, %v666
        %v733 = vpack.c.b16 %v670, %v667
        %v734 = vpack.c.b16 %v674, %v671
        %v735 = vpack.c.b16 %v675, %v672
        %v736 = vpack.c.b16 %v676, %v673
        %v737 = vpack.c.b16 %v680, %v677
        %v738 = vpack.c.b16 %v681, %v678
        %v739 = vpack.c.b16 %v682, %v679
        %v740 = vpack.c.b16 %v686, %v683
        %v741 = vpack.c.b16 %v687, %v684
        %v742 = vpack.c.b16 %v688, %v685
        %v743 = vpack.c.b16 %v692, %v689
        %v744 = vpack.c.b16 %v693, %v690
        %v745 = vpack.c.b16 %v694, %v691
        %v746 = vpack.c.b16 %v698, %v695
        %v747 = vpack.c.b16 %v699, %v696
        %v748 = vpack.c.b16 %v700, %v697
        %797 = vmatprep.subr.bf16.mxu0 %v702
        %798 = vmatpush1.bf16.msra.mxu0 %v701
        %799 = vmatprep.subr.bf16.mxu0 %v705
        %800 = vmatpush1.bf16.msra.mxu0 %v704
        %801 = vmatprep.subr.bf16.mxu0 %v708
        %802 = vmatpush1.bf16.msra.mxu0 %v707
        %803 = vmatprep.subr.bf16.mxu0 %v711
        %804 = vmatpush1.bf16.msra.mxu0 %v710
        %805 = vmatprep.subr.bf16.mxu0 %v714
        %806 = vmatpush1.bf16.msra.mxu0 %v713
        %807 = vmatprep.subr.bf16.mxu0 %v717
        %808 = vmatpush1.bf16.msra.mxu0 %v716
        %809 = vmatprep.subr.bf16.mxu0 %v720
        %810 = vmatpush1.bf16.msra.mxu0 %v719
        %811 = vmatprep.subr.bf16.mxu0 %v723
        %812 = vmatpush1.bf16.msra.mxu0 %v722
        %813 = vmatprep.subr.bf16.mxu0 %v726
        %814 = vmatpush1.bf16.msra.mxu0 %v725
        %815 = vmatprep.subr.bf16.mxu0 %v729
        %816 = vmatpush1.bf16.msra.mxu0 %v728
        %817 = vmatprep.subr.bf16.mxu0 %v732
        %818 = vmatpush1.bf16.msra.mxu0 %v731
        %819 = vmatprep.subr.bf16.mxu0 %v735
        %820 = vmatpush1.bf16.msra.mxu0 %v734
        %821 = vmatprep.subr.bf16.mxu0 %v738
        %822 = vmatpush1.bf16.msra.mxu0 %v737
        %823 = vmatprep.subr.bf16.mxu0 %v741
        %824 = vmatpush1.bf16.msra.mxu0 %v740
        %825 = vmatprep.subr.bf16.mxu0 %v744
        %826 = vmatpush1.bf16.msra.mxu0 %v743
        %827 = vmatprep.subr.bf16.mxu0 %v747
        %828 = vmatpush1.bf16.msra.mxu0 %v746
        %829 = vmatprep.mubr.bf16.mxu0 %v538
        %830 = vmatmul.mubr.bf16.gmra.mrb[0].mxu0 %v537
        %v831 = vpop.f32.mrb[0].mxu0
        %v832 = vadd.f32 0.0, %v831
        %v833 = vpop.f32.mrb[0].mxu0
        %v834 = vadd.f32 0.0, %v833
        %v835 = vpop.f32.mrb[0].mxu0
        %v836 = vpop.f32.mrb[0].mxu0
        %837 = vdwg.mxu0
        %838 = vmatprep.subr.bf16.mxu0 0
        %839 = vmatpush1.bf16.msra.mxu0 %v703
        %840 = vmatprep.subr.bf16.mxu0 0
        %841 = vmatpush1.bf16.msra.mxu0 %v706
        %842 = vmatprep.subr.bf16.mxu0 0
        %843 = vmatpush1.bf16.msra.mxu0 %v709
        %844 = vmatprep.subr.bf16.mxu0 0
        %845 = vmatpush1.bf16.msra.mxu0 %v712
        %846 = vmatprep.subr.bf16.mxu0 0
        %847 = vmatpush1.bf16.msra.mxu0 %v715
        %848 = vmatprep.subr.bf16.mxu0 0
        %849 = vmatpush1.bf16.msra.mxu0 %v718
        %850 = vmatprep.subr.bf16.mxu0 0
        %851 = vmatpush1.bf16.msra.mxu0 %v721
        %852 = vmatprep.subr.bf16.mxu0 0
        %853 = vmatpush1.bf16.msra.mxu0 %v724
        %854 = vmatprep.subr.bf16.mxu0 0
        %855 = vmatpush1.bf16.msra.mxu0 %v727
        %856 = vmatprep.subr.bf16.mxu0 0
        %857 = vmatpush1.bf16.msra.mxu0 %v730
        %858 = vmatprep.subr.bf16.mxu0 0
        %859 = vmatpush1.bf16.msra.mxu0 %v733
        %860 = vmatprep.subr.bf16.mxu0 0
        %861 = vmatpush1.bf16.msra.mxu0 %v736
        %862 = vmatprep.subr.bf16.mxu0 0
        %863 = vmatpush1.bf16.msra.mxu0 %v739
        %864 = vmatprep.subr.bf16.mxu0 0
        %865 = vmatpush1.bf16.msra.mxu0 %v742
        %866 = vmatprep.subr.bf16.mxu0 0
        %867 = vmatpush1.bf16.msra.mxu0 %v745
        %868 = vmatprep.subr.bf16.mxu0 0
        %869 = vmatpush1.bf16.msra.mxu0 %v748
        %870 = vmatprep.mubr.bf16.mxu0 %v538
        %871 = vmatmul.mubr.bf16.gmra.mrb[0].mxu0 %v537
        %v872 = vpop.f32.mrb[0].mxu0
        %v873 = vadd.f32 0.0, %v872
        %v874 = vpop.f32.mrb[0].mxu0
        %v875 = vpop.f32.mrb[0].mxu0
        %v876 = vpop.f32.mrb[0].mxu0
        %877 = vdwg.mxu0
        %v878 = vadd.f32 %v466, %v832
        %v879 = vadd.f32 %v467, %v834
        %v880 = vadd.f32 %v468, %v873
        %881 = vst [vmem:[#allocation2] sm:$0xff] %v878
        %882 = vst [vmem:[#allocation2 + $0x8] sm:$0xff] %v879
        %883 = vst [vmem:[#allocation2 + $0x10] sm:$0xff] %v880
        // Predicated region
        $region63: #{joint_transformer_block.13} parent=53 // pred_check
          %p884 = pneg %p459
        $region64: #{joint_transformer_block.13} parent=53 // pred_check_branch
          %886 = sbr.rel (%p884) target = $region66
        $region65: #{joint_transformer_block.13} parent=53 // pred_region
          %v887 = vld [vmem:[#allocation2] sm:$0xff]
          %v888 = vld [vmem:[#allocation2 + $0x8] sm:$0xff]
          %v889 = vld [vmem:[#allocation2 + $0x10] sm:$0xff]
          %v890 = vld [vmem:[%s444] sm:$0x7]
          %v891 = vunpack.c.l.bf16 %v890
          %v893 = vlaneseq
          %v894 = vshrl.u32 %v893, 7
          %v895 = vsub.s32 0, %v894
          %v896 = vrot.slane %v891, %v895
          %v897 = vlaneseq
          %v898 = vshrl.u32 %v897, 7
          %v899 = vsub.s32 2, %v898
          %v900 = vrot.slane %v891, %v899
          %v901 = vlaneseq
          %v902 = vshrl.u32 %v901, 7
          %v903 = vsub.s32 4, %v902
          %v904 = vrot.slane %v891, %v903
          %v908 = vlaneseq
          %v909 = vshrl.u32 %v908, 7
          %v910 = vsub.s32 0, %v909
          %v911 = vrot.slane %v896, %v910
          %v912 = vlaneseq
          %v913 = vshrl.u32 %v912, 7
          %v914 = vsub.s32 0, %v913
          %v915 = vrot.slane %v900, %v914
          %v916 = vlaneseq
          %v917 = vshrl.u32 %v916, 7
          %v918 = vsub.s32 0, %v917
          %v919 = vrot.slane %v904, %v918
          %v920 = vadd.f32 %v887, %v911
          %v921 = vadd.f32 %v888, %v915
          %v922 = vadd.f32 %v889, %v919
          %v923 = vpack.c.bf16 %v920, %v920
          %v924 = vpack.c.bf16 %v921, %v921
          %v925 = vpack.c.bf16 %v922, %v922
          %v929 = vunpack.c.l.b16 %v923
          %v930 = vunpack.c.l.b16 %v924
          %v931 = vunpack.c.l.b16 %v925
          %v932 = vpack.c.b16 %v930, %v929
          %v933 = vpack.c.b16 %v931, %v931
          %936 = vst [vmem:[%s456] sm:$0xff] %v932
          %937 = vst [vmem:[%s456 + $0x8] sm:$0xf] %v933
        $region66: #{joint_transformer_block.13} parent=53 // pred_fallthru
          _
        %s938 = smul.u32 3, %s20
        %p939 = scmp.lt.s32.totalorder %s19, 1
        %s940 = scalar_select %p939, %s19, 1
        %p941 = scmp.lt.s32.totalorder %s938, 5
        %s942 = scalar_select %p941, %s938, 5
        %s943 = smul.addr %s940, 6
        %s944 = sadd.s32 %s942, %s943
        %s945 = smul.addr %s944, 4
        %s946 = scalar_lea.vmem %s3, %s945
        // Predicated region
        $region67: #{joint_transformer_block.13} parent=53 // pred_check
          %p947 = pneg %p147
        $region68: #{joint_transformer_block.13} parent=53 // pred_check_branch
          %949 = sbr.rel (%p947) target = $region70
        $region69: #{joint_transformer_block.13} parent=53 // pred_region
          %s950 = smul.u32 3, %s20
        $region70: #{joint_transformer_block.13} parent=53 // pred_fallthru
          _
      $region54: #{joint_transformer_block.13} parent=5 // pred_fallthru
        _
      %p951 = scmp.le.s32.totalorder 2, %s9
      // Predicated region
      $region71: #{joint_transformer_block.13} parent=5 // pred_check
        %p952 = pneg %p951
      $region72: #{joint_transformer_block.13} parent=5 // pred_check_branch
        %954 = sbr.rel (%p952) target = $region74
      $region73: #{joint_transformer_block.13} parent=5 // pred_region
        %s955 = ssub.s32 %s9, 2
        // Predicated region
        $region75: #{joint_transformer_block.13} parent=73 // pred_check
          %p956 = pneg %p153
        $region76: #{joint_transformer_block.13} parent=73 // pred_check_branch
          %958 = sbr.rel (%p956) target = $region78
        $region77: #{joint_transformer_block.13} parent=73 // pred_region
          %s959 = smul.u32 3, %s23
          %p960 = scmp.lt.s32.totalorder %s22, 1
          %s961 = scalar_select %p960, %s22, 1
          %p962 = scmp.lt.s32.totalorder %s959, 5
          %s963 = scalar_select %p962, %s959, 5
          %s964 = smul.addr %s961, 6
          %s965 = sadd.s32 %s963, %s964
          %s966 = smul.addr %s965, 4
          %s967 = scalar_lea.vmem %s3, %s966
        $region78: #{joint_transformer_block.13} parent=73 // pred_fallthru
          _
      $region74: #{joint_transformer_block.13} parent=5 // pred_fallthru
        _
    $region6: #{joint_transformer_block.13} parent=1 // loop_footer
      %s13 = sadd.s32 1, %s9
    $region7: #{joint_transformer_block.13} parent=1 // loop_footer_branch
      %8 = sbr.rel target = $region3
    $region8: #{joint_transformer_block.13} parent=1 // loop_exit
      _

// kernel: joint_transformer_block.14
$region0: #{joint_transformer_block.14}
  #allocation0 [shape = 'u32[]', space=smem, size = 0x4, offset = 0x4, fixed_abs, tag = 'smem constant byte address 0x4 - core index']
  #allocation1 [shape = 'u32[144,128]{1,0:T(1,128)}', space=vmem, size = 0x12000, scoped, tag = 'internal scratch']
  %s0 = inlined_call_operand.vmem [shape: bf16[16,768], index: 0, kind: input, shape index: {}, may-alias: {0,1}]
  %s1 = inlined_call_operand.vmem [shape: bf16[16,768], index: 1, kind: input, shape index: {}, may-alias: {0,1}]
  %s2 = inlined_call_operand.vmem [shape: bf16[16,128], index: 2, kind: input, shape index: {}]
  %s3 = inlined_call_operand.vmem [shape: bf16[16,128], index: 3, kind: input, shape index: {}]
  %s4 = inlined_call_operand.vmem [shape: bf16[16,128], index: 4, kind: input, shape index: {}]
  %s5 = inlined_call_operand.vmem [shape: bf16[16,128], index: 5, kind: input, shape index: {}]
  %s6 = inlined_call_operand.vmem [shape: bf16[16,256], index: 6, kind: output, shape index: {0}]
  %s7 = inlined_call_operand.vmem [shape: bf16[16,256], index: 7, kind: output, shape index: {1}]
  %8 = xla_tuple %s6, %s7
  %s9 = sld [smem:[#allocation0]]
  $region221: #{joint_transformer_block.14} parent=0
    _
  %s11 = ssub.s32 1, %s9
  %s12 = scalar_select 0, %s11, %s9
  $region1: #{joint_transformer_block.14} parent=0
    #allocation2 [shape = 'u8[8192]{0}', space=vmem, size = 0x2000, scoped, tag = 'input window, operand 0']
    #allocation3 [shape = 'u8[8192]{0}', space=vmem, size = 0x2000, scoped, tag = 'input window, operand 1']
    #allocation4 [shape = 'u8[8192]{0}', space=vmem, size = 0x2000, scoped, tag = 'output window, operand 0']
    #allocation5 [shape = 'u8[8192]{0}', space=vmem, size = 0x2000, scoped, tag = 'output window, operand 1']
    loop: start=0, step=1, limit=4
    $region2: #{joint_transformer_block.14} parent=1 // loop_pre_header
      _
    $region3: #{joint_transformer_block.14} parent=1 // loop_header
      %s14 = sphi 0, %s18
      %p15 = scmp.ge.s32.totalorder %s14, 4
      %s21 = sphi 0, %s33
      %s22 = sphi 0, %s29
      %s23 = sphi 0, %s21
      %s24 = sphi 0, %s22
      %s25 = sphi 0, %s23
      %s26 = sphi 0, %s24
      %s38 = sphi 0, %s40
      %s41 = sphi 0, %s38
      %s42 = sphi 0, %s41
      %s58 = sphi 0, %s42
      %s68 = sphi 0, %s70
      %s71 = sphi 0, %s68
      %s72 = sphi 0, %s71
      %s88 = sphi 0, %s72
      %s94 = sphi 0, %s96
      %s97 = sphi 0, %s94
      %s98 = sphi 0, %s97
      %s114 = sphi 0, %s98
      %s120 = sphi 0, %s122
      %s123 = sphi 0, %s120
      %s124 = sphi 0, %s123
      %s140 = sphi 0, %s124
      %s146 = sphi 0, %s148
      %s149 = sphi 0, %s146
      %s150 = sphi 0, %s149
      %s166 = sphi 0, %s150
      %s172 = sphi 0, %s174
      %s175 = sphi 0, %s172
      %s176 = sphi 0, %s175
      %s192 = sphi 0, %s176
      %s200 = sphi 0, %s202
      %s203 = sphi 0, %s200
      %s204 = sphi 0, %s203
      %s220 = sphi 0, %s204
      %s228 = sphi 0, %s230
      %s231 = sphi 0, %s228
      %s232 = sphi 0, %s231
      %s248 = sphi 0, %s232
    $region4: #{joint_transformer_block.14} parent=1 // loop_header_branch
      %17 = sbr.rel (%p15) target = $region8
    $region5: #{joint_transformer_block.14} parent=1 // loop_body
      %s19 = ssub.s32 %s14, 1
      %s20 = ssub.s32 %s14, 2
      %s27 = sadd.s32 1, %s22
      %p28 = scmp.ge.s32.totalorder %s27, 2
      %s29 = scalar_select %p28, 0, %s27
      %s30 = sadd.s32 1, %s21
      %s31 = scalar_select %p28, %s30, %s21
      %p32 = scmp.ge.s32.totalorder %s31, 1
      %s33 = scalar_select %p32, 0, %s31
      %s34 = ssub.s32 %s21, %s33
      %s35 = ssub.s32 %s22, %s29
      %s36 = sor.u32 %s34, %s35
      %p37 = scmp.eq.s32.totalorder %s36, 0
      %s39 = sadd.s32 %s38, 1
      %s40 = scalar_select %p37, %s38, %s39
      %p43 = pneg %p37
      %p44 = scmp.eq.s32.totalorder %s14, 1
      %p45 = por %p43, %p44
      %p46 = scmp.ne.s32.totalorder %s38, %s41
      %p47 = scmp.eq.s32.totalorder %s14, 0
      %p48 = por %p46, %p47
      %p49 = scmp.ne.s32.totalorder %s38, %s41
      %p50 = scmp.eq.s32.totalorder %s19, 1
      %p51 = por %p49, %p50
      %p52 = scmp.ne.s32.totalorder %s41, %s42
      %p53 = scmp.eq.s32.totalorder %s19, 0
      %p54 = por %p52, %p53
      %p55 = scmp.ne.s32.totalorder %s41, %s42
      %p56 = scmp.eq.s32.totalorder %s20, 1
      %p57 = por %p55, %p56
      %p59 = scmp.ne.s32.totalorder %s42, %s58
      %p60 = scmp.eq.s32.totalorder %s20, 0
      %p61 = por %p59, %p60
      %s62 = sadd.s32 %s22, 2
      %s63 = sadd.s32 %s29, 2
      %s64 = ssub.s32 %s21, %s33
      %s65 = ssub.s32 %s62, %s63
      %s66 = sor.u32 %s64, %s65
      %p67 = scmp.eq.s32.totalorder %s66, 0
      %s69 = sadd.s32 %s68, 1
      %s70 = scalar_select %p67, %s68, %s69
      %p73 = pneg %p67
      %p74 = scmp.eq.s32.totalorder %s14, 1
      %p75 = por %p73, %p74
      %p76 = scmp.ne.s32.totalorder %s68, %s71
      %p77 = scmp.eq.s32.totalorder %s14, 0
      %p78 = por %p76, %p77
      %p79 = scmp.ne.s32.totalorder %s68, %s71
      %p80 = scmp.eq.s32.totalorder %s19, 1
      %p81 = por %p79, %p80
      %p82 = scmp.ne.s32.totalorder %s71, %s72
      %p83 = scmp.eq.s32.totalorder %s19, 0
      %p84 = por %p82, %p83
      %p85 = scmp.ne.s32.totalorder %s71, %s72
      %p86 = scmp.eq.s32.totalorder %s20, 1
      %p87 = por %p85, %p86
      %p89 = scmp.ne.s32.totalorder %s72, %s88
      %p90 = scmp.eq.s32.totalorder %s20, 0
      %p91 = por %p89, %p90
      %s92 = ssub.s32 %s21, %s33
      %p93 = scmp.eq.s32.totalorder %s92, 0
      %s95 = sadd.s32 %s94, 1
      %s96 = scalar_select %p93, %s94, %s95
      %p99 = pneg %p93
      %p100 = scmp.eq.s32.totalorder %s14, 1
      %p101 = por %p99, %p100
      %p102 = scmp.ne.s32.totalorder %s94, %s97
      %p103 = scmp.eq.s32.totalorder %s14, 0
      %p104 = por %p102, %p103
      %p105 = scmp.ne.s32.totalorder %s94, %s97
      %p106 = scmp.eq.s32.totalorder %s19, 1
      %p107 = por %p105, %p106
      %p108 = scmp.ne.s32.totalorder %s97, %s98
      %p109 = scmp.eq.s32.totalorder %s19, 0
      %p110 = por %p108, %p109
      %p111 = scmp.ne.s32.totalorder %s97, %s98
      %p112 = scmp.eq.s32.totalorder %s20, 1
      %p113 = por %p111, %p112
      %p115 = scmp.ne.s32.totalorder %s98, %s114
      %p116 = scmp.eq.s32.totalorder %s20, 0
      %p117 = por %p115, %p116
      %s118 = ssub.s32 %s21, %s33
      %p119 = scmp.eq.s32.totalorder %s118, 0
      %s121 = sadd.s32 %s120, 1
      %s122 = scalar_select %p119, %s120, %s121
      %p125 = pneg %p119
      %p126 = scmp.eq.s32.totalorder %s14, 1
      %p127 = por %p125, %p126
      %p128 = scmp.ne.s32.totalorder %s120, %s123
      %p129 = scmp.eq.s32.totalorder %s14, 0
      %p130 = por %p128, %p129
      %p131 = scmp.ne.s32.totalorder %s120, %s123
      %p132 = scmp.eq.s32.totalorder %s19, 1
      %p133 = por %p131, %p132
      %p134 = scmp.ne.s32.totalorder %s123, %s124
      %p135 = scmp.eq.s32.totalorder %s19, 0
      %p136 = por %p134, %p135
      %p137 = scmp.ne.s32.totalorder %s123, %s124
      %p138 = scmp.eq.s32.totalorder %s20, 1
      %p139 = por %p137, %p138
      %p141 = scmp.ne.s32.totalorder %s124, %s140
      %p142 = scmp.eq.s32.totalorder %s20, 0
      %p143 = por %p141, %p142
      %s144 = ssub.s32 %s21, %s33
      %p145 = scmp.eq.s32.totalorder %s144, 0
      %s147 = sadd.s32 %s146, 1
      %s148 = scalar_select %p145, %s146, %s147
      %p151 = pneg %p145
      %p152 = scmp.eq.s32.totalorder %s14, 1
      %p153 = por %p151, %p152
      %p154 = scmp.ne.s32.totalorder %s146, %s149
      %p155 = scmp.eq.s32.totalorder %s14, 0
      %p156 = por %p154, %p155
      %p157 = scmp.ne.s32.totalorder %s146, %s149
      %p158 = scmp.eq.s32.totalorder %s19, 1
      %p159 = por %p157, %p158
      %p160 = scmp.ne.s32.totalorder %s149, %s150
      %p161 = scmp.eq.s32.totalorder %s19, 0
      %p162 = por %p160, %p161
      %p163 = scmp.ne.s32.totalorder %s149, %s150
      %p164 = scmp.eq.s32.totalorder %s20, 1
      %p165 = por %p163, %p164
      %p167 = scmp.ne.s32.totalorder %s150, %s166
      %p168 = scmp.eq.s32.totalorder %s20, 0
      %p169 = por %p167, %p168
      %s170 = ssub.s32 %s21, %s33
      %p171 = scmp.eq.s32.totalorder %s170, 0
      %s173 = sadd.s32 %s172, 1
      %s174 = scalar_select %p171, %s172, %s173
      %p177 = pneg %p171
      %p178 = scmp.eq.s32.totalorder %s14, 1
      %p179 = por %p177, %p178
      %p180 = scmp.ne.s32.totalorder %s172, %s175
      %p181 = scmp.eq.s32.totalorder %s14, 0
      %p182 = por %p180, %p181
      %p183 = scmp.ne.s32.totalorder %s172, %s175
      %p184 = scmp.eq.s32.totalorder %s19, 1
      %p185 = por %p183, %p184
      %p186 = scmp.ne.s32.totalorder %s175, %s176
      %p187 = scmp.eq.s32.totalorder %s19, 0
      %p188 = por %p186, %p187
      %p189 = scmp.ne.s32.totalorder %s175, %s176
      %p190 = scmp.eq.s32.totalorder %s20, 1
      %p191 = por %p189, %p190
      %p193 = scmp.ne.s32.totalorder %s176, %s192
      %p194 = scmp.eq.s32.totalorder %s20, 0
      %p195 = por %p193, %p194
      %s196 = ssub.s32 %s21, %s33
      %s197 = ssub.s32 %s22, %s29
      %s198 = sor.u32 %s196, %s197
      %p199 = scmp.eq.s32.totalorder %s198, 0
      %s201 = sadd.s32 %s200, 1
      %s202 = scalar_select %p199, %s200, %s201
      %p205 = pneg %p199
      %p206 = scmp.eq.s32.totalorder %s14, 1
      %p207 = por %p205, %p206
      %p208 = scmp.ne.s32.totalorder %s200, %s203
      %p209 = scmp.eq.s32.totalorder %s14, 0
      %p210 = por %p208, %p209
      %p211 = scmp.ne.s32.totalorder %s200, %s203
      %p212 = scmp.eq.s32.totalorder %s19, 1
      %p213 = por %p211, %p212
      %p214 = scmp.ne.s32.totalorder %s203, %s204
      %p215 = scmp.eq.s32.totalorder %s19, 0
      %p216 = por %p214, %p215
      %p217 = scmp.ne.s32.totalorder %s203, %s204
      %p218 = scmp.eq.s32.totalorder %s20, 1
      %p219 = por %p217, %p218
      %p221 = scmp.ne.s32.totalorder %s204, %s220
      %p222 = scmp.eq.s32.totalorder %s20, 0
      %p223 = por %p221, %p222
      %s224 = ssub.s32 %s21, %s33
      %s225 = ssub.s32 %s22, %s29
      %s226 = sor.u32 %s224, %s225
      %p227 = scmp.eq.s32.totalorder %s226, 0
      %s229 = sadd.s32 %s228, 1
      %s230 = scalar_select %p227, %s228, %s229
      %p233 = pneg %p227
      %p234 = scmp.eq.s32.totalorder %s14, 1
      %p235 = por %p233, %p234
      %p236 = scmp.ne.s32.totalorder %s228, %s231
      %p237 = scmp.eq.s32.totalorder %s14, 0
      %p238 = por %p236, %p237
      %p239 = scmp.ne.s32.totalorder %s228, %s231
      %p240 = scmp.eq.s32.totalorder %s19, 1
      %p241 = por %p239, %p240
      %p242 = scmp.ne.s32.totalorder %s231, %s232
      %p243 = scmp.eq.s32.totalorder %s19, 0
      %p244 = por %p242, %p243
      %p245 = scmp.ne.s32.totalorder %s231, %s232
      %p246 = scmp.eq.s32.totalorder %s20, 1
      %p247 = por %p245, %p246
      %p249 = scmp.ne.s32.totalorder %s232, %s248
      %p250 = scmp.eq.s32.totalorder %s20, 0
      %p251 = por %p249, %p250
      %p252 = scmp.le.s32.totalorder 1, %s14
      %p253 = scmp.lt.s32.totalorder %s14, 3
      %p254 = pnand %p252, %p253
      %p255 = pneg %p254
      // Predicated region
      $region9: #{joint_transformer_block.14} parent=5 // pred_check
        _
      $region10: #{joint_transformer_block.14} parent=5 // pred_check_branch
        %257 = sbr.rel (%p254) target = $region12
      $region11: #{joint_transformer_block.14} parent=5 // pred_region
        %s258 = ssub.s32 %s14, 1
        // Predicated region
        $region13: #{joint_transformer_block.14} parent=11 // pred_check
          %p259 = pneg %p110
        $region14: #{joint_transformer_block.14} parent=11 // pred_check_branch
          %261 = sbr.rel (%p259) target = $region16
        $region15: #{joint_transformer_block.14} parent=11 // pred_region
          %s262 = smul.u32 2, %s23
          %p263 = scmp.lt.s32.totalorder %s262, 1
          %s264 = scalar_select %p263, %s262, 1
          %s265 = smul.addr %s264, 4
          %s266 = scalar_lea.vmem %s2, %s265
          %s267 = smul.u32 2, %s23
        $region16: #{joint_transformer_block.14} parent=11 // pred_fallthru
          _
        // Predicated region
        $region17: #{joint_transformer_block.14} parent=11 // pred_check
          %p268 = pneg %p136
        $region18: #{joint_transformer_block.14} parent=11 // pred_check_branch
          %270 = sbr.rel (%p268) target = $region20
        $region19: #{joint_transformer_block.14} parent=11 // pred_region
          %s271 = smul.u32 2, %s23
          %p272 = scmp.lt.s32.totalorder %s271, 1
          %s273 = scalar_select %p272, %s271, 1
          %s274 = smul.addr %s273, 4
          %s275 = scalar_lea.vmem %s3, %s274
          %s276 = smul.u32 2, %s23
        $region20: #{joint_transformer_block.14} parent=11 // pred_fallthru
          _
        // Predicated region
        $region21: #{joint_transformer_block.14} parent=11 // pred_check
          %p277 = pneg %p162
        $region22: #{joint_transformer_block.14} parent=11 // pred_check_branch
          %279 = sbr.rel (%p277) target = $region24
        $region23: #{joint_transformer_block.14} parent=11 // pred_region
          %s280 = smul.u32 2, %s23
          %p281 = scmp.lt.s32.totalorder %s280, 1
          %s282 = scalar_select %p281, %s280, 1
          %s283 = smul.addr %s282, 4
          %s284 = scalar_lea.vmem %s4, %s283
          %s285 = smul.u32 2, %s23
        $region24: #{joint_transformer_block.14} parent=11 // pred_fallthru
          _
        // Predicated region
        $region25: #{joint_transformer_block.14} parent=11 // pred_check
          %p286 = pneg %p188
        $region26: #{joint_transformer_block.14} parent=11 // pred_check_branch
          %288 = sbr.rel (%p286) target = $region28
        $region27: #{joint_transformer_block.14} parent=11 // pred_region
          %s289 = smul.u32 2, %s23
          %p290 = scmp.lt.s32.totalorder %s289, 1
          %s291 = scalar_select %p290, %s289, 1
          %s292 = smul.addr %s291, 4
          %s293 = scalar_lea.vmem %s5, %s292
          %s294 = smul.u32 2, %s23
        $region28: #{joint_transformer_block.14} parent=11 // pred_fallthru
          _
      $region12: #{joint_transformer_block.14} parent=5 // pred_fallthru
        _
      %p295 = scmp.lt.s32.totalorder %s14, 2
      // Predicated region
      $region29: #{joint_transformer_block.14} parent=5 // pred_check
        %p296 = pneg %p295
      $region30: #{joint_transformer_block.14} parent=5 // pred_check_branch
        %298 = sbr.rel (%p296) target = $region32
      $region31: #{joint_transformer_block.14} parent=5 // pred_region
        // Predicated region
        $region33: #{joint_transformer_block.14} parent=31 // pred_check
          %p299 = pneg %p48
        $region34: #{joint_transformer_block.14} parent=31 // pred_check_branch
          %301 = sbr.rel (%p299) target = $region36
        $region35: #{joint_transformer_block.14} parent=31 // pred_region
          %s302 = sand.u32 %s38, 1
          %s303 = sand.u32 %s38, 1
          %s304 = smul.addr %s303, 8
          %s305 = scalar_lea.vmem [#allocation2], %s304
          %s306 = smul.u32 2, %s21
          %s307 = smul.addr %s306, 6
          %s308 = sadd.s32 %s22, %s307
          %s309 = smul.addr %s308, 4
          %s310 = scalar_lea.vmem %s0, %s309
          // Predicated region
          $region37: #{joint_transformer_block.14} parent=35 // pred_check
            _
          $region38: #{joint_transformer_block.14} parent=35 // pred_check_branch
            %312 = sbr.rel (0) target = $region40
          $region39: #{joint_transformer_block.14} parent=35 // pred_region
            // Predicated region
            $region41: #{joint_transformer_block.14} parent=39 // pred_check
              _
            $region42: #{joint_transformer_block.14} parent=39 // pred_check_branch
              %314 = sbr.rel target = $region44
            $region43: #{joint_transformer_block.14} parent=39 // pred_region
              // Predicated region
              $region56: #{joint_transformer_block.14} parent=43 // pred_check
                _
              $region57: #{joint_transformer_block.14} parent=43 // pred_check_branch
                %331 = sbr.rel (0) target = $region59
              $region58: #{joint_transformer_block.14} parent=43 // pred_region
                loop: start=0, step=1, limit=1
                $region60: #{joint_transformer_block.14} parent=58 // loop_pre_header
                  _
                $region61: #{joint_transformer_block.14} parent=58 // loop_header
                  %s333 = sphi 0, %s337
                  %p334 = scmp.ge.s32.totalorder %s333, 1
                  %s338 = sphi %s310, %s310
                  %s339 = sphi %s305, %s305
                $region62: #{joint_transformer_block.14} parent=58 // loop_header_branch
                  %336 = sbr.rel (%p334) target = $region66
                $region63: #{joint_transformer_block.14} parent=58 // loop_body
                  _
                $region64: #{joint_transformer_block.14} parent=58 // loop_footer
                  %s337 = sadd.s32 1, %s333
                $region65: #{joint_transformer_block.14} parent=58 // loop_footer_branch
                  %332 = sbr.rel target = $region61
                $region66: #{joint_transformer_block.14} parent=58 // loop_exit
                  _
                loop: start=0, step=1, limit=1
                $region67: #{joint_transformer_block.14} parent=58 // loop_pre_header
                  _
                $region68: #{joint_transformer_block.14} parent=58 // loop_header
                  %s342 = sphi 0, %s346
                  %p343 = scmp.ge.s32.totalorder %s342, 1
                  %s347 = sphi %s310, %s310
                  %s348 = sphi %s305, %s305
                $region69: #{joint_transformer_block.14} parent=58 // loop_header_branch
                  %345 = sbr.rel (%p343) target = $region73
                $region70: #{joint_transformer_block.14} parent=58 // loop_body
                  %v349 = vld [vmem:[%s347] sm:$0xf]
                  %350 = vst [vmem:[%s348] sm:$0xf] %v349
                  %v351 = vld [vmem:[%s347 + $0x18] sm:$0xf]
                  %352 = vst [vmem:[%s348 + $0x4] sm:$0xf] %v351
                $region71: #{joint_transformer_block.14} parent=58 // loop_footer
                  %s346 = sadd.s32 1, %s342
                $region72: #{joint_transformer_block.14} parent=58 // loop_footer_branch
                  %341 = sbr.rel target = $region68
                $region73: #{joint_transformer_block.14} parent=58 // loop_exit
                  _
              $region59: #{joint_transformer_block.14} parent=43 // pred_fallthru
                _
            $region44: #{joint_transformer_block.14} parent=39 // pred_fallthru
              _
            // Predicated region
            $region45: #{joint_transformer_block.14} parent=39 // pred_check
              _
            $region46: #{joint_transformer_block.14} parent=39 // pred_check_branch
              %316 = sbr.rel (0) target = $region48
            $region47: #{joint_transformer_block.14} parent=39 // pred_region
              loop: start=0, step=1, limit=1
              $region49: #{joint_transformer_block.14} parent=47 // loop_pre_header
                _
              $region50: #{joint_transformer_block.14} parent=47 // loop_header
                %s319 = sphi 0, %s323
                %p320 = scmp.ge.s32.totalorder %s319, 1
                %s324 = sphi %s310, %s310
                %s325 = sphi %s305, %s305
              $region51: #{joint_transformer_block.14} parent=47 // loop_header_branch
                %322 = sbr.rel (%p320) target = $region55
              $region52: #{joint_transformer_block.14} parent=47 // loop_body
                %v326 = vld [vmem:[%s324] sm:$0xf]
                %327 = vst [vmem:[%s325] sm:$0xf] %v326
                %v328 = vld [vmem:[%s324 + $0x18] sm:$0xf]
                %329 = vst [vmem:[%s325 + $0x4] sm:$0xf] %v328
              $region53: #{joint_transformer_block.14} parent=47 // loop_footer
                %s323 = sadd.s32 1, %s319
              $region54: #{joint_transformer_block.14} parent=47 // loop_footer_branch
                %318 = sbr.rel target = $region50
              $region55: #{joint_transformer_block.14} parent=47 // loop_exit
                _
            $region48: #{joint_transformer_block.14} parent=39 // pred_fallthru
              _
          $region40: #{joint_transformer_block.14} parent=35 // pred_fallthru
            _
          %353 = vnop
        $region36: #{joint_transformer_block.14} parent=31 // pred_fallthru
          _
        // Predicated region
        $region74: #{joint_transformer_block.14} parent=31 // pred_check
          %p354 = pneg %p78
        $region75: #{joint_transformer_block.14} parent=31 // pred_check_branch
          %356 = sbr.rel (%p354) target = $region77
        $region76: #{joint_transformer_block.14} parent=31 // pred_region
          %s357 = sand.u32 %s68, 1
          %s358 = sand.u32 %s68, 1
          %s359 = smul.addr %s358, 8
          %s360 = scalar_lea.vmem [#allocation3], %s359
          %s361 = sadd.s32 %s22, 2
          %s362 = smul.u32 2, %s21
          %s363 = smul.addr %s362, 6
          %s364 = sadd.s32 %s361, %s363
          %s365 = smul.addr %s364, 4
          %s366 = scalar_lea.vmem %s1, %s365
          // Predicated region
          $region78: #{joint_transformer_block.14} parent=76 // pred_check
            _
          $region79: #{joint_transformer_block.14} parent=76 // pred_check_branch
            %368 = sbr.rel (0) target = $region81
          $region80: #{joint_transformer_block.14} parent=76 // pred_region
            // Predicated region
            $region82: #{joint_transformer_block.14} parent=80 // pred_check
              _
            $region83: #{joint_transformer_block.14} parent=80 // pred_check_branch
              %370 = sbr.rel target = $region85
            $region84: #{joint_transformer_block.14} parent=80 // pred_region
              // Predicated region
              $region97: #{joint_transformer_block.14} parent=84 // pred_check
                _
              $region98: #{joint_transformer_block.14} parent=84 // pred_check_branch
                %387 = sbr.rel (0) target = $region100
              $region99: #{joint_transformer_block.14} parent=84 // pred_region
                loop: start=0, step=1, limit=1
                $region101: #{joint_transformer_block.14} parent=99 // loop_pre_header
                  _
                $region102: #{joint_transformer_block.14} parent=99 // loop_header
                  %s389 = sphi 0, %s393
                  %p390 = scmp.ge.s32.totalorder %s389, 1
                  %s394 = sphi %s366, %s366
                  %s395 = sphi %s360, %s360
                $region103: #{joint_transformer_block.14} parent=99 // loop_header_branch
                  %392 = sbr.rel (%p390) target = $region107
                $region104: #{joint_transformer_block.14} parent=99 // loop_body
                  _
                $region105: #{joint_transformer_block.14} parent=99 // loop_footer
                  %s393 = sadd.s32 1, %s389
                $region106: #{joint_transformer_block.14} parent=99 // loop_footer_branch
                  %388 = sbr.rel target = $region102
                $region107: #{joint_transformer_block.14} parent=99 // loop_exit
                  _
                loop: start=0, step=1, limit=1
                $region108: #{joint_transformer_block.14} parent=99 // loop_pre_header
                  _
                $region109: #{joint_transformer_block.14} parent=99 // loop_header
                  %s398 = sphi 0, %s402
                  %p399 = scmp.ge.s32.totalorder %s398, 1
                  %s403 = sphi %s366, %s366
                  %s404 = sphi %s360, %s360
                $region110: #{joint_transformer_block.14} parent=99 // loop_header_branch
                  %401 = sbr.rel (%p399) target = $region114
                $region111: #{joint_transformer_block.14} parent=99 // loop_body
                  %v405 = vld [vmem:[%s403] sm:$0xf]
                  %406 = vst [vmem:[%s404] sm:$0xf] %v405
                  %v407 = vld [vmem:[%s403 + $0x18] sm:$0xf]
                  %408 = vst [vmem:[%s404 + $0x4] sm:$0xf] %v407
                $region112: #{joint_transformer_block.14} parent=99 // loop_footer
                  %s402 = sadd.s32 1, %s398
                $region113: #{joint_transformer_block.14} parent=99 // loop_footer_branch
                  %397 = sbr.rel target = $region109
                $region114: #{joint_transformer_block.14} parent=99 // loop_exit
                  _
              $region100: #{joint_transformer_block.14} parent=84 // pred_fallthru
                _
            $region85: #{joint_transformer_block.14} parent=80 // pred_fallthru
              _
            // Predicated region
            $region86: #{joint_transformer_block.14} parent=80 // pred_check
              _
            $region87: #{joint_transformer_block.14} parent=80 // pred_check_branch
              %372 = sbr.rel (0) target = $region89
            $region88: #{joint_transformer_block.14} parent=80 // pred_region
              loop: start=0, step=1, limit=1
              $region90: #{joint_transformer_block.14} parent=88 // loop_pre_header
                _
              $region91: #{joint_transformer_block.14} parent=88 // loop_header
                %s375 = sphi 0, %s379
                %p376 = scmp.ge.s32.totalorder %s375, 1
                %s380 = sphi %s366, %s366
                %s381 = sphi %s360, %s360
              $region92: #{joint_transformer_block.14} parent=88 // loop_header_branch
                %378 = sbr.rel (%p376) target = $region96
              $region93: #{joint_transformer_block.14} parent=88 // loop_body
                %v382 = vld [vmem:[%s380] sm:$0xf]
                %383 = vst [vmem:[%s381] sm:$0xf] %v382
                %v384 = vld [vmem:[%s380 + $0x18] sm:$0xf]
                %385 = vst [vmem:[%s381 + $0x4] sm:$0xf] %v384
              $region94: #{joint_transformer_block.14} parent=88 // loop_footer
                %s379 = sadd.s32 1, %s375
              $region95: #{joint_transformer_block.14} parent=88 // loop_footer_branch
                %374 = sbr.rel target = $region91
              $region96: #{joint_transformer_block.14} parent=88 // loop_exit
                _
            $region89: #{joint_transformer_block.14} parent=80 // pred_fallthru
              _
          $region81: #{joint_transformer_block.14} parent=76 // pred_fallthru
            _
          %409 = vnop
        $region77: #{joint_transformer_block.14} parent=31 // pred_fallthru
          _
      $region32: #{joint_transformer_block.14} parent=5 // pred_fallthru
        _
      %p410 = scmp.le.s32.totalorder 1, %s14
      %p411 = scmp.lt.s32.totalorder %s14, 3
      %p412 = pnand %p410, %p411
      %p413 = pneg %p412
      // Predicated region
      $region115: #{joint_transformer_block.14} parent=5 // pred_check
        _
      $region116: #{joint_transformer_block.14} parent=5 // pred_check_branch
        %415 = sbr.rel (%p412) target = $region118
      $region117: #{joint_transformer_block.14} parent=5 // pred_region
        %s416 = ssub.s32 %s14, 1
        %s417 = sand.u32 %s41, 1
        %s418 = sand.u32 %s41, 1
        %s419 = smul.addr %s418, 8
        %s420 = scalar_lea.vmem [#allocation2], %s419
        // Predicated region
        $region119: #{joint_transformer_block.14} parent=117 // pred_check
          %p421 = pneg %p54
        $region120: #{joint_transformer_block.14} parent=117 // pred_check_branch
          %423 = sbr.rel (%p421) target = $region122
        $region121: #{joint_transformer_block.14} parent=117 // pred_region
          _
        $region122: #{joint_transformer_block.14} parent=117 // pred_fallthru
          _
        %s424 = sand.u32 %s71, 1
        %s425 = sand.u32 %s71, 1
        %s426 = smul.addr %s425, 8
        %s427 = scalar_lea.vmem [#allocation3], %s426
        // Predicated region
        $region123: #{joint_transformer_block.14} parent=117 // pred_check
          %p428 = pneg %p84
        $region124: #{joint_transformer_block.14} parent=117 // pred_check_branch
          %430 = sbr.rel (%p428) target = $region126
        $region125: #{joint_transformer_block.14} parent=117 // pred_region
          _
        $region126: #{joint_transformer_block.14} parent=117 // pred_fallthru
          _
        %s431 = sand.u32 %s41, 1
        %s432 = sand.u32 %s41, 1
        %s433 = smul.addr %s432, 8
        %s434 = scalar_lea.vmem [#allocation2], %s433
        %p435 = pneg %p54
        %p436 = pneg %p51
        %s437 = sand.u32 %s71, 1
        %s438 = sand.u32 %s71, 1
        %s439 = smul.addr %s438, 8
        %s440 = scalar_lea.vmem [#allocation3], %s439
        %p441 = pneg %p84
        %p442 = pneg %p81
        %s443 = smul.u32 2, %s23
        %p444 = scmp.lt.s32.totalorder %s443, 1
        %s445 = scalar_select %p444, %s443, 1
        %s446 = smul.addr %s445, 4
        %s447 = scalar_lea.vmem %s2, %s446
        %p448 = pneg %p110
        %p449 = pneg %p107
        %s450 = smul.u32 2, %s23
        %p451 = scmp.lt.s32.totalorder %s450, 1
        %s452 = scalar_select %p451, %s450, 1
        %s453 = smul.addr %s452, 4
        %s454 = scalar_lea.vmem %s3, %s453
        %p455 = pneg %p136
        %p456 = pneg %p133
        %s457 = smul.u32 2, %s23
        %p458 = scmp.lt.s32.totalorder %s457, 1
        %s459 = scalar_select %p458, %s457, 1
        %s460 = smul.addr %s459, 4
        %s461 = scalar_lea.vmem %s4, %s460
        %p462 = pneg %p162
        %p463 = pneg %p159
        %s464 = smul.u32 2, %s23
        %p465 = scmp.lt.s32.totalorder %s464, 1
        %s466 = scalar_select %p465, %s464, 1
        %s467 = smul.addr %s466, 4
        %s468 = scalar_lea.vmem %s5, %s467
        %p469 = pneg %p188
        %p470 = pneg %p185
        %p471 = pneg %p216
        %p472 = pneg %p213
        %s473 = sand.u32 %s203, 1
        %s474 = sand.u32 %s203, 1
        %s475 = smul.addr %s474, 8
        %s476 = scalar_lea.vmem [#allocation4], %s475
        %p477 = pneg %p244
        %p478 = pneg %p241
        %s479 = sand.u32 %s231, 1
        %s480 = sand.u32 %s231, 1
        %s481 = smul.addr %s480, 8
        %s482 = scalar_lea.vmem [#allocation5], %s481
        %s483 = smul.u32 2, %s23
        %s484 = sadd.s32 %s24, 2
        %s485 = smul.u32 2, %s23
        %s486 = smul.u32 2, %s23
        %p487 = scmp.lt.s32.totalorder %s486, 1
        %s488 = scalar_select %p487, %s486, 1
        %s489 = smul.addr %s488, 4
        %s490 = scalar_lea.vmem %s2, %s489
        %s491 = smul.u32 2, %s23
        %s492 = smul.u32 2, %s23
        %p493 = scmp.lt.s32.totalorder %s492, 1
        %s494 = scalar_select %p493, %s492, 1
        %s495 = smul.addr %s494, 4
        %s496 = scalar_lea.vmem %s3, %s495
        %s497 = smul.u32 2, %s23
        %s498 = smul.u32 2, %s23
        %p499 = scmp.lt.s32.totalorder %s498, 1
        %s500 = scalar_select %p499, %s498, 1
        %s501 = smul.addr %s500, 4
        %s502 = scalar_lea.vmem %s4, %s501
        %s503 = smul.u32 2, %s23
        %s504 = smul.u32 2, %s23
        %p505 = scmp.lt.s32.totalorder %s504, 1
        %s506 = scalar_select %p505, %s504, 1
        %s507 = smul.addr %s506, 4
        %s508 = scalar_lea.vmem %s5, %s507
        %s509 = smul.u32 2, %s23
        %s510 = smul.u32 2, %s23
        %s511 = smul.u32 2, %s23
        %v512 = vlaneseq
        %v513 = vand.u32 %v512, 127
        %vm514 = vcmp.lt.s32.totalorder %v513, 0
        %v515 = vsub.s32 0, %v513
        %v516 = vsel %vm514, %v515, %v513
        %v517 = vshrl.u32 %v516, 1
        %v518 = vand.u32 %v516, 1
        %v519 = vsub.s32 0, %v518
        %v520 = vsel %vm514, %v519, %v518
        %vm521 = vcmp.ne.s32.totalorder %v520, 0
        %vm522 = vcmp.lt.s32.totalorder %v520, 0
        %vm523 = vmand %vm522, %vm521
        %v524 = vadd.s32 %v520, 2
        %v525 = vsel %vm523, %v524, %v520
        %vm526 = vcmp.eq.s32.totalorder %v525, 0
        %v527 = vld [vmem:[%s420] sm:$0xf]
        %v528 = vld [vmem:[%s420 + $0x4] sm:$0xf]
        %v529 = vunpack.c.l.bf16 %v527
        %v530 = vunpack.c.l.bf16 %v528
        %v531 = vmul.f32 %v529, %v529
        %v532 = vmul.f32 %v530, %v530
        %533 = vadd.xlane.f32.xlu0 %v531
        %v534 = vpop.xlane.xlu0 %533
        %535 = vadd.xlane.f32.xlu0 %v532
        %v536 = vpop.xlane.xlu0 %535
        %v537 = vrcp.pop 128.0
        %v538 = vmul.f32 %v534, %v537
        %v539 = vmul.f32 %v536, %v537
        %v540 = vadd.f32 %v538, 1e-06
        %v541 = vadd.f32 %v539, 1e-06
        %v542 = vrsqrt.pop %v540
        %v543 = vrsqrt.pop %v541
        %v544 = vmul.f32 %v529, %v542
        %v545 = vmul.f32 %v530, %v543
        %546 = vrot.lane.b32.xlu0 %v544, 127
        %v547 = vpop.permute.xlu0 %546
        %548 = vrot.lane.b32.xlu0 %v545, 127
        %v549 = vpop.permute.xlu0 %548
        %550 = vrot.lane.b32.xlu0 %v544, 1
        %v551 = vpop.permute.xlu0 %550
        %552 = vrot.lane.b32.xlu0 %v545, 1
        %v553 = vpop.permute.xlu0 %552
        %v554 = vsel %vm526, %v547, %v551
        %v555 = vsel %vm526, %v549, %v553
        %v556 = vld [vmem:[%s490] sm:$0xf]
        %v557 = vld [vmem:[%s490 + $0x4] sm:$0xf]
        %v558 = vunpack.c.l.bf16 %v556
        %v559 = vunpack.c.l.bf16 %v557
        %v560 = vmul.f32 %v558, %v544
        %v561 = vmul.f32 %v559, %v545
        %v562 = vld [vmem:[%s496] sm:$0xf]
        %v563 = vld [vmem:[%s496 + $0x4] sm:$0xf]
        %v564 = vunpack.c.l.bf16 %v562
        %v565 = vunpack.c.l.bf16 %v563
        %v566 = vmul.f32 %v564, %v554
        %v567 = vmul.f32 %v565, %v555
        %v568 = vadd.f32 %v560, %v566
        %v569 = vadd.f32 %v561, %v567
        %v570 = vpack.c.bf16 %v569, %v568
        %v572 = vunpack.c.l.b16 %v570
        %v573 = vunpack.c.h.b16 %v570
        %v574 = vpack.c.b16 %v572, %v572
        %v575 = vpack.c.b16 %v573, %v573
        %578 = vst [vmem:[%s476] sm:$0xf] %v574
        %579 = vst [vmem:[%s476 + $0x4] sm:$0xf] %v575
        %v580 = vld [vmem:[%s427] sm:$0xf]
        %v581 = vld [vmem:[%s427 + $0x4] sm:$0xf]
        %v582 = vunpack.c.l.bf16 %v580
        %v583 = vunpack.c.l.bf16 %v581
        %v584 = vmul.f32 %v582, %v582
        %v585 = vmul.f32 %v583, %v583
        %586 = vadd.xlane.f32.xlu0 %v584
        %v587 = vpop.xlane.xlu0 %586
        %588 = vadd.xlane.f32.xlu0 %v585
        %v589 = vpop.xlane.xlu0 %588
        %v590 = vmul.f32 %v587, %v537
        %v591 = vmul.f32 %v589, %v537
        %v592 = vadd.f32 %v590, 1e-06
        %v593 = vadd.f32 %v591, 1e-06
        %v594 = vrsqrt.pop %v592
        %v595 = vrsqrt.pop %v593
        %v596 = vmul.f32 %v582, %v594
        %v597 = vmul.f32 %v583, %v595
        %598 = vrot.lane.b32.xlu0 %v596, 127
        %v599 = vpop.permute.xlu0 %598
        %600 = vrot.lane.b32.xlu0 %v597, 127
        %v601 = vpop.permute.xlu0 %600
        %602 = vrot.lane.b32.xlu0 %v596, 1
        %v603 = vpop.permute.xlu0 %602
        %604 = vrot.lane.b32.xlu0 %v597, 1
        %v605 = vpop.permute.xlu0 %604
        %v606 = vsel %vm526, %v599, %v603
        %v607 = vsel %vm526, %v601, %v605
        %v608 = vld [vmem:[%s502] sm:$0xf]
        %v609 = vld [vmem:[%s502 + $0x4] sm:$0xf]
        %v610 = vunpack.c.l.bf16 %v608
        %v611 = vunpack.c.l.bf16 %v609
        %v612 = vmul.f32 %v610, %v596
        %v613 = vmul.f32 %v611, %v597
        %v614 = vld [vmem:[%s508] sm:$0xf]
        %v615 = vld [vmem:[%s508 + $0x4] sm:$0xf]
        %v616 = vunpack.c.l.bf16 %v614
        %v617 = vunpack.c.l.bf16 %v615
        %v618 = vmul.f32 %v616, %v606
        %v619 = vmul.f32 %v617, %v607
        %v620 = vadd.f32 %v612, %v618
        %v621 = vadd.f32 %v613, %v619
        %v622 = vpack.c.bf16 %v621, %v620
        %v624 = vunpack.c.l.b16 %v622
        %v625 = vunpack.c.h.b16 %v622
        %v626 = vpack.c.b16 %v624, %v624
        %v627 = vpack.c.b16 %v625, %v625
        %630 = vst [vmem:[%s482] sm:$0xf] %v626
        %631 = vst [vmem:[%s482 + $0x4] sm:$0xf] %v627
        %s632 = sand.u32 %s203, 1
        %s633 = sand.u32 %s203, 1
        %s634 = smul.addr %s633, 8
        %s635 = scalar_lea.vmem [#allocation4], %s634
        %s636 = sand.u32 %s231, 1
        %s637 = sand.u32 %s231, 1
        %s638 = smul.addr %s637, 8
        %s639 = scalar_lea.vmem [#allocation5], %s638
        // Predicated region
        $region127: #{joint_transformer_block.14} parent=117 // pred_check
          %p640 = pneg %p213
        $region128: #{joint_transformer_block.14} parent=117 // pred_check_branch
          %642 = sbr.rel (%p640) target = $region130
        $region129: #{joint_transformer_block.14} parent=117 // pred_region
          %s643 = smul.u32 2, %s23
          %s644 = smul.addr %s643, 2
          %s645 = sadd.s32 %s24, %s644
          %s646 = smul.addr %s645, 4
          %s647 = scalar_lea.vmem %s6, %s646
          // Predicated region
          $region131: #{joint_transformer_block.14} parent=129 // pred_check
            _
          $region132: #{joint_transformer_block.14} parent=129 // pred_check_branch
            %649 = sbr.rel (0) target = $region134
          $region133: #{joint_transformer_block.14} parent=129 // pred_region
            // Predicated region
            $region135: #{joint_transformer_block.14} parent=133 // pred_check
              _
            $region136: #{joint_transformer_block.14} parent=133 // pred_check_branch
              %651 = sbr.rel target = $region138
            $region137: #{joint_transformer_block.14} parent=133 // pred_region
              // Predicated region
              $region150: #{joint_transformer_block.14} parent=137 // pred_check
                _
              $region151: #{joint_transformer_block.14} parent=137 // pred_check_branch
                %668 = sbr.rel (0) target = $region153
              $region152: #{joint_transformer_block.14} parent=137 // pred_region
                loop: start=0, step=1, limit=1
                $region154: #{joint_transformer_block.14} parent=152 // loop_pre_header
                  _
                $region155: #{joint_transformer_block.14} parent=152 // loop_header
                  %s670 = sphi 0, %s674
                  %p671 = scmp.ge.s32.totalorder %s670, 1
                  %s675 = sphi %s635, %s635
                  %s676 = sphi %s647, %s647
                $region156: #{joint_transformer_block.14} parent=152 // loop_header_branch
                  %673 = sbr.rel (%p671) target = $region160
                $region157: #{joint_transformer_block.14} parent=152 // loop_body
                  _
                $region158: #{joint_transformer_block.14} parent=152 // loop_footer
                  %s674 = sadd.s32 1, %s670
                $region159: #{joint_transformer_block.14} parent=152 // loop_footer_branch
                  %669 = sbr.rel target = $region155
                $region160: #{joint_transformer_block.14} parent=152 // loop_exit
                  _
                loop: start=0, step=1, limit=1
                $region161: #{joint_transformer_block.14} parent=152 // loop_pre_header
                  _
                $region162: #{joint_transformer_block.14} parent=152 // loop_header
                  %s679 = sphi 0, %s683
                  %p680 = scmp.ge.s32.totalorder %s679, 1
                  %s684 = sphi %s635, %s635
                  %s685 = sphi %s647, %s647
                $region163: #{joint_transformer_block.14} parent=152 // loop_header_branch
                  %682 = sbr.rel (%p680) target = $region167
                $region164: #{joint_transformer_block.14} parent=152 // loop_body
                  %v686 = vld [vmem:[%s684] sm:$0xf]
                  %687 = vst [vmem:[%s685] sm:$0xf] %v686
                  %v688 = vld [vmem:[%s684 + $0x4] sm:$0xf]
                  %689 = vst [vmem:[%s685 + $0x8] sm:$0xf] %v688
                $region165: #{joint_transformer_block.14} parent=152 // loop_footer
                  %s683 = sadd.s32 1, %s679
                $region166: #{joint_transformer_block.14} parent=152 // loop_footer_branch
                  %678 = sbr.rel target = $region162
                $region167: #{joint_transformer_block.14} parent=152 // loop_exit
                  _
              $region153: #{joint_transformer_block.14} parent=137 // pred_fallthru
                _
            $region138: #{joint_transformer_block.14} parent=133 // pred_fallthru
              _
            // Predicated region
            $region139: #{joint_transformer_block.14} parent=133 // pred_check
              _
            $region140: #{joint_transformer_block.14} parent=133 // pred_check_branch
              %653 = sbr.rel (0) target = $region142
            $region141: #{joint_transformer_block.14} parent=133 // pred_region
              loop: start=0, step=1, limit=1
              $region143: #{joint_transformer_block.14} parent=141 // loop_pre_header
                _
              $region144: #{joint_transformer_block.14} parent=141 // loop_header
                %s656 = sphi 0, %s660
                %p657 = scmp.ge.s32.totalorder %s656, 1
                %s661 = sphi %s635, %s635
                %s662 = sphi %s647, %s647
              $region145: #{joint_transformer_block.14} parent=141 // loop_header_branch
                %659 = sbr.rel (%p657) target = $region149
              $region146: #{joint_transformer_block.14} parent=141 // loop_body
                %v663 = vld [vmem:[%s661] sm:$0xf]
                %664 = vst [vmem:[%s662] sm:$0xf] %v663
                %v665 = vld [vmem:[%s661 + $0x4] sm:$0xf]
                %666 = vst [vmem:[%s662 + $0x8] sm:$0xf] %v665
              $region147: #{joint_transformer_block.14} parent=141 // loop_footer
                %s660 = sadd.s32 1, %s656
              $region148: #{joint_transformer_block.14} parent=141 // loop_footer_branch
                %655 = sbr.rel target = $region144
              $region149: #{joint_transformer_block.14} parent=141 // loop_exit
                _
            $region142: #{joint_transformer_block.14} parent=133 // pred_fallthru
              _
          $region134: #{joint_transformer_block.14} parent=129 // pred_fallthru
            _
          %690 = vnop
        $region130: #{joint_transformer_block.14} parent=117 // pred_fallthru
          _
        // Predicated region
        $region168: #{joint_transformer_block.14} parent=117 // pred_check
          %p691 = pneg %p241
        $region169: #{joint_transformer_block.14} parent=117 // pred_check_branch
          %693 = sbr.rel (%p691) target = $region171
        $region170: #{joint_transformer_block.14} parent=117 // pred_region
          %s694 = smul.u32 2, %s23
          %s695 = smul.addr %s694, 2
          %s696 = sadd.s32 %s24, %s695
          %s697 = smul.addr %s696, 4
          %s698 = scalar_lea.vmem %s7, %s697
          // Predicated region
          $region172: #{joint_transformer_block.14} parent=170 // pred_check
            _
          $region173: #{joint_transformer_block.14} parent=170 // pred_check_branch
            %700 = sbr.rel (0) target = $region175
          $region174: #{joint_transformer_block.14} parent=170 // pred_region
            // Predicated region
            $region176: #{joint_transformer_block.14} parent=174 // pred_check
              _
            $region177: #{joint_transformer_block.14} parent=174 // pred_check_branch
              %702 = sbr.rel target = $region179
            $region178: #{joint_transformer_block.14} parent=174 // pred_region
              // Predicated region
              $region191: #{joint_transformer_block.14} parent=178 // pred_check
                _
              $region192: #{joint_transformer_block.14} parent=178 // pred_check_branch
                %719 = sbr.rel (0) target = $region194
              $region193: #{joint_transformer_block.14} parent=178 // pred_region
                loop: start=0, step=1, limit=1
                $region195: #{joint_transformer_block.14} parent=193 // loop_pre_header
                  _
                $region196: #{joint_transformer_block.14} parent=193 // loop_header
                  %s721 = sphi 0, %s725
                  %p722 = scmp.ge.s32.totalorder %s721, 1
                  %s726 = sphi %s639, %s639
                  %s727 = sphi %s698, %s698
                $region197: #{joint_transformer_block.14} parent=193 // loop_header_branch
                  %724 = sbr.rel (%p722) target = $region201
                $region198: #{joint_transformer_block.14} parent=193 // loop_body
                  _
                $region199: #{joint_transformer_block.14} parent=193 // loop_footer
                  %s725 = sadd.s32 1, %s721
                $region200: #{joint_transformer_block.14} parent=193 // loop_footer_branch
                  %720 = sbr.rel target = $region196
                $region201: #{joint_transformer_block.14} parent=193 // loop_exit
                  _
                loop: start=0, step=1, limit=1
                $region202: #{joint_transformer_block.14} parent=193 // loop_pre_header
                  _
                $region203: #{joint_transformer_block.14} parent=193 // loop_header
                  %s730 = sphi 0, %s734
                  %p731 = scmp.ge.s32.totalorder %s730, 1
                  %s735 = sphi %s639, %s639
                  %s736 = sphi %s698, %s698
                $region204: #{joint_transformer_block.14} parent=193 // loop_header_branch
                  %733 = sbr.rel (%p731) target = $region208
                $region205: #{joint_transformer_block.14} parent=193 // loop_body
                  %v737 = vld [vmem:[%s735] sm:$0xf]
                  %738 = vst [vmem:[%s736] sm:$0xf] %v737
                  %v739 = vld [vmem:[%s735 + $0x4] sm:$0xf]
                  %740 = vst [vmem:[%s736 + $0x8] sm:$0xf] %v739
                $region206: #{joint_transformer_block.14} parent=193 // loop_footer
                  %s734 = sadd.s32 1, %s730
                $region207: #{joint_transformer_block.14} parent=193 // loop_footer_branch
                  %729 = sbr.rel target = $region203
                $region208: #{joint_transformer_block.14} parent=193 // loop_exit
                  _
              $region194: #{joint_transformer_block.14} parent=178 // pred_fallthru
                _
            $region179: #{joint_transformer_block.14} parent=174 // pred_fallthru
              _
            // Predicated region
            $region180: #{joint_transformer_block.14} parent=174 // pred_check
              _
            $region181: #{joint_transformer_block.14} parent=174 // pred_check_branch
              %704 = sbr.rel (0) target = $region183
            $region182: #{joint_transformer_block.14} parent=174 // pred_region
              loop: start=0, step=1, limit=1
              $region184: #{joint_transformer_block.14} parent=182 // loop_pre_header
                _
              $region185: #{joint_transformer_block.14} parent=182 // loop_header
                %s707 = sphi 0, %s711
                %p708 = scmp.ge.s32.totalorder %s707, 1
                %s712 = sphi %s639, %s639
                %s713 = sphi %s698, %s698
              $region186: #{joint_transformer_block.14} parent=182 // loop_header_branch
                %710 = sbr.rel (%p708) target = $region190
              $region187: #{joint_transformer_block.14} parent=182 // loop_body
                %v714 = vld [vmem:[%s712] sm:$0xf]
                %715 = vst [vmem:[%s713] sm:$0xf] %v714
                %v716 = vld [vmem:[%s712 + $0x4] sm:$0xf]
                %717 = vst [vmem:[%s713 + $0x8] sm:$0xf] %v716
              $region188: #{joint_transformer_block.14} parent=182 // loop_footer
                %s711 = sadd.s32 1, %s707
              $region189: #{joint_transformer_block.14} parent=182 // loop_footer_branch
                %706 = sbr.rel target = $region185
              $region190: #{joint_transformer_block.14} parent=182 // loop_exit
                _
            $region183: #{joint_transformer_block.14} parent=174 // pred_fallthru
              _
          $region175: #{joint_transformer_block.14} parent=170 // pred_fallthru
            _
          %741 = vnop
        $region171: #{joint_transformer_block.14} parent=117 // pred_fallthru
          _
      $region118: #{joint_transformer_block.14} parent=5 // pred_fallthru
        _
      %p742 = scmp.le.s32.totalorder 2, %s14
      // Predicated region
      $region209: #{joint_transformer_block.14} parent=5 // pred_check
        %p743 = pneg %p742
      $region210: #{joint_transformer_block.14} parent=5 // pred_check_branch
        %745 = sbr.rel (%p743) target = $region212
      $region211: #{joint_transformer_block.14} parent=5 // pred_region
        %s746 = ssub.s32 %s14, 2
        // Predicated region
        $region213: #{joint_transformer_block.14} parent=211 // pred_check
          %p747 = pneg %p219
        $region214: #{joint_transformer_block.14} parent=211 // pred_check_branch
          %749 = sbr.rel (%p747) target = $region216
        $region215: #{joint_transformer_block.14} parent=211 // pred_region
          %s750 = sand.u32 %s204, 1
          %s751 = sand.u32 %s204, 1
          %s752 = smul.addr %s751, 8
          %s753 = scalar_lea.vmem [#allocation4], %s752
        $region216: #{joint_transformer_block.14} parent=211 // pred_fallthru
          _
        // Predicated region
        $region217: #{joint_transformer_block.14} parent=211 // pred_check
          %p754 = pneg %p247
        $region218: #{joint_transformer_block.14} parent=211 // pred_check_branch
          %756 = sbr.rel (%p754) target = $region220
        $region219: #{joint_transformer_block.14} parent=211 // pred_region
          %s757 = sand.u32 %s232, 1
          %s758 = sand.u32 %s232, 1
          %s759 = smul.addr %s758, 8
          %s760 = scalar_lea.vmem [#allocation5], %s759
        $region220: #{joint_transformer_block.14} parent=211 // pred_fallthru
          _
      $region212: #{joint_transformer_block.14} parent=5 // pred_fallthru
        _
    $region6: #{joint_transformer_block.14} parent=1 // loop_footer
      %s18 = sadd.s32 1, %s14
    $region7: #{joint_transformer_block.14} parent=1 // loop_footer_branch
      %13 = sbr.rel target = $region3
    $region8: #{joint_transformer_block.14} parent=1 // loop_exit
      _

// kernel: joint_transformer_block.15
$region0: #{joint_transformer_block.15}
  #allocation0 [shape = 'u32[]', space=smem, size = 0x4, offset = 0x4, fixed_abs, tag = 'smem constant byte address 0x4 - core index']
  #allocation1 [shape = 'u32[144,128]{1,0:T(1,128)}', space=vmem, size = 0x12000, scoped, tag = 'internal scratch']
  #allocation2 [shape = 'f32[16,1]{1,0:T(8,128)}', space=vmem, size = 0x2000, scoped, tag = 'scratch operand']
  #allocation3 [shape = 'f32[16,1]{1,0:T(8,128)}', space=vmem, size = 0x2000, scoped, tag = 'scratch operand']
  #allocation4 [shape = 'f32[16,128]{1,0:T(8,128)}', space=vmem, size = 0x2000, scoped, tag = 'scratch operand']
  %s0 = inlined_call_operand.vmem [shape: bf16[16,256], index: 0, kind: input, shape index: {}]
  %s1 = inlined_call_operand.vmem [shape: bf16[16,256], index: 1, kind: input, shape index: {}]
  %s2 = inlined_call_operand.vmem [shape: bf16[16,768], index: 2, kind: input, shape index: {}]
  %s3 = inlined_call_operand.vmem [shape: bf16[16,256], index: 3, kind: output, shape index: {}]
  %s4 = sld [smem:[#allocation0]]
  $region213: #{joint_transformer_block.15} parent=0
    _
  %s6 = ssub.s32 1, %s4
  %s7 = scalar_select 0, %s6, %s4
  $region1: #{joint_transformer_block.15} parent=0
    #allocation5 [shape = 'u8[8192]{0}', space=vmem, size = 0x2000, scoped, tag = 'input window, operand 0']
    #allocation6 [shape = 'u8[8192]{0}', space=vmem, size = 0x2000, scoped, tag = 'input window, operand 1']
    #allocation7 [shape = 'u8[8192]{0}', space=vmem, size = 0x2000, scoped, tag = 'input window, operand 2']
    #allocation8 [shape = 'u8[8192]{0}', space=vmem, size = 0x2000, scoped, tag = 'output window, operand 0']
    loop: start=0, step=1, limit=4
    $region2: #{joint_transformer_block.15} parent=1 // loop_pre_header
      _
    $region3: #{joint_transformer_block.15} parent=1 // loop_header
      %s9 = sphi 0, %s13
      %p10 = scmp.ge.s32.totalorder %s9, 4
      %s16 = sphi 0, %s35
      %s17 = sphi 0, %s31
      %s18 = sphi 0, %s27
      %s19 = sphi 0, %s16
      %s20 = sphi 0, %s17
      %s21 = sphi 0, %s18
      %s22 = sphi 0, %s19
      %s23 = sphi 0, %s20
      %s24 = sphi 0, %s21
      %s40 = sphi 0, %s42
      %s43 = sphi 0, %s40
      %s44 = sphi 0, %s43
      %s60 = sphi 0, %s44
      %s68 = sphi 0, %s70
      %s71 = sphi 0, %s68
      %s72 = sphi 0, %s71
      %s88 = sphi 0, %s72
      %s98 = sphi 0, %s100
      %s101 = sphi 0, %s98
      %s102 = sphi 0, %s101
      %s118 = sphi 0, %s102
      %s126 = sphi 0, %s128
      %s129 = sphi 0, %s126
      %s130 = sphi 0, %s129
      %s146 = sphi 0, %s130
    $region4: #{joint_transformer_block.15} parent=1 // loop_header_branch
      %12 = sbr.rel (%p10) target = $region8
    $region5: #{joint_transformer_block.15} parent=1 // loop_body
      %s14 = ssub.s32 %s9, 1
      %s15 = ssub.s32 %s9, 2
      %s25 = sadd.s32 1, %s18
      %p26 = scmp.ge.s32.totalorder %s25, 1
      %s27 = scalar_select %p26, 0, %s25
      %s28 = sadd.s32 1, %s17
      %s29 = scalar_select %p26, %s28, %s17
      %p30 = scmp.ge.s32.totalorder %s29, 1
      %s31 = scalar_select %p30, 0, %s29
      %s32 = sadd.s32 1, %s16
      %s33 = scalar_select %p30, %s32, %s16
      %p34 = scmp.ge.s32.totalorder %s33, 2
      %s35 = scalar_select %p34, 0, %s33
      %s36 = ssub.s32 %s17, %s31
      %s37 = ssub.s32 %s16, %s35
      %s38 = sor.u32 %s36, %s37
      %p39 = scmp.eq.s32.totalorder %s38, 0
      %s41 = sadd.s32 %s40, 1
      %s42 = scalar_select %p39, %s40, %s41
      %p45 = pneg %p39
      %p46 = scmp.eq.s32.totalorder %s9, 1
      %p47 = por %p45, %p46
      %p48 = scmp.ne.s32.totalorder %s40, %s43
      %p49 = scmp.eq.s32.totalorder %s9, 0
      %p50 = por %p48, %p49
      %p51 = scmp.ne.s32.totalorder %s40, %s43
      %p52 = scmp.eq.s32.totalorder %s14, 1
      %p53 = por %p51, %p52
      %p54 = scmp.ne.s32.totalorder %s43, %s44
      %p55 = scmp.eq.s32.totalorder %s14, 0
      %p56 = por %p54, %p55
      %p57 = scmp.ne.s32.totalorder %s43, %s44
      %p58 = scmp.eq.s32.totalorder %s15, 1
      %p59 = por %p57, %p58
      %p61 = scmp.ne.s32.totalorder %s44, %s60
      %p62 = scmp.eq.s32.totalorder %s15, 0
      %p63 = por %p61, %p62
      %s64 = ssub.s32 %s18, %s27
      %s65 = ssub.s32 %s16, %s35
      %s66 = sor.u32 %s64, %s65
      %p67 = scmp.eq.s32.totalorder %s66, 0
      %s69 = sadd.s32 %s68, 1
      %s70 = scalar_select %p67, %s68, %s69
      %p73 = pneg %p67
      %p74 = scmp.eq.s32.totalorder %s9, 1
      %p75 = por %p73, %p74
      %p76 = scmp.ne.s32.totalorder %s68, %s71
      %p77 = scmp.eq.s32.totalorder %s9, 0
      %p78 = por %p76, %p77
      %p79 = scmp.ne.s32.totalorder %s68, %s71
      %p80 = scmp.eq.s32.totalorder %s14, 1
      %p81 = por %p79, %p80
      %p82 = scmp.ne.s32.totalorder %s71, %s72
      %p83 = scmp.eq.s32.totalorder %s14, 0
      %p84 = por %p82, %p83
      %p85 = scmp.ne.s32.totalorder %s71, %s72
      %p86 = scmp.eq.s32.totalorder %s15, 1
      %p87 = por %p85, %p86
      %p89 = scmp.ne.s32.totalorder %s72, %s88
      %p90 = scmp.eq.s32.totalorder %s15, 0
      %p91 = por %p89, %p90
      %s92 = sadd.s32 %s16, 4
      %s93 = sadd.s32 %s35, 4
      %s94 = ssub.s32 %s18, %s27
      %s95 = ssub.s32 %s92, %s93
      %s96 = sor.u32 %s94, %s95
      %p97 = scmp.eq.s32.totalorder %s96, 0
      %s99 = sadd.s32 %s98, 1
      %s100 = scalar_select %p97, %s98, %s99
      %p103 = pneg %p97
      %p104 = scmp.eq.s32.totalorder %s9, 1
      %p105 = por %p103, %p104
      %p106 = scmp.ne.s32.totalorder %s98, %s101
      %p107 = scmp.eq.s32.totalorder %s9, 0
      %p108 = por %p106, %p107
      %p109 = scmp.ne.s32.totalorder %s98, %s101
      %p110 = scmp.eq.s32.totalorder %s14, 1
      %p111 = por %p109, %p110
      %p112 = scmp.ne.s32.totalorder %s101, %s102
      %p113 = scmp.eq.s32.totalorder %s14, 0
      %p114 = por %p112, %p113
      %p115 = scmp.ne.s32.totalorder %s101, %s102
      %p116 = scmp.eq.s32.totalorder %s15, 1
      %p117 = por %p115, %p116
      %p119 = scmp.ne.s32.totalorder %s102, %s118
      %p120 = scmp.eq.s32.totalorder %s15, 0
      %p121 = por %p119, %p120
      %s122 = ssub.s32 %s17, %s31
      %s123 = ssub.s32 %s16, %s35
      %s124 = sor.u32 %s122, %s123
      %p125 = scmp.eq.s32.totalorder %s124, 0
      %s127 = sadd.s32 %s126, 1
      %s128 = scalar_select %p125, %s126, %s127
      %p131 = pneg %p125
      %p132 = scmp.eq.s32.totalorder %s9, 1
      %p133 = por %p131, %p132
      %p134 = scmp.ne.s32.totalorder %s126, %s129
      %p135 = scmp.eq.s32.totalorder %s9, 0
      %p136 = por %p134, %p135
      %p137 = scmp.ne.s32.totalorder %s126, %s129
      %p138 = scmp.eq.s32.totalorder %s14, 1
      %p139 = por %p137, %p138
      %p140 = scmp.ne.s32.totalorder %s129, %s130
      %p141 = scmp.eq.s32.totalorder %s14, 0
      %p142 = por %p140, %p141
      %p143 = scmp.ne.s32.totalorder %s129, %s130
      %p144 = scmp.eq.s32.totalorder %s15, 1
      %p145 = por %p143, %p144
      %p147 = scmp.ne.s32.totalorder %s130, %s146
      %p148 = scmp.eq.s32.totalorder %s15, 0
      %p149 = por %p147, %p148
      %p150 = scmp.le.s32.totalorder 1, %s9
      %p151 = scmp.lt.s32.totalorder %s9, 3
      %p152 = pnand %p150, %p151
      %p153 = pneg %p152
      // Predicated region
      $region9: #{joint_transformer_block.15} parent=5 // pred_check
        _
      $region10: #{joint_transformer_block.15} parent=5 // pred_check_branch
        %155 = sbr.rel (%p152) target = $region12
      $region11: #{joint_transformer_block.15} parent=5 // pred_region
        %s156 = ssub.s32 %s9, 1
      $region12: #{joint_transformer_block.15} parent=5 // pred_fallthru
        _
      %p157 = scmp.lt.s32.totalorder %s9, 2
      // Predicated region
      $region13: #{joint_transformer_block.15} parent=5 // pred_check
        %p158 = pneg %p157
      $region14: #{joint_transformer_block.15} parent=5 // pred_check_branch
        %160 = sbr.rel (%p158) target = $region16
      $region15: #{joint_transformer_block.15} parent=5 // pred_region
        // Predicated region
        $region17: #{joint_transformer_block.15} parent=15 // pred_check
          %p161 = pneg %p50
        $region18: #{joint_transformer_block.15} parent=15 // pred_check_branch
          %163 = sbr.rel (%p161) target = $region20
        $region19: #{joint_transformer_block.15} parent=15 // pred_region
          %s164 = sand.u32 %s40, 1
          %s165 = sand.u32 %s40, 1
          %s166 = smul.addr %s165, 8
          %s167 = scalar_lea.vmem [#allocation5], %s166
          %s168 = smul.u32 2, %s17
          %s169 = smul.addr %s168, 2
          %s170 = sadd.s32 %s16, %s169
          %s171 = smul.addr %s170, 4
          %s172 = scalar_lea.vmem %s0, %s171
          // Predicated region
          $region21: #{joint_transformer_block.15} parent=19 // pred_check
            _
          $region22: #{joint_transformer_block.15} parent=19 // pred_check_branch
            %174 = sbr.rel (0) target = $region24
          $region23: #{joint_transformer_block.15} parent=19 // pred_region
            // Predicated region
            $region25: #{joint_transformer_block.15} parent=23 // pred_check
              _
            $region26: #{joint_transformer_block.15} parent=23 // pred_check_branch
              %176 = sbr.rel target = $region28
            $region27: #{joint_transformer_block.15} parent=23 // pred_region
              // Predicated region
              $region40: #{joint_transformer_block.15} parent=27 // pred_check
                _
              $region41: #{joint_transformer_block.15} parent=27 // pred_check_branch
                %193 = sbr.rel (0) target = $region43
              $region42: #{joint_transformer_block.15} parent=27 // pred_region
                loop: start=0, step=1, limit=1
                $region44: #{joint_transformer_block.15} parent=42 // loop_pre_header
                  _
                $region45: #{joint_transformer_block.15} parent=42 // loop_header
                  %s195 = sphi 0, %s199
                  %p196 = scmp.ge.s32.totalorder %s195, 1
                  %s200 = sphi %s172, %s172
                  %s201 = sphi %s167, %s167
                $region46: #{joint_transformer_block.15} parent=42 // loop_header_branch
                  %198 = sbr.rel (%p196) target = $region50
                $region47: #{joint_transformer_block.15} parent=42 // loop_body
                  _
                $region48: #{joint_transformer_block.15} parent=42 // loop_footer
                  %s199 = sadd.s32 1, %s195
                $region49: #{joint_transformer_block.15} parent=42 // loop_footer_branch
                  %194 = sbr.rel target = $region45
                $region50: #{joint_transformer_block.15} parent=42 // loop_exit
                  _
                loop: start=0, step=1, limit=1
                $region51: #{joint_transformer_block.15} parent=42 // loop_pre_header
                  _
                $region52: #{joint_transformer_block.15} parent=42 // loop_header
                  %s204 = sphi 0, %s208
                  %p205 = scmp.ge.s32.totalorder %s204, 1
                  %s209 = sphi %s172, %s172
                  %s210 = sphi %s167, %s167
                $region53: #{joint_transformer_block.15} parent=42 // loop_header_branch
                  %207 = sbr.rel (%p205) target = $region57
                $region54: #{joint_transformer_block.15} parent=42 // loop_body
                  %v211 = vld [vmem:[%s209] sm:$0xf]
                  %212 = vst [vmem:[%s210] sm:$0xf] %v211
                  %v213 = vld [vmem:[%s209 + $0x8] sm:$0xf]
                  %214 = vst [vmem:[%s210 + $0x4] sm:$0xf] %v213
                $region55: #{joint_transformer_block.15} parent=42 // loop_footer
                  %s208 = sadd.s32 1, %s204
                $region56: #{joint_transformer_block.15} parent=42 // loop_footer_branch
                  %203 = sbr.rel target = $region52
                $region57: #{joint_transformer_block.15} parent=42 // loop_exit
                  _
              $region43: #{joint_transformer_block.15} parent=27 // pred_fallthru
                _
            $region28: #{joint_transformer_block.15} parent=23 // pred_fallthru
              _
            // Predicated region
            $region29: #{joint_transformer_block.15} parent=23 // pred_check
              _
            $region30: #{joint_transformer_block.15} parent=23 // pred_check_branch
              %178 = sbr.rel (0) target = $region32
            $region31: #{joint_transformer_block.15} parent=23 // pred_region
              loop: start=0, step=1, limit=1
              $region33: #{joint_transformer_block.15} parent=31 // loop_pre_header
                _
              $region34: #{joint_transformer_block.15} parent=31 // loop_header
                %s181 = sphi 0, %s185
                %p182 = scmp.ge.s32.totalorder %s181, 1
                %s186 = sphi %s172, %s172
                %s187 = sphi %s167, %s167
              $region35: #{joint_transformer_block.15} parent=31 // loop_header_branch
                %184 = sbr.rel (%p182) target = $region39
              $region36: #{joint_transformer_block.15} parent=31 // loop_body
                %v188 = vld [vmem:[%s186] sm:$0xf]
                %189 = vst [vmem:[%s187] sm:$0xf] %v188
                %v190 = vld [vmem:[%s186 + $0x8] sm:$0xf]
                %191 = vst [vmem:[%s187 + $0x4] sm:$0xf] %v190
              $region37: #{joint_transformer_block.15} parent=31 // loop_footer
                %s185 = sadd.s32 1, %s181
              $region38: #{joint_transformer_block.15} parent=31 // loop_footer_branch
                %180 = sbr.rel target = $region34
              $region39: #{joint_transformer_block.15} parent=31 // loop_exit
                _
            $region32: #{joint_transformer_block.15} parent=23 // pred_fallthru
              _
          $region24: #{joint_transformer_block.15} parent=19 // pred_fallthru
            _
          %215 = vnop
        $region20: #{joint_transformer_block.15} parent=15 // pred_fallthru
          _
        // Predicated region
        $region58: #{joint_transformer_block.15} parent=15 // pred_check
          %p216 = pneg %p78
        $region59: #{joint_transformer_block.15} parent=15 // pred_check_branch
          %218 = sbr.rel (%p216) target = $region61
        $region60: #{joint_transformer_block.15} parent=15 // pred_region
          %s219 = sand.u32 %s68, 1
          %s220 = sand.u32 %s68, 1
          %s221 = smul.addr %s220, 8
          %s222 = scalar_lea.vmem [#allocation6], %s221
          %s223 = smul.u32 2, %s18
          %s224 = smul.addr %s223, 2
          %s225 = sadd.s32 %s16, %s224
          %s226 = smul.addr %s225, 4
          %s227 = scalar_lea.vmem %s1, %s226
          // Predicated region
          $region62: #{joint_transformer_block.15} parent=60 // pred_check
            _
          $region63: #{joint_transformer_block.15} parent=60 // pred_check_branch
            %229 = sbr.rel (0) target = $region65
          $region64: #{joint_transformer_block.15} parent=60 // pred_region
            // Predicated region
            $region66: #{joint_transformer_block.15} parent=64 // pred_check
              _
            $region67: #{joint_transformer_block.15} parent=64 // pred_check_branch
              %231 = sbr.rel target = $region69
            $region68: #{joint_transformer_block.15} parent=64 // pred_region
              // Predicated region
              $region81: #{joint_transformer_block.15} parent=68 // pred_check
                _
              $region82: #{joint_transformer_block.15} parent=68 // pred_check_branch
                %248 = sbr.rel (0) target = $region84
              $region83: #{joint_transformer_block.15} parent=68 // pred_region
                loop: start=0, step=1, limit=1
                $region85: #{joint_transformer_block.15} parent=83 // loop_pre_header
                  _
                $region86: #{joint_transformer_block.15} parent=83 // loop_header
                  %s250 = sphi 0, %s254
                  %p251 = scmp.ge.s32.totalorder %s250, 1
                  %s255 = sphi %s227, %s227
                  %s256 = sphi %s222, %s222
                $region87: #{joint_transformer_block.15} parent=83 // loop_header_branch
                  %253 = sbr.rel (%p251) target = $region91
                $region88: #{joint_transformer_block.15} parent=83 // loop_body
                  _
                $region89: #{joint_transformer_block.15} parent=83 // loop_footer
                  %s254 = sadd.s32 1, %s250
                $region90: #{joint_transformer_block.15} parent=83 // loop_footer_branch
                  %249 = sbr.rel target = $region86
                $region91: #{joint_transformer_block.15} parent=83 // loop_exit
                  _
                loop: start=0, step=1, limit=1
                $region92: #{joint_transformer_block.15} parent=83 // loop_pre_header
                  _
                $region93: #{joint_transformer_block.15} parent=83 // loop_header
                  %s259 = sphi 0, %s263
                  %p260 = scmp.ge.s32.totalorder %s259, 1
                  %s264 = sphi %s227, %s227
                  %s265 = sphi %s222, %s222
                $region94: #{joint_transformer_block.15} parent=83 // loop_header_branch
                  %262 = sbr.rel (%p260) target = $region98
                $region95: #{joint_transformer_block.15} parent=83 // loop_body
                  %v266 = vld [vmem:[%s264] sm:$0xf]
                  %267 = vst [vmem:[%s265] sm:$0xf] %v266
                  %v268 = vld [vmem:[%s264 + $0x8] sm:$0xf]
                  %269 = vst [vmem:[%s265 + $0x4] sm:$0xf] %v268
                $region96: #{joint_transformer_block.15} parent=83 // loop_footer
                  %s263 = sadd.s32 1, %s259
                $region97: #{joint_transformer_block.15} parent=83 // loop_footer_branch
                  %258 = sbr.rel target = $region93
                $region98: #{joint_transformer_block.15} parent=83 // loop_exit
                  _
              $region84: #{joint_transformer_block.15} parent=68 // pred_fallthru
                _
            $region69: #{joint_transformer_block.15} parent=64 // pred_fallthru
              _
            // Predicated region
            $region70: #{joint_transformer_block.15} parent=64 // pred_check
              _
            $region71: #{joint_transformer_block.15} parent=64 // pred_check_branch
              %233 = sbr.rel (0) target = $region73
            $region72: #{joint_transformer_block.15} parent=64 // pred_region
              loop: start=0, step=1, limit=1
              $region74: #{joint_transformer_block.15} parent=72 // loop_pre_header
                _
              $region75: #{joint_transformer_block.15} parent=72 // loop_header
                %s236 = sphi 0, %s240
                %p237 = scmp.ge.s32.totalorder %s236, 1
                %s241 = sphi %s227, %s227
                %s242 = sphi %s222, %s222
              $region76: #{joint_transformer_block.15} parent=72 // loop_header_branch
                %239 = sbr.rel (%p237) target = $region80
              $region77: #{joint_transformer_block.15} parent=72 // loop_body
                %v243 = vld [vmem:[%s241] sm:$0xf]
                %244 = vst [vmem:[%s242] sm:$0xf] %v243
                %v245 = vld [vmem:[%s241 + $0x8] sm:$0xf]
                %246 = vst [vmem:[%s242 + $0x4] sm:$0xf] %v245
              $region78: #{joint_transformer_block.15} parent=72 // loop_footer
                %s240 = sadd.s32 1, %s236
              $region79: #{joint_transformer_block.15} parent=72 // loop_footer_branch
                %235 = sbr.rel target = $region75
              $region80: #{joint_transformer_block.15} parent=72 // loop_exit
                _
            $region73: #{joint_transformer_block.15} parent=64 // pred_fallthru
              _
          $region65: #{joint_transformer_block.15} parent=60 // pred_fallthru
            _
          %270 = vnop
        $region61: #{joint_transformer_block.15} parent=15 // pred_fallthru
          _
        // Predicated region
        $region99: #{joint_transformer_block.15} parent=15 // pred_check
          %p271 = pneg %p108
        $region100: #{joint_transformer_block.15} parent=15 // pred_check_branch
          %273 = sbr.rel (%p271) target = $region102
        $region101: #{joint_transformer_block.15} parent=15 // pred_region
          %s274 = sand.u32 %s98, 1
          %s275 = sand.u32 %s98, 1
          %s276 = smul.addr %s275, 8
          %s277 = scalar_lea.vmem [#allocation7], %s276
          %s278 = sadd.s32 %s16, 4
          %s279 = smul.u32 2, %s18
          %s280 = smul.addr %s279, 6
          %s281 = sadd.s32 %s278, %s280
          %s282 = smul.addr %s281, 4
          %s283 = scalar_lea.vmem %s2, %s282
          // Predicated region
          $region103: #{joint_transformer_block.15} parent=101 // pred_check
            _
          $region104: #{joint_transformer_block.15} parent=101 // pred_check_branch
            %285 = sbr.rel (0) target = $region106
          $region105: #{joint_transformer_block.15} parent=101 // pred_region
            // Predicated region
            $region107: #{joint_transformer_block.15} parent=105 // pred_check
              _
            $region108: #{joint_transformer_block.15} parent=105 // pred_check_branch
              %287 = sbr.rel target = $region110
            $region109: #{joint_transformer_block.15} parent=105 // pred_region
              // Predicated region
              $region122: #{joint_transformer_block.15} parent=109 // pred_check
                _
              $region123: #{joint_transformer_block.15} parent=109 // pred_check_branch
                %304 = sbr.rel (0) target = $region125
              $region124: #{joint_transformer_block.15} parent=109 // pred_region
                loop: start=0, step=1, limit=1
                $region126: #{joint_transformer_block.15} parent=124 // loop_pre_header
                  _
                $region127: #{joint_transformer_block.15} parent=124 // loop_header
                  %s306 = sphi 0, %s310
                  %p307 = scmp.ge.s32.totalorder %s306, 1
                  %s311 = sphi %s283, %s283
                  %s312 = sphi %s277, %s277
                $region128: #{joint_transformer_block.15} parent=124 // loop_header_branch
                  %309 = sbr.rel (%p307) target = $region132
                $region129: #{joint_transformer_block.15} parent=124 // loop_body
                  _
                $region130: #{joint_transformer_block.15} parent=124 // loop_footer
                  %s310 = sadd.s32 1, %s306
                $region131: #{joint_transformer_block.15} parent=124 // loop_footer_branch
                  %305 = sbr.rel target = $region127
                $region132: #{joint_transformer_block.15} parent=124 // loop_exit
                  _
                loop: start=0, step=1, limit=1
                $region133: #{joint_transformer_block.15} parent=124 // loop_pre_header
                  _
                $region134: #{joint_transformer_block.15} parent=124 // loop_header
                  %s315 = sphi 0, %s319
                  %p316 = scmp.ge.s32.totalorder %s315, 1
                  %s320 = sphi %s283, %s283
                  %s321 = sphi %s277, %s277
                $region135: #{joint_transformer_block.15} parent=124 // loop_header_branch
                  %318 = sbr.rel (%p316) target = $region139
                $region136: #{joint_transformer_block.15} parent=124 // loop_body
                  %v322 = vld [vmem:[%s320] sm:$0xf]
                  %323 = vst [vmem:[%s321] sm:$0xf] %v322
                  %v324 = vld [vmem:[%s320 + $0x18] sm:$0xf]
                  %325 = vst [vmem:[%s321 + $0x4] sm:$0xf] %v324
                $region137: #{joint_transformer_block.15} parent=124 // loop_footer
                  %s319 = sadd.s32 1, %s315
                $region138: #{joint_transformer_block.15} parent=124 // loop_footer_branch
                  %314 = sbr.rel target = $region134
                $region139: #{joint_transformer_block.15} parent=124 // loop_exit
                  _
              $region125: #{joint_transformer_block.15} parent=109 // pred_fallthru
                _
            $region110: #{joint_transformer_block.15} parent=105 // pred_fallthru
              _
            // Predicated region
            $region111: #{joint_transformer_block.15} parent=105 // pred_check
              _
            $region112: #{joint_transformer_block.15} parent=105 // pred_check_branch
              %289 = sbr.rel (0) target = $region114
            $region113: #{joint_transformer_block.15} parent=105 // pred_region
              loop: start=0, step=1, limit=1
              $region115: #{joint_transformer_block.15} parent=113 // loop_pre_header
                _
              $region116: #{joint_transformer_block.15} parent=113 // loop_header
                %s292 = sphi 0, %s296
                %p293 = scmp.ge.s32.totalorder %s292, 1
                %s297 = sphi %s283, %s283
                %s298 = sphi %s277, %s277
              $region117: #{joint_transformer_block.15} parent=113 // loop_header_branch
                %295 = sbr.rel (%p293) target = $region121
              $region118: #{joint_transformer_block.15} parent=113 // loop_body
                %v299 = vld [vmem:[%s297] sm:$0xf]
                %300 = vst [vmem:[%s298] sm:$0xf] %v299
                %v301 = vld [vmem:[%s297 + $0x18] sm:$0xf]
                %302 = vst [vmem:[%s298 + $0x4] sm:$0xf] %v301
              $region119: #{joint_transformer_block.15} parent=113 // loop_footer
                %s296 = sadd.s32 1, %s292
              $region120: #{joint_transformer_block.15} parent=113 // loop_footer_branch
                %291 = sbr.rel target = $region116
              $region121: #{joint_transformer_block.15} parent=113 // loop_exit
                _
            $region114: #{joint_transformer_block.15} parent=105 // pred_fallthru
              _
          $region106: #{joint_transformer_block.15} parent=101 // pred_fallthru
            _
          %326 = vnop
        $region102: #{joint_transformer_block.15} parent=15 // pred_fallthru
          _
      $region16: #{joint_transformer_block.15} parent=5 // pred_fallthru
        _
      %p327 = scmp.le.s32.totalorder 1, %s9
      %p328 = scmp.lt.s32.totalorder %s9, 3
      %p329 = pnand %p327, %p328
      %p330 = pneg %p329
      // Predicated region
      $region140: #{joint_transformer_block.15} parent=5 // pred_check
        _
      $region141: #{joint_transformer_block.15} parent=5 // pred_check_branch
        %332 = sbr.rel (%p329) target = $region143
      $region142: #{joint_transformer_block.15} parent=5 // pred_region
        %s333 = ssub.s32 %s9, 1
        %s334 = sand.u32 %s43, 1
        %s335 = sand.u32 %s43, 1
        %s336 = smul.addr %s335, 8
        %s337 = scalar_lea.vmem [#allocation5], %s336
        // Predicated region
        $region144: #{joint_transformer_block.15} parent=142 // pred_check
          %p338 = pneg %p56
        $region145: #{joint_transformer_block.15} parent=142 // pred_check_branch
          %340 = sbr.rel (%p338) target = $region147
        $region146: #{joint_transformer_block.15} parent=142 // pred_region
          _
        $region147: #{joint_transformer_block.15} parent=142 // pred_fallthru
          _
        %s341 = sand.u32 %s71, 1
        %s342 = sand.u32 %s71, 1
        %s343 = smul.addr %s342, 8
        %s344 = scalar_lea.vmem [#allocation6], %s343
        // Predicated region
        $region148: #{joint_transformer_block.15} parent=142 // pred_check
          %p345 = pneg %p84
        $region149: #{joint_transformer_block.15} parent=142 // pred_check_branch
          %347 = sbr.rel (%p345) target = $region151
        $region150: #{joint_transformer_block.15} parent=142 // pred_region
          _
        $region151: #{joint_transformer_block.15} parent=142 // pred_fallthru
          _
        %s348 = sand.u32 %s101, 1
        %s349 = sand.u32 %s101, 1
        %s350 = smul.addr %s349, 8
        %s351 = scalar_lea.vmem [#allocation7], %s350
        // Predicated region
        $region152: #{joint_transformer_block.15} parent=142 // pred_check
          %p352 = pneg %p114
        $region153: #{joint_transformer_block.15} parent=142 // pred_check_branch
          %354 = sbr.rel (%p352) target = $region155
        $region154: #{joint_transformer_block.15} parent=142 // pred_region
          _
        $region155: #{joint_transformer_block.15} parent=142 // pred_fallthru
          _
        %s355 = sand.u32 %s43, 1
        %s356 = sand.u32 %s43, 1
        %s357 = smul.addr %s356, 8
        %s358 = scalar_lea.vmem [#allocation5], %s357
        %p359 = pneg %p56
        %p360 = pneg %p53
        %s361 = sand.u32 %s71, 1
        %s362 = sand.u32 %s71, 1
        %s363 = smul.addr %s362, 8
        %s364 = scalar_lea.vmem [#allocation6], %s363
        %p365 = pneg %p84
        %p366 = pneg %p81
        %s367 = sand.u32 %s101, 1
        %s368 = sand.u32 %s101, 1
        %s369 = smul.addr %s368, 8
        %s370 = scalar_lea.vmem [#allocation7], %s369
        %p371 = pneg %p114
        %p372 = pneg %p111
        %p373 = pneg %p142
        %p374 = pneg %p139
        %s375 = sand.u32 %s129, 1
        %s376 = sand.u32 %s129, 1
        %s377 = smul.addr %s376, 8
        %s378 = scalar_lea.vmem [#allocation8], %s377
        %s379 = smul.u32 2, %s20
        %s380 = smul.u32 2, %s21
        %s381 = sadd.s32 %s19, 4
        %s382 = smul.u32 2, %s21
        %s383 = smul.u32 2, %s20
        %p385 = scmp.eq.s32.totalorder %s21, 0
        // Predicated region
        $region156: #{joint_transformer_block.15} parent=142 // pred_check
          %p386 = pneg %p385
        $region157: #{joint_transformer_block.15} parent=142 // pred_check_branch
          %388 = sbr.rel (%p386) target = $region159
        $region158: #{joint_transformer_block.15} parent=142 // pred_region
          %vm389 = vcmask 7168
          %390 = vst.msk [vmem:[#allocation2] sm:$0xff] %vm389, -1e+30
          %391 = vst.msk [vmem:[#allocation2 + $0x8] sm:$0xff] %vm389, -1e+30
          %392 = vst.msk [vmem:[#allocation3] sm:$0xff] %vm389, 0.0
          %393 = vst.msk [vmem:[#allocation3 + $0x8] sm:$0xff] %vm389, 0.0
          %394 = vst [vmem:[#allocation4] sm:$0xff] 0.0
          %395 = vst [vmem:[#allocation4 + $0x8] sm:$0xff] 0.0
        $region159: #{joint_transformer_block.15} parent=142 // pred_fallthru
          _
        %v396 = vld [vmem:[%s337] sm:$0xf]
        %v397 = vld [vmem:[%s337 + $0x4] sm:$0xf]
        %v398 = vld [vmem:[%s344] sm:$0xf]
        %v399 = vld [vmem:[%s344 + $0x4] sm:$0xf]
        %v402 = vunpack.c.l.b16 %v396
        %v403 = vunpack.c.l.b16 %v397
        %v404 = vpack.c.b16 %v403, %v402
        %v408 = vunpack.c.l.b16 %v398
        %v409 = vunpack.c.l.b16 %v399
        %v410 = vpack.c.b16 %v409, %v408
        %412 = vmatprep.subr.bf16.mxu0 0
        %413 = vmatpush1.bf16.xpose.msra.mxu0 %v410
        %414 = vmatprep.subr.bf16.mxu0 0
        %415 = vmatpush1.bf16.xpose.msra.mxu0 0
        %416 = vmatprep.subr.bf16.mxu0 0
        %417 = vmatpush1.bf16.xpose.msra.mxu0 0
        %418 = vmatprep.subr.bf16.mxu0 0
        %419 = vmatpush1.bf16.xpose.msra.mxu0 0
        %420 = vmatprep.subr.bf16.mxu0 0
        %421 = vmatpush1.bf16.xpose.msra.mxu0 0
        %422 = vmatprep.subr.bf16.mxu0 0
        %423 = vmatpush1.bf16.xpose.msra.mxu0 0
        %424 = vmatprep.subr.bf16.mxu0 0
        %425 = vmatpush1.bf16.xpose.msra.mxu0 0
        %426 = vmatprep.subr.bf16.mxu0 0
        %427 = vmatpush1.bf16.xpose.msra.mxu0 0
        %428 = vmatprep.subr.bf16.mxu0 0
        %429 = vmatpush1.bf16.xpose.msra.mxu0 0
        %430 = vmatprep.subr.bf16.mxu0 0
        %431 = vmatpush1.bf16.xpose.msra.mxu0 0
        %432 = vmatprep.subr.bf16.mxu0 0
        %433 = vmatpush1.bf16.xpose.msra.mxu0 0
        %434 = vmatprep.subr.bf16.mxu0 0
        %435 = vmatpush1.bf16.xpose.msra.mxu0 0
        %436 = vmatprep.subr.bf16.mxu0 0
        %437 = vmatpush1.bf16.xpose.msra.mxu0 0
        %438 = vmatprep.subr.bf16.mxu0 0
        %439 = vmatpush1.bf16.xpose.msra.mxu0 0
        %440 = vmatprep.subr.bf16.mxu0 0
        %441 = vmatpush1.bf16.xpose.msra.mxu0 0
        %442 = vmatprep.subr.bf16.mxu0 0
        %443 = vmatpush1.bf16.xpose.msra.mxu0 0
        %444 = vmatprep.mubr.bf16.mxu0 0
        %445 = vmatmul.mubr.bf16.gmra.mrb[0].mxu0 %v404
        %v446 = vpop.f32.mrb[0].mxu0
        %v447 = vadd.f32 0.0, %v446
        %v448 = vpop.f32.mrb[0].mxu0
        %v449 = vpop.f32.mrb[0].mxu0
        %v450 = vadd.f32 0.0, %v449
        %v451 = vpop.f32.mrb[0].mxu0
        %452 = vdwg.mxu0
        %v453 = vld [vmem:[#allocation2] sm:$0xff]
        %v454 = vld [vmem:[#allocation2 + $0x8] sm:$0xff]
        %vm455 = vcmask 130048
        %v456 = vsel %vm455, %v447, -inf
        %457 = vmax.xlane.f32.xlu0 %v456
        %v458 = vpop.xlane.xlu0 %457
        %v459 = vsel %vm455, %v450, -inf
        %460 = vmax.xlane.f32.xlu0 %v459
        %v461 = vpop.xlane.xlu0 %460
        %v462 = vmax.f32 %v453, %v458
        %v463 = vmax.f32 %v454, %v461
        %v464 = vsub.f32 %v453, %v462
        %v465 = vsub.f32 %v454, %v463
        %v466 = vmul.f32 %v464, 1.442695
        %v467 = vpow.pop %v466
        %v468 = vmul.f32 %v465, 1.442695
        %v469 = vpow.pop %v468
        %471 = vset.pattern.permute.xlu0 0
        %472 = vperm.xlu0 %471, %v462
        %v473 = vpop.permute.xlu0 %472
        %476 = vset.pattern.permute.xlu0 0
        %477 = vperm.xlu0 %476, %v463
        %v478 = vpop.permute.xlu0 %477
        %v480 = vsub.f32 %v447, %v473
        %v481 = vsub.f32 %v450, %v478
        %v482 = vpack.c.bf16 %v481, %v480
        %v484 = vmul.bf16 %v482, 1069105081
        %v485 = vpow.bf16.pop %v484
        %v486 = vunpack.c.l.bf16 %v485
        %v487 = vunpack.c.h.bf16 %v485
        %v488 = vsel %vm455, %v486, 0.0
        %489 = vadd.xlane.f32.xlu0 %v488
        %v490 = vpop.xlane.xlu0 %489
        %v491 = vsel %vm455, %v487, 0.0
        %492 = vadd.xlane.f32.xlu0 %v491
        %v493 = vpop.xlane.xlu0 %492
        %v494 = vld [vmem:[%s351] sm:$0xf]
        %v495 = vld [vmem:[%s351 + $0x4] sm:$0xf]
        %v498 = vunpack.c.l.b16 %v494
        %v499 = vunpack.c.l.b16 %v495
        %v500 = vpack.c.b16 %v499, %v498
        %v503 = vsel %vm455, %v485, 0
        %505 = vmatprep.subr.bf16.mxu0 0
        %506 = vmatpush1.bf16.msra.mxu0 %v500
        %507 = vmatprep.subr.bf16.mxu0 0
        %508 = vmatpush1.bf16.msra.mxu0 0
        %509 = vmatprep.subr.bf16.mxu0 0
        %510 = vmatpush1.bf16.msra.mxu0 0
        %511 = vmatprep.subr.bf16.mxu0 0
        %512 = vmatpush1.bf16.msra.mxu0 0
        %513 = vmatprep.subr.bf16.mxu0 0
        %514 = vmatpush1.bf16.msra.mxu0 0
        %515 = vmatprep.subr.bf16.mxu0 0
        %516 = vmatpush1.bf16.msra.mxu0 0
        %517 = vmatprep.subr.bf16.mxu0 0
        %518 = vmatpush1.bf16.msra.mxu0 0
        %519 = vmatprep.subr.bf16.mxu0 0
        %520 = vmatpush1.bf16.msra.mxu0 0
        %521 = vmatprep.subr.bf16.mxu0 0
        %522 = vmatpush1.bf16.msra.mxu0 0
        %523 = vmatprep.subr.bf16.mxu0 0
        %524 = vmatpush1.bf16.msra.mxu0 0
        %525 = vmatprep.subr.bf16.mxu0 0
        %526 = vmatpush1.bf16.msra.mxu0 0
        %527 = vmatprep.subr.bf16.mxu0 0
        %528 = vmatpush1.bf16.msra.mxu0 0
        %529 = vmatprep.subr.bf16.mxu0 0
        %530 = vmatpush1.bf16.msra.mxu0 0
        %531 = vmatprep.subr.bf16.mxu0 0
        %532 = vmatpush1.bf16.msra.mxu0 0
        %533 = vmatprep.subr.bf16.mxu0 0
        %534 = vmatpush1.bf16.msra.mxu0 0
        %535 = vmatprep.subr.bf16.mxu0 0
        %536 = vmatpush1.bf16.msra.mxu0 0
        %537 = vmatprep.mubr.bf16.mxu0 0
        %538 = vmatmul.mubr.bf16.gmra.mrb[0].mxu0 %v503
        %v539 = vpop.f32.mrb[0].mxu0
        %v540 = vadd.f32 0.0, %v539
        %v541 = vpop.f32.mrb[0].mxu0
        %v542 = vpop.f32.mrb[0].mxu0
        %v543 = vadd.f32 0.0, %v542
        %v544 = vpop.f32.mrb[0].mxu0
        %545 = vdwg.mxu0
        %v546 = vld [vmem:[#allocation3] sm:$0xff]
        %v547 = vld [vmem:[#allocation3 + $0x8] sm:$0xff]
        %v548 = vmul.f32 %v467, %v546
        %v549 = vmul.f32 %v469, %v547
        %v550 = vadd.f32 %v548, %v490
        %v551 = vadd.f32 %v549, %v493
        %vm552 = vcmask 7168
        %553 = vst.msk [vmem:[#allocation3] sm:$0xff] %vm552, %v550
        %554 = vst.msk [vmem:[#allocation3 + $0x8] sm:$0xff] %vm552, %v551
        %v555 = vld [vmem:[#allocation4] sm:$0xff]
        %v556 = vld [vmem:[#allocation4 + $0x8] sm:$0xff]
        %558 = vset.pattern.permute.xlu0 0
        %559 = vperm.xlu0 %558, %v467
        %v560 = vpop.permute.xlu0 %559
        %563 = vset.pattern.permute.xlu0 0
        %564 = vperm.xlu0 %563, %v469
        %v565 = vpop.permute.xlu0 %564
        %v567 = vmul.f32 %v560, %v555
        %v568 = vmul.f32 %v565, %v556
        %v569 = vadd.f32 %v567, %v540
        %v570 = vadd.f32 %v568, %v543
        %571 = vst [vmem:[#allocation4] sm:$0xff] %v569
        %572 = vst [vmem:[#allocation4 + $0x8] sm:$0xff] %v570
        %573 = vst.msk [vmem:[#allocation2] sm:$0xff] %vm552, %v462
        %574 = vst.msk [vmem:[#allocation2 + $0x8] sm:$0xff] %vm552, %v463
        // Predicated region
        $region160: #{joint_transformer_block.15} parent=142 // pred_check
          %p575 = pneg %p385
        $region161: #{joint_transformer_block.15} parent=142 // pred_check_branch
          %577 = sbr.rel (%p575) target = $region163
        $region162: #{joint_transformer_block.15} parent=142 // pred_region
          %v578 = vld [vmem:[#allocation4] sm:$0xff]
          %v579 = vld [vmem:[#allocation4 + $0x8] sm:$0xff]
          %v580 = vld [vmem:[#allocation3] sm:$0xff]
          %v581 = vld [vmem:[#allocation3 + $0x8] sm:$0xff]
          %v582 = vrcp.pop %v580
          %v583 = vrcp.pop %v581
          %585 = vset.pattern.permute.xlu0 0
          %586 = vperm.xlu0 %585, %v582
          %v587 = vpop.permute.xlu0 %586
          %590 = vset.pattern.permute.xlu0 0
          %591 = vperm.xlu0 %590, %v583
          %v592 = vpop.permute.xlu0 %591
          %v594 = vmul.f32 %v578, %v587
          %v595 = vmul.f32 %v579, %v592
          %v596 = vpack.c.bf16 %v595, %v594
          %v598 = vunpack.c.l.b16 %v596
          %v599 = vunpack.c.h.b16 %v596
          %v600 = vpack.c.b16 %v598, %v598
          %v601 = vpack.c.b16 %v599, %v599
          %604 = vst [vmem:[%s378] sm:$0xf] %v600
          %605 = vst [vmem:[%s378 + $0x4] sm:$0xf] %v601
        $region163: #{joint_transformer_block.15} parent=142 // pred_fallthru
          _
        %s606 = sand.u32 %s129, 1
        %s607 = sand.u32 %s129, 1
        %s608 = smul.addr %s607, 8
        %s609 = scalar_lea.vmem [#allocation8], %s608
        // Predicated region
        $region164: #{joint_transformer_block.15} parent=142 // pred_check
          %p610 = pneg %p139
        $region165: #{joint_transformer_block.15} parent=142 // pred_check_branch
          %612 = sbr.rel (%p610) target = $region167
        $region166: #{joint_transformer_block.15} parent=142 // pred_region
          %s613 = smul.u32 2, %s20
          %s614 = smul.addr %s613, 2
          %s615 = sadd.s32 %s19, %s614
          %s616 = smul.addr %s615, 4
          %s617 = scalar_lea.vmem %s3, %s616
          // Predicated region
          $region168: #{joint_transformer_block.15} parent=166 // pred_check
            _
          $region169: #{joint_transformer_block.15} parent=166 // pred_check_branch
            %619 = sbr.rel (0) target = $region171
          $region170: #{joint_transformer_block.15} parent=166 // pred_region
            // Predicated region
            $region172: #{joint_transformer_block.15} parent=170 // pred_check
              _
            $region173: #{joint_transformer_block.15} parent=170 // pred_check_branch
              %621 = sbr.rel target = $region175
            $region174: #{joint_transformer_block.15} parent=170 // pred_region
              // Predicated region
              $region187: #{joint_transformer_block.15} parent=174 // pred_check
                _
              $region188: #{joint_transformer_block.15} parent=174 // pred_check_branch
                %638 = sbr.rel (0) target = $region190
              $region189: #{joint_transformer_block.15} parent=174 // pred_region
                loop: start=0, step=1, limit=1
                $region191: #{joint_transformer_block.15} parent=189 // loop_pre_header
                  _
                $region192: #{joint_transformer_block.15} parent=189 // loop_header
                  %s640 = sphi 0, %s644
                  %p641 = scmp.ge.s32.totalorder %s640, 1
                  %s645 = sphi %s609, %s609
                  %s646 = sphi %s617, %s617
                $region193: #{joint_transformer_block.15} parent=189 // loop_header_branch
                  %643 = sbr.rel (%p641) target = $region197
                $region194: #{joint_transformer_block.15} parent=189 // loop_body
                  _
                $region195: #{joint_transformer_block.15} parent=189 // loop_footer
                  %s644 = sadd.s32 1, %s640
                $region196: #{joint_transformer_block.15} parent=189 // loop_footer_branch
                  %639 = sbr.rel target = $region192
                $region197: #{joint_transformer_block.15} parent=189 // loop_exit
                  _
                loop: start=0, step=1, limit=1
                $region198: #{joint_transformer_block.15} parent=189 // loop_pre_header
                  _
                $region199: #{joint_transformer_block.15} parent=189 // loop_header
                  %s649 = sphi 0, %s653
                  %p650 = scmp.ge.s32.totalorder %s649, 1
                  %s654 = sphi %s609, %s609
                  %s655 = sphi %s617, %s617
                $region200: #{joint_transformer_block.15} parent=189 // loop_header_branch
                  %652 = sbr.rel (%p650) target = $region204
                $region201: #{joint_transformer_block.15} parent=189 // loop_body
                  %v656 = vld [vmem:[%s654] sm:$0xf]
                  %657 = vst [vmem:[%s655] sm:$0xf] %v656
                  %v658 = vld [vmem:[%s654 + $0x4] sm:$0xf]
                  %659 = vst [vmem:[%s655 + $0x8] sm:$0xf] %v658
                $region202: #{joint_transformer_block.15} parent=189 // loop_footer
                  %s653 = sadd.s32 1, %s649
                $region203: #{joint_transformer_block.15} parent=189 // loop_footer_branch
                  %648 = sbr.rel target = $region199
                $region204: #{joint_transformer_block.15} parent=189 // loop_exit
                  _
              $region190: #{joint_transformer_block.15} parent=174 // pred_fallthru
                _
            $region175: #{joint_transformer_block.15} parent=170 // pred_fallthru
              _
            // Predicated region
            $region176: #{joint_transformer_block.15} parent=170 // pred_check
              _
            $region177: #{joint_transformer_block.15} parent=170 // pred_check_branch
              %623 = sbr.rel (0) target = $region179
            $region178: #{joint_transformer_block.15} parent=170 // pred_region
              loop: start=0, step=1, limit=1
              $region180: #{joint_transformer_block.15} parent=178 // loop_pre_header
                _
              $region181: #{joint_transformer_block.15} parent=178 // loop_header
                %s626 = sphi 0, %s630
                %p627 = scmp.ge.s32.totalorder %s626, 1
                %s631 = sphi %s609, %s609
                %s632 = sphi %s617, %s617
              $region182: #{joint_transformer_block.15} parent=178 // loop_header_branch
                %629 = sbr.rel (%p627) target = $region186
              $region183: #{joint_transformer_block.15} parent=178 // loop_body
                %v633 = vld [vmem:[%s631] sm:$0xf]
                %634 = vst [vmem:[%s632] sm:$0xf] %v633
                %v635 = vld [vmem:[%s631 + $0x4] sm:$0xf]
                %636 = vst [vmem:[%s632 + $0x8] sm:$0xf] %v635
              $region184: #{joint_transformer_block.15} parent=178 // loop_footer
                %s630 = sadd.s32 1, %s626
              $region185: #{joint_transformer_block.15} parent=178 // loop_footer_branch
                %625 = sbr.rel target = $region181
              $region186: #{joint_transformer_block.15} parent=178 // loop_exit
                _
            $region179: #{joint_transformer_block.15} parent=170 // pred_fallthru
              _
          $region171: #{joint_transformer_block.15} parent=166 // pred_fallthru
            _
          %660 = vnop
        $region167: #{joint_transformer_block.15} parent=142 // pred_fallthru
          _
      $region143: #{joint_transformer_block.15} parent=5 // pred_fallthru
        _
      %p661 = scmp.le.s32.totalorder 2, %s9
      // Predicated region
      $region205: #{joint_transformer_block.15} parent=5 // pred_check
        %p662 = pneg %p661
      $region206: #{joint_transformer_block.15} parent=5 // pred_check_branch
        %664 = sbr.rel (%p662) target = $region208
      $region207: #{joint_transformer_block.15} parent=5 // pred_region
        %s665 = ssub.s32 %s9, 2
        // Predicated region
        $region209: #{joint_transformer_block.15} parent=207 // pred_check
          %p666 = pneg %p145
        $region210: #{joint_transformer_block.15} parent=207 // pred_check_branch
          %668 = sbr.rel (%p666) target = $region212
        $region211: #{joint_transformer_block.15} parent=207 // pred_region
          %s669 = sand.u32 %s130, 1
          %s670 = sand.u32 %s130, 1
          %s671 = smul.addr %s670, 8
          %s672 = scalar_lea.vmem [#allocation8], %s671
        $region212: #{joint_transformer_block.15} parent=207 // pred_fallthru
          _
      $region208: #{joint_transformer_block.15} parent=5 // pred_fallthru
        _
    $region6: #{joint_transformer_block.15} parent=1 // loop_footer
      %s13 = sadd.s32 1, %s9
    $region7: #{joint_transformer_block.15} parent=1 // loop_footer_branch
      %8 = sbr.rel target = $region3
    $region8: #{joint_transformer_block.15} parent=1 // loop_exit
      _

// kernel: joint_transformer_block.16
$region0: #{joint_transformer_block.16}
  #allocation0 [shape = 'u32[]', space=smem, size = 0x4, offset = 0x4, fixed_abs, tag = 'smem constant byte address 0x4 - core index']
  #allocation1 [shape = 'u32[144,128]{1,0:T(1,128)}', space=vmem, size = 0x12000, scoped, tag = 'internal scratch']
  #allocation2 [shape = 'f32[8,256]{1,0:T(8,128)}', space=vmem, size = 0x2000, scoped, tag = 'scratch operand']
  %s0 = inlined_call_operand.vmem [shape: bf16[16,256], index: 0, kind: input, shape index: {}]
  %s1 = inlined_call_operand.vmem [shape: bf16[2,256,256], index: 1, kind: input, shape index: {}]
  %s2 = inlined_call_operand.vmem [shape: bf16[2,1,256], index: 2, kind: input, shape index: {}]
  %s3 = inlined_call_operand.vmem [shape: bf16[16,256], index: 3, kind: input, shape index: {}]
  %s4 = inlined_call_operand.vmem [shape: f32[2,1,256], index: 4, kind: input, shape index: {}]
  %s5 = inlined_call_operand.vmem [shape: bf16[16,256], index: 5, kind: output, shape index: {}]
  %s6 = sld [smem:[#allocation0]]
  $region61: #{joint_transformer_block.16} parent=0
    _
  %s8 = ssub.s32 1, %s6
  %s9 = scalar_select 0, %s8, %s6
  loop: start=0, step=1, limit=4
  $region2: #{joint_transformer_block.16} parent=0 // loop_pre_header
    _
  $region3: #{joint_transformer_block.16} parent=0 // loop_header
    %s11 = sphi 0, %s15
    %p12 = scmp.ge.s32.totalorder %s11, 4
    %s18 = sphi 0, %s37
    %s19 = sphi 0, %s33
    %s20 = sphi 0, %s29
    %s21 = sphi 0, %s18
    %s22 = sphi 0, %s19
    %s23 = sphi 0, %s20
    %s24 = sphi 0, %s21
    %s25 = sphi 0, %s22
    %s26 = sphi 0, %s23
    %s42 = sphi 0, %s44
    %s45 = sphi 0, %s42
    %s46 = sphi 0, %s45
    %s62 = sphi 0, %s46
    %s76 = sphi 0, %s78
    %s79 = sphi 0, %s76
    %s80 = sphi 0, %s79
    %s96 = sphi 0, %s80
    %s108 = sphi 0, %s110
    %s111 = sphi 0, %s108
    %s112 = sphi 0, %s111
    %s128 = sphi 0, %s112
    %s136 = sphi 0, %s138
    %s139 = sphi 0, %s136
    %s140 = sphi 0, %s139
    %s156 = sphi 0, %s140
    %s168 = sphi 0, %s170
    %s171 = sphi 0, %s168
    %s172 = sphi 0, %s171
    %s188 = sphi 0, %s172
    %s196 = sphi 0, %s198
    %s199 = sphi 0, %s196
    %s200 = sphi 0, %s199
    %s216 = sphi 0, %s200
  $region4: #{joint_transformer_block.16} parent=0 // loop_header_branch
    %14 = sbr.rel (%p12) target = $region8
  $region5: #{joint_transformer_block.16} parent=0 // loop_body
    %s16 = ssub.s32 %s11, 1
    %s17 = ssub.s32 %s11, 2
    %s27 = sadd.s32 1, %s20
    %p28 = scmp.ge.s32.totalorder %s27, 1
    %s29 = scalar_select %p28, 0, %s27
    %s30 = sadd.s32 1, %s19
    %s31 = scalar_select %p28, %s30, %s19
    %p32 = scmp.ge.s32.totalorder %s31, 1
    %s33 = scalar_select %p32, 0, %s31
    %s34 = sadd.s32 1, %s18
    %s35 = scalar_select %p32, %s34, %s18
    %p36 = scmp.ge.s32.totalorder %s35, 2
    %s37 = scalar_select %p36, 0, %s35
    %s38 = ssub.s32 %s18, %s37
    %s39 = ssub.s32 %s20, %s29
    %s40 = sor.u32 %s38, %s39
    %p41 = scmp.eq.s32.totalorder %s40, 0
    %s43 = sadd.s32 %s42, 1
    %s44 = scalar_select %p41, %s42, %s43
    %p47 = pneg %p41
    %p48 = scmp.eq.s32.totalorder %s11, 1
    %p49 = por %p47, %p48
    %p50 = scmp.ne.s32.totalorder %s42, %s45
    %p51 = scmp.eq.s32.totalorder %s11, 0
    %p52 = por %p50, %p51
    %p53 = scmp.ne.s32.totalorder %s42, %s45
    %p54 = scmp.eq.s32.totalorder %s16, 1
    %p55 = por %p53, %p54
    %p56 = scmp.ne.s32.totalorder %s45, %s46
    %p57 = scmp.eq.s32.totalorder %s16, 0
    %p58 = por %p56, %p57
    %p59 = scmp.ne.s32.totalorder %s45, %s46
    %p60 = scmp.eq.s32.totalorder %s17, 1
    %p61 = por %p59, %p60
    %p63 = scmp.ne.s32.totalorder %s46, %s62
    %p64 = scmp.eq.s32.totalorder %s17, 0
    %p65 = por %p63, %p64
    %p66 = scmp.ge.s32.totalorder %s18, 1
    %s67 = scalar_select %p66, 1, 0
    %p68 = scmp.ge.s32.totalorder %s37, 1
    %s69 = scalar_select %p68, 1, 0
    %s70 = ssub.s32 %s67, %s69
    %s71 = ssub.s32 %s20, %s29
    %s72 = sor.u32 %s70, %s71
    %s73 = ssub.s32 %s19, %s33
    %s74 = sor.u32 %s72, %s73
    %p75 = scmp.eq.s32.totalorder %s74, 0
    %s77 = sadd.s32 %s76, 1
    %s78 = scalar_select %p75, %s76, %s77
    %p81 = pneg %p75
    %p82 = scmp.eq.s32.totalorder %s11, 1
    %p83 = por %p81, %p82
    %p84 = scmp.ne.s32.totalorder %s76, %s79
    %p85 = scmp.eq.s32.totalorder %s11, 0
    %p86 = por %p84, %p85
    %p87 = scmp.ne.s32.totalorder %s76, %s79
    %p88 = scmp.eq.s32.totalorder %s16, 1
    %p89 = por %p87, %p88
    %p90 = scmp.ne.s32.totalorder %s79, %s80
    %p91 = scmp.eq.s32.totalorder %s16, 0
    %p92 = por %p90, %p91
    %p93 = scmp.ne.s32.totalorder %s79, %s80
    %p94 = scmp.eq.s32.totalorder %s17, 1
    %p95 = por %p93, %p94
    %p97 = scmp.ne.s32.totalorder %s80, %s96
    %p98 = scmp.eq.s32.totalorder %s17, 0
    %p99 = por %p97, %p98
    %p100 = scmp.ge.s32.totalorder %s18, 1
    %s101 = scalar_select %p100, 1, 0
    %p102 = scmp.ge.s32.totalorder %s37, 1
    %s103 = scalar_select %p102, 1, 0
    %s104 = ssub.s32 %s101, %s103
    %s105 = ssub.s32 %s19, %s33
    %s106 = sor.u32 %s104, %s105
    %p107 = scmp.eq.s32.totalorder %s106, 0
    %s109 = sadd.s32 %s108, 1
    %s110 = scalar_select %p107, %s108, %s109
    %p113 = pneg %p107
    %p114 = scmp.eq.s32.totalorder %s11, 1
    %p115 = por %p113, %p114
    %p116 = scmp.ne.s32.totalorder %s108, %s111
    %p117 = scmp.eq.s32.totalorder %s11, 0
    %p118 = por %p116, %p117
    %p119 = scmp.ne.s32.totalorder %s108, %s111
    %p120 = scmp.eq.s32.totalorder %s16, 1
    %p121 = por %p119, %p120
    %p122 = scmp.ne.s32.totalorder %s111, %s112
    %p123 = scmp.eq.s32.totalorder %s16, 0
    %p124 = por %p122, %p123
    %p125 = scmp.ne.s32.totalorder %s111, %s112
    %p126 = scmp.eq.s32.totalorder %s17, 1
    %p127 = por %p125, %p126
    %p129 = scmp.ne.s32.totalorder %s112, %s128
    %p130 = scmp.eq.s32.totalorder %s17, 0
    %p131 = por %p129, %p130
    %s132 = ssub.s32 %s18, %s37
    %s133 = ssub.s32 %s19, %s33
    %s134 = sor.u32 %s132, %s133
    %p135 = scmp.eq.s32.totalorder %s134, 0
    %s137 = sadd.s32 %s136, 1
    %s138 = scalar_select %p135, %s136, %s137
    %p141 = pneg %p135
    %p142 = scmp.eq.s32.totalorder %s11, 1
    %p143 = por %p141, %p142
    %p144 = scmp.ne.s32.totalorder %s136, %s139
    %p145 = scmp.eq.s32.totalorder %s11, 0
    %p146 = por %p144, %p145
    %p147 = scmp.ne.s32.totalorder %s136, %s139
    %p148 = scmp.eq.s32.totalorder %s16, 1
    %p149 = por %p147, %p148
    %p150 = scmp.ne.s32.totalorder %s139, %s140
    %p151 = scmp.eq.s32.totalorder %s16, 0
    %p152 = por %p150, %p151
    %p153 = scmp.ne.s32.totalorder %s139, %s140
    %p154 = scmp.eq.s32.totalorder %s17, 1
    %p155 = por %p153, %p154
    %p157 = scmp.ne.s32.totalorder %s140, %s156
    %p158 = scmp.eq.s32.totalorder %s17, 0
    %p159 = por %p157, %p158
    %p160 = scmp.ge.s32.totalorder %s18, 1
    %s161 = scalar_select %p160, 1, 0
    %p162 = scmp.ge.s32.totalorder %s37, 1
    %s163 = scalar_select %p162, 1, 0
    %s164 = ssub.s32 %s161, %s163
    %s165 = ssub.s32 %s19, %s33
    %s166 = sor.u32 %s164, %s165
    %p167 = scmp.eq.s32.totalorder %s166, 0
    %s169 = sadd.s32 %s168, 1
    %s170 = scalar_select %p167, %s168, %s169
    %p173 = pneg %p167
    %p174 = scmp.eq.s32.totalorder %s11, 1
    %p175 = por %p173, %p174
    %p176 = scmp.ne.s32.totalorder %s168, %s171
    %p177 = scmp.eq.s32.totalorder %s11, 0
    %p178 = por %p176, %p177
    %p179 = scmp.ne.s32.totalorder %s168, %s171
    %p180 = scmp.eq.s32.totalorder %s16, 1
    %p181 = por %p179, %p180
    %p182 = scmp.ne.s32.totalorder %s171, %s172
    %p183 = scmp.eq.s32.totalorder %s16, 0
    %p184 = por %p182, %p183
    %p185 = scmp.ne.s32.totalorder %s171, %s172
    %p186 = scmp.eq.s32.totalorder %s17, 1
    %p187 = por %p185, %p186
    %p189 = scmp.ne.s32.totalorder %s172, %s188
    %p190 = scmp.eq.s32.totalorder %s17, 0
    %p191 = por %p189, %p190
    %s192 = ssub.s32 %s18, %s37
    %s193 = ssub.s32 %s19, %s33
    %s194 = sor.u32 %s192, %s193
    %p195 = scmp.eq.s32.totalorder %s194, 0
    %s197 = sadd.s32 %s196, 1
    %s198 = scalar_select %p195, %s196, %s197
    %p201 = pneg %p195
    %p202 = scmp.eq.s32.totalorder %s11, 1
    %p203 = por %p201, %p202
    %p204 = scmp.ne.s32.totalorder %s196, %s199
    %p205 = scmp.eq.s32.totalorder %s11, 0
    %p206 = por %p204, %p205
    %p207 = scmp.ne.s32.totalorder %s196, %s199
    %p208 = scmp.eq.s32.totalorder %s16, 1
    %p209 = por %p207, %p208
    %p210 = scmp.ne.s32.totalorder %s199, %s200
    %p211 = scmp.eq.s32.totalorder %s16, 0
    %p212 = por %p210, %p211
    %p213 = scmp.ne.s32.totalorder %s199, %s200
    %p214 = scmp.eq.s32.totalorder %s17, 1
    %p215 = por %p213, %p214
    %p217 = scmp.ne.s32.totalorder %s200, %s216
    %p218 = scmp.eq.s32.totalorder %s17, 0
    %p219 = por %p217, %p218
    %p220 = scmp.le.s32.totalorder 1, %s11
    %p221 = scmp.lt.s32.totalorder %s11, 3
    %p222 = pnand %p220, %p221
    %p223 = pneg %p222
    // Predicated region
    $region9: #{joint_transformer_block.16} parent=5 // pred_check
      _
    $region10: #{joint_transformer_block.16} parent=5 // pred_check_branch
      %225 = sbr.rel (%p222) target = $region12
    $region11: #{joint_transformer_block.16} parent=5 // pred_region
      %s226 = ssub.s32 %s11, 1
    $region12: #{joint_transformer_block.16} parent=5 // pred_fallthru
      _
    %p227 = scmp.lt.s32.totalorder %s11, 2
    // Predicated region
    $region13: #{joint_transformer_block.16} parent=5 // pred_check
      %p228 = pneg %p227
    $region14: #{joint_transformer_block.16} parent=5 // pred_check_branch
      %230 = sbr.rel (%p228) target = $region16
    $region15: #{joint_transformer_block.16} parent=5 // pred_region
      // Predicated region
      $region17: #{joint_transformer_block.16} parent=15 // pred_check
        %p231 = pneg %p52
      $region18: #{joint_transformer_block.16} parent=15 // pred_check_branch
        %233 = sbr.rel (%p231) target = $region20
      $region19: #{joint_transformer_block.16} parent=15 // pred_region
        %s234 = smul.u32 2, %s20
        %p235 = scmp.lt.s32.totalorder %s18, 1
        %s236 = scalar_select %p235, %s18, 1
        %p237 = scmp.lt.s32.totalorder %s234, 1
        %s238 = scalar_select %p237, %s234, 1
        %s239 = smul.addr %s236, 2
        %s240 = sadd.s32 %s238, %s239
        %s241 = smul.addr %s240, 4
        %s242 = scalar_lea.vmem %s0, %s241
        %s243 = smul.u32 2, %s20
      $region20: #{joint_transformer_block.16} parent=15 // pred_fallthru
        _
      // Predicated region
      $region21: #{joint_transformer_block.16} parent=15 // pred_check
        %p244 = pneg %p86
      $region22: #{joint_transformer_block.16} parent=15 // pred_check_branch
        %246 = sbr.rel (%p244) target = $region24
      $region23: #{joint_transformer_block.16} parent=15 // pred_region
        %p247 = scmp.ge.s32.totalorder %s18, 1
        %s248 = scalar_select %p247, 1, 0
        %s249 = smul.u32 32, %s20
        %s250 = smul.u32 2, %s19
        %p251 = scmp.lt.s32.totalorder %s248, 1
        %s252 = scalar_select %p251, %s248, 1
        %p253 = scmp.lt.s32.totalorder %s249, 31
        %s254 = scalar_select %p253, %s249, 31
        %p255 = scmp.lt.s32.totalorder %s250, 1
        %s256 = scalar_select %p255, %s250, 1
        %s257 = smul.addr %s254, 2
        %s258 = sadd.s32 %s256, %s257
        %s259 = smul.addr %s252, 64
        %s260 = sadd.s32 %s258, %s259
        %s261 = smul.addr %s260, 4
        %s262 = scalar_lea.vmem %s1, %s261
        %p263 = scmp.ge.s32.totalorder %s18, 1
        %s264 = scalar_select %p263, 1, 0
        %s265 = smul.u32 32, %s20
        %s266 = smul.u32 2, %s19
      $region24: #{joint_transformer_block.16} parent=15 // pred_fallthru
        _
      // Predicated region
      $region25: #{joint_transformer_block.16} parent=15 // pred_check
        %p267 = pneg %p118
      $region26: #{joint_transformer_block.16} parent=15 // pred_check_branch
        %269 = sbr.rel (%p267) target = $region28
      $region27: #{joint_transformer_block.16} parent=15 // pred_region
        %p270 = scmp.ge.s32.totalorder %s18, 1
        %s271 = scalar_select %p270, 1, 0
        %s272 = smul.u32 2, %s19
        %p273 = scmp.lt.s32.totalorder %s271, 1
        %s274 = scalar_select %p273, %s271, 1
        %p275 = scmp.lt.s32.totalorder %s272, 1
        %s276 = scalar_select %p275, %s272, 1
        %s277 = smul.addr %s274, 2
        %s278 = sadd.s32 %s276, %s277
        %s279 = scalar_lea.vmem %s2, %s278
        %p280 = scmp.ge.s32.totalorder %s18, 1
        %s281 = scalar_select %p280, 1, 0
        %s282 = smul.u32 2, %s19
      $region28: #{joint_transformer_block.16} parent=15 // pred_fallthru
        _
      // Predicated region
      $region29: #{joint_transformer_block.16} parent=15 // pred_check
        %p283 = pneg %p146
      $region30: #{joint_transformer_block.16} parent=15 // pred_check_branch
        %285 = sbr.rel (%p283) target = $region32
      $region31: #{joint_transformer_block.16} parent=15 // pred_region
        %s286 = smul.u32 2, %s19
        %p287 = scmp.lt.s32.totalorder %s18, 1
        %s288 = scalar_select %p287, %s18, 1
        %p289 = scmp.lt.s32.totalorder %s286, 1
        %s290 = scalar_select %p289, %s286, 1
        %s291 = smul.addr %s288, 2
        %s292 = sadd.s32 %s290, %s291
        %s293 = smul.addr %s292, 4
        %s294 = scalar_lea.vmem %s3, %s293
        %s295 = smul.u32 2, %s19
      $region32: #{joint_transformer_block.16} parent=15 // pred_fallthru
        _
      // Predicated region
      $region33: #{joint_transformer_block.16} parent=15 // pred_check
        %p296 = pneg %p178
      $region34: #{joint_transformer_block.16} parent=15 // pred_check_branch
        %298 = sbr.rel (%p296) target = $region36
      $region35: #{joint_transformer_block.16} parent=15 // pred_region
        %p299 = scmp.ge.s32.totalorder %s18, 1
        %s300 = scalar_select %p299, 1, 0
        %s301 = smul.u32 2, %s19
        %p302 = scmp.lt.s32.totalorder %s300, 1
        %s303 = scalar_select %p302, %s300, 1
        %p304 = scmp.lt.s32.totalorder %s301, 1
        %s305 = scalar_select %p304, %s301, 1
        %s306 = smul.addr %s303, 2
        %s307 = sadd.s32 %s305, %s306
        %s308 = scalar_lea.vmem %s4, %s307
        %p309 = scmp.ge.s32.totalorder %s18, 1
        %s310 = scalar_select %p309, 1, 0
        %s311 = smul.u32 2, %s19
      $region36: #{joint_transformer_block.16} parent=15 // pred_fallthru
        _
    $region16: #{joint_transformer_block.16} parent=5 // pred_fallthru
      _
    %p312 = scmp.le.s32.totalorder 1, %s11
    %p313 = scmp.lt.s32.totalorder %s11, 3
    %p314 = pnand %p312, %p313
    %p315 = pneg %p314
    // Predicated region
    $region37: #{joint_transformer_block.16} parent=5 // pred_check
      _
    $region38: #{joint_transformer_block.16} parent=5 // pred_check_branch
      %317 = sbr.rel (%p314) target = $region40
    $region39: #{joint_transformer_block.16} parent=5 // pred_region
      %s318 = ssub.s32 %s11, 1
      %s319 = smul.u32 2, %s23
      %p320 = scmp.lt.s32.totalorder %s21, 1
      %s321 = scalar_select %p320, %s21, 1
      %p322 = scmp.lt.s32.totalorder %s319, 1
      %s323 = scalar_select %p322, %s319, 1
      %s324 = smul.addr %s321, 2
      %s325 = sadd.s32 %s323, %s324
      %s326 = smul.addr %s325, 4
      %s327 = scalar_lea.vmem %s0, %s326
      %p328 = pneg %p58
      %p329 = pneg %p55
      %p330 = scmp.ge.s32.totalorder %s21, 1
      %s331 = scalar_select %p330, 1, 0
      %s332 = smul.u32 32, %s23
      %s333 = smul.u32 2, %s22
      %p334 = scmp.lt.s32.totalorder %s331, 1
      %s335 = scalar_select %p334, %s331, 1
      %p336 = scmp.lt.s32.totalorder %s332, 31
      %s337 = scalar_select %p336, %s332, 31
      %p338 = scmp.lt.s32.totalorder %s333, 1
      %s339 = scalar_select %p338, %s333, 1
      %s340 = smul.addr %s337, 2
      %s341 = sadd.s32 %s339, %s340
      %s342 = smul.addr %s335, 64
      %s343 = sadd.s32 %s341, %s342
      %s344 = smul.addr %s343, 4
      %s345 = scalar_lea.vmem %s1, %s344
      %p346 = pneg %p92
      %p347 = pneg %p89
      %p348 = scmp.ge.s32.totalorder %s21, 1
      %s349 = scalar_select %p348, 1, 0
      %s350 = smul.u32 2, %s22
      %p351 = scmp.lt.s32.totalorder %s349, 1
      %s352 = scalar_select %p351, %s349, 1
      %p353 = scmp.lt.s32.totalorder %s350, 1
      %s354 = scalar_select %p353, %s350, 1
      %s355 = smul.addr %s352, 2
      %s356 = sadd.s32 %s354, %s355
      %s357 = scalar_lea.vmem %s2, %s356
      %p358 = pneg %p124
      %p359 = pneg %p121
      %s360 = smul.u32 2, %s22
      %p361 = scmp.lt.s32.totalorder %s21, 1
      %s362 = scalar_select %p361, %s21, 1
      %p363 = scmp.lt.s32.totalorder %s360, 1
      %s364 = scalar_select %p363, %s360, 1
      %s365 = smul.addr %s362, 2
      %s366 = sadd.s32 %s364, %s365
      %s367 = smul.addr %s366, 4
      %s368 = scalar_lea.vmem %s3, %s367
      %p369 = pneg %p152
      %p370 = pneg %p149
      %p371 = scmp.ge.s32.totalorder %s21, 1
      %s372 = scalar_select %p371, 1, 0
      %s373 = smul.u32 2, %s22
      %p374 = scmp.lt.s32.totalorder %s372, 1
      %s375 = scalar_select %p374, %s372, 1
      %p376 = scmp.lt.s32.totalorder %s373, 1
      %s377 = scalar_select %p376, %s373, 1
      %s378 = smul.addr %s375, 2
      %s379 = sadd.s32 %s377, %s378
      %s380 = scalar_lea.vmem %s4, %s379
      %p381 = pneg %p184
      %p382 = pneg %p181
      %p383 = pneg %p212
      %p384 = pneg %p209
      %s385 = smul.u32 2, %s22
      %p386 = scmp.lt.s32.totalorder %s21, 1
      %s387 = scalar_select %p386, %s21, 1
      %p388 = scmp.lt.s32.totalorder %s385, 1
      %s389 = scalar_select %p388, %s385, 1
      %s390 = smul.addr %s387, 2
      %s391 = sadd.s32 %s389, %s390
      %s392 = smul.addr %s391, 4
      %s393 = scalar_lea.vmem %s5, %s392
      %s394 = smul.u32 2, %s23
      %p395 = scmp.lt.s32.totalorder %s21, 1
      %s396 = scalar_select %p395, %s21, 1
      %p397 = scmp.lt.s32.totalorder %s394, 1
      %s398 = scalar_select %p397, %s394, 1
      %s399 = smul.addr %s396, 2
      %s400 = sadd.s32 %s398, %s399
      %s401 = smul.addr %s400, 4
      %s402 = scalar_lea.vmem %s0, %s401
      %s403 = smul.u32 2, %s23
      %p404 = scmp.ge.s32.totalorder %s21, 1
      %s405 = scalar_select %p404, 1, 0
      %s406 = smul.u32 32, %s23
      %s407 = smul.u32 2, %s22
      %p408 = scmp.lt.s32.totalorder %s405, 1
      %s409 = scalar_select %p408, %s405, 1
      %p410 = scmp.lt.s32.totalorder %s406, 31
      %s411 = scalar_select %p410, %s406, 31
      %p412 = scmp.lt.s32.totalorder %s407, 1
      %s413 = scalar_select %p412, %s407, 1
      %s414 = smul.addr %s411, 2
      %s415 = sadd.s32 %s413, %s414
      %s416 = smul.addr %s409, 64
      %s417 = sadd.s32 %s415, %s416
      %s418 = smul.addr %s417, 4
      %s419 = scalar_lea.vmem %s1, %s418
      %p420 = scmp.ge.s32.totalorder %s21, 1
      %s421 = scalar_select %p420, 1, 0
      %s422 = smul.u32 32, %s23
      %s423 = smul.u32 2, %s22
      %p424 = scmp.ge.s32.totalorder %s21, 1
      %s425 = scalar_select %p424, 1, 0
      %s426 = smul.u32 2, %s22
      %p427 = scmp.lt.s32.totalorder %s425, 1
      %s428 = scalar_select %p427, %s425, 1
      %p429 = scmp.lt.s32.totalorder %s426, 1
      %s430 = scalar_select %p429, %s426, 1
      %s431 = smul.addr %s428, 2
      %s432 = sadd.s32 %s430, %s431
      %s433 = scalar_lea.vmem %s2, %s432
      %p434 = scmp.ge.s32.totalorder %s21, 1
      %s435 = scalar_select %p434, 1, 0
      %s436 = smul.u32 2, %s22
      %s437 = smul.u32 2, %s22
      %p438 = scmp.lt.s32.totalorder %s21, 1
      %s439 = scalar_select %p438, %s21, 1
      %p440 = scmp.lt.s32.totalorder %s437, 1
      %s441 = scalar_select %p440, %s437, 1
      %s442 = smul.addr %s439, 2
      %s443 = sadd.s32 %s441, %s442
      %s444 = smul.addr %s443, 4
      %s445 = scalar_lea.vmem %s3, %s444
      %s446 = smul.u32 2, %s22
      %p447 = scmp.ge.s32.totalorder %s21, 1
      %s448 = scalar_select %p447, 1, 0
      %s449 = smul.u32 2, %s22
      %p450 = scmp.lt.s32.totalorder %s448, 1
      %s451 = scalar_select %p450, %s448, 1
      %p452 = scmp.lt.s32.totalorder %s449, 1
      %s453 = scalar_select %p452, %s449, 1
      %s454 = smul.addr %s451, 2
      %s455 = sadd.s32 %s453, %s454
      %s456 = scalar_lea.vmem %s4, %s455
      %p457 = scmp.ge.s32.totalorder %s21, 1
      %s458 = scalar_select %p457, 1, 0
      %s459 = smul.u32 2, %s22
      %s460 = smul.u32 2, %s22
      %p461 = scmp.lt.s32.totalorder %s21, 1
      %s462 = scalar_select %p461, %s21, 1
      %p463 = scmp.lt.s32.totalorder %s460, 1
      %s464 = scalar_select %p463, %s460, 1
      %s465 = smul.addr %s462, 2
      %s466 = sadd.s32 %s464, %s465
      %s467 = smul.addr %s466, 4
      %s468 = scalar_lea.vmem %s5, %s467
      %s469 = smul.u32 2, %s22
      %p470 = scmp.eq.s32.totalorder %s23, 0
      // Predicated region
      $region41: #{joint_transformer_block.16} parent=39 // pred_check
        %p471 = pneg %p470
      $region42: #{joint_transformer_block.16} parent=39 // pred_check_branch
        %473 = sbr.rel (%p471) target = $region44
      $region43: #{joint_transformer_block.16} parent=39 // pred_region
        %474 = vst [vmem:[#allocation2] sm:$0xff] 0.0
        %475 = vst [vmem:[#allocation2 + $0x8] sm:$0xff] 0.0
      $region44: #{joint_transformer_block.16} parent=39 // pred_fallthru
        _
      %v476 = vld [vmem:[#allocation2] sm:$0xff]
      %v477 = vld [vmem:[#allocation2 + $0x8] sm:$0xff]
      %v478 = vld [vmem:[%s402] sm:$0xff]
      %v479 = vld [vmem:[%s419] sm:$0xff]
      %v480 = vld [vmem:[%s419 + $0x8] sm:$0xff]
      %v481 = vld [vmem:[%s419 + $0x10] sm:$0xff]
      %v482 = vld [vmem:[%s419 + $0x18] sm:$0xff]
      %v483 = vld [vmem:[%s419 + $0x20] sm:$0xff]
      %v484 = vld [vmem:[%s419 + $0x28] sm:$0xff]
      %v485 = vld [vmem:[%s419 + $0x30] sm:$0xff]
      %v486 = vld [vmem:[%s419 + $0x38] sm:$0xff]
      %v487 = vld [vmem:[%s419 + $0x40] sm:$0xff]
      %v488 = vld [vmem:[%s419 + $0x48] sm:$0xff]
      %v489 = vld [vmem:[%s419 + $0x50] sm:$0xff]
      %v490 = vld [vmem:[%s419 + $0x58] sm:$0xff]
      %v491 = vld [vmem:[%s419 + $0x60] sm:$0xff]
      %v492 = vld [vmem:[%s419 + $0x68] sm:$0xff]
      %v493 = vld [vmem:[%s419 + $0x70] sm:$0xff]
      %v494 = vld [vmem:[%s419 + $0x78] sm:$0xff]
      %v495 = vld [vmem:[%s419 + $0x80] sm:$0xff]
      %v496 = vld [vmem:[%s419 + $0x88] sm:$0xff]
      %v497 = vld [vmem:[%s419 + $0x90] sm:$0xff]
      %v498 = vld [vmem:[%s419 + $0x98] sm:$0xff]
      %v499 = vld [vmem:[%s419 + $0xa0] sm:$0xff]
      %v500 = vld [vmem:[%s419 + $0xa8] sm:$0xff]
      %v501 = vld [vmem:[%s419 + $0xb0] sm:$0xff]
      %v502 = vld [vmem:[%s419 + $0xb8] sm:$0xff]
      %v503 = vld [vmem:[%s419 + $0xc0] sm:$0xff]
      %v504 = vld [vmem:[%s419 + $0xc8] sm:$0xff]
      %v505 = vld [vmem:[%s419 + $0xd0] sm:$0xff]
      %v506 = vld [vmem:[%s419 + $0xd8] sm:$0xff]
      %v507 = vld [vmem:[%s419 + $0xe0] sm:$0xff]
      %v508 = vld [vmem:[%s419 + $0xe8] sm:$0xff]
      %v509 = vld [vmem:[%s419 + $0xf0] sm:$0xff]
      %v510 = vld [vmem:[%s419 + $0xf8] sm:$0xff]
      %v512 = vunpack.c.l.b16 %v478
      %v513 = vunpack.c.h.b16 %v478
      %v514 = vpack.c.b16 %v512, %v512
      %v515 = vpack.c.b16 %v513, %v513
      %v550 = vunpack.c.l.b16 %v479
      %v551 = vunpack.c.h.b16 %v479
      %v552 = vunpack.c.l.b16 %v480
      %v553 = vunpack.c.h.b16 %v480
      %v554 = vunpack.c.l.b16 %v481
      %v555 = vunpack.c.h.b16 %v481
      %v556 = vunpack.c.l.b16 %v482
      %v557 = vunpack.c.h.b16 %v482
      %v558 = vunpack.c.l.b16 %v483
      %v559 = vunpack.c.h.b16 %v483
      %v560 = vunpack.c.l.b16 %v484
      %v561 = vunpack.c.h.b16 %v484
      %v562 = vunpack.c.l.b16 %v485
      %v563 = vunpack.c.h.b16 %v485
      %v564 = vunpack.c.l.b16 %v486
      %v565 = vunpack.c.h.b16 %v486
      %v566 = vunpack.c.l.b16 %v487
      %v567 = vunpack.c.h.b16 %v487
      %v568 = vunpack.c.l.b16 %v488
      %v569 = vunpack.c.h.b16 %v488
      %v570 = vunpack.c.l.b16 %v489
      %v571 = vunpack.c.h.b16 %v489
      %v572 = vunpack.c.l.b16 %v490
      %v573 = vunpack.c.h.b16 %v490
      %v574 = vunpack.c.l.b16 %v491
      %v575 = vunpack.c.h.b16 %v491
      %v576 = vunpack.c.l.b16 %v492
      %v577 = vunpack.c.h.b16 %v492
      %v578 = vunpack.c.l.b16 %v493
      %v579 = vunpack.c.h.b16 %v493
      %v580 = vunpack.c.l.b16 %v494
      %v581 = vunpack.c.h.b16 %v494
      %v582 = vunpack.c.l.b16 %v495
      %v583 = vunpack.c.h.b16 %v495
      %v584 = vunpack.c.l.b16 %v496
      %v585 = vunpack.c.h.b16 %v496
      %v586 = vunpack.c.l.b16 %v497
      %v587 = vunpack.c.h.b16 %v497
      %v588 = vunpack.c.l.b16 %v498
      %v589 = vunpack.c.h.b16 %v498
      %v590 = vunpack.c.l.b16 %v499
      %v591 = vunpack.c.h.b16 %v499
      %v592 = vunpack.c.l.b16 %v500
      %v593 = vunpack.c.h.b16 %v500
      %v594 = vunpack.c.l.b16 %v501
      %v595 = vunpack.c.h.b16 %v501
      %v596 = vunpack.c.l.b16 %v502
      %v597 = vunpack.c.h.b16 %v502
      %v598 = vunpack.c.l.b16 %v503
      %v599 = vunpack.c.h.b16 %v503
      %v600 = vunpack.c.l.b16 %v504
      %v601 = vunpack.c.h.b16 %v504
      %v602 = vunpack.c.l.b16 %v505
      %v603 = vunpack.c.h.b16 %v505
      %v604 = vunpack.c.l.b16 %v506
      %v605 = vunpack.c.h.b16 %v506
      %v606 = vunpack.c.l.b16 %v507
      %v607 = vunpack.c.h.b16 %v507
      %v608 = vunpack.c.l.b16 %v508
      %v609 = vunpack.c.h.b16 %v508
      %v610 = vunpack.c.l.b16 %v509
      %v611 = vunpack.c.h.b16 %v509
      %v612 = vunpack.c.l.b16 %v510
      %v613 = vunpack.c.h.b16 %v510
      %v614 = vpack.c.b16 %v552, %v550
      %v615 = vpack.c.b16 %v553, %v551
      %v616 = vpack.c.b16 %v556, %v554
      %v617 = vpack.c.b16 %v557, %v555
      %v618 = vpack.c.b16 %v560, %v558
      %v619 = vpack.c.b16 %v561, %v559
      %v620 = vpack.c.b16 %v564, %v562
      %v621 = vpack.c.b16 %v565, %v563
      %v622 = vpack.c.b16 %v568, %v566
      %v623 = vpack.c.b16 %v569, %v567
      %v624 = vpack.c.b16 %v572, %v570
      %v625 = vpack.c.b16 %v573, %v571
      %v626 = vpack.c.b16 %v576, %v574
      %v627 = vpack.c.b16 %v577, %v575
      %v628 = vpack.c.b16 %v580, %v578
      %v629 = vpack.c.b16 %v581, %v579
      %v630 = vpack.c.b16 %v584, %v582
      %v631 = vpack.c.b16 %v585, %v583
      %v632 = vpack.c.b16 %v588, %v586
      %v633 = vpack.c.b16 %v589, %v587
      %v634 = vpack.c.b16 %v592, %v590
      %v635 = vpack.c.b16 %v593, %v591
      %v636 = vpack.c.b16 %v596, %v594
      %v637 = vpack.c.b16 %v597, %v595
      %v638 = vpack.c.b16 %v600, %v598
      %v639 = vpack.c.b16 %v601, %v599
      %v640 = vpack.c.b16 %v604, %v602
      %v641 = vpack.c.b16 %v605, %v603
      %v642 = vpack.c.b16 %v608, %v606
      %v643 = vpack.c.b16 %v609, %v607
      %v644 = vpack.c.b16 %v612, %v610
      %v645 = vpack.c.b16 %v613, %v611
      %678 = vmatprep.subr.bf16.mxu0 %v615
      %679 = vmatpush1.bf16.msra.mxu0 %v614
      %680 = vmatprep.subr.bf16.mxu0 %v617
      %681 = vmatpush1.bf16.msra.mxu0 %v616
      %682 = vmatprep.subr.bf16.mxu0 %v619
      %683 = vmatpush1.bf16.msra.mxu0 %v618
      %684 = vmatprep.subr.bf16.mxu0 %v621
      %685 = vmatpush1.bf16.msra.mxu0 %v620
      %686 = vmatprep.subr.bf16.mxu0 %v623
      %687 = vmatpush1.bf16.msra.mxu0 %v622
      %688 = vmatprep.subr.bf16.mxu0 %v625
      %689 = vmatpush1.bf16.msra.mxu0 %v624
      %690 = vmatprep.subr.bf16.mxu0 %v627
      %691 = vmatpush1.bf16.msra.mxu0 %v626
      %692 = vmatprep.subr.bf16.mxu0 %v629
      %693 = vmatpush1.bf16.msra.mxu0 %v628
      %694 = vmatprep.subr.bf16.mxu0 %v631
      %695 = vmatpush1.bf16.msra.mxu0 %v630
      %696 = vmatprep.subr.bf16.mxu0 %v633
      %697 = vmatpush1.bf16.msra.mxu0 %v632
      %698 = vmatprep.subr.bf16.mxu0 %v635
      %699 = vmatpush1.bf16.msra.mxu0 %v634
      %700 = vmatprep.subr.bf16.mxu0 %v637
      %701 = vmatpush1.bf16.msra.mxu0 %v636
      %702 = vmatprep.subr.bf16.mxu0 %v639
      %703 = vmatpush1.bf16.msra.mxu0 %v638
      %704 = vmatprep.subr.bf16.mxu0 %v641
      %705 = vmatpush1.bf16.msra.mxu0 %v640
      %706 = vmatprep.subr.bf16.mxu0 %v643
      %707 = vmatpush1.bf16.msra.mxu0 %v642
      %708 = vmatprep.subr.bf16.mxu0 %v645
      %709 = vmatpush1.bf16.msra.mxu0 %v644
      %710 = vmatprep.mubr.bf16.mxu0 %v515
      %711 = vmatmul.mubr.bf16.gmra.mrb[0].mxu0 %v514
      %v712 = vpop.f32.mrb[0].mxu0
      %v713 = vadd.f32 0.0, %v712
      %v714 = vpop.f32.mrb[0].mxu0
      %v715 = vadd.f32 0.0, %v714
      %v716 = vpop.f32.mrb[0].mxu0
      %v717 = vpop.f32.mrb[0].mxu0
      %718 = vdwg.mxu0
      %v719 = vadd.f32 %v476, %v713
      %v720 = vadd.f32 %v477, %v715
      %721 = vst [vmem:[#allocation2] sm:$0xff] %v719
      %722 = vst [vmem:[#allocation2 + $0x8] sm:$0xff] %v720
      // Predicated region
      $region45: #{joint_transformer_block.16} parent=39 // pred_check
        %p723 = pneg %p470
      $region46: #{joint_transformer_block.16} parent=39 // pred_check_branch
        %725 = sbr.rel (%p723) target = $region48
      $region47: #{joint_transformer_block.16} parent=39 // pred_region
        %v726 = vld [vmem:[#allocation2] sm:$0xff]
        %v727 = vld [vmem:[#allocation2 + $0x8] sm:$0xff]
        %v728 = vld [vmem:[%s433] sm:$0x3]
        %v729 = vunpack.c.l.bf16 %v728
        %v731 = vlaneseq
        %v732 = vshrl.u32 %v731, 7
        %v733 = vsub.s32 0, %v732
        %v734 = vrot.slane %v729, %v733
        %v735 = vlaneseq
        %v736 = vshrl.u32 %v735, 7
        %v737 = vsub.s32 2, %v736
        %v738 = vrot.slane %v729, %v737
        %v741 = vlaneseq
        %v742 = vshrl.u32 %v741, 7
        %v743 = vsub.s32 0, %v742
        %v744 = vrot.slane %v734, %v743
        %v745 = vlaneseq
        %v746 = vshrl.u32 %v745, 7
        %v747 = vsub.s32 0, %v746
        %v748 = vrot.slane %v738, %v747
        %v749 = vadd.f32 %v726, %v744
        %v750 = vadd.f32 %v727, %v748
        %v751 = vld [vmem:[%s445] sm:$0xff]
        %v752 = vunpack.c.l.bf16 %v751
        %v753 = vunpack.c.h.bf16 %v751
        %v754 = vld [vmem:[%s456] sm:$0x3]
        %v756 = vlaneseq
        %v757 = vshrl.u32 %v756, 7
        %v758 = vsub.s32 0, %v757
        %v759 = vrot.slane %v754, %v758
        %v760 = vlaneseq
        %v761 = vshrl.u32 %v760, 7
        %v762 = vsub.s32 1, %v761
        %v763 = vrot.slane %v754, %v762
        %v766 = vmul.f32 %v759, %v749
        %v767 = vmul.f32 %v763, %v750
        %v768 = vadd.f32 %v752, %v766
        %v769 = vadd.f32 %v753, %v767
        %v770 = vpack.c.bf16 %v768, %v768
        %v771 = vpack.c.bf16 %v769, %v769
        %v774 = vunpack.c.l.b16 %v770
        %v775 = vunpack.c.l.b16 %v771
        %v776 = vpack.c.b16 %v775, %v774
        %778 = vst [vmem:[%s468] sm:$0xff] %v776
      $region48: #{joint_transformer_block.16} parent=39 // pred_fallthru
        _
      %s779 = smul.u32 2, %s22
      %p780 = scmp.lt.s32.totalorder %s21, 1
      %s781 = scalar_select %p780, %s21, 1
      %p782 = scmp.lt.s32.totalorder %s779, 1
      %s783 = scalar_select %p782, %s779, 1
      %s784 = smul.addr %s781, 2
      %s785 = sadd.s32 %s783, %s784
      %s786 = smul.addr %s785, 4
      %s787 = scalar_lea.vmem %s5, %s786
      // Predicated region
      $region49: #{joint_transformer_block.16} parent=39 // pred_check
        %p788 = pneg %p209
      $region50: #{joint_transformer_block.16} parent=39 // pred_check_branch
        %790 = sbr.rel (%p788) target = $region52
      $region51: #{joint_transformer_block.16} parent=39 // pred_region
        %s791 = smul.u32 2, %s22
      $region52: #{joint_transformer_block.16} parent=39 // pred_fallthru
        _
    $region40: #{joint_transformer_block.16} parent=5 // pred_fallthru
      _
    %p792 = scmp.le.s32.totalorder 2, %s11
    // Predicated region
    $region53: #{joint_transformer_block.16} parent=5 // pred_check
      %p793 = pneg %p792
    $region54: #{joint_transformer_block.16} parent=5 // pred_check_branch
      %795 = sbr.rel (%p793) target = $region56
    $region55: #{joint_transformer_block.16} parent=5 // pred_region
      %s796 = ssub.s32 %s11, 2
      // Predicated region
      $region57: #{joint_transformer_block.16} parent=55 // pred_check
        %p797 = pneg %p215
      $region58: #{joint_transformer_block.16} parent=55 // pred_check_branch
        %799 = sbr.rel (%p797) target = $region60
      $region59: #{joint_transformer_block.16} parent=55 // pred_region
        %s800 = smul.u32 2, %s25
        %p801 = scmp.lt.s32.totalorder %s24, 1
        %s802 = scalar_select %p801, %s24, 1
        %p803 = scmp.lt.s32.totalorder %s800, 1
        %s804 = scalar_select %p803, %s800, 1
        %s805 = smul.addr %s802, 2
        %s806 = sadd.s32 %s804, %s805
        %s807 = smul.addr %s806, 4
        %s808 = scalar_lea.vmem %s5, %s807
      $region60: #{joint_transformer_block.16} parent=55 // pred_fallthru
        _
    $region56: #{joint_transformer_block.16} parent=5 // pred_fallthru
      _
  $region6: #{joint_transformer_block.16} parent=0 // loop_footer
    %s15 = sadd.s32 1, %s11
  $region7: #{joint_transformer_block.16} parent=0 // loop_footer_branch
    %10 = sbr.rel target = $region3
  $region8: #{joint_transformer_block.16} parent=0 // loop_exit
    _

// kernel: joint_transformer_block.18
$region0: #{joint_transformer_block.18}
  #allocation0 [shape = 'u32[]', space=smem, size = 0x4, offset = 0x4, fixed_abs, tag = 'smem constant byte address 0x4 - core index']
  #allocation1 [shape = 'u32[144,128]{1,0:T(1,128)}', space=vmem, size = 0x12000, scoped, tag = 'internal scratch']
  #allocation2 [shape = 'f32[8,512]{1,0:T(8,128)}', space=vmem, size = 0x4000, scoped, tag = 'scratch operand']
  %s0 = inlined_call_operand.vmem [shape: bf16[16,256], index: 0, kind: input, shape index: {}]
  %s1 = inlined_call_operand.vmem [shape: bf16[2,256,1024], index: 1, kind: input, shape index: {}]
  %s2 = inlined_call_operand.vmem [shape: bf16[2,1,1024], index: 2, kind: input, shape index: {}]
  %s3 = inlined_call_operand.vmem [shape: bf16[16,1024], index: 3, kind: output, shape index: {}]
  %s4 = sld [smem:[#allocation0]]
  $region76: #{joint_transformer_block.18} parent=0
    _
  %s6 = ssub.s32 1, %s4
  %s7 = scalar_select 0, %s6, %s4
  $region1: #{joint_transformer_block.18} parent=0
    #allocation3 [shape = 'u8[524288]{0}', space=vmem, size = 0x80000, scoped, tag = 'input window, operand 1']
    loop: start=0, step=1, limit=6
    $region2: #{joint_transformer_block.18} parent=1 // loop_pre_header
      _
    $region3: #{joint_transformer_block.18} parent=1 // loop_header
      %s9 = sphi 0, %s13
      %p10 = scmp.ge.s32.totalorder %s9, 6
      %s16 = sphi 0, %s35
      %s17 = sphi 0, %s31
      %s18 = sphi 0, %s27
      %s19 = sphi 0, %s16
      %s20 = sphi 0, %s17
      %s21 = sphi 0, %s18
      %s22 = sphi 0, %s19
      %s23 = sphi 0, %s20
      %s24 = sphi 0, %s21
      %s40 = sphi 0, %s42
      %s43 = sphi 0, %s40
      %s44 = sphi 0, %s43
      %s60 = sphi 0, %s44
      %s74 = sphi 0, %s76
      %s77 = sphi 0, %s74
      %s78 = sphi 0, %s77
      %s94 = sphi 0, %s78
      %s106 = sphi 0, %s108
      %s109 = sphi 0, %s106
      %s110 = sphi 0, %s109
      %s126 = sphi 0, %s110
      %s134 = sphi 0, %s136
      %s137 = sphi 0, %s134
      %s138 = sphi 0, %s137
      %s154 = sphi 0, %s138
    $region4: #{joint_transformer_block.18} parent=1 // loop_header_branch
      %12 = sbr.rel (%p10) target = $region8
    $region5: #{joint_transformer_block.18} parent=1 // loop_body
      %s14 = ssub.s32 %s9, 1
      %s15 = ssub.s32 %s9, 2
      %s25 = sadd.s32 1, %s18
      %p26 = scmp.ge.s32.totalorder %s25, 1
      %s27 = scalar_select %p26, 0, %s25
      %s28 = sadd.s32 1, %s17
      %s29 = scalar_select %p26, %s28, %s17
      %p30 = scmp.ge.s32.totalorder %s29, 2
      %s31 = scalar_select %p30, 0, %s29
      %s32 = sadd.s32 1, %s16
      %s33 = scalar_select %p30, %s32, %s16
      %p34 = scmp.ge.s32.totalorder %s33, 2
      %s35 = scalar_select %p34, 0, %s33
      %s36 = ssub.s32 %s16, %s35
      %s37 = ssub.s32 %s18, %s27
      %s38 = sor.u32 %s36, %s37
      %p39 = scmp.eq.s32.totalorder %s38, 0
      %s41 = sadd.s32 %s40, 1
      %s42 = scalar_select %p39, %s40, %s41
      %p45 = pneg %p39
      %p46 = scmp.eq.s32.totalorder %s9, 3
      %p47 = por %p45, %p46
      %p48 = scmp.ne.s32.totalorder %s40, %s43
      %p49 = scmp.eq.s32.totalorder %s9, 0
      %p50 = por %p48, %p49
      %p51 = scmp.ne.s32.totalorder %s40, %s43
      %p52 = scmp.eq.s32.totalorder %s14, 3
      %p53 = por %p51, %p52
      %p54 = scmp.ne.s32.totalorder %s43, %s44
      %p55 = scmp.eq.s32.totalorder %s14, 0
      %p56 = por %p54, %p55
      %p57 = scmp.ne.s32.totalorder %s43, %s44
      %p58 = scmp.eq.s32.totalorder %s15, 3
      %p59 = por %p57, %p58
      %p61 = scmp.ne.s32.totalorder %s44, %s60
      %p62 = scmp.eq.s32.totalorder %s15, 0
      %p63 = por %p61, %p62
      %p64 = scmp.ge.s32.totalorder %s16, 1
      %s65 = scalar_select %p64, 1, 0
      %p66 = scmp.ge.s32.totalorder %s35, 1
      %s67 = scalar_select %p66, 1, 0
      %s68 = ssub.s32 %s65, %s67
      %s69 = ssub.s32 %s18, %s27
      %s70 = sor.u32 %s68, %s69
      %s71 = ssub.s32 %s17, %s31
      %s72 = sor.u32 %s70, %s71
      %p73 = scmp.eq.s32.totalorder %s72, 0
      %s75 = sadd.s32 %s74, 1
      %s76 = scalar_select %p73, %s74, %s75
      %p79 = pneg %p73
      %p80 = scmp.eq.s32.totalorder %s9, 3
      %p81 = por %p79, %p80
      %p82 = scmp.ne.s32.totalorder %s74, %s77
      %p83 = scmp.eq.s32.totalorder %s9, 0
      %p84 = por %p82, %p83
      %p85 = scmp.ne.s32.totalorder %s74, %s77
      %p86 = scmp.eq.s32.totalorder %s14, 3
      %p87 = por %p85, %p86
      %p88 = scmp.ne.s32.totalorder %s77, %s78
      %p89 = scmp.eq.s32.totalorder %s14, 0
      %p90 = por %p88, %p89
      %p91 = scmp.ne.s32.totalorder %s77, %s78
      %p92 = scmp.eq.s32.totalorder %s15, 3
      %p93 = por %p91, %p92
      %p95 = scmp.ne.s32.totalorder %s78, %s94
      %p96 = scmp.eq.s32.totalorder %s15, 0
      %p97 = por %p95, %p96
      %p98 = scmp.ge.s32.totalorder %s16, 1
      %s99 = scalar_select %p98, 1, 0
      %p100 = scmp.ge.s32.totalorder %s35, 1
      %s101 = scalar_select %p100, 1, 0
      %s102 = ssub.s32 %s99, %s101
      %s103 = ssub.s32 %s17, %s31
      %s104 = sor.u32 %s102, %s103
      %p105 = scmp.eq.s32.totalorder %s104, 0
      %s107 = sadd.s32 %s106, 1
      %s108 = scalar_select %p105, %s106, %s107
      %p111 = pneg %p105
      %p112 = scmp.eq.s32.totalorder %s9, 3
      %p113 = por %p111, %p112
      %p114 = scmp.ne.s32.totalorder %s106, %s109
      %p115 = scmp.eq.s32.totalorder %s9, 0
      %p116 = por %p114, %p115
      %p117 = scmp.ne.s32.totalorder %s106, %s109
      %p118 = scmp.eq.s32.totalorder %s14, 3
      %p119 = por %p117, %p118
      %p120 = scmp.ne.s32.totalorder %s109, %s110
      %p121 = scmp.eq.s32.totalorder %s14, 0
      %p122 = por %p120, %p121
      %p123 = scmp.ne.s32.totalorder %s109, %s110
      %p124 = scmp.eq.s32.totalorder %s15, 3
      %p125 = por %p123, %p124
      %p127 = scmp.ne.s32.totalorder %s110, %s126
      %p128 = scmp.eq.s32.totalorder %s15, 0
      %p129 = por %p127, %p128
      %s130 = ssub.s32 %s16, %s35
      %s131 = ssub.s32 %s17, %s31
      %s132 = sor.u32 %s130, %s131
      %p133 = scmp.eq.s32.totalorder %s132, 0
      %s135 = sadd.s32 %s134, 1
      %s136 = scalar_select %p133, %s134, %s135
      %p139 = pneg %p133
      %p140 = scmp.eq.s32.totalorder %s9, 3
      %p141 = por %p139, %p140
      %p142 = scmp.ne.s32.totalorder %s134, %s137
      %p143 = scmp.eq.s32.totalorder %s9, 0
      %p144 = por %p142, %p143
      %p145 = scmp.ne.s32.totalorder %s134, %s137
      %p146 = scmp.eq.s32.totalorder %s14, 3
      %p147 = por %p145, %p146
      %p148 = scmp.ne.s32.totalorder %s137, %s138
      %p149 = scmp.eq.s32.totalorder %s14, 0
      %p150 = por %p148, %p149
      %p151 = scmp.ne.s32.totalorder %s137, %s138
      %p152 = scmp.eq.s32.totalorder %s15, 3
      %p153 = por %p151, %p152
      %p155 = scmp.ne.s32.totalorder %s138, %s154
      %p156 = scmp.eq.s32.totalorder %s15, 0
      %p157 = por %p155, %p156
      %p158 = scmp.le.s32.totalorder 1, %s9
      %p159 = scmp.lt.s32.totalorder %s9, 5
      %p160 = pnand %p158, %p159
      %p161 = pneg %p160
      // Predicated region
      $region9: #{joint_transformer_block.18} parent=5 // pred_check
        _
      $region10: #{joint_transformer_block.18} parent=5 // pred_check_branch
        %163 = sbr.rel (%p160) target = $region12
      $region11: #{joint_transformer_block.18} parent=5 // pred_region
        %s164 = ssub.s32 %s9, 1
      $region12: #{joint_transformer_block.18} parent=5 // pred_fallthru
        _
      %p165 = scmp.lt.s32.totalorder %s9, 4
      // Predicated region
      $region13: #{joint_transformer_block.18} parent=5 // pred_check
        %p166 = pneg %p165
      $region14: #{joint_transformer_block.18} parent=5 // pred_check_branch
        %168 = sbr.rel (%p166) target = $region16
      $region15: #{joint_transformer_block.18} parent=5 // pred_region
        // Predicated region
        $region17: #{joint_transformer_block.18} parent=15 // pred_check
          %p169 = pneg %p50
        $region18: #{joint_transformer_block.18} parent=15 // pred_check_branch
          %171 = sbr.rel (%p169) target = $region20
        $region19: #{joint_transformer_block.18} parent=15 // pred_region
          %s172 = smul.u32 2, %s18
          %p173 = scmp.lt.s32.totalorder %s16, 1
          %s174 = scalar_select %p173, %s16, 1
          %p175 = scmp.lt.s32.totalorder %s172, 1
          %s176 = scalar_select %p175, %s172, 1
          %s177 = smul.addr %s174, 2
          %s178 = sadd.s32 %s176, %s177
          %s179 = smul.addr %s178, 4
          %s180 = scalar_lea.vmem %s0, %s179
          %s181 = smul.u32 2, %s18
        $region20: #{joint_transformer_block.18} parent=15 // pred_fallthru
          _
        // Predicated region
        $region21: #{joint_transformer_block.18} parent=15 // pred_check
          %p182 = pneg %p84
        $region22: #{joint_transformer_block.18} parent=15 // pred_check_branch
          %184 = sbr.rel (%p182) target = $region24
        $region23: #{joint_transformer_block.18} parent=15 // pred_region
          %s185 = sand.u32 %s74, 1
          %s186 = sand.u32 %s74, 1
          %s187 = smul.addr %s186, 512
          %s188 = scalar_lea.vmem [#allocation3], %s187
          %p189 = scmp.ge.s32.totalorder %s16, 1
          %s190 = scalar_select %p189, 1, 0
          %s191 = smul.u32 32, %s18
          %s192 = smul.u32 4, %s17
          %s193 = smul.addr %s191, 8
          %s194 = sadd.s32 %s192, %s193
          %s195 = smul.addr %s190, 256
          %s196 = sadd.s32 %s194, %s195
          %s197 = smul.addr %s196, 4
          %s198 = scalar_lea.vmem %s1, %s197
          // Predicated region
          $region25: #{joint_transformer_block.18} parent=23 // pred_check
            _
          $region26: #{joint_transformer_block.18} parent=23 // pred_check_branch
            %200 = sbr.rel (0) target = $region28
          $region27: #{joint_transformer_block.18} parent=23 // pred_region
            // Predicated region
            $region29: #{joint_transformer_block.18} parent=27 // pred_check
              _
            $region30: #{joint_transformer_block.18} parent=27 // pred_check_branch
              %202 = sbr.rel (0) target = $region32
            $region31: #{joint_transformer_block.18} parent=27 // pred_region
              loop: start=0, step=1, limit=1
              $region33: #{joint_transformer_block.18} parent=31 // loop_pre_header
                _
              $region34: #{joint_transformer_block.18} parent=31 // loop_header
                %s204 = sphi 0, %s208
                %p205 = scmp.ge.s32.totalorder %s204, 1
                %s209 = sphi %s198, %s198
                %s210 = sphi %s188, %s188
              $region35: #{joint_transformer_block.18} parent=31 // loop_header_branch
                %207 = sbr.rel (%p205) target = $region39
              $region36: #{joint_transformer_block.18} parent=31 // loop_body
                %v211 = vld [vmem:[%s209] sm:$0xff]
                %212 = vst [vmem:[%s210] sm:$0xff] %v211
                %v213 = vld [vmem:[%s209 + $0x8] sm:$0xff]
                %214 = vst [vmem:[%s210 + $0x8] sm:$0xff] %v213
                %v215 = vld [vmem:[%s209 + $0x20] sm:$0xff]
                %216 = vst [vmem:[%s210 + $0x10] sm:$0xff] %v215
                %v217 = vld [vmem:[%s209 + $0x28] sm:$0xff]
                %218 = vst [vmem:[%s210 + $0x18] sm:$0xff] %v217
                %v219 = vld [vmem:[%s209 + $0x40] sm:$0xff]
                %220 = vst [vmem:[%s210 + $0x20] sm:$0xff] %v219
                %v221 = vld [vmem:[%s209 + $0x48] sm:$0xff]
                %222 = vst [vmem:[%s210 + $0x28] sm:$0xff] %v221
                %v223 = vld [vmem:[%s209 + $0x60] sm:$0xff]
                %224 = vst [vmem:[%s210 + $0x30] sm:$0xff] %v223
                %v225 = vld [vmem:[%s209 + $0x68] sm:$0xff]
                %226 = vst [vmem:[%s210 + $0x38] sm:$0xff] %v225
                %v227 = vld [vmem:[%s209 + $0x80] sm:$0xff]
                %228 = vst [vmem:[%s210 + $0x40] sm:$0xff] %v227
                %v229 = vld [vmem:[%s209 + $0x88] sm:$0xff]
                %230 = vst [vmem:[%s210 + $0x48] sm:$0xff] %v229
                %v231 = vld [vmem:[%s209 + $0xa0] sm:$0xff]
                %232 = vst [vmem:[%s210 + $0x50] sm:$0xff] %v231
                %v233 = vld [vmem:[%s209 + $0xa8] sm:$0xff]
                %234 = vst [vmem:[%s210 + $0x58] sm:$0xff] %v233
                %v235 = vld [vmem:[%s209 + $0xc0] sm:$0xff]
                %236 = vst [vmem:[%s210 + $0x60] sm:$0xff] %v235
                %v237 = vld [vmem:[%s209 + $0xc8] sm:$0xff]
                %238 = vst [vmem:[%s210 + $0x68] sm:$0xff] %v237
                %v239 = vld [vmem:[%s209 + $0xe0] sm:$0xff]
                %240 = vst [vmem:[%s210 + $0x70] sm:$0xff] %v239
                %v241 = vld [vmem:[%s209 + $0xe8] sm:$0xff]
                %242 = vst [vmem:[%s210 + $0x78] sm:$0xff] %v241
                %v243 = vld [vmem:[%s209 + $0x100] sm:$0xff]
                %244 = vst [vmem:[%s210 + $0x80] sm:$0xff] %v243
                %v245 = vld [vmem:[%s209 + $0x108] sm:$0xff]
                %246 = vst [vmem:[%s210 + $0x88] sm:$0xff] %v245
                %v247 = vld [vmem:[%s209 + $0x120] sm:$0xff]
                %248 = vst [vmem:[%s210 + $0x90] sm:$0xff] %v247
                %v249 = vld [vmem:[%s209 + $0x128] sm:$0xff]
                %250 = vst [vmem:[%s210 + $0x98] sm:$0xff] %v249
                %v251 = vld [vmem:[%s209 + $0x140] sm:$0xff]
                %252 = vst [vmem:[%s210 + $0xa0] sm:$0xff] %v251
                %v253 = vld [vmem:[%s209 + $0x148] sm:$0xff]
                %254 = vst [vmem:[%s210 + $0xa8] sm:$0xff] %v253
                %v255 = vld [vmem:[%s209 + $0x160] sm:$0xff]
                %256 = vst [vmem:[%s210 + $0xb0] sm:$0xff] %v255
                %v257 = vld [vmem:[%s209 + $0x168] sm:$0xff]
                %258 = vst [vmem:[%s210 + $0xb8] sm:$0xff] %v257
                %v259 = vld [vmem:[%s209 + $0x180] sm:$0xff]
                %260 = vst [vmem:[%s210 + $0xc0] sm:$0xff] %v259
                %v261 = vld [vmem:[%s209 + $0x188] sm:$0xff]
                %262 = vst [vmem:[%s210 + $0xc8] sm:$0xff] %v261
                %v263 = vld [vmem:[%s209 + $0x1a0] sm:$0xff]
                %264 = vst [vmem:[%s210 + $0xd0] sm:$0xff] %v263
                %v265 = vld [vmem:[%s209 + $0x1a8] sm:$0xff]
                %266 = vst [vmem:[%s210 + $0xd8] sm:$0xff] %v265
                %v267 = vld [vmem:[%s209 + $0x1c0] sm:$0xff]
                %268 = vst [vmem:[%s210 + $0xe0] sm:$0xff] %v267
                %v269 = vld [vmem:[%s209 + $0x1c8] sm:$0xff]
                %270 = vst [vmem:[%s210 + $0xe8] sm:$0xff] %v269
                %v271 = vld [vmem:[%s209 + $0x1e0] sm:$0xff]
                %272 = vst [vmem:[%s210 + $0xf0] sm:$0xff] %v271
                %v273 = vld [vmem:[%s209 + $0x1e8] sm:$0xff]
                %274 = vst [vmem:[%s210 + $0xf8] sm:$0xff] %v273
                %v275 = vld [vmem:[%s209 + $0x200] sm:$0xff]
                %276 = vst [vmem:[%s210 + $0x100] sm:$0xff] %v275
                %v277 = vld [vmem:[%s209 + $0x208] sm:$0xff]
                %278 = vst [vmem:[%s210 + $0x108] sm:$0xff] %v277
                %v279 = vld [vmem:[%s209 + $0x220] sm:$0xff]
                %280 = vst [vmem:[%s210 + $0x110] sm:$0xff] %v279
                %v281 = vld [vmem:[%s209 + $0x228] sm:$0xff]
                %282 = vst [vmem:[%s210 + $0x118] sm:$0xff] %v281
                %v283 = vld [vmem:[%s209 + $0x240] sm:$0xff]
                %284 = vst [vmem:[%s210 + $0x120] sm:$0xff] %v283
                %v285 = vld [vmem:[%s209 + $0x248] sm:$0xff]
                %286 = vst [vmem:[%s210 + $0x128] sm:$0xff] %v285
                %v287 = vld [vmem:[%s209 + $0x260] sm:$0xff]
                %288 = vst [vmem:[%s210 + $0x130] sm:$0xff] %v287
                %v289 = vld [vmem:[%s209 + $0x268] sm:$0xff]
                %290 = vst [vmem:[%s210 + $0x138] sm:$0xff] %v289
                %v291 = vld [vmem:[%s209 + $0x280] sm:$0xff]
                %292 = vst [vmem:[%s210 + $0x140] sm:$0xff] %v291
                %v293 = vld [vmem:[%s209 + $0x288] sm:$0xff]
                %294 = vst [vmem:[%s210 + $0x148] sm:$0xff] %v293
                %v295 = vld [vmem:[%s209 + $0x2a0] sm:$0xff]
                %296 = vst [vmem:[%s210 + $0x150] sm:$0xff] %v295
                %v297 = vld [vmem:[%s209 + $0x2a8] sm:$0xff]
                %298 = vst [vmem:[%s210 + $0x158] sm:$0xff] %v297
                %v299 = vld [vmem:[%s209 + $0x2c0] sm:$0xff]
                %300 = vst [vmem:[%s210 + $0x160] sm:$0xff] %v299
                %v301 = vld [vmem:[%s209 + $0x2c8] sm:$0xff]
                %302 = vst [vmem:[%s210 + $0x168] sm:$0xff] %v301
                %v303 = vld [vmem:[%s209 + $0x2e0] sm:$0xff]
                %304 = vst [vmem:[%s210 + $0x170] sm:$0xff] %v303
                %v305 = vld [vmem:[%s209 + $0x2e8] sm:$0xff]
                %306 = vst [vmem:[%s210 + $0x178] sm:$0xff] %v305
                %v307 = vld [vmem:[%s209 + $0x300] sm:$0xff]
                %308 = vst [vmem:[%s210 + $0x180] sm:$0xff] %v307
                %v309 = vld [vmem:[%s209 + $0x308] sm:$0xff]
                %310 = vst [vmem:[%s210 + $0x188] sm:$0xff] %v309
                %v311 = vld [vmem:[%s209 + $0x320] sm:$0xff]
                %312 = vst [vmem:[%s210 + $0x190] sm:$0xff] %v311
                %v313 = vld [vmem:[%s209 + $0x328] sm:$0xff]
                %314 = vst [vmem:[%s210 + $0x198] sm:$0xff] %v313
                %v315 = vld [vmem:[%s209 + $0x340] sm:$0xff]
                %316 = vst [vmem:[%s210 + $0x1a0] sm:$0xff] %v315
                %v317 = vld [vmem:[%s209 + $0x348] sm:$0xff]
                %318 = vst [vmem:[%s210 + $0x1a8] sm:$0xff] %v317
                %v319 = vld [vmem:[%s209 + $0x360] sm:$0xff]
                %320 = vst [vmem:[%s210 + $0x1b0] sm:$0xff] %v319
                %v321 = vld [vmem:[%s209 + $0x368] sm:$0xff]
                %322 = vst [vmem:[%s210 + $0x1b8] sm:$0xff] %v321
                %v323 = vld [vmem:[%s209 + $0x380] sm:$0xff]
                %324 = vst [vmem:[%s210 + $0x1c0] sm:$0xff] %v323
                %v325 = vld [vmem:[%s209 + $0x388] sm:$0xff]
                %326 = vst [vmem:[%s210 + $0x1c8] sm:$0xff] %v325
                %v327 = vld [vmem:[%s209 + $0x3a0] sm:$0xff]
                %328 = vst [vmem:[%s210 + $0x1d0] sm:$0xff] %v327
                %v329 = vld [vmem:[%s209 + $0x3a8] sm:$0xff]
                %330 = vst [vmem:[%s210 + $0x1d8] sm:$0xff] %v329
                %v331 = vld [vmem:[%s209 + $0x3c0] sm:$0xff]
                %332 = vst [vmem:[%s210 + $0x1e0] sm:$0xff] %v331
                %v333 = vld [vmem:[%s209 + $0x3c8] sm:$0xff]
                %334 = vst [vmem:[%s210 + $0x1e8] sm:$0xff] %v333
                %v335 = vld [vmem:[%s209 + $0x3e0] sm:$0xff]
                %336 = vst [vmem:[%s210 + $0x1f0] sm:$0xff] %v335
                %v337 = vld [vmem:[%s209 + $0x3e8] sm:$0xff]
                %338 = vst [vmem:[%s210 + $0x1f8] sm:$0xff] %v337
              $region37: #{joint_transformer_block.18} parent=31 // loop_footer
                %s208 = sadd.s32 1, %s204
              $region38: #{joint_transformer_block.18} parent=31 // loop_footer_branch
                %203 = sbr.rel target = $region34
              $region39: #{joint_transformer_block.18} parent=31 // loop_exit
                _
            $region32: #{joint_transformer_block.18} parent=27 // pred_fallthru
              _
            // Predicated region
            $region40: #{joint_transformer_block.18} parent=27 // pred_check
              _
            $region41: #{joint_transformer_block.18} parent=27 // pred_check_branch
              %340 = sbr.rel target = $region43
            $region42: #{joint_transformer_block.18} parent=27 // pred_region
              _
            $region43: #{joint_transformer_block.18} parent=27 // pred_fallthru
              _
          $region28: #{joint_transformer_block.18} parent=23 // pred_fallthru
            _
          %341 = vnop
        $region24: #{joint_transformer_block.18} parent=15 // pred_fallthru
          _
        // Predicated region
        $region44: #{joint_transformer_block.18} parent=15 // pred_check
          %p342 = pneg %p116
        $region45: #{joint_transformer_block.18} parent=15 // pred_check_branch
          %344 = sbr.rel (%p342) target = $region47
        $region46: #{joint_transformer_block.18} parent=15 // pred_region
          %p345 = scmp.ge.s32.totalorder %s16, 1
          %s346 = scalar_select %p345, 1, 0
          %s347 = smul.u32 4, %s17
          %p348 = scmp.lt.s32.totalorder %s346, 1
          %s349 = scalar_select %p348, %s346, 1
          %p350 = scmp.lt.s32.totalorder %s347, 7
          %s351 = scalar_select %p350, %s347, 7
          %s352 = smul.addr %s349, 8
          %s353 = sadd.s32 %s351, %s352
          %s354 = scalar_lea.vmem %s2, %s353
          %p355 = scmp.ge.s32.totalorder %s16, 1
          %s356 = scalar_select %p355, 1, 0
          %s357 = smul.u32 4, %s17
        $region47: #{joint_transformer_block.18} parent=15 // pred_fallthru
          _
      $region16: #{joint_transformer_block.18} parent=5 // pred_fallthru
        _
      %p358 = scmp.le.s32.totalorder 1, %s9
      %p359 = scmp.lt.s32.totalorder %s9, 5
      %p360 = pnand %p358, %p359
      %p361 = pneg %p360
      // Predicated region
      $region48: #{joint_transformer_block.18} parent=5 // pred_check
        _
      $region49: #{joint_transformer_block.18} parent=5 // pred_check_branch
        %363 = sbr.rel (%p360) target = $region51
      $region50: #{joint_transformer_block.18} parent=5 // pred_region
        %s364 = ssub.s32 %s9, 1
        %s365 = sand.u32 %s77, 1
        %s366 = sand.u32 %s77, 1
        %s367 = smul.addr %s366, 512
        %s368 = scalar_lea.vmem [#allocation3], %s367
        // Predicated region
        $region52: #{joint_transformer_block.18} parent=50 // pred_check
          %p369 = pneg %p90
        $region53: #{joint_transformer_block.18} parent=50 // pred_check_branch
          %371 = sbr.rel (%p369) target = $region55
        $region54: #{joint_transformer_block.18} parent=50 // pred_region
          _
        $region55: #{joint_transformer_block.18} parent=50 // pred_fallthru
          _
        %s372 = smul.u32 2, %s21
        %p373 = scmp.lt.s32.totalorder %s19, 1
        %s374 = scalar_select %p373, %s19, 1
        %p375 = scmp.lt.s32.totalorder %s372, 1
        %s376 = scalar_select %p375, %s372, 1
        %s377 = smul.addr %s374, 2
        %s378 = sadd.s32 %s376, %s377
        %s379 = smul.addr %s378, 4
        %s380 = scalar_lea.vmem %s0, %s379
        %p381 = pneg %p56
        %p382 = pneg %p53
        %s383 = sand.u32 %s77, 1
        %s384 = sand.u32 %s77, 1
        %s385 = smul.addr %s384, 512
        %s386 = scalar_lea.vmem [#allocation3], %s385
        %p387 = pneg %p90
        %p388 = pneg %p87
        %p389 = scmp.ge.s32.totalorder %s19, 1
        %s390 = scalar_select %p389, 1, 0
        %s391 = smul.u32 4, %s20
        %p392 = scmp.lt.s32.totalorder %s390, 1
        %s393 = scalar_select %p392, %s390, 1
        %p394 = scmp.lt.s32.totalorder %s391, 7
        %s395 = scalar_select %p394, %s391, 7
        %s396 = smul.addr %s393, 8
        %s397 = sadd.s32 %s395, %s396
        %s398 = scalar_lea.vmem %s2, %s397
        %p399 = pneg %p122
        %p400 = pneg %p119
        %p401 = pneg %p150
        %p402 = pneg %p147
        %s403 = smul.u32 4, %s20
        %p404 = scmp.lt.s32.totalorder %s19, 1
        %s405 = scalar_select %p404, %s19, 1
        %p406 = scmp.lt.s32.totalorder %s403, 7
        %s407 = scalar_select %p406, %s403, 7
        %s408 = smul.addr %s405, 8
        %s409 = sadd.s32 %s407, %s408
        %s410 = smul.addr %s409, 4
        %s411 = scalar_lea.vmem %s3, %s410
        %s412 = smul.u32 2, %s21
        %p413 = scmp.lt.s32.totalorder %s19, 1
        %s414 = scalar_select %p413, %s19, 1
        %p415 = scmp.lt.s32.totalorder %s412, 1
        %s416 = scalar_select %p415, %s412, 1
        %s417 = smul.addr %s414, 2
        %s418 = sadd.s32 %s416, %s417
        %s419 = smul.addr %s418, 4
        %s420 = scalar_lea.vmem %s0, %s419
        %s421 = smul.u32 2, %s21
        %p422 = scmp.ge.s32.totalorder %s19, 1
        %s423 = scalar_select %p422, 1, 0
        %s424 = smul.u32 32, %s21
        %s425 = smul.u32 4, %s20
        %p426 = scmp.ge.s32.totalorder %s19, 1
        %s427 = scalar_select %p426, 1, 0
        %s428 = smul.u32 4, %s20
        %p429 = scmp.lt.s32.totalorder %s427, 1
        %s430 = scalar_select %p429, %s427, 1
        %p431 = scmp.lt.s32.totalorder %s428, 7
        %s432 = scalar_select %p431, %s428, 7
        %s433 = smul.addr %s430, 8
        %s434 = sadd.s32 %s432, %s433
        %s435 = scalar_lea.vmem %s2, %s434
        %p436 = scmp.ge.s32.totalorder %s19, 1
        %s437 = scalar_select %p436, 1, 0
        %s438 = smul.u32 4, %s20
        %s439 = smul.u32 4, %s20
        %p440 = scmp.lt.s32.totalorder %s19, 1
        %s441 = scalar_select %p440, %s19, 1
        %p442 = scmp.lt.s32.totalorder %s439, 7
        %s443 = scalar_select %p442, %s439, 7
        %s444 = smul.addr %s441, 8
        %s445 = sadd.s32 %s443, %s444
        %s446 = smul.addr %s445, 4
        %s447 = scalar_lea.vmem %s3, %s446
        %s448 = smul.u32 4, %s20
        %p449 = scmp.eq.s32.totalorder %s21, 0
        // Predicated region
        $region56: #{joint_transformer_block.18} parent=50 // pred_check
          %p450 = pneg %p449
        $region57: #{joint_transformer_block.18} parent=50 // pred_check_branch
          %452 = sbr.rel (%p450) target = $region59
        $region58: #{joint_transformer_block.18} parent=50 // pred_region
          %453 = vst [vmem:[#allocation2] sm:$0xff] 0.0
          %454 = vst [vmem:[#allocation2 + $0x8] sm:$0xff] 0.0
          %455 = vst [vmem:[#allocation2 + $0x10] sm:$0xff] 0.0
          %456 = vst [vmem:[#allocation2 + $0x18] sm:$0xff] 0.0
        $region59: #{joint_transformer_block.18} parent=50 // pred_fallthru
          _
        %v457 = vld [vmem:[#allocation2] sm:$0xff]
        %v458 = vld [vmem:[#allocation2 + $0x8] sm:$0xff]
        %v459 = vld [vmem:[#allocation2 + $0x10] sm:$0xff]
        %v460 = vld [vmem:[#allocation2 + $0x18] sm:$0xff]
        %v461 = vld [vmem:[%s420] sm:$0xff]
        %v462 = vld [vmem:[%s368] sm:$0xff]
        %v463 = vld [vmem:[%s368 + $0x8] sm:$0xff]
        %v464 = vld [vmem:[%s368 + $0x10] sm:$0xff]
        %v465 = vld [vmem:[%s368 + $0x18] sm:$0xff]
        %v466 = vld [vmem:[%s368 + $0x20] sm:$0xff]
        %v467 = vld [vmem:[%s368 + $0x28] sm:$0xff]
        %v468 = vld [vmem:[%s368 + $0x30] sm:$0xff]
        %v469 = vld [vmem:[%s368 + $0x38] sm:$0xff]
        %v470 = vld [vmem:[%s368 + $0x40] sm:$0xff]
        %v471 = vld [vmem:[%s368 + $0x48] sm:$0xff]
        %v472 = vld [vmem:[%s368 + $0x50] sm:$0xff]
        %v473 = vld [vmem:[%s368 + $0x58] sm:$0xff]
        %v474 = vld [vmem:[%s368 + $0x60] sm:$0xff]
        %v475 = vld [vmem:[%s368 + $0x68] sm:$0xff]
        %v476 = vld [vmem:[%s368 + $0x70] sm:$0xff]
        %v477 = vld [vmem:[%s368 + $0x78] sm:$0xff]
        %v478 = vld [vmem:[%s368 + $0x80] sm:$0xff]
        %v479 = vld [vmem:[%s368 + $0x88] sm:$0xff]
        %v480 = vld [vmem:[%s368 + $0x90] sm:$0xff]
        %v481 = vld [vmem:[%s368 + $0x98] sm:$0xff]
        %v482 = vld [vmem:[%s368 + $0xa0] sm:$0xff]
        %v483 = vld [vmem:[%s368 + $0xa8] sm:$0xff]
        %v484 = vld [vmem:[%s368 + $0xb0] sm:$0xff]
        %v485 = vld [vmem:[%s368 + $0xb8] sm:$0xff]
        %v486 = vld [vmem:[%s368 + $0xc0] sm:$0xff]
        %v487 = vld [vmem:[%s368 + $0xc8] sm:$0xff]
        %v488 = vld [vmem:[%s368 + $0xd0] sm:$0xff]
        %v489 = vld [vmem:[%s368 + $0xd8] sm:$0xff]
        %v490 = vld [vmem:[%s368 + $0xe0] sm:$0xff]
        %v491 = vld [vmem:[%s368 + $0xe8] sm:$0xff]
        %v492 = vld [vmem:[%s368 + $0xf0] sm:$0xff]
        %v493 = vld [vmem:[%s368 + $0xf8] sm:$0xff]
        %v494 = vld [vmem:[%s368 + $0x100] sm:$0xff]
        %v495 = vld [vmem:[%s368 + $0x108] sm:$0xff]
        %v496 = vld [vmem:[%s368 + $0x110] sm:$0xff]
        %v497 = vld [vmem:[%s368 + $0x118] sm:$0xff]
        %v498 = vld [vmem:[%s368 + $0x120] sm:$0xff]
        %v499 = vld [vmem:[%s368 + $0x128] sm:$0xff]
        %v500 = vld [vmem:[%s368 + $0x130] sm:$0xff]
        %v501 = vld [vmem:[%s368 + $0x138] sm:$0xff]
        %v502 = vld [vmem:[%s368 + $0x140] sm:$0xff]
        %v503 = vld [vmem:[%s368 + $0x148] sm:$0xff]
        %v504 = vld [vmem:[%s368 + $0x150] sm:$0xff]
        %v505 = vld [vmem:[%s368 + $0x158] sm:$0xff]
        %v506 = vld [vmem:[%s368 + $0x160] sm:$0xff]
        %v507 = vld [vmem:[%s368 + $0x168] sm:$0xff]
        %v508 = vld [vmem:[%s368 + $0x170] sm:$0xff]
        %v509 = vld [vmem:[%s368 + $0x178] sm:$0xff]
        %v510 = vld [vmem:[%s368 + $0x180] sm:$0xff]
        %v511 = vld [vmem:[%s368 + $0x188] sm:$0xff]
        %v512 = vld [vmem:[%s368 + $0x190] sm:$0xff]
        %v513 = vld [vmem:[%s368 + $0x198] sm:$0xff]
        %v514 = vld [vmem:[%s368 + $0x1a0] sm:$0xff]
        %v515 = vld [vmem:[%s368 + $0x1a8] sm:$0xff]
        %v516 = vld [vmem:[%s368 + $0x1b0] sm:$0xff]
        %v517 = vld [vmem:[%s368 + $0x1b8] sm:$0xff]
        %v518 = vld [vmem:[%s368 + $0x1c0] sm:$0xff]
        %v519 = vld [vmem:[%s368 + $0x1c8] sm:$0xff]
        %v520 = vld [vmem:[%s368 + $0x1d0] sm:$0xff]
        %v521 = vld [vmem:[%s368 + $0x1d8] sm:$0xff]
        %v522 = vld [vmem:[%s368 + $0x1e0] sm:$0xff]
        %v523 = vld [vmem:[%s368 + $0x1e8] sm:$0xff]
        %v524 = vld [vmem:[%s368 + $0x1f0] sm:$0xff]
        %v525 = vld [vmem:[%s368 + $0x1f8] sm:$0xff]
        %v527 = vunpack.c.l.b16 %v461
        %v528 = vunpack.c.h.b16 %v461
        %v529 = vpack.c.b16 %v527, %v527
        %v530 = vpack.c.b16 %v528, %v528
        %v597 = vunpack.c.l.b16 %v462
        %v598 = vunpack.c.h.b16 %v462
        %v599 = vunpack.c.l.b16 %v463
        %v600 = vunpack.c.h.b16 %v463
        %v601 = vunpack.c.l.b16 %v464
        %v602 = vunpack.c.h.b16 %v464
        %v603 = vunpack.c.l.b16 %v465
        %v604 = vunpack.c.h.b16 %v465
        %v605 = vunpack.c.l.b16 %v466
        %v606 = vunpack.c.h.b16 %v466
        %v607 = vunpack.c.l.b16 %v467
        %v608 = vunpack.c.h.b16 %v467
        %v609 = vunpack.c.l.b16 %v468
        %v610 = vunpack.c.h.b16 %v468
        %v611 = vunpack.c.l.b16 %v469
        %v612 = vunpack.c.h.b16 %v469
        %v613 = vunpack.c.l.b16 %v470
        %v614 = vunpack.c.h.b16 %v470
        %v615 = vunpack.c.l.b16 %v471
        %v616 = vunpack.c.h.b16 %v471
        %v617 = vunpack.c.l.b16 %v472
        %v618 = vunpack.c.h.b16 %v472
        %v619 = vunpack.c.l.b16 %v473
        %v620 = vunpack.c.h.b16 %v473
        %v621 = vunpack.c.l.b16 %v474
        %v622 = vunpack.c.h.b16 %v474
        %v623 = vunpack.c.l.b16 %v475
        %v624 = vunpack.c.h.b16 %v475
        %v625 = vunpack.c.l.b16 %v476
        %v626 = vunpack.c.h.b16 %v476
        %v627 = vunpack.c.l.b16 %v477
        %v628 = vunpack.c.h.b16 %v477
        %v629 = vunpack.c.l.b16 %v478
        %v630 = vunpack.c.h.b16 %v478
        %v631 = vunpack.c.l.b16 %v479
        %v632 = vunpack.c.h.b16 %v479
        %v633 = vunpack.c.l.b16 %v480
        %v634 = vunpack.c.h.b16 %v480
        %v635 = vunpack.c.l.b16 %v481
        %v636 = vunpack.c.h.b16 %v481
        %v637 = vunpack.c.l.b16 %v482
        %v638 = vunpack.c.h.b16 %v482
        %v639 = vunpack.c.l.b16 %v483
        %v640 = vunpack.c.h.b16 %v483
        %v641 = vunpack.c.l.b16 %v484
        %v642 = vunpack.c.h.b16 %v484
        %v643 = vunpack.c.l.b16 %v485
        %v644 = vunpack.c.h.b16 %v485
        %v645 = vunpack.c.l.b16 %v486
        %v646 = vunpack.c.h.b16 %v486
        %v647 = vunpack.c.l.b16 %v487
        %v648 = vunpack.c.h.b16 %v487
        %v649 = vunpack.c.l.b16 %v488
        %v650 = vunpack.c.h.b16 %v488
        %v651 = vunpack.c.l.b16 %v489
        %v652 = vunpack.c.h.b16 %v489
        %v653 = vunpack.c.l.b16 %v490
        %v654 = vunpack.c.h.b16 %v490
        %v655 = vunpack.c.l.b16 %v491
        %v656 = vunpack.c.h.b16 %v491
        %v657 = vunpack.c.l.b16 %v492
        %v658 = vunpack.c.h.b16 %v492
        %v659 = vunpack.c.l.b16 %v493
        %v660 = vunpack.c.h.b16 %v493
        %v661 = vunpack.c.l.b16 %v494
        %v662 = vunpack.c.h.b16 %v494
        %v663 = vunpack.c.l.b16 %v495
        %v664 = vunpack.c.h.b16 %v495
        %v665 = vunpack.c.l.b16 %v496
        %v666 = vunpack.c.h.b16 %v496
        %v667 = vunpack.c.l.b16 %v497
        %v668 = vunpack.c.h.b16 %v497
        %v669 = vunpack.c.l.b16 %v498
        %v670 = vunpack.c.h.b16 %v498
        %v671 = vunpack.c.l.b16 %v499
        %v672 = vunpack.c.h.b16 %v499
        %v673 = vunpack.c.l.b16 %v500
        %v674 = vunpack.c.h.b16 %v500
        %v675 = vunpack.c.l.b16 %v501
        %v676 = vunpack.c.h.b16 %v501
        %v677 = vunpack.c.l.b16 %v502
        %v678 = vunpack.c.h.b16 %v502
        %v679 = vunpack.c.l.b16 %v503
        %v680 = vunpack.c.h.b16 %v503
        %v681 = vunpack.c.l.b16 %v504
        %v682 = vunpack.c.h.b16 %v504
        %v683 = vunpack.c.l.b16 %v505
        %v684 = vunpack.c.h.b16 %v505
        %v685 = vunpack.c.l.b16 %v506
        %v686 = vunpack.c.h.b16 %v506
        %v687 = vunpack.c.l.b16 %v507
        %v688 = vunpack.c.h.b16 %v507
        %v689 = vunpack.c.l.b16 %v508
        %v690 = vunpack.c.h.b16 %v508
        %v691 = vunpack.c.l.b16 %v509
        %v692 = vunpack.c.h.b16 %v509
        %v693 = vunpack.c.l.b16 %v510
        %v694 = vunpack.c.h.b16 %v510
        %v695 = vunpack.c.l.b16 %v511
        %v696 = vunpack.c.h.b16 %v511
        %v697 = vunpack.c.l.b16 %v512
        %v698 = vunpack.c.h.b16 %v512
        %v699 = vunpack.c.l.b16 %v513
        %v700 = vunpack.c.h.b16 %v513
        %v701 = vunpack.c.l.b16 %v514
        %v702 = vunpack.c.h.b16 %v514
        %v703 = vunpack.c.l.b16 %v515
        %v704 = vunpack.c.h.b16 %v515
        %v705 = vunpack.c.l.b16 %v516
        %v706 = vunpack.c.h.b16 %v516
        %v707 = vunpack.c.l.b16 %v517
        %v708 = vunpack.c.h.b16 %v517
        %v709 = vunpack.c.l.b16 %v518
        %v710 = vunpack.c.h.b16 %v518
        %v711 = vunpack.c.l.b16 %v519
        %v712 = vunpack.c.h.b16 %v519
        %v713 = vunpack.c.l.b16 %v520
        %v714 = vunpack.c.h.b16 %v520
        %v715 = vunpack.c.l.b16 %v521
        %v716 = vunpack.c.h.b16 %v521
        %v717 = vunpack.c.l.b16 %v522
        %v718 = vunpack.c.h.b16 %v522
        %v719 = vunpack.c.l.b16 %v523
        %v720 = vunpack.c.h.b16 %v523
        %v721 = vunpack.c.l.b16 %v524
        %v722 = vunpack.c.h.b16 %v524
        %v723 = vunpack.c.l.b16 %v525
        %v724 = vunpack.c.h.b16 %v525
        %v725 = vpack.c.b16 %v601, %v597
        %v726 = vpack.c.b16 %v602, %v598
        %v727 = vpack.c.b16 %v603, %v599
        %v728 = vpack.c.b16 %v604, %v600
        %v729 = vpack.c.b16 %v609, %v605
        %v730 = vpack.c.b16 %v610, %v606
        %v731 = vpack.c.b16 %v611, %v607
        %v732 = vpack.c.b16 %v612, %v608
        %v733 = vpack.c.b16 %v617, %v613
        %v734 = vpack.c.b16 %v618, %v614
        %v735 = vpack.c.b16 %v619, %v615
        %v736 = vpack.c.b16 %v620, %v616
        %v737 = vpack.c.b16 %v625, %v621
        %v738 = vpack.c.b16 %v626, %v622
        %v739 = vpack.c.b16 %v627, %v623
        %v740 = vpack.c.b16 %v628, %v624
        %v741 = vpack.c.b16 %v633, %v629
        %v742 = vpack.c.b16 %v634, %v630
        %v743 = vpack.c.b16 %v635, %v631
        %v744 = vpack.c.b16 %v636, %v632
        %v745 = vpack.c.b16 %v641, %v637
        %v746 = vpack.c.b16 %v642, %v638
        %v747 = vpack.c.b16 %v643, %v639
        %v748 = vpack.c.b16 %v644, %v640
        %v749 = vpack.c.b16 %v649, %v645
        %v750 = vpack.c.b16 %v650, %v646
        %v751 = vpack.c.b16 %v651, %v647
        %v752 = vpack.c.b16 %v652, %v648
        %v753 = vpack.c.b16 %v657, %v653
        %v754 = vpack.c.b16 %v658, %v654
        %v755 = vpack.c.b16 %v659, %v655
        %v756 = vpack.c.b16 %v660, %v656
        %v757 = vpack.c.b16 %v665, %v661
        %v758 = vpack.c.b16 %v666, %v662
        %v759 = vpack.c.b16 %v667, %v663
        %v760 = vpack.c.b16 %v668, %v664
        %v761 = vpack.c.b16 %v673, %v669
        %v762 = vpack.c.b16 %v674, %v670
        %v763 = vpack.c.b16 %v675, %v671
        %v764 = vpack.c.b16 %v676, %v672
        %v765 = vpack.c.b16 %v681, %v677
        %v766 = vpack.c.b16 %v682, %v678
        %v767 = vpack.c.b16 %v683, %v679
        %v768 = vpack.c.b16 %v684, %v680
        %v769 = vpack.c.b16 %v689, %v685
        %v770 = vpack.c.b16 %v690, %v686
        %v771 = vpack.c.b16 %v691, %v687
        %v772 = vpack.c.b16 %v692, %v688
        %v773 = vpack.c.b16 %v697, %v693
        %v774 = vpack.c.b16 %v698, %v694
        %v775 = vpack.c.b16 %v699, %v695
        %v776 = vpack.c.b16 %v700, %v696
        %v777 = vpack.c.b16 %v705, %v701
        %v778 = vpack.c.b16 %v706, %v702
        %v779 = vpack.c.b16 %v707, %v703
        %v780 = vpack.c.b16 %v708, %v704
        %v781 = vpack.c.b16 %v713, %v709
        %v782 = vpack.c.b16 %v714, %v710
        %v783 = vpack.c.b16 %v715, %v711
        %v784 = vpack.c.b16 %v716, %v712
        %v785 = vpack.c.b16 %v721, %v717
        %v786 = vpack.c.b16 %v722, %v718
        %v787 = vpack.c.b16 %v723, %v719
        %v788 = vpack.c.b16 %v724, %v720
        %853 = vmatprep.subr.bf16.mxu0 %v726
        %854 = vmatpush1.bf16.msra.mxu0 %v725
        %855 = vmatprep.subr.bf16.mxu0 %v730
        %856 = vmatpush1.bf16.msra.mxu0 %v729
        %857 = vmatprep.subr.bf16.mxu0 %v734
        %858 = vmatpush1.bf16.msra.mxu0 %v733
        %859 = vmatprep.subr.bf16.mxu0 %v738
        %860 = vmatpush1.bf16.msra.mxu0 %v737
        %861 = vmatprep.subr.bf16.mxu0 %v742
        %862 = vmatpush1.bf16.msra.mxu0 %v741
        %863 = vmatprep.subr.bf16.mxu0 %v746
        %864 = vmatpush1.bf16.msra.mxu0 %v745
        %865 = vmatprep.subr.bf16.mxu0 %v750
        %866 = vmatpush1.bf16.msra.mxu0 %v749
        %867 = vmatprep.subr.bf16.mxu0 %v754
        %868 = vmatpush1.bf16.msra.mxu0 %v753
        %869 = vmatprep.subr.bf16.mxu0 %v758
        %870 = vmatpush1.bf16.msra.mxu0 %v757
        %871 = vmatprep.subr.bf16.mxu0 %v762
        %872 = vmatpush1.bf16.msra.mxu0 %v761
        %873 = vmatprep.subr.bf16.mxu0 %v766
        %874 = vmatpush1.bf16.msra.mxu0 %v765
        %875 = vmatprep.subr.bf16.mxu0 %v770
        %876 = vmatpush1.bf16.msra.mxu0 %v769
        %877 = vmatprep.subr.bf16.mxu0 %v774
        %878 = vmatpush1.bf16.msra.mxu0 %v773
        %879 = vmatprep.subr.bf16.mxu0 %v778
        %880 = vmatpush1.bf16.msra.mxu0 %v777
        %881 = vmatprep.subr.bf16.mxu0 %v782
        %882 = vmatpush1.bf16.msra.mxu0 %v781
        %883 = vmatprep.subr.bf16.mxu0 %v786
        %884 = vmatpush1.bf16.msra.mxu0 %v785
        %885 = vmatprep.mubr.bf16.mxu0 %v530
        %886 = vmatmul.mubr.bf16.gmra.mrb[0].mxu0 %v529
        %v887 = vpop.f32.mrb[0].mxu0
        %v888 = vadd.f32 0.0, %v887
        %v889 = vpop.f32.mrb[0].mxu0
        %v890 = vadd.f32 0.0, %v889
        %v891 = vpop.f32.mrb[0].mxu0
        %v892 = vpop.f32.mrb[0].mxu0
        %893 = vdwg.mxu0
        %894 = vmatprep.subr.bf16.mxu0 %v728
        %895 = vmatpush1.bf16.msra.mxu0 %v727
        %896 = vmatprep.subr.bf16.mxu0 %v732
        %897 = vmatpush1.bf16.msra.mxu0 %v731
        %898 = vmatprep.subr.bf16.mxu0 %v736
        %899 = vmatpush1.bf16.msra.mxu0 %v735
        %900 = vmatprep.subr.bf16.mxu0 %v740
        %901 = vmatpush1.bf16.msra.mxu0 %v739
        %902 = vmatprep.subr.bf16.mxu0 %v744
        %903 = vmatpush1.bf16.msra.mxu0 %v743
        %904 = vmatprep.subr.bf16.mxu0 %v748
        %905 = vmatpush1.bf16.msra.mxu0 %v747
        %906 = vmatprep.subr.bf16.mxu0 %v752
        %907 = vmatpush1.bf16.msra.mxu0 %v751
        %908 = vmatprep.subr.bf16.mxu0 %v756
        %909 = vmatpush1.bf16.msra.mxu0 %v755
        %910 = vmatprep.subr.bf16.mxu0 %v760
        %911 = vmatpush1.bf16.msra.mxu0 %v759
        %912 = vmatprep.subr.bf16.mxu0 %v764
        %913 = vmatpush1.bf16.msra.mxu0 %v763
        %914 = vmatprep.subr.bf16.mxu0 %v768
        %915 = vmatpush1.bf16.msra.mxu0 %v767
        %916 = vmatprep.subr.bf16.mxu0 %v772
        %917 = vmatpush1.bf16.msra.mxu0 %v771
        %918 = vmatprep.subr.bf16.mxu0 %v776
        %919 = vmatpush1.bf16.msra.mxu0 %v775
        %920 = vmatprep.subr.bf16.mxu0 %v780
        %921 = vmatpush1.bf16.msra.mxu0 %v779
        %922 = vmatprep.subr.bf16.mxu0 %v784
        %923 = vmatpush1.bf16.msra.mxu0 %v783
        %924 = vmatprep.subr.bf16.mxu0 %v788
        %925 = vmatpush1.bf16.msra.mxu0 %v787
        %926 = vmatprep.mubr.bf16.mxu0 %v530
        %927 = vmatmul.mubr.bf16.gmra.mrb[0].mxu0 %v529
        %v928 = vpop.f32.mrb[0].mxu0
        %v929 = vadd.f32 0.0, %v928
        %v930 = vpop.f32.mrb[0].mxu0
        %v931 = vadd.f32 0.0, %v930
        %v932 = vpop.f32.mrb[0].mxu0
        %v933 = vpop.f32.mrb[0].mxu0
        %934 = vdwg.mxu0
        %v935 = vadd.f32 %v457, %v888
        %v936 = vadd.f32 %v458, %v890
        %v937 = vadd.f32 %v459, %v929
        %v938 = vadd.f32 %v460, %v931
        %939 = vst [vmem:[#allocation2] sm:$0xff] %v935
        %940 = vst [vmem:[#allocation2 + $0x8] sm:$0xff] %v936
        %941 = vst [vmem:[#allocation2 + $0x10] sm:$0xff] %v937
        %942 = vst [vmem:[#allocation2 + $0x18] sm:$0xff] %v938
        // Predicated region
        $region60: #{joint_transformer_block.18} parent=50 // pred_check
          %p943 = pneg %p449
        $region61: #{joint_transformer_block.18} parent=50 // pred_check_branch
          %945 = sbr.rel (%p943) target = $region63
        $region62: #{joint_transformer_block.18} parent=50 // pred_region
          %v946 = vld [vmem:[#allocation2] sm:$0xff]
          %v947 = vld [vmem:[#allocation2 + $0x8] sm:$0xff]
          %v948 = vld [vmem:[#allocation2 + $0x10] sm:$0xff]
          %v949 = vld [vmem:[#allocation2 + $0x18] sm:$0xff]
          %v950 = vld [vmem:[%s435] sm:$0xf]
          %v951 = vunpack.c.l.bf16 %v950
          %v953 = vlaneseq
          %v954 = vshrl.u32 %v953, 7
          %v955 = vsub.s32 0, %v954
          %v956 = vrot.slane %v951, %v955
          %v957 = vlaneseq
          %v958 = vshrl.u32 %v957, 7
          %v959 = vsub.s32 2, %v958
          %v960 = vrot.slane %v951, %v959
          %v961 = vlaneseq
          %v962 = vshrl.u32 %v961, 7
          %v963 = vsub.s32 4, %v962
          %v964 = vrot.slane %v951, %v963
          %v965 = vlaneseq
          %v966 = vshrl.u32 %v965, 7
          %v967 = vsub.s32 6, %v966
          %v968 = vrot.slane %v951, %v967
          %v973 = vlaneseq
          %v974 = vshrl.u32 %v973, 7
          %v975 = vsub.s32 0, %v974
          %v976 = vrot.slane %v956, %v975
          %v977 = vlaneseq
          %v978 = vshrl.u32 %v977, 7
          %v979 = vsub.s32 0, %v978
          %v980 = vrot.slane %v960, %v979
          %v981 = vlaneseq
          %v982 = vshrl.u32 %v981, 7
          %v983 = vsub.s32 0, %v982
          %v984 = vrot.slane %v964, %v983
          %v985 = vlaneseq
          %v986 = vshrl.u32 %v985, 7
          %v987 = vsub.s32 0, %v986
          %v988 = vrot.slane %v968, %v987
          %v989 = vadd.f32 %v946, %v976
          %v990 = vadd.f32 %v947, %v980
          %v991 = vadd.f32 %v948, %v984
          %v992 = vadd.f32 %v949, %v988
          %v993 = vmul.f32 %v989, 0.5
          %v994 = vmul.f32 %v990, 0.5
          %v995 = vmul.f32 %v991, 0.5
          %v996 = vmul.f32 %v992, 0.5
          %v997 = vmul.f32 %v989, 0.044715
          %v998 = vmul.f32 %v990, 0.044715
          %v999 = vmul.f32 %v991, 0.044715
          %v1000 = vmul.f32 %v992, 0.044715
          %v1001 = vmul.f32 %v997, %v989
          %v1002 = vmul.f32 %v998, %v990
          %v1003 = vmul.f32 %v999, %v991
          %v1004 = vmul.f32 %v1000, %v992
          %v1005 = vmul.f32 %v1001, %v989
          %v1006 = vmul.f32 %v1002, %v990
          %v1007 = vmul.f32 %v1003, %v991
          %v1008 = vmul.f32 %v1004, %v992
          %v1009 = vadd.f32 %v989, %v1005
          %v1010 = vadd.f32 %v990, %v1006
          %v1011 = vadd.f32 %v991, %v1007
          %v1012 = vadd.f32 %v992, %v1008
          %v1013 = vmul.f32 %v1009, 0.7978846
          %v1014 = vmul.f32 %v1010, 0.7978846
          %v1015 = vmul.f32 %v1011, 0.7978846
          %v1016 = vmul.f32 %v1012, 0.7978846
          %v1017 = vtanh.pop %v1013
          %v1018 = vtanh.pop %v1014
          %v1019 = vtanh.pop %v1015
          %v1020 = vtanh.pop %v1016
          %v1021 = vadd.f32 %v1017, 1.0
          %v1022 = vadd.f32 %v1018, 1.0
          %v1023 = vadd.f32 %v1019, 1.0
          %v1024 = vadd.f32 %v1020, 1.0
          %v1025 = vmul.f32 %v993, %v1021
          %v1026 = vmul.f32 %v994, %v1022
          %v1027 = vmul.f32 %v995, %v1023
          %v1028 = vmul.f32 %v996, %v1024
          %v1029 = vpack.c.bf16 %v1025, %v1025
          %v1030 = vpack.c.bf16 %v1026, %v1026
          %v1031 = vpack.c.bf16 %v1027, %v1027
          %v1032 = vpack.c.bf16 %v1028, %v1028
          %v1037 = vunpack.c.l.b16 %v1029
          %v1038 = vunpack.c.l.b16 %v1030
          %v1039 = vunpack.c.l.b16 %v1031
          %v1040 = vunpack.c.l.b16 %v1032
          %v1041 = vpack.c.b16 %v1038, %v1037
          %v1042 = vpack.c.b16 %v1040, %v1039
          %1045 = vst [vmem:[%s447] sm:$0xff] %v1041
          %1046 = vst [vmem:[%s447 + $0x8] sm:$0xff] %v1042
        $region63: #{joint_transformer_block.18} parent=50 // pred_fallthru
          _
        %s1047 = smul.u32 4, %s20
        %p1048 = scmp.lt.s32.totalorder %s19, 1
        %s1049 = scalar_select %p1048, %s19, 1
        %p1050 = scmp.lt.s32.totalorder %s1047, 7
        %s1051 = scalar_select %p1050, %s1047, 7
        %s1052 = smul.addr %s1049, 8
        %s1053 = sadd.s32 %s1051, %s1052
        %s1054 = smul.addr %s1053, 4
        %s1055 = scalar_lea.vmem %s3, %s1054
        // Predicated region
        $region64: #{joint_transformer_block.18} parent=50 // pred_check
          %p1056 = pneg %p147
        $region65: #{joint_transformer_block.18} parent=50 // pred_check_branch
          %1058 = sbr.rel (%p1056) target = $region67
        $region66: #{joint_transformer_block.18} parent=50 // pred_region
          %s1059 = smul.u32 4, %s20
        $region67: #{joint_transformer_block.18} parent=50 // pred_fallthru
          _
      $region51: #{joint_transformer_block.18} parent=5 // pred_fallthru
        _
      %p1060 = scmp.le.s32.totalorder 2, %s9
      // Predicated region
      $region68: #{joint_transformer_block.18} parent=5 // pred_check
        %p1061 = pneg %p1060
      $region69: #{joint_transformer_block.18} parent=5 // pred_check_branch
        %1063 = sbr.rel (%p1061) target = $region71
      $region70: #{joint_transformer_block.18} parent=5 // pred_region
        %s1064 = ssub.s32 %s9, 2
        // Predicated region
        $region72: #{joint_transformer_block.18} parent=70 // pred_check
          %p1065 = pneg %p153
        $region73: #{joint_transformer_block.18} parent=70 // pred_check_branch
          %1067 = sbr.rel (%p1065) target = $region75
        $region74: #{joint_transformer_block.18} parent=70 // pred_region
          %s1068 = smul.u32 4, %s23
          %p1069 = scmp.lt.s32.totalorder %s22, 1
          %s1070 = scalar_select %p1069, %s22, 1
          %p1071 = scmp.lt.s32.totalorder %s1068, 7
          %s1072 = scalar_select %p1071, %s1068, 7
          %s1073 = smul.addr %s1070, 8
          %s1074 = sadd.s32 %s1072, %s1073
          %s1075 = smul.addr %s1074, 4
          %s1076 = scalar_lea.vmem %s3, %s1075
        $region75: #{joint_transformer_block.18} parent=70 // pred_fallthru
          _
      $region71: #{joint_transformer_block.18} parent=5 // pred_fallthru
        _
    $region6: #{joint_transformer_block.18} parent=1 // loop_footer
      %s13 = sadd.s32 1, %s9
    $region7: #{joint_transformer_block.18} parent=1 // loop_footer_branch
      %8 = sbr.rel target = $region3
    $region8: #{joint_transformer_block.18} parent=1 // loop_exit
      _

// kernel: joint_transformer_block.19
$region0: #{joint_transformer_block.19}
  #allocation0 [shape = 'u32[]', space=smem, size = 0x4, offset = 0x4, fixed_abs, tag = 'smem constant byte address 0x4 - core index']
  #allocation1 [shape = 'u32[144,128]{1,0:T(1,128)}', space=vmem, size = 0x12000, scoped, tag = 'internal scratch']
  #allocation2 [shape = 'f32[8,256]{1,0:T(8,128)}', space=vmem, size = 0x2000, scoped, tag = 'scratch operand']
  %s0 = inlined_call_operand.vmem [shape: bf16[16,1024], index: 0, kind: input, shape index: {}]
  %s1 = inlined_call_operand.vmem [shape: bf16[2,1024,256], index: 1, kind: input, shape index: {}]
  %s2 = inlined_call_operand.vmem [shape: bf16[2,1,256], index: 2, kind: input, shape index: {}]
  %s3 = inlined_call_operand.vmem [shape: bf16[16,256], index: 3, kind: input, shape index: {}]
  %s4 = inlined_call_operand.vmem [shape: f32[2,1,256], index: 4, kind: input, shape index: {}]
  %s5 = inlined_call_operand.vmem [shape: bf16[16,256], index: 5, kind: output, shape index: {}]
  %s6 = sld [smem:[#allocation0]]
  $region61: #{joint_transformer_block.19} parent=0
    _
  %s8 = ssub.s32 1, %s6
  %s9 = scalar_select 0, %s8, %s6
  loop: start=0, step=1, limit=6
  $region2: #{joint_transformer_block.19} parent=0 // loop_pre_header
    _
  $region3: #{joint_transformer_block.19} parent=0 // loop_header
    %s11 = sphi 0, %s15
    %p12 = scmp.ge.s32.totalorder %s11, 6
    %s18 = sphi 0, %s37
    %s19 = sphi 0, %s33
    %s20 = sphi 0, %s29
    %s21 = sphi 0, %s18
    %s22 = sphi 0, %s19
    %s23 = sphi 0, %s20
    %s24 = sphi 0, %s21
    %s25 = sphi 0, %s22
    %s26 = sphi 0, %s23
    %s42 = sphi 0, %s44
    %s45 = sphi 0, %s42
    %s46 = sphi 0, %s45
    %s62 = sphi 0, %s46
    %s76 = sphi 0, %s78
    %s79 = sphi 0, %s76
    %s80 = sphi 0, %s79
    %s96 = sphi 0, %s80
    %s108 = sphi 0, %s110
    %s111 = sphi 0, %s108
    %s112 = sphi 0, %s111
    %s128 = sphi 0, %s112
    %s136 = sphi 0, %s138
    %s139 = sphi 0, %s136
    %s140 = sphi 0, %s139
    %s156 = sphi 0, %s140
    %s168 = sphi 0, %s170
    %s171 = sphi 0, %s168
    %s172 = sphi 0, %s171
    %s188 = sphi 0, %s172
    %s196 = sphi 0, %s198
    %s199 = sphi 0, %s196
    %s200 = sphi 0, %s199
    %s216 = sphi 0, %s200
  $region4: #{joint_transformer_block.19} parent=0 // loop_header_branch
    %14 = sbr.rel (%p12) target = $region8
  $region5: #{joint_transformer_block.19} parent=0 // loop_body
    %s16 = ssub.s32 %s11, 1
    %s17 = ssub.s32 %s11, 2
    %s27 = sadd.s32 1, %s20
    %p28 = scmp.ge.s32.totalorder %s27, 2
    %s29 = scalar_select %p28, 0, %s27
    %s30 = sadd.s32 1, %s19
    %s31 = scalar_select %p28, %s30, %s19
    %p32 = scmp.ge.s32.totalorder %s31, 1
    %s33 = scalar_select %p32, 0, %s31
    %s34 = sadd.s32 1, %s18
    %s35 = scalar_select %p32, %s34, %s18
    %p36 = scmp.ge.s32.totalorder %s35, 2
    %s37 = scalar_select %p36, 0, %s35
    %s38 = ssub.s32 %s18, %s37
    %s39 = ssub.s32 %s20, %s29
    %s40 = sor.u32 %s38, %s39
    %p41 = scmp.eq.s32.totalorder %s40, 0
    %s43 = sadd.s32 %s42, 1
    %s44 = scalar_select %p41, %s42, %s43
    %p47 = pneg %p41
    %p48 = scmp.eq.s32.totalorder %s11, 3
    %p49 = por %p47, %p48
    %p50 = scmp.ne.s32.totalorder %s42, %s45
    %p51 = scmp.eq.s32.totalorder %s11, 0
    %p52 = por %p50, %p51
    %p53 = scmp.ne.s32.totalorder %s42, %s45
    %p54 = scmp.eq.s32.totalorder %s16, 3
    %p55 = por %p53, %p54
    %p56 = scmp.ne.s32.totalorder %s45, %s46
    %p57 = scmp.eq.s32.totalorder %s16, 0
    %p58 = por %p56, %p57
    %p59 = scmp.ne.s32.totalorder %s45, %s46
    %p60 = scmp.eq.s32.totalorder %s17, 3
    %p61 = por %p59, %p60
    %p63 = scmp.ne.s32.totalorder %s46, %s62
    %p64 = scmp.eq.s32.totalorder %s17, 0
    %p65 = por %p63, %p64
    %p66 = scmp.ge.s32.totalorder %s18, 1
    %s67 = scalar_select %p66, 1, 0
    %p68 = scmp.ge.s32.totalorder %s37, 1
    %s69 = scalar_select %p68, 1, 0
    %s70 = ssub.s32 %s67, %s69
    %s71 = ssub.s32 %s20, %s29
    %s72 = sor.u32 %s70, %s71
    %s73 = ssub.s32 %s19, %s33
    %s74 = sor.u32 %s72, %s73
    %p75 = scmp.eq.s32.totalorder %s74, 0
    %s77 = sadd.s32 %s76, 1
    %s78 = scalar_select %p75, %s76, %s77
    %p81 = pneg %p75
    %p82 = scmp.eq.s32.totalorder %s11, 3
    %p83 = por %p81, %p82
    %p84 = scmp.ne.s32.totalorder %s76, %s79
    %p85 = scmp.eq.s32.totalorder %s11, 0
    %p86 = por %p84, %p85
    %p87 = scmp.ne.s32.totalorder %s76, %s79
    %p88 = scmp.eq.s32.totalorder %s16, 3
    %p89 = por %p87, %p88
    %p90 = scmp.ne.s32.totalorder %s79, %s80
    %p91 = scmp.eq.s32.totalorder %s16, 0
    %p92 = por %p90, %p91
    %p93 = scmp.ne.s32.totalorder %s79, %s80
    %p94 = scmp.eq.s32.totalorder %s17, 3
    %p95 = por %p93, %p94
    %p97 = scmp.ne.s32.totalorder %s80, %s96
    %p98 = scmp.eq.s32.totalorder %s17, 0
    %p99 = por %p97, %p98
    %p100 = scmp.ge.s32.totalorder %s18, 1
    %s101 = scalar_select %p100, 1, 0
    %p102 = scmp.ge.s32.totalorder %s37, 1
    %s103 = scalar_select %p102, 1, 0
    %s104 = ssub.s32 %s101, %s103
    %s105 = ssub.s32 %s19, %s33
    %s106 = sor.u32 %s104, %s105
    %p107 = scmp.eq.s32.totalorder %s106, 0
    %s109 = sadd.s32 %s108, 1
    %s110 = scalar_select %p107, %s108, %s109
    %p113 = pneg %p107
    %p114 = scmp.eq.s32.totalorder %s11, 3
    %p115 = por %p113, %p114
    %p116 = scmp.ne.s32.totalorder %s108, %s111
    %p117 = scmp.eq.s32.totalorder %s11, 0
    %p118 = por %p116, %p117
    %p119 = scmp.ne.s32.totalorder %s108, %s111
    %p120 = scmp.eq.s32.totalorder %s16, 3
    %p121 = por %p119, %p120
    %p122 = scmp.ne.s32.totalorder %s111, %s112
    %p123 = scmp.eq.s32.totalorder %s16, 0
    %p124 = por %p122, %p123
    %p125 = scmp.ne.s32.totalorder %s111, %s112
    %p126 = scmp.eq.s32.totalorder %s17, 3
    %p127 = por %p125, %p126
    %p129 = scmp.ne.s32.totalorder %s112, %s128
    %p130 = scmp.eq.s32.totalorder %s17, 0
    %p131 = por %p129, %p130
    %s132 = ssub.s32 %s18, %s37
    %s133 = ssub.s32 %s19, %s33
    %s134 = sor.u32 %s132, %s133
    %p135 = scmp.eq.s32.totalorder %s134, 0
    %s137 = sadd.s32 %s136, 1
    %s138 = scalar_select %p135, %s136, %s137
    %p141 = pneg %p135
    %p142 = scmp.eq.s32.totalorder %s11, 3
    %p143 = por %p141, %p142
    %p144 = scmp.ne.s32.totalorder %s136, %s139
    %p145 = scmp.eq.s32.totalorder %s11, 0
    %p146 = por %p144, %p145
    %p147 = scmp.ne.s32.totalorder %s136, %s139
    %p148 = scmp.eq.s32.totalorder %s16, 3
    %p149 = por %p147, %p148
    %p150 = scmp.ne.s32.totalorder %s139, %s140
    %p151 = scmp.eq.s32.totalorder %s16, 0
    %p152 = por %p150, %p151
    %p153 = scmp.ne.s32.totalorder %s139, %s140
    %p154 = scmp.eq.s32.totalorder %s17, 3
    %p155 = por %p153, %p154
    %p157 = scmp.ne.s32.totalorder %s140, %s156
    %p158 = scmp.eq.s32.totalorder %s17, 0
    %p159 = por %p157, %p158
    %p160 = scmp.ge.s32.totalorder %s18, 1
    %s161 = scalar_select %p160, 1, 0
    %p162 = scmp.ge.s32.totalorder %s37, 1
    %s163 = scalar_select %p162, 1, 0
    %s164 = ssub.s32 %s161, %s163
    %s165 = ssub.s32 %s19, %s33
    %s166 = sor.u32 %s164, %s165
    %p167 = scmp.eq.s32.totalorder %s166, 0
    %s169 = sadd.s32 %s168, 1
    %s170 = scalar_select %p167, %s168, %s169
    %p173 = pneg %p167
    %p174 = scmp.eq.s32.totalorder %s11, 3
    %p175 = por %p173, %p174
    %p176 = scmp.ne.s32.totalorder %s168, %s171
    %p177 = scmp.eq.s32.totalorder %s11, 0
    %p178 = por %p176, %p177
    %p179 = scmp.ne.s32.totalorder %s168, %s171
    %p180 = scmp.eq.s32.totalorder %s16, 3
    %p181 = por %p179, %p180
    %p182 = scmp.ne.s32.totalorder %s171, %s172
    %p183 = scmp.eq.s32.totalorder %s16, 0
    %p184 = por %p182, %p183
    %p185 = scmp.ne.s32.totalorder %s171, %s172
    %p186 = scmp.eq.s32.totalorder %s17, 3
    %p187 = por %p185, %p186
    %p189 = scmp.ne.s32.totalorder %s172, %s188
    %p190 = scmp.eq.s32.totalorder %s17, 0
    %p191 = por %p189, %p190
    %s192 = ssub.s32 %s18, %s37
    %s193 = ssub.s32 %s19, %s33
    %s194 = sor.u32 %s192, %s193
    %p195 = scmp.eq.s32.totalorder %s194, 0
    %s197 = sadd.s32 %s196, 1
    %s198 = scalar_select %p195, %s196, %s197
    %p201 = pneg %p195
    %p202 = scmp.eq.s32.totalorder %s11, 3
    %p203 = por %p201, %p202
    %p204 = scmp.ne.s32.totalorder %s196, %s199
    %p205 = scmp.eq.s32.totalorder %s11, 0
    %p206 = por %p204, %p205
    %p207 = scmp.ne.s32.totalorder %s196, %s199
    %p208 = scmp.eq.s32.totalorder %s16, 3
    %p209 = por %p207, %p208
    %p210 = scmp.ne.s32.totalorder %s199, %s200
    %p211 = scmp.eq.s32.totalorder %s16, 0
    %p212 = por %p210, %p211
    %p213 = scmp.ne.s32.totalorder %s199, %s200
    %p214 = scmp.eq.s32.totalorder %s17, 3
    %p215 = por %p213, %p214
    %p217 = scmp.ne.s32.totalorder %s200, %s216
    %p218 = scmp.eq.s32.totalorder %s17, 0
    %p219 = por %p217, %p218
    %p220 = scmp.le.s32.totalorder 1, %s11
    %p221 = scmp.lt.s32.totalorder %s11, 5
    %p222 = pnand %p220, %p221
    %p223 = pneg %p222
    // Predicated region
    $region9: #{joint_transformer_block.19} parent=5 // pred_check
      _
    $region10: #{joint_transformer_block.19} parent=5 // pred_check_branch
      %225 = sbr.rel (%p222) target = $region12
    $region11: #{joint_transformer_block.19} parent=5 // pred_region
      %s226 = ssub.s32 %s11, 1
    $region12: #{joint_transformer_block.19} parent=5 // pred_fallthru
      _
    %p227 = scmp.lt.s32.totalorder %s11, 4
    // Predicated region
    $region13: #{joint_transformer_block.19} parent=5 // pred_check
      %p228 = pneg %p227
    $region14: #{joint_transformer_block.19} parent=5 // pred_check_branch
      %230 = sbr.rel (%p228) target = $region16
    $region15: #{joint_transformer_block.19} parent=5 // pred_region
      // Predicated region
      $region17: #{joint_transformer_block.19} parent=15 // pred_check
        %p231 = pneg %p52
      $region18: #{joint_transformer_block.19} parent=15 // pred_check_branch
        %233 = sbr.rel (%p231) target = $region20
      $region19: #{joint_transformer_block.19} parent=15 // pred_region
        %s234 = smul.u32 4, %s20
        %p235 = scmp.lt.s32.totalorder %s18, 1
        %s236 = scalar_select %p235, %s18, 1
        %p237 = scmp.lt.s32.totalorder %s234, 7
        %s238 = scalar_select %p237, %s234, 7
        %s239 = smul.addr %s236, 8
        %s240 = sadd.s32 %s238, %s239
        %s241 = smul.addr %s240, 4
        %s242 = scalar_lea.vmem %s0, %s241
        %s243 = smul.u32 4, %s20
      $region20: #{joint_transformer_block.19} parent=15 // pred_fallthru
        _
      // Predicated region
      $region21: #{joint_transformer_block.19} parent=15 // pred_check
        %p244 = pneg %p86
      $region22: #{joint_transformer_block.19} parent=15 // pred_check_branch
        %246 = sbr.rel (%p244) target = $region24
      $region23: #{joint_transformer_block.19} parent=15 // pred_region
        %p247 = scmp.ge.s32.totalorder %s18, 1
        %s248 = scalar_select %p247, 1, 0
        %s249 = smul.u32 64, %s20
        %s250 = smul.u32 2, %s19
        %p251 = scmp.lt.s32.totalorder %s248, 1
        %s252 = scalar_select %p251, %s248, 1
        %p253 = scmp.lt.s32.totalorder %s249, 127
        %s254 = scalar_select %p253, %s249, 127
        %p255 = scmp.lt.s32.totalorder %s250, 1
        %s256 = scalar_select %p255, %s250, 1
        %s257 = smul.addr %s254, 2
        %s258 = sadd.s32 %s256, %s257
        %s259 = smul.addr %s252, 256
        %s260 = sadd.s32 %s258, %s259
        %s261 = smul.addr %s260, 4
        %s262 = scalar_lea.vmem %s1, %s261
        %p263 = scmp.ge.s32.totalorder %s18, 1
        %s264 = scalar_select %p263, 1, 0
        %s265 = smul.u32 64, %s20
        %s266 = smul.u32 2, %s19
      $region24: #{joint_transformer_block.19} parent=15 // pred_fallthru
        _
      // Predicated region
      $region25: #{joint_transformer_block.19} parent=15 // pred_check
        %p267 = pneg %p118
      $region26: #{joint_transformer_block.19} parent=15 // pred_check_branch
        %269 = sbr.rel (%p267) target = $region28
      $region27: #{joint_transformer_block.19} parent=15 // pred_region
        %p270 = scmp.ge.s32.totalorder %s18, 1
        %s271 = scalar_select %p270, 1, 0
        %s272 = smul.u32 2, %s19
        %p273 = scmp.lt.s32.totalorder %s271, 1
        %s274 = scalar_select %p273, %s271, 1
        %p275 = scmp.lt.s32.totalorder %s272, 1
        %s276 = scalar_select %p275, %s272, 1
        %s277 = smul.addr %s274, 2
        %s278 = sadd.s32 %s276, %s277
        %s279 = scalar_lea.vmem %s2, %s278
        %p280 = scmp.ge.s32.totalorder %s18, 1
        %s281 = scalar_select %p280, 1, 0
        %s282 = smul.u32 2, %s19
      $region28: #{joint_transformer_block.19} parent=15 // pred_fallthru
        _
      // Predicated region
      $region29: #{joint_transformer_block.19} parent=15 // pred_check
        %p283 = pneg %p146
      $region30: #{joint_transformer_block.19} parent=15 // pred_check_branch
        %285 = sbr.rel (%p283) target = $region32
      $region31: #{joint_transformer_block.19} parent=15 // pred_region
        %s286 = smul.u32 2, %s19
        %p287 = scmp.lt.s32.totalorder %s18, 1
        %s288 = scalar_select %p287, %s18, 1
        %p289 = scmp.lt.s32.totalorder %s286, 1
        %s290 = scalar_select %p289, %s286, 1
        %s291 = smul.addr %s288, 2
        %s292 = sadd.s32 %s290, %s291
        %s293 = smul.addr %s292, 4
        %s294 = scalar_lea.vmem %s3, %s293
        %s295 = smul.u32 2, %s19
      $region32: #{joint_transformer_block.19} parent=15 // pred_fallthru
        _
      // Predicated region
      $region33: #{joint_transformer_block.19} parent=15 // pred_check
        %p296 = pneg %p178
      $region34: #{joint_transformer_block.19} parent=15 // pred_check_branch
        %298 = sbr.rel (%p296) target = $region36
      $region35: #{joint_transformer_block.19} parent=15 // pred_region
        %p299 = scmp.ge.s32.totalorder %s18, 1
        %s300 = scalar_select %p299, 1, 0
        %s301 = smul.u32 2, %s19
        %p302 = scmp.lt.s32.totalorder %s300, 1
        %s303 = scalar_select %p302, %s300, 1
        %p304 = scmp.lt.s32.totalorder %s301, 1
        %s305 = scalar_select %p304, %s301, 1
        %s306 = smul.addr %s303, 2
        %s307 = sadd.s32 %s305, %s306
        %s308 = scalar_lea.vmem %s4, %s307
        %p309 = scmp.ge.s32.totalorder %s18, 1
        %s310 = scalar_select %p309, 1, 0
        %s311 = smul.u32 2, %s19
      $region36: #{joint_transformer_block.19} parent=15 // pred_fallthru
        _
    $region16: #{joint_transformer_block.19} parent=5 // pred_fallthru
      _
    %p312 = scmp.le.s32.totalorder 1, %s11
    %p313 = scmp.lt.s32.totalorder %s11, 5
    %p314 = pnand %p312, %p313
    %p315 = pneg %p314
    // Predicated region
    $region37: #{joint_transformer_block.19} parent=5 // pred_check
      _
    $region38: #{joint_transformer_block.19} parent=5 // pred_check_branch
      %317 = sbr.rel (%p314) target = $region40
    $region39: #{joint_transformer_block.19} parent=5 // pred_region
      %s318 = ssub.s32 %s11, 1
      %s319 = smul.u32 4, %s23
      %p320 = scmp.lt.s32.totalorder %s21, 1
      %s321 = scalar_select %p320, %s21, 1
      %p322 = scmp.lt.s32.totalorder %s319, 7
      %s323 = scalar_select %p322, %s319, 7
      %s324 = smul.addr %s321, 8
      %s325 = sadd.s32 %s323, %s324
      %s326 = smul.addr %s325, 4
      %s327 = scalar_lea.vmem %s0, %s326
      %p328 = pneg %p58
      %p329 = pneg %p55
      %p330 = scmp.ge.s32.totalorder %s21, 1
      %s331 = scalar_select %p330, 1, 0
      %s332 = smul.u32 64, %s23
      %s333 = smul.u32 2, %s22
      %p334 = scmp.lt.s32.totalorder %s331, 1
      %s335 = scalar_select %p334, %s331, 1
      %p336 = scmp.lt.s32.totalorder %s332, 127
      %s337 = scalar_select %p336, %s332, 127
      %p338 = scmp.lt.s32.totalorder %s333, 1
      %s339 = scalar_select %p338, %s333, 1
      %s340 = smul.addr %s337, 2
      %s341 = sadd.s32 %s339, %s340
      %s342 = smul.addr %s335, 256
      %s343 = sadd.s32 %s341, %s342
      %s344 = smul.addr %s343, 4
      %s345 = scalar_lea.vmem %s1, %s344
      %p346 = pneg %p92
      %p347 = pneg %p89
      %p348 = scmp.ge.s32.totalorder %s21, 1
      %s349 = scalar_select %p348, 1, 0
      %s350 = smul.u32 2, %s22
      %p351 = scmp.lt.s32.totalorder %s349, 1
      %s352 = scalar_select %p351, %s349, 1
      %p353 = scmp.lt.s32.totalorder %s350, 1
      %s354 = scalar_select %p353, %s350, 1
      %s355 = smul.addr %s352, 2
      %s356 = sadd.s32 %s354, %s355
      %s357 = scalar_lea.vmem %s2, %s356
      %p358 = pneg %p124
      %p359 = pneg %p121
      %s360 = smul.u32 2, %s22
      %p361 = scmp.lt.s32.totalorder %s21, 1
      %s362 = scalar_select %p361, %s21, 1
      %p363 = scmp.lt.s32.totalorder %s360, 1
      %s364 = scalar_select %p363, %s360, 1
      %s365 = smul.addr %s362, 2
      %s366 = sadd.s32 %s364, %s365
      %s367 = smul.addr %s366, 4
      %s368 = scalar_lea.vmem %s3, %s367
      %p369 = pneg %p152
      %p370 = pneg %p149
      %p371 = scmp.ge.s32.totalorder %s21, 1
      %s372 = scalar_select %p371, 1, 0
      %s373 = smul.u32 2, %s22
      %p374 = scmp.lt.s32.totalorder %s372, 1
      %s375 = scalar_select %p374, %s372, 1
      %p376 = scmp.lt.s32.totalorder %s373, 1
      %s377 = scalar_select %p376, %s373, 1
      %s378 = smul.addr %s375, 2
      %s379 = sadd.s32 %s377, %s378
      %s380 = scalar_lea.vmem %s4, %s379
      %p381 = pneg %p184
      %p382 = pneg %p181
      %p383 = pneg %p212
      %p384 = pneg %p209
      %s385 = smul.u32 2, %s22
      %p386 = scmp.lt.s32.totalorder %s21, 1
      %s387 = scalar_select %p386, %s21, 1
      %p388 = scmp.lt.s32.totalorder %s385, 1
      %s389 = scalar_select %p388, %s385, 1
      %s390 = smul.addr %s387, 2
      %s391 = sadd.s32 %s389, %s390
      %s392 = smul.addr %s391, 4
      %s393 = scalar_lea.vmem %s5, %s392
      %s394 = smul.u32 4, %s23
      %p395 = scmp.lt.s32.totalorder %s21, 1
      %s396 = scalar_select %p395, %s21, 1
      %p397 = scmp.lt.s32.totalorder %s394, 7
      %s398 = scalar_select %p397, %s394, 7
      %s399 = smul.addr %s396, 8
      %s400 = sadd.s32 %s398, %s399
      %s401 = smul.addr %s400, 4
      %s402 = scalar_lea.vmem %s0, %s401
      %s403 = smul.u32 4, %s23
      %p404 = scmp.ge.s32.totalorder %s21, 1
      %s405 = scalar_select %p404, 1, 0
      %s406 = smul.u32 64, %s23
      %s407 = smul.u32 2, %s22
      %p408 = scmp.lt.s32.totalorder %s405, 1
      %s409 = scalar_select %p408, %s405, 1
      %p410 = scmp.lt.s32.totalorder %s406, 127
      %s411 = scalar_select %p410, %s406, 127
      %p412 = scmp.lt.s32.totalorder %s407, 1
      %s413 = scalar_select %p412, %s407, 1
      %s414 = smul.addr %s411, 2
      %s415 = sadd.s32 %s413, %s414
      %s416 = smul.addr %s409, 256
      %s417 = sadd.s32 %s415, %s416
      %s418 = smul.addr %s417, 4
      %s419 = scalar_lea.vmem %s1, %s418
      %p420 = scmp.ge.s32.totalorder %s21, 1
      %s421 = scalar_select %p420, 1, 0
      %s422 = smul.u32 64, %s23
      %s423 = smul.u32 2, %s22
      %p424 = scmp.ge.s32.totalorder %s21, 1
      %s425 = scalar_select %p424, 1, 0
      %s426 = smul.u32 2, %s22
      %p427 = scmp.lt.s32.totalorder %s425, 1
      %s428 = scalar_select %p427, %s425, 1
      %p429 = scmp.lt.s32.totalorder %s426, 1
      %s430 = scalar_select %p429, %s426, 1
      %s431 = smul.addr %s428, 2
      %s432 = sadd.s32 %s430, %s431
      %s433 = scalar_lea.vmem %s2, %s432
      %p434 = scmp.ge.s32.totalorder %s21, 1
      %s435 = scalar_select %p434, 1, 0
      %s436 = smul.u32 2, %s22
      %s437 = smul.u32 2, %s22
      %p438 = scmp.lt.s32.totalorder %s21, 1
      %s439 = scalar_select %p438, %s21, 1
      %p440 = scmp.lt.s32.totalorder %s437, 1
      %s441 = scalar_select %p440, %s437, 1
      %s442 = smul.addr %s439, 2
      %s443 = sadd.s32 %s441, %s442
      %s444 = smul.addr %s443, 4
      %s445 = scalar_lea.vmem %s3, %s444
      %s446 = smul.u32 2, %s22
      %p447 = scmp.ge.s32.totalorder %s21, 1
      %s448 = scalar_select %p447, 1, 0
      %s449 = smul.u32 2, %s22
      %p450 = scmp.lt.s32.totalorder %s448, 1
      %s451 = scalar_select %p450, %s448, 1
      %p452 = scmp.lt.s32.totalorder %s449, 1
      %s453 = scalar_select %p452, %s449, 1
      %s454 = smul.addr %s451, 2
      %s455 = sadd.s32 %s453, %s454
      %s456 = scalar_lea.vmem %s4, %s455
      %p457 = scmp.ge.s32.totalorder %s21, 1
      %s458 = scalar_select %p457, 1, 0
      %s459 = smul.u32 2, %s22
      %s460 = smul.u32 2, %s22
      %p461 = scmp.lt.s32.totalorder %s21, 1
      %s462 = scalar_select %p461, %s21, 1
      %p463 = scmp.lt.s32.totalorder %s460, 1
      %s464 = scalar_select %p463, %s460, 1
      %s465 = smul.addr %s462, 2
      %s466 = sadd.s32 %s464, %s465
      %s467 = smul.addr %s466, 4
      %s468 = scalar_lea.vmem %s5, %s467
      %s469 = smul.u32 2, %s22
      %p470 = scmp.eq.s32.totalorder %s23, 0
      // Predicated region
      $region41: #{joint_transformer_block.19} parent=39 // pred_check
        %p471 = pneg %p470
      $region42: #{joint_transformer_block.19} parent=39 // pred_check_branch
        %473 = sbr.rel (%p471) target = $region44
      $region43: #{joint_transformer_block.19} parent=39 // pred_region
        %474 = vst [vmem:[#allocation2] sm:$0xff] 0.0
        %475 = vst [vmem:[#allocation2 + $0x8] sm:$0xff] 0.0
      $region44: #{joint_transformer_block.19} parent=39 // pred_fallthru
        _
      %v476 = vld [vmem:[#allocation2] sm:$0xff]
      %v477 = vld [vmem:[#allocation2 + $0x8] sm:$0xff]
      %v478 = vld [vmem:[%s402] sm:$0xff]
      %v479 = vld [vmem:[%s402 + $0x8] sm:$0xff]
      %v480 = vld [vmem:[%s419] sm:$0xff]
      %v481 = vld [vmem:[%s419 + $0x8] sm:$0xff]
      %v482 = vld [vmem:[%s419 + $0x10] sm:$0xff]
      %v483 = vld [vmem:[%s419 + $0x18] sm:$0xff]
      %v484 = vld [vmem:[%s419 + $0x20] sm:$0xff]
      %v485 = vld [vmem:[%s419 + $0x28] sm:$0xff]
      %v486 = vld [vmem:[%s419 + $0x30] sm:$0xff]
      %v487 = vld [vmem:[%s419 + $0x38] sm:$0xff]
      %v488 = vld [vmem:[%s419 + $0x40] sm:$0xff]
      %v489 = vld [vmem:[%s419 + $0x48] sm:$0xff]
      %v490 = vld [vmem:[%s419 + $0x50] sm:$0xff]
      %v491 = vld [vmem:[%s419 + $0x58] sm:$0xff]
      %v492 = vld [vmem:[%s419 + $0x60] sm:$0xff]
      %v493 = vld [vmem:[%s419 + $0x68] sm:$0xff]
      %v494 = vld [vmem:[%s419 + $0x70] sm:$0xff]
      %v495 = vld [vmem:[%s419 + $0x78] sm:$0xff]
      %v496 = vld [vmem:[%s419 + $0x80] sm:$0xff]
      %v497 = vld [vmem:[%s419 + $0x88] sm:$0xff]
      %v498 = vld [vmem:[%s419 + $0x90] sm:$0xff]
      %v499 = vld [vmem:[%s419 + $0x98] sm:$0xff]
      %v500 = vld [vmem:[%s419 + $0xa0] sm:$0xff]
      %v501 = vld [vmem:[%s419 + $0xa8] sm:$0xff]
      %v502 = vld [vmem:[%s419 + $0xb0] sm:$0xff]
      %v503 = vld [vmem:[%s419 + $0xb8] sm:$0xff]
      %v504 = vld [vmem:[%s419 + $0xc0] sm:$0xff]
      %v505 = vld [vmem:[%s419 + $0xc8] sm:$0xff]
      %v506 = vld [vmem:[%s419 + $0xd0] sm:$0xff]
      %v507 = vld [vmem:[%s419 + $0xd8] sm:$0xff]
      %v508 = vld [vmem:[%s419 + $0xe0] sm:$0xff]
      %v509 = vld [vmem:[%s419 + $0xe8] sm:$0xff]
      %v510 = vld [vmem:[%s419 + $0xf0] sm:$0xff]
      %v511 = vld [vmem:[%s419 + $0xf8] sm:$0xff]
      %v512 = vld [vmem:[%s419 + $0x100] sm:$0xff]
      %v513 = vld [vmem:[%s419 + $0x108] sm:$0xff]
      %v514 = vld [vmem:[%s419 + $0x110] sm:$0xff]
      %v515 = vld [vmem:[%s419 + $0x118] sm:$0xff]
      %v516 = vld [vmem:[%s419 + $0x120] sm:$0xff]
      %v517 = vld [vmem:[%s419 + $0x128] sm:$0xff]
      %v518 = vld [vmem:[%s419 + $0x130] sm:$0xff]
      %v519 = vld [vmem:[%s419 + $0x138] sm:$0xff]
      %v520 = vld [vmem:[%s419 + $0x140] sm:$0xff]
      %v521 = vld [vmem:[%s419 + $0x148] sm:$0xff]
      %v522 = vld [vmem:[%s419 + $0x150] sm:$0xff]
      %v523 = vld [vmem:[%s419 + $0x158] sm:$0xff]
      %v524 = vld [vmem:[%s419 + $0x160] sm:$0xff]
      %v525 = vld [vmem:[%s419 + $0x168] sm:$0xff]
      %v526 = vld [vmem:[%s419 + $0x170] sm:$0xff]
      %v527 = vld [vmem:[%s419 + $0x178] sm:$0xff]
      %v528 = vld [vmem:[%s419 + $0x180] sm:$0xff]
      %v529 = vld [vmem:[%s419 + $0x188] sm:$0xff]
      %v530 = vld [vmem:[%s419 + $0x190] sm:$0xff]
      %v531 = vld [vmem:[%s419 + $0x198] sm:$0xff]
      %v532 = vld [vmem:[%s419 + $0x1a0] sm:$0xff]
      %v533 = vld [vmem:[%s419 + $0x1a8] sm:$0xff]
      %v534 = vld [vmem:[%s419 + $0x1b0] sm:$0xff]
      %v535 = vld [vmem:[%s419 + $0x1b8] sm:$0xff]
      %v536 = vld [vmem:[%s419 + $0x1c0] sm:$0xff]
      %v537 = vld [vmem:[%s419 + $0x1c8] sm:$0xff]
      %v538 = vld [vmem:[%s419 + $0x1d0] sm:$0xff]
      %v539 = vld [vmem:[%s419 + $0x1d8] sm:$0xff]
      %v540 = vld [vmem:[%s419 + $0x1e0] sm:$0xff]
      %v541 = vld [vmem:[%s419 + $0x1e8] sm:$0xff]
      %v542 = vld [vmem:[%s419 + $0x1f0] sm:$0xff]
      %v543 = vld [vmem:[%s419 + $0x1f8] sm:$0xff]
      %v546 = vunpack.c.l.b16 %v478
      %v547 = vunpack.c.h.b16 %v478
      %v548 = vunpack.c.l.b16 %v479
      %v549 = vunpack.c.h.b16 %v479
      %v550 = vpack.c.b16 %v546, %v546
      %v551 = vpack.c.b16 %v547, %v547
      %v552 = vpack.c.b16 %v548, %v548
      %v553 = vpack.c.b16 %v549, %v549
      %v622 = vunpack.c.l.b16 %v480
      %v623 = vunpack.c.h.b16 %v480
      %v624 = vunpack.c.l.b16 %v481
      %v625 = vunpack.c.h.b16 %v481
      %v626 = vunpack.c.l.b16 %v482
      %v627 = vunpack.c.h.b16 %v482
      %v628 = vunpack.c.l.b16 %v483
      %v629 = vunpack.c.h.b16 %v483
      %v630 = vunpack.c.l.b16 %v484
      %v631 = vunpack.c.h.b16 %v484
      %v632 = vunpack.c.l.b16 %v485
      %v633 = vunpack.c.h.b16 %v485
      %v634 = vunpack.c.l.b16 %v486
      %v635 = vunpack.c.h.b16 %v486
      %v636 = vunpack.c.l.b16 %v487
      %v637 = vunpack.c.h.b16 %v487
      %v638 = vunpack.c.l.b16 %v488
      %v639 = vunpack.c.h.b16 %v488
      %v640 = vunpack.c.l.b16 %v489
      %v641 = vunpack.c.h.b16 %v489
      %v642 = vunpack.c.l.b16 %v490
      %v643 = vunpack.c.h.b16 %v490
      %v644 = vunpack.c.l.b16 %v491
      %v645 = vunpack.c.h.b16 %v491
      %v646 = vunpack.c.l.b16 %v492
      %v647 = vunpack.c.h.b16 %v492
      %v648 = vunpack.c.l.b16 %v493
      %v649 = vunpack.c.h.b16 %v493
      %v650 = vunpack.c.l.b16 %v494
      %v651 = vunpack.c.h.b16 %v494
      %v652 = vunpack.c.l.b16 %v495
      %v653 = vunpack.c.h.b16 %v495
      %v654 = vunpack.c.l.b16 %v496
      %v655 = vunpack.c.h.b16 %v496
      %v656 = vunpack.c.l.b16 %v497
      %v657 = vunpack.c.h.b16 %v497
      %v658 = vunpack.c.l.b16 %v498
      %v659 = vunpack.c.h.b16 %v498
      %v660 = vunpack.c.l.b16 %v499
      %v661 = vunpack.c.h.b16 %v499
      %v662 = vunpack.c.l.b16 %v500
      %v663 = vunpack.c.h.b16 %v500
      %v664 = vunpack.c.l.b16 %v501
      %v665 = vunpack.c.h.b16 %v501
      %v666 = vunpack.c.l.b16 %v502
      %v667 = vunpack.c.h.b16 %v502
      %v668 = vunpack.c.l.b16 %v503
      %v669 = vunpack.c.h.b16 %v503
      %v670 = vunpack.c.l.b16 %v504
      %v671 = vunpack.c.h.b16 %v504
      %v672 = vunpack.c.l.b16 %v505
      %v673 = vunpack.c.h.b16 %v505
      %v674 = vunpack.c.l.b16 %v506
      %v675 = vunpack.c.h.b16 %v506
      %v676 = vunpack.c.l.b16 %v507
      %v677 = vunpack.c.h.b16 %v507
      %v678 = vunpack.c.l.b16 %v508
      %v679 = vunpack.c.h.b16 %v508
      %v680 = vunpack.c.l.b16 %v509
      %v681 = vunpack.c.h.b16 %v509
      %v682 = vunpack.c.l.b16 %v510
      %v683 = vunpack.c.h.b16 %v510
      %v684 = vunpack.c.l.b16 %v511
      %v685 = vunpack.c.h.b16 %v511
      %v686 = vunpack.c.l.b16 %v512
      %v687 = vunpack.c.h.b16 %v512
      %v688 = vunpack.c.l.b16 %v513
      %v689 = vunpack.c.h.b16 %v513
      %v690 = vunpack.c.l.b16 %v514
      %v691 = vunpack.c.h.b16 %v514
      %v692 = vunpack.c.l.b16 %v515
      %v693 = vunpack.c.h.b16 %v515
      %v694 = vunpack.c.l.b16 %v516
      %v695 = vunpack.c.h.b16 %v516
      %v696 = vunpack.c.l.b16 %v517
      %v697 = vunpack.c.h.b16 %v517
      %v698 = vunpack.c.l.b16 %v518
      %v699 = vunpack.c.h.b16 %v518
      %v700 = vunpack.c.l.b16 %v519
      %v701 = vunpack.c.h.b16 %v519
      %v702 = vunpack.c.l.b16 %v520
      %v703 = vunpack.c.h.b16 %v520
      %v704 = vunpack.c.l.b16 %v521
      %v705 = vunpack.c.h.b16 %v521
      %v706 = vunpack.c.l.b16 %v522
      %v707 = vunpack.c.h.b16 %v522
      %v708 = vunpack.c.l.b16 %v523
      %v709 = vunpack.c.h.b16 %v523
      %v710 = vunpack.c.l.b16 %v524
      %v711 = vunpack.c.h.b16 %v524
      %v712 = vunpack.c.l.b16 %v525
      %v713 = vunpack.c.h.b16 %v525
      %v714 = vunpack.c.l.b16 %v526
      %v715 = vunpack.c.h.b16 %v526
      %v716 = vunpack.c.l.b16 %v527
      %v717 = vunpack.c.h.b16 %v527
      %v718 = vunpack.c.l.b16 %v528
      %v719 = vunpack.c.h.b16 %v528
      %v720 = vunpack.c.l.b16 %v529
      %v721 = vunpack.c.h.b16 %v529
      %v722 = vunpack.c.l.b16 %v530
      %v723 = vunpack.c.h.b16 %v530
      %v724 = vunpack.c.l.b16 %v531
      %v725 = vunpack.c.h.b16 %v531
      %v726 = vunpack.c.l.b16 %v532
      %v727 = vunpack.c.h.b16 %v532
      %v728 = vunpack.c.l.b16 %v533
      %v729 = vunpack.c.h.b16 %v533
      %v730 = vunpack.c.l.b16 %v534
      %v731 = vunpack.c.h.b16 %v534
      %v732 = vunpack.c.l.b16 %v535
      %v733 = vunpack.c.h.b16 %v535
      %v734 = vunpack.c.l.b16 %v536
      %v735 = vunpack.c.h.b16 %v536
      %v736 = vunpack.c.l.b16 %v537
      %v737 = vunpack.c.h.b16 %v537
      %v738 = vunpack.c.l.b16 %v538
      %v739 = vunpack.c.h.b16 %v538
      %v740 = vunpack.c.l.b16 %v539
      %v741 = vunpack.c.h.b16 %v539
      %v742 = vunpack.c.l.b16 %v540
      %v743 = vunpack.c.h.b16 %v540
      %v744 = vunpack.c.l.b16 %v541
      %v745 = vunpack.c.h.b16 %v541
      %v746 = vunpack.c.l.b16 %v542
      %v747 = vunpack.c.h.b16 %v542
      %v748 = vunpack.c.l.b16 %v543
      %v749 = vunpack.c.h.b16 %v543
      %v750 = vpack.c.b16 %v624, %v622
      %v751 = vpack.c.b16 %v625, %v623
      %v752 = vpack.c.b16 %v628, %v626
      %v753 = vpack.c.b16 %v629, %v627
      %v754 = vpack.c.b16 %v632, %v630
      %v755 = vpack.c.b16 %v633, %v631
      %v756 = vpack.c.b16 %v636, %v634
      %v757 = vpack.c.b16 %v637, %v635
      %v758 = vpack.c.b16 %v640, %v638
      %v759 = vpack.c.b16 %v641, %v639
      %v760 = vpack.c.b16 %v644, %v642
      %v761 = vpack.c.b16 %v645, %v643
      %v762 = vpack.c.b16 %v648, %v646
      %v763 = vpack.c.b16 %v649, %v647
      %v764 = vpack.c.b16 %v652, %v650
      %v765 = vpack.c.b16 %v653, %v651
      %v766 = vpack.c.b16 %v656, %v654
      %v767 = vpack.c.b16 %v657, %v655
      %v768 = vpack.c.b16 %v660, %v658
      %v769 = vpack.c.b16 %v661, %v659
      %v770 = vpack.c.b16 %v664, %v662
      %v771 = vpack.c.b16 %v665, %v663
      %v772 = vpack.c.b16 %v668, %v666
      %v773 = vpack.c.b16 %v669, %v667
      %v774 = vpack.c.b16 %v672, %v670
      %v775 = vpack.c.b16 %v673, %v671
      %v776 = vpack.c.b16 %v676, %v674
      %v777 = vpack.c.b16 %v677, %v675
      %v778 = vpack.c.b16 %v680, %v678
      %v779 = vpack.c.b16 %v681, %v679
      %v780 = vpack.c.b16 %v684, %v682
      %v781 = vpack.c.b16 %v685, %v683
      %v782 = vpack.c.b16 %v688, %v686
      %v783 = vpack.c.b16 %v689, %v687
      %v784 = vpack.c.b16 %v692, %v690
      %v785 = vpack.c.b16 %v693, %v691
      %v786 = vpack.c.b16 %v696, %v694
      %v787 = vpack.c.b16 %v697, %v695
      %v788 = vpack.c.b16 %v700, %v698
      %v789 = vpack.c.b16 %v701, %v699
      %v790 = vpack.c.b16 %v704, %v702
      %v791 = vpack.c.b16 %v705, %v703
      %v792 = vpack.c.b16 %v708, %v706
      %v793 = vpack.c.b16 %v709, %v707
      %v794 = vpack.c.b16 %v712, %v710
      %v795 = vpack.c.b16 %v713, %v711
      %v796 = vpack.c.b16 %v716, %v714
      %v797 = vpack.c.b16 %v717, %v715
      %v798 = vpack.c.b16 %v720, %v718
      %v799 = vpack.c.b16 %v721, %v719
      %v800 = vpack.c.b16 %v724, %v722
      %v801 = vpack.c.b16 %v725, %v723
      %v802 = vpack.c.b16 %v728, %v726
      %v803 = vpack.c.b16 %v729, %v727
      %v804 = vpack.c.b16 %v732, %v730
      %v805 = vpack.c.b16 %v733, %v731
      %v806 = vpack.c.b16 %v736, %v734
      %v807 = vpack.c.b16 %v737, %v735
      %v808 = vpack.c.b16 %v740, %v738
      %v809 = vpack.c.b16 %v741, %v739
      %v810 = vpack.c.b16 %v744, %v742
      %v811 = vpack.c.b16 %v745, %v743
      %v812 = vpack.c.b16 %v748, %v746
      %v813 = vpack.c.b16 %v749, %v747
      %878 = vmatprep.subr.bf16.mxu0 %v751
      %879 = vmatpush1.bf16.msra.mxu0 %v750
      %880 = vmatprep.subr.bf16.mxu0 %v753
      %881 = vmatpush1.bf16.msra.mxu0 %v752
      %882 = vmatprep.subr.bf16.mxu0 %v755
      %883 = vmatpush1.bf16.msra.mxu0 %v754
      %884 = vmatprep.subr.bf16.mxu0 %v757
      %885 = vmatpush1.bf16.msra.mxu0 %v756
      %886 = vmatprep.subr.bf16.mxu0 %v759
      %887 = vmatpush1.bf16.msra.mxu0 %v758
      %888 = vmatprep.subr.bf16.mxu0 %v761
      %889 = vmatpush1.bf16.msra.mxu0 %v760
      %890 = vmatprep.subr.bf16.mxu0 %v763
      %891 = vmatpush1.bf16.msra.mxu0 %v762
      %892 = vmatprep.subr.bf16.mxu0 %v765
      %893 = vmatpush1.bf16.msra.mxu0 %v764
      %894 = vmatprep.subr.bf16.mxu0 %v767
      %895 = vmatpush1.bf16.msra.mxu0 %v766
      %896 = vmatprep.subr.bf16.mxu0 %v769
      %897 = vmatpush1.bf16.msra.mxu0 %v768
      %898 = vmatprep.subr.bf16.mxu0 %v771
      %899 = vmatpush1.bf16.msra.mxu0 %v770
      %900 = vmatprep.subr.bf16.mxu0 %v773
      %901 = vmatpush1.bf16.msra.mxu0 %v772
      %902 = vmatprep.subr.bf16.mxu0 %v775
      %903 = vmatpush1.bf16.msra.mxu0 %v774
      %904 = vmatprep.subr.bf16.mxu0 %v777
      %905 = vmatpush1.bf16.msra.mxu0 %v776
      %906 = vmatprep.subr.bf16.mxu0 %v779
      %907 = vmatpush1.bf16.msra.mxu0 %v778
      %908 = vmatprep.subr.bf16.mxu0 %v781
      %909 = vmatpush1.bf16.msra.mxu0 %v780
      %910 = vmatprep.mubr.bf16.mxu0 %v551
      %911 = vmatmul.mubr.bf16.gmra.mrb[0].mxu0 %v550
      %v912 = vpop.f32.mrb[0].mxu0
      %v913 = vadd.f32 0.0, %v912
      %v914 = vpop.f32.mrb[0].mxu0
      %v915 = vadd.f32 0.0, %v914
      %v916 = vpop.f32.mrb[0].mxu0
      %v917 = vpop.f32.mrb[0].mxu0
      %918 = vdwg.mxu0
      %919 = vmatprep.subr.bf16.mxu0 %v783
      %920 = vmatpush1.bf16.msra.mxu0 %v782
      %921 = vmatprep.subr.bf16.mxu0 %v785
      %922 = vmatpush1.bf16.msra.mxu0 %v784
      %923 = vmatprep.subr.bf16.mxu0 %v787
      %924 = vmatpush1.bf16.msra.mxu0 %v786
      %925 = vmatprep.subr.bf16.mxu0 %v789
      %926 = vmatpush1.bf16.msra.mxu0 %v788
      %927 = vmatprep.subr.bf16.mxu0 %v791
      %928 = vmatpush1.bf16.msra.mxu0 %v790
      %929 = vmatprep.subr.bf16.mxu0 %v793
      %930 = vmatpush1.bf16.msra.mxu0 %v792
      %931 = vmatprep.subr.bf16.mxu0 %v795
      %932 = vmatpush1.bf16.msra.mxu0 %v794
      %933 = vmatprep.subr.bf16.mxu0 %v797
      %934 = vmatpush1.bf16.msra.mxu0 %v796
      %935 = vmatprep.subr.bf16.mxu0 %v799
      %936 = vmatpush1.bf16.msra.mxu0 %v798
      %937 = vmatprep.subr.bf16.mxu0 %v801
      %938 = vmatpush1.bf16.msra.mxu0 %v800
      %939 = vmatprep.subr.bf16.mxu0 %v803
      %940 = vmatpush1.bf16.msra.mxu0 %v802
      %941 = vmatprep.subr.bf16.mxu0 %v805
      %942 = vmatpush1.bf16.msra.mxu0 %v804
      %943 = vmatprep.subr.bf16.mxu0 %v807
      %944 = vmatpush1.bf16.msra.mxu0 %v806
      %945 = vmatprep.subr.bf16.mxu0 %v809
      %946 = vmatpush1.bf16.msra.mxu0 %v808
      %947 = vmatprep.subr.bf16.mxu0 %v811
      %948 = vmatpush1.bf16.msra.mxu0 %v810
      %949 = vmatprep.subr.bf16.mxu0 %v813
      %950 = vmatpush1.bf16.msra.mxu0 %v812
      %951 = vmatprep.mubr.bf16.mxu0 %v553
      %952 = vmatmul.mubr.bf16.gmra.mrb[0].mxu0 %v552
      %v953 = vpop.f32.mrb[0].mxu0
      %v954 = vadd.f32 %v913, %v953
      %v955 = vpop.f32.mrb[0].mxu0
      %v956 = vadd.f32 %v915, %v955
      %v957 = vpop.f32.mrb[0].mxu0
      %v958 = vpop.f32.mrb[0].mxu0
      %959 = vdwg.mxu0
      %v960 = vadd.f32 %v476, %v954
      %v961 = vadd.f32 %v477, %v956
      %962 = vst [vmem:[#allocation2] sm:$0xff] %v960
      %963 = vst [vmem:[#allocation2 + $0x8] sm:$0xff] %v961
      %p964 = scmp.eq.s32.totalorder %s23, 1
      // Predicated region
      $region45: #{joint_transformer_block.19} parent=39 // pred_check
        %p965 = pneg %p964
      $region46: #{joint_transformer_block.19} parent=39 // pred_check_branch
        %967 = sbr.rel (%p965) target = $region48
      $region47: #{joint_transformer_block.19} parent=39 // pred_region
        %v968 = vld [vmem:[#allocation2] sm:$0xff]
        %v969 = vld [vmem:[#allocation2 + $0x8] sm:$0xff]
        %v970 = vld [vmem:[%s433] sm:$0x3]
        %v971 = vunpack.c.l.bf16 %v970
        %v973 = vlaneseq
        %v974 = vshrl.u32 %v973, 7
        %v975 = vsub.s32 0, %v974
        %v976 = vrot.slane %v971, %v975
        %v977 = vlaneseq
        %v978 = vshrl.u32 %v977, 7
        %v979 = vsub.s32 2, %v978
        %v980 = vrot.slane %v971, %v979
        %v983 = vlaneseq
        %v984 = vshrl.u32 %v983, 7
        %v985 = vsub.s32 0, %v984
        %v986 = vrot.slane %v976, %v985
        %v987 = vlaneseq
        %v988 = vshrl.u32 %v987, 7
        %v989 = vsub.s32 0, %v988
        %v990 = vrot.slane %v980, %v989
        %v991 = vadd.f32 %v968, %v986
        %v992 = vadd.f32 %v969, %v990
        %v993 = vld [vmem:[%s445] sm:$0xff]
        %v994 = vunpack.c.l.bf16 %v993
        %v995 = vunpack.c.h.bf16 %v993
        %v996 = vld [vmem:[%s456] sm:$0x3]
        %v998 = vlaneseq
        %v999 = vshrl.u32 %v998, 7
        %v1000 = vsub.s32 0, %v999
        %v1001 = vrot.slane %v996, %v1000
        %v1002 = vlaneseq
        %v1003 = vshrl.u32 %v1002, 7
        %v1004 = vsub.s32 1, %v1003
        %v1005 = vrot.slane %v996, %v1004
        %v1008 = vmul.f32 %v1001, %v991
        %v1009 = vmul.f32 %v1005, %v992
        %v1010 = vadd.f32 %v994, %v1008
        %v1011 = vadd.f32 %v995, %v1009
        %v1012 = vpack.c.bf16 %v1010, %v1010
        %v1013 = vpack.c.bf16 %v1011, %v1011
        %v1016 = vunpack.c.l.b16 %v1012
        %v1017 = vunpack.c.l.b16 %v1013
        %v1018 = vpack.c.b16 %v1017, %v1016
        %1020 = vst [vmem:[%s468] sm:$0xff] %v1018
      $region48: #{joint_transformer_block.19} parent=39 // pred_fallthru
        _
      %s1021 = smul.u32 2, %s22
      %p1022 = scmp.lt.s32.totalorder %s21, 1
      %s1023 = scalar_select %p1022, %s21, 1
      %p1024 = scmp.lt.s32.totalorder %s1021, 1
      %s1025 = scalar_select %p1024, %s1021, 1
      %s1026 = smul.addr %s1023, 2
      %s1027 = sadd.s32 %s1025, %s1026
      %s1028 = smul.addr %s1027, 4
      %s1029 = scalar_lea.vmem %s5, %s1028
      // Predicated region
      $region49: #{joint_transformer_block.19} parent=39 // pred_check
        %p1030 = pneg %p209
      $region50: #{joint_transformer_block.19} parent=39 // pred_check_branch
        %1032 = sbr.rel (%p1030) target = $region52
      $region51: #{joint_transformer_block.19} parent=39 // pred_region
        %s1033 = smul.u32 2, %s22
      $region52: #{joint_transformer_block.19} parent=39 // pred_fallthru
        _
    $region40: #{joint_transformer_block.19} parent=5 // pred_fallthru
      _
    %p1034 = scmp.le.s32.totalorder 2, %s11
    // Predicated region
    $region53: #{joint_transformer_block.19} parent=5 // pred_check
      %p1035 = pneg %p1034
    $region54: #{joint_transformer_block.19} parent=5 // pred_check_branch
      %1037 = sbr.rel (%p1035) target = $region56
    $region55: #{joint_transformer_block.19} parent=5 // pred_region
      %s1038 = ssub.s32 %s11, 2
      // Predicated region
      $region57: #{joint_transformer_block.19} parent=55 // pred_check
        %p1039 = pneg %p215
      $region58: #{joint_transformer_block.19} parent=55 // pred_check_branch
        %1041 = sbr.rel (%p1039) target = $region60
      $region59: #{joint_transformer_block.19} parent=55 // pred_region
        %s1042 = smul.u32 2, %s25
        %p1043 = scmp.lt.s32.totalorder %s24, 1
        %s1044 = scalar_select %p1043, %s24, 1
        %p1045 = scmp.lt.s32.totalorder %s1042, 1
        %s1046 = scalar_select %p1045, %s1042, 1
        %s1047 = smul.addr %s1044, 2
        %s1048 = sadd.s32 %s1046, %s1047
        %s1049 = smul.addr %s1048, 4
        %s1050 = scalar_lea.vmem %s5, %s1049
      $region60: #{joint_transformer_block.19} parent=55 // pred_fallthru
        _
    $region56: #{joint_transformer_block.19} parent=5 // pred_fallthru
      _
  $region6: #{joint_transformer_block.19} parent=0 // loop_footer
    %s15 = sadd.s32 1, %s11
  $region7: #{joint_transformer_block.19} parent=0 // loop_footer_branch
    %10 = sbr.rel target = $region3
  $region8: #{joint_transformer_block.19} parent=0 // loop_exit
    _

</llo_original>
